<compile_context>
chip_gen: v7x
topology: tpu7x:2x2x1
jax: 0.10.0
libtpu: 0.0.40
codegen_flags: <defaults>
</compile_context>

<pallas_src>
import jax
import jax.numpy as jnp
from jax.experimental import pallas as pl
from jax.experimental.pallas import tpu as pltpu

# ---- model dims (small / consistent with the module) -----------------------
STATE_DIM = 16          # env.get_observation(1)[2].shape[0]  (synthetic)
NUM_ACTIONS = 6         # NumAcceNetwork + NumCoreNetwork + NumCloudNetwork
LAYER1 = 400
LAYER2 = 300
NUM_HEADS = 8
BATCH = 2


def actor_kernel(x_ref,
                 w1_ref, b1_ref, w2_ref, b2_ref, w3_ref, b3_ref,
                 hw1f_ref, hb1f_ref, hw2_ref, hb2_ref, hw3_ref, hb3f_ref,
                 out_ref):
    """Single invocation: shared trunk + all 8 heads, fully unrolled.

    Weights arrive as bf16 (halved HBM bytes); accumulation is f32.
    """
    bf16 = jnp.bfloat16
    f32 = jnp.float32

    # ---- shared trunk: actor_1 -> actor_2 -> actor_3 (all ReLU) ------------
    x = x_ref[...].astype(bf16)
    s = jnp.dot(x, w1_ref[...], preferred_element_type=f32) + b1_ref[...]
    s = jnp.maximum(s, 0.0)
    s = jnp.dot(s.astype(bf16), w2_ref[...], preferred_element_type=f32) + b2_ref[...]
    s = jnp.maximum(s, 0.0)
    s = jnp.dot(s.astype(bf16), w3_ref[...], preferred_element_type=f32) + b3_ref[...]
    s = jnp.maximum(s, 0.0).astype(bf16)

    # ---- fused first head layer: one (B,300) @ (300, 8*400) MXU call -------
    t_all = jnp.dot(s, hw1f_ref[...], preferred_element_type=f32) + hb1f_ref[...]
    t_all = jnp.maximum(t_all, 0.0).astype(bf16)

    # ---- remaining per-head layers (inputs differ per head) ----------------
    zs = []
    for i in range(NUM_HEADS):                       # static, fully unrolled
        t = t_all[:, i * LAYER1:(i + 1) * LAYER1]
        u = jnp.dot(t, hw2_ref[i], preferred_element_type=f32) + hb2_ref[i]
        u = jnp.maximum(u, 0.0).astype(bf16)
        zs.append(jnp.dot(u, hw3_ref[i], preferred_element_type=f32))

    # One packed bias add + one sigmoid + one lane-denser store (B, 8*A).
    z_all = jnp.concatenate(zs, axis=-1) + hb3f_ref[...]
    out_ref[...] = jax.nn.sigmoid(z_all)


@jax.jit
def actor_forward(x, packed):
    (w1, b1, w2, b2, w3, b3, hw1f, hb1f, hw2, hb2, hw3, hb3f) = packed
    B = x.shape[0]
    A = hw3.shape[-1]

    full = lambda a: pl.BlockSpec(a.shape, lambda _: (0,) * a.ndim)

    out = pl.pallas_call(
        actor_kernel,
        out_shape=jax.ShapeDtypeStruct((B, NUM_HEADS * A), jnp.float32),
        grid_spec=pltpu.PrefetchScalarGridSpec(
            num_scalar_prefetch=0,
            grid=(1,),
            in_specs=[
                full(x),
                full(w1), full(b1), full(w2), full(b2), full(w3), full(b3),
                full(hw1f), full(hb1f), full(hw2), full(hb2),
                full(hw3), full(hb3f),
            ],
            out_specs=pl.BlockSpec((B, NUM_HEADS * A), lambda _: (0, 0)),
        ),
        compiler_params=pltpu.CompilerParams(
            dimension_semantics=("arbitrary",),
            vmem_limit_bytes=32 << 20,
        ),
    )(x, w1, b1, w2, b2, w3, b3, hw1f, hb1f, hw2, hb2, hw3, hb3f)

    # Split the packed (B, 8*A) result back into the module's 8 head outputs.
    return tuple(out[:, i * A:(i + 1) * A] for i in range(NUM_HEADS))


def init_params(key):
    """Deterministic synthetic f32 parameters (shapes match the nn.Module)."""
    ks = jax.random.split(key, 12)
    scale = 0.05
    # Trunk: actor_1 (S->L1), actor_2 (L1->L2), actor_3 (L2->L2)
    w1 = scale * jax.random.normal(ks[0], (STATE_DIM, LAYER1), jnp.float32)
    b1 = scale * jax.random.normal(ks[1], (1, LAYER1), jnp.float32)
    w2 = scale * jax.random.normal(ks[2], (LAYER1, LAYER2), jnp.float32)
    b2 = scale * jax.random.normal(ks[3], (1, LAYER2), jnp.float32)
    w3 = scale * jax.random.normal(ks[4], (LAYER2, LAYER2), jnp.float32)
    b3 = scale * jax.random.normal(ks[5], (1, LAYER2), jnp.float32)
    # 8 heads: actor_i1 (L2->L1), actor_i2 (L1->L2), actor_i3 (L2->A)
    hw1 = scale * jax.random.normal(ks[6], (NUM_HEADS, LAYER2, LAYER1), jnp.float32)
    hb1 = scale * jax.random.normal(ks[7], (NUM_HEADS, 1, LAYER1), jnp.float32)
    hw2 = scale * jax.random.normal(ks[8], (NUM_HEADS, LAYER1, LAYER2), jnp.float32)
    hb2 = scale * jax.random.normal(ks[9], (NUM_HEADS, 1, LAYER2), jnp.float32)
    hw3 = scale * jax.random.normal(ks[10], (NUM_HEADS, LAYER2, NUM_ACTIONS), jnp.float32)
    hb3 = scale * jax.random.normal(ks[11], (NUM_HEADS, 1, NUM_ACTIONS), jnp.float32)
    return (w1, b1, w2, b2, w3, b3, hw1, hb1, hw2, hb2, hw3, hb3)


def pack_params(params):
    """Kernel-layout params: bf16 weights, fused head-layer-1, packed head bias-3."""
    (w1, b1, w2, b2, w3, b3, hw1, hb1, hw2, hb2, hw3, hb3) = params
    bf = lambda w: w.astype(jnp.bfloat16)
    # Fuse the 8 head first-layers: (8, 300, 400) -> (300, 8*400) column blocks.
    hw1f = jnp.transpose(hw1, (1, 0, 2)).reshape(LAYER2, NUM_HEADS * LAYER1)
    hb1f = jnp.transpose(hb1, (1, 0, 2)).reshape(1, NUM_HEADS * LAYER1)
    # Pack the 8 head output biases: (8, 1, A) -> (1, 8*A).
    hb3f = jnp.transpose(hb3, (1, 0, 2)).reshape(1, NUM_HEADS * NUM_ACTIONS)
    return (bf(w1), b1, bf(w2), b2, bf(w3), b3,
            bf(hw1f), hb1f, bf(hw2), hb2, bf(hw3), hb3f)


def reference_forward(x, params):
    """Pure-JAX reference with the same bf16-weight / f32-accumulate recipe."""
    (w1, b1, w2, b2, w3, b3, hw1, hb1, hw2, hb2, hw3, hb3) = params
    bf16 = jnp.bfloat16

    def lin(a, w, b):
        return jnp.dot(a.astype(bf16), w.astype(bf16),
                       preferred_element_type=jnp.float32) + b

    s = jax.nn.relu(lin(x, w1, b1))
    s = jax.nn.relu(lin(s, w2, b2))
    s = jax.nn.relu(lin(s, w3, b3))
    outs = []
    for i in range(NUM_HEADS):
        t = jax.nn.relu(lin(s, hw1[i], hb1[i]))
        u = jax.nn.relu(lin(t, hw2[i], hb2[i]))
        outs.append(jax.nn.sigmoid(lin(u, hw3[i], hb3[i])))
    return tuple(outs)


if __name__ == "__main__":
    key = jax.random.PRNGKey(0)
    pkey, xkey = jax.random.split(key)
    params = init_params(pkey)
    packed = pack_params(params)
    x = jax.random.normal(xkey, (BATCH, STATE_DIM), jnp.float32)

    outs = actor_forward(x, packed)
    outs = jax.block_until_ready(outs)

    refs = reference_forward(x, params)
    for o, r in zip(outs, refs):
        assert o.shape == (BATCH, NUM_ACTIONS)
        assert jnp.allclose(o, r, atol=5e-4, rtol=5e-4), \
            float(jnp.max(jnp.abs(o - r)))

    print("KERNEL_OK")
</pallas_src>

<mosaic_0001>
module attributes {stable_mosaic.version = 11 : i64} {
  func.func @actor_kernel(%arg0: i32, %arg1: memref<2x16xf32, #tpu.memory_space<vmem>>, %arg2: memref<16x400xbf16, #tpu.memory_space<vmem>>, %arg3: memref<1x400xf32, #tpu.memory_space<vmem>>, %arg4: memref<400x300xbf16, #tpu.memory_space<vmem>>, %arg5: memref<1x300xf32, #tpu.memory_space<vmem>>, %arg6: memref<300x300xbf16, #tpu.memory_space<vmem>>, %arg7: memref<1x300xf32, #tpu.memory_space<vmem>>, %arg8: memref<300x3200xbf16, #tpu.memory_space<vmem>>, %arg9: memref<1x3200xf32, #tpu.memory_space<vmem>>, %arg10: memref<8x400x300xbf16, #tpu.memory_space<vmem>>, %arg11: memref<8x1x300xf32, #tpu.memory_space<vmem>>, %arg12: memref<8x300x6xbf16, #tpu.memory_space<vmem>>, %arg13: memref<1x48xf32, #tpu.memory_space<vmem>>, %arg14: memref<2x48xf32, #tpu.memory_space<vmem>>) attributes {dimension_semantics = [#tpu.dimension_semantics<arbitrary>], iteration_bounds = array<i64: 1>, scalar_prefetch = 0 : i64, scratch_operands = 0 : i64, tpu.core_type = #tpu.core_type<tc>, window_params = [{pipeline_mode = #tpu.pipeline_mode<synchronous>, transform_indices = @transform_0, window_bounds = array<i64: 2, 16>}, {pipeline_mode = #tpu.pipeline_mode<synchronous>, transform_indices = @transform_1, window_bounds = array<i64: 16, 400>}, {pipeline_mode = #tpu.pipeline_mode<synchronous>, transform_indices = @transform_2, window_bounds = array<i64: 1, 400>}, {pipeline_mode = #tpu.pipeline_mode<synchronous>, transform_indices = @transform_3, window_bounds = array<i64: 400, 300>}, {pipeline_mode = #tpu.pipeline_mode<synchronous>, transform_indices = @transform_4, window_bounds = array<i64: 1, 300>}, {pipeline_mode = #tpu.pipeline_mode<synchronous>, transform_indices = @transform_5, window_bounds = array<i64: 300, 300>}, {pipeline_mode = #tpu.pipeline_mode<synchronous>, transform_indices = @transform_6, window_bounds = array<i64: 1, 300>}, {pipeline_mode = #tpu.pipeline_mode<synchronous>, transform_indices = @transform_7, window_bounds = array<i64: 300, 3200>}, {pipeline_mode = #tpu.pipeline_mode<synchronous>, transform_indices = @transform_8, window_bounds = array<i64: 1, 3200>}, {pipeline_mode = #tpu.pipeline_mode<synchronous>, transform_indices = @transform_9, window_bounds = array<i64: 8, 400, 300>}, {pipeline_mode = #tpu.pipeline_mode<synchronous>, transform_indices = @transform_10, window_bounds = array<i64: 8, 1, 300>}, {pipeline_mode = #tpu.pipeline_mode<synchronous>, transform_indices = @transform_11, window_bounds = array<i64: 8, 300, 6>}, {pipeline_mode = #tpu.pipeline_mode<synchronous>, transform_indices = @transform_12, window_bounds = array<i64: 1, 48>}, {pipeline_mode = #tpu.pipeline_mode<synchronous>, transform_indices = @transform_13, window_bounds = array<i64: 2, 48>}]} {
    %c0 = arith.constant 0 : index
    %c0_0 = arith.constant 0 : index
    %0 = vector.load %arg1[%c0, %c0_0] : memref<2x16xf32, #tpu.memory_space<vmem>>, vector<2x16xf32>
    %1 = arith.truncf %0 : vector<2x16xf32> to vector<2x16xbf16>
    %c0_1 = arith.constant 0 : index
    %c0_2 = arith.constant 0 : index
    %2 = vector.load %arg2[%c0_1, %c0_2] : memref<16x400xbf16, #tpu.memory_space<vmem>>, vector<16x400xbf16>
    %cst = arith.constant dense<0.000000e+00> : vector<2x400xf32>
    %3 = tpu.matmul %1, %2, %cst {dimension_numbers = #tpu.dot_dimension_numbers<[1], [0], [0], [1], [0, 0, 1, 1], [], []>} : vector<2x16xbf16>, vector<16x400xbf16>, vector<2x400xf32> -> vector<2x400xf32>
    %c0_3 = arith.constant 0 : index
    %c0_4 = arith.constant 0 : index
    %4 = vector.load %arg3[%c0_3, %c0_4] : memref<1x400xf32, #tpu.memory_space<vmem>>, vector<1x400xf32>
    %5 = vector.broadcast %4 : vector<1x400xf32> to vector<2x400xf32>
    %6 = arith.addf %3, %5 : vector<2x400xf32>
    %cst_5 = arith.constant 0.000000e+00 : f32
    %7 = vector.broadcast %cst_5 : f32 to vector<2x400xf32>
    %8 = arith.maximumf %6, %7 : vector<2x400xf32>
    %9 = arith.truncf %8 : vector<2x400xf32> to vector<2x400xbf16>
    %c0_6 = arith.constant 0 : index
    %c0_7 = arith.constant 0 : index
    %10 = vector.load %arg4[%c0_6, %c0_7] : memref<400x300xbf16, #tpu.memory_space<vmem>>, vector<400x300xbf16>
    %cst_8 = arith.constant dense<0.000000e+00> : vector<2x300xf32>
    %11 = tpu.matmul %9, %10, %cst_8 {dimension_numbers = #tpu.dot_dimension_numbers<[1], [0], [0], [1], [0, 0, 1, 1], [], []>} : vector<2x400xbf16>, vector<400x300xbf16>, vector<2x300xf32> -> vector<2x300xf32>
    %c0_9 = arith.constant 0 : index
    %c0_10 = arith.constant 0 : index
    %12 = vector.load %arg5[%c0_9, %c0_10] : memref<1x300xf32, #tpu.memory_space<vmem>>, vector<1x300xf32>
    %13 = vector.broadcast %12 : vector<1x300xf32> to vector<2x300xf32>
    %14 = arith.addf %11, %13 : vector<2x300xf32>
    %cst_11 = arith.constant 0.000000e+00 : f32
    %15 = vector.broadcast %cst_11 : f32 to vector<2x300xf32>
    %16 = arith.maximumf %14, %15 : vector<2x300xf32>
    %17 = arith.truncf %16 : vector<2x300xf32> to vector<2x300xbf16>
    %c0_12 = arith.constant 0 : index
    %c0_13 = arith.constant 0 : index
    %18 = vector.load %arg6[%c0_12, %c0_13] : memref<300x300xbf16, #tpu.memory_space<vmem>>, vector<300x300xbf16>
    %cst_14 = arith.constant dense<0.000000e+00> : vector<2x300xf32>
    %19 = tpu.matmul %17, %18, %cst_14 {dimension_numbers = #tpu.dot_dimension_numbers<[1], [0], [0], [1], [0, 0, 1, 1], [], []>} : vector<2x300xbf16>, vector<300x300xbf16>, vector<2x300xf32> -> vector<2x300xf32>
    %c0_15 = arith.constant 0 : index
    %c0_16 = arith.constant 0 : index
    %20 = vector.load %arg7[%c0_15, %c0_16] : memref<1x300xf32, #tpu.memory_space<vmem>>, vector<1x300xf32>
    %21 = vector.broadcast %20 : vector<1x300xf32> to vector<2x300xf32>
    %22 = arith.addf %19, %21 : vector<2x300xf32>
    %cst_17 = arith.constant 0.000000e+00 : f32
    %23 = vector.broadcast %cst_17 : f32 to vector<2x300xf32>
    %24 = arith.maximumf %22, %23 : vector<2x300xf32>
    %25 = arith.truncf %24 : vector<2x300xf32> to vector<2x300xbf16>
    %c0_18 = arith.constant 0 : index
    %c0_19 = arith.constant 0 : index
    %26 = vector.load %arg8[%c0_18, %c0_19] : memref<300x3200xbf16, #tpu.memory_space<vmem>>, vector<300x3200xbf16>
    %cst_20 = arith.constant dense<0.000000e+00> : vector<2x3200xf32>
    %27 = tpu.matmul %25, %26, %cst_20 {dimension_numbers = #tpu.dot_dimension_numbers<[1], [0], [0], [1], [0, 0, 1, 1], [], []>} : vector<2x300xbf16>, vector<300x3200xbf16>, vector<2x3200xf32> -> vector<2x3200xf32>
    %c0_21 = arith.constant 0 : index
    %c0_22 = arith.constant 0 : index
    %28 = vector.load %arg9[%c0_21, %c0_22] : memref<1x3200xf32, #tpu.memory_space<vmem>>, vector<1x3200xf32>
    %29 = vector.broadcast %28 : vector<1x3200xf32> to vector<2x3200xf32>
    %30 = arith.addf %27, %29 : vector<2x3200xf32>
    %cst_23 = arith.constant 0.000000e+00 : f32
    %31 = vector.broadcast %cst_23 : f32 to vector<2x3200xf32>
    %32 = arith.maximumf %30, %31 : vector<2x3200xf32>
    %33 = arith.truncf %32 : vector<2x3200xf32> to vector<2x3200xbf16>
    %34 = vector.extract_strided_slice %33 {offsets = [0, 0], sizes = [2, 400], strides = [1, 1]} : vector<2x3200xbf16> to vector<2x400xbf16>
    %c0_24 = arith.constant 0 : index
    %c0_25 = arith.constant 0 : index
    %c0_26 = arith.constant 0 : index
    %35 = vector.load %arg10[%c0_24, %c0_25, %c0_26] : memref<8x400x300xbf16, #tpu.memory_space<vmem>>, vector<1x400x300xbf16>
    %36 = vector.shape_cast %35 : vector<1x400x300xbf16> to vector<400x300xbf16>
    %cst_27 = arith.constant dense<0.000000e+00> : vector<2x300xf32>
    %37 = tpu.matmul %34, %36, %cst_27 {dimension_numbers = #tpu.dot_dimension_numbers<[1], [0], [0], [1], [0, 0, 1, 1], [], []>} : vector<2x400xbf16>, vector<400x300xbf16>, vector<2x300xf32> -> vector<2x300xf32>
    %c0_28 = arith.constant 0 : index
    %c0_29 = arith.constant 0 : index
    %c0_30 = arith.constant 0 : index
    %38 = vector.load %arg11[%c0_28, %c0_29, %c0_30] : memref<8x1x300xf32, #tpu.memory_space<vmem>>, vector<1x1x300xf32>
    %39 = vector.shape_cast %38 : vector<1x1x300xf32> to vector<1x300xf32>
    %40 = vector.broadcast %39 : vector<1x300xf32> to vector<2x300xf32>
    %41 = arith.addf %37, %40 : vector<2x300xf32>
    %cst_31 = arith.constant 0.000000e+00 : f32
    %42 = vector.broadcast %cst_31 : f32 to vector<2x300xf32>
    %43 = arith.maximumf %41, %42 : vector<2x300xf32>
    %44 = arith.truncf %43 : vector<2x300xf32> to vector<2x300xbf16>
    %c0_32 = arith.constant 0 : index
    %c0_33 = arith.constant 0 : index
    %c0_34 = arith.constant 0 : index
    %45 = vector.load %arg12[%c0_32, %c0_33, %c0_34] : memref<8x300x6xbf16, #tpu.memory_space<vmem>>, vector<1x300x6xbf16>
    %46 = vector.shape_cast %45 : vector<1x300x6xbf16> to vector<300x6xbf16>
    %cst_35 = arith.constant dense<0.000000e+00> : vector<2x6xf32>
    %47 = tpu.matmul %44, %46, %cst_35 {dimension_numbers = #tpu.dot_dimension_numbers<[1], [0], [0], [1], [0, 0, 1, 1], [], []>} : vector<2x300xbf16>, vector<300x6xbf16>, vector<2x6xf32> -> vector<2x6xf32>
    %48 = vector.extract_strided_slice %33 {offsets = [0, 400], sizes = [2, 400], strides = [1, 1]} : vector<2x3200xbf16> to vector<2x400xbf16>
    %c1 = arith.constant 1 : index
    %c0_36 = arith.constant 0 : index
    %c0_37 = arith.constant 0 : index
    %49 = vector.load %arg10[%c1, %c0_36, %c0_37] : memref<8x400x300xbf16, #tpu.memory_space<vmem>>, vector<1x400x300xbf16>
    %50 = vector.shape_cast %49 : vector<1x400x300xbf16> to vector<400x300xbf16>
    %cst_38 = arith.constant dense<0.000000e+00> : vector<2x300xf32>
    %51 = tpu.matmul %48, %50, %cst_38 {dimension_numbers = #tpu.dot_dimension_numbers<[1], [0], [0], [1], [0, 0, 1, 1], [], []>} : vector<2x400xbf16>, vector<400x300xbf16>, vector<2x300xf32> -> vector<2x300xf32>
    %c1_39 = arith.constant 1 : index
    %c0_40 = arith.constant 0 : index
    %c0_41 = arith.constant 0 : index
    %52 = vector.load %arg11[%c1_39, %c0_40, %c0_41] : memref<8x1x300xf32, #tpu.memory_space<vmem>>, vector<1x1x300xf32>
    %53 = vector.shape_cast %52 : vector<1x1x300xf32> to vector<1x300xf32>
    %54 = vector.broadcast %53 : vector<1x300xf32> to vector<2x300xf32>
    %55 = arith.addf %51, %54 : vector<2x300xf32>
    %cst_42 = arith.constant 0.000000e+00 : f32
    %56 = vector.broadcast %cst_42 : f32 to vector<2x300xf32>
    %57 = arith.maximumf %55, %56 : vector<2x300xf32>
    %58 = arith.truncf %57 : vector<2x300xf32> to vector<2x300xbf16>
    %c1_43 = arith.constant 1 : index
    %c0_44 = arith.constant 0 : index
    %c0_45 = arith.constant 0 : index
    %59 = vector.load %arg12[%c1_43, %c0_44, %c0_45] : memref<8x300x6xbf16, #tpu.memory_space<vmem>>, vector<1x300x6xbf16>
    %60 = vector.shape_cast %59 : vector<1x300x6xbf16> to vector<300x6xbf16>
    %cst_46 = arith.constant dense<0.000000e+00> : vector<2x6xf32>
    %61 = tpu.matmul %58, %60, %cst_46 {dimension_numbers = #tpu.dot_dimension_numbers<[1], [0], [0], [1], [0, 0, 1, 1], [], []>} : vector<2x300xbf16>, vector<300x6xbf16>, vector<2x6xf32> -> vector<2x6xf32>
    %62 = vector.extract_strided_slice %33 {offsets = [0, 800], sizes = [2, 400], strides = [1, 1]} : vector<2x3200xbf16> to vector<2x400xbf16>
    %c2 = arith.constant 2 : index
    %c0_47 = arith.constant 0 : index
    %c0_48 = arith.constant 0 : index
    %63 = vector.load %arg10[%c2, %c0_47, %c0_48] : memref<8x400x300xbf16, #tpu.memory_space<vmem>>, vector<1x400x300xbf16>
    %64 = vector.shape_cast %63 : vector<1x400x300xbf16> to vector<400x300xbf16>
    %cst_49 = arith.constant dense<0.000000e+00> : vector<2x300xf32>
    %65 = tpu.matmul %62, %64, %cst_49 {dimension_numbers = #tpu.dot_dimension_numbers<[1], [0], [0], [1], [0, 0, 1, 1], [], []>} : vector<2x400xbf16>, vector<400x300xbf16>, vector<2x300xf32> -> vector<2x300xf32>
    %c2_50 = arith.constant 2 : index
    %c0_51 = arith.constant 0 : index
    %c0_52 = arith.constant 0 : index
    %66 = vector.load %arg11[%c2_50, %c0_51, %c0_52] : memref<8x1x300xf32, #tpu.memory_space<vmem>>, vector<1x1x300xf32>
    %67 = vector.shape_cast %66 : vector<1x1x300xf32> to vector<1x300xf32>
    %68 = vector.broadcast %67 : vector<1x300xf32> to vector<2x300xf32>
    %69 = arith.addf %65, %68 : vector<2x300xf32>
    %cst_53 = arith.constant 0.000000e+00 : f32
    %70 = vector.broadcast %cst_53 : f32 to vector<2x300xf32>
    %71 = arith.maximumf %69, %70 : vector<2x300xf32>
    %72 = arith.truncf %71 : vector<2x300xf32> to vector<2x300xbf16>
    %c2_54 = arith.constant 2 : index
    %c0_55 = arith.constant 0 : index
    %c0_56 = arith.constant 0 : index
    %73 = vector.load %arg12[%c2_54, %c0_55, %c0_56] : memref<8x300x6xbf16, #tpu.memory_space<vmem>>, vector<1x300x6xbf16>
    %74 = vector.shape_cast %73 : vector<1x300x6xbf16> to vector<300x6xbf16>
    %cst_57 = arith.constant dense<0.000000e+00> : vector<2x6xf32>
    %75 = tpu.matmul %72, %74, %cst_57 {dimension_numbers = #tpu.dot_dimension_numbers<[1], [0], [0], [1], [0, 0, 1, 1], [], []>} : vector<2x300xbf16>, vector<300x6xbf16>, vector<2x6xf32> -> vector<2x6xf32>
    %76 = vector.extract_strided_slice %33 {offsets = [0, 1200], sizes = [2, 400], strides = [1, 1]} : vector<2x3200xbf16> to vector<2x400xbf16>
    %c3 = arith.constant 3 : index
    %c0_58 = arith.constant 0 : index
    %c0_59 = arith.constant 0 : index
    %77 = vector.load %arg10[%c3, %c0_58, %c0_59] : memref<8x400x300xbf16, #tpu.memory_space<vmem>>, vector<1x400x300xbf16>
    %78 = vector.shape_cast %77 : vector<1x400x300xbf16> to vector<400x300xbf16>
    %cst_60 = arith.constant dense<0.000000e+00> : vector<2x300xf32>
    %79 = tpu.matmul %76, %78, %cst_60 {dimension_numbers = #tpu.dot_dimension_numbers<[1], [0], [0], [1], [0, 0, 1, 1], [], []>} : vector<2x400xbf16>, vector<400x300xbf16>, vector<2x300xf32> -> vector<2x300xf32>
    %c3_61 = arith.constant 3 : index
    %c0_62 = arith.constant 0 : index
    %c0_63 = arith.constant 0 : index
    %80 = vector.load %arg11[%c3_61, %c0_62, %c0_63] : memref<8x1x300xf32, #tpu.memory_space<vmem>>, vector<1x1x300xf32>
    %81 = vector.shape_cast %80 : vector<1x1x300xf32> to vector<1x300xf32>
    %82 = vector.broadcast %81 : vector<1x300xf32> to vector<2x300xf32>
    %83 = arith.addf %79, %82 : vector<2x300xf32>
    %cst_64 = arith.constant 0.000000e+00 : f32
    %84 = vector.broadcast %cst_64 : f32 to vector<2x300xf32>
    %85 = arith.maximumf %83, %84 : vector<2x300xf32>
    %86 = arith.truncf %85 : vector<2x300xf32> to vector<2x300xbf16>
    %c3_65 = arith.constant 3 : index
    %c0_66 = arith.constant 0 : index
    %c0_67 = arith.constant 0 : index
    %87 = vector.load %arg12[%c3_65, %c0_66, %c0_67] : memref<8x300x6xbf16, #tpu.memory_space<vmem>>, vector<1x300x6xbf16>
    %88 = vector.shape_cast %87 : vector<1x300x6xbf16> to vector<300x6xbf16>
    %cst_68 = arith.constant dense<0.000000e+00> : vector<2x6xf32>
    %89 = tpu.matmul %86, %88, %cst_68 {dimension_numbers = #tpu.dot_dimension_numbers<[1], [0], [0], [1], [0, 0, 1, 1], [], []>} : vector<2x300xbf16>, vector<300x6xbf16>, vector<2x6xf32> -> vector<2x6xf32>
    %90 = vector.extract_strided_slice %33 {offsets = [0, 1600], sizes = [2, 400], strides = [1, 1]} : vector<2x3200xbf16> to vector<2x400xbf16>
    %c4 = arith.constant 4 : index
    %c0_69 = arith.constant 0 : index
    %c0_70 = arith.constant 0 : index
    %91 = vector.load %arg10[%c4, %c0_69, %c0_70] : memref<8x400x300xbf16, #tpu.memory_space<vmem>>, vector<1x400x300xbf16>
    %92 = vector.shape_cast %91 : vector<1x400x300xbf16> to vector<400x300xbf16>
    %cst_71 = arith.constant dense<0.000000e+00> : vector<2x300xf32>
    %93 = tpu.matmul %90, %92, %cst_71 {dimension_numbers = #tpu.dot_dimension_numbers<[1], [0], [0], [1], [0, 0, 1, 1], [], []>} : vector<2x400xbf16>, vector<400x300xbf16>, vector<2x300xf32> -> vector<2x300xf32>
    %c4_72 = arith.constant 4 : index
    %c0_73 = arith.constant 0 : index
    %c0_74 = arith.constant 0 : index
    %94 = vector.load %arg11[%c4_72, %c0_73, %c0_74] : memref<8x1x300xf32, #tpu.memory_space<vmem>>, vector<1x1x300xf32>
    %95 = vector.shape_cast %94 : vector<1x1x300xf32> to vector<1x300xf32>
    %96 = vector.broadcast %95 : vector<1x300xf32> to vector<2x300xf32>
    %97 = arith.addf %93, %96 : vector<2x300xf32>
    %cst_75 = arith.constant 0.000000e+00 : f32
    %98 = vector.broadcast %cst_75 : f32 to vector<2x300xf32>
    %99 = arith.maximumf %97, %98 : vector<2x300xf32>
    %100 = arith.truncf %99 : vector<2x300xf32> to vector<2x300xbf16>
    %c4_76 = arith.constant 4 : index
    %c0_77 = arith.constant 0 : index
    %c0_78 = arith.constant 0 : index
    %101 = vector.load %arg12[%c4_76, %c0_77, %c0_78] : memref<8x300x6xbf16, #tpu.memory_space<vmem>>, vector<1x300x6xbf16>
    %102 = vector.shape_cast %101 : vector<1x300x6xbf16> to vector<300x6xbf16>
    %cst_79 = arith.constant dense<0.000000e+00> : vector<2x6xf32>
    %103 = tpu.matmul %100, %102, %cst_79 {dimension_numbers = #tpu.dot_dimension_numbers<[1], [0], [0], [1], [0, 0, 1, 1], [], []>} : vector<2x300xbf16>, vector<300x6xbf16>, vector<2x6xf32> -> vector<2x6xf32>
    %104 = vector.extract_strided_slice %33 {offsets = [0, 2000], sizes = [2, 400], strides = [1, 1]} : vector<2x3200xbf16> to vector<2x400xbf16>
    %c5 = arith.constant 5 : index
    %c0_80 = arith.constant 0 : index
    %c0_81 = arith.constant 0 : index
    %105 = vector.load %arg10[%c5, %c0_80, %c0_81] : memref<8x400x300xbf16, #tpu.memory_space<vmem>>, vector<1x400x300xbf16>
    %106 = vector.shape_cast %105 : vector<1x400x300xbf16> to vector<400x300xbf16>
    %cst_82 = arith.constant dense<0.000000e+00> : vector<2x300xf32>
    %107 = tpu.matmul %104, %106, %cst_82 {dimension_numbers = #tpu.dot_dimension_numbers<[1], [0], [0], [1], [0, 0, 1, 1], [], []>} : vector<2x400xbf16>, vector<400x300xbf16>, vector<2x300xf32> -> vector<2x300xf32>
    %c5_83 = arith.constant 5 : index
    %c0_84 = arith.constant 0 : index
    %c0_85 = arith.constant 0 : index
    %108 = vector.load %arg11[%c5_83, %c0_84, %c0_85] : memref<8x1x300xf32, #tpu.memory_space<vmem>>, vector<1x1x300xf32>
    %109 = vector.shape_cast %108 : vector<1x1x300xf32> to vector<1x300xf32>
    %110 = vector.broadcast %109 : vector<1x300xf32> to vector<2x300xf32>
    %111 = arith.addf %107, %110 : vector<2x300xf32>
    %cst_86 = arith.constant 0.000000e+00 : f32
    %112 = vector.broadcast %cst_86 : f32 to vector<2x300xf32>
    %113 = arith.maximumf %111, %112 : vector<2x300xf32>
    %114 = arith.truncf %113 : vector<2x300xf32> to vector<2x300xbf16>
    %c5_87 = arith.constant 5 : index
    %c0_88 = arith.constant 0 : index
    %c0_89 = arith.constant 0 : index
    %115 = vector.load %arg12[%c5_87, %c0_88, %c0_89] : memref<8x300x6xbf16, #tpu.memory_space<vmem>>, vector<1x300x6xbf16>
    %116 = vector.shape_cast %115 : vector<1x300x6xbf16> to vector<300x6xbf16>
    %cst_90 = arith.constant dense<0.000000e+00> : vector<2x6xf32>
    %117 = tpu.matmul %114, %116, %cst_90 {dimension_numbers = #tpu.dot_dimension_numbers<[1], [0], [0], [1], [0, 0, 1, 1], [], []>} : vector<2x300xbf16>, vector<300x6xbf16>, vector<2x6xf32> -> vector<2x6xf32>
    %118 = vector.extract_strided_slice %33 {offsets = [0, 2400], sizes = [2, 400], strides = [1, 1]} : vector<2x3200xbf16> to vector<2x400xbf16>
    %c6 = arith.constant 6 : index
    %c0_91 = arith.constant 0 : index
    %c0_92 = arith.constant 0 : index
    %119 = vector.load %arg10[%c6, %c0_91, %c0_92] : memref<8x400x300xbf16, #tpu.memory_space<vmem>>, vector<1x400x300xbf16>
    %120 = vector.shape_cast %119 : vector<1x400x300xbf16> to vector<400x300xbf16>
    %cst_93 = arith.constant dense<0.000000e+00> : vector<2x300xf32>
    %121 = tpu.matmul %118, %120, %cst_93 {dimension_numbers = #tpu.dot_dimension_numbers<[1], [0], [0], [1], [0, 0, 1, 1], [], []>} : vector<2x400xbf16>, vector<400x300xbf16>, vector<2x300xf32> -> vector<2x300xf32>
    %c6_94 = arith.constant 6 : index
    %c0_95 = arith.constant 0 : index
    %c0_96 = arith.constant 0 : index
    %122 = vector.load %arg11[%c6_94, %c0_95, %c0_96] : memref<8x1x300xf32, #tpu.memory_space<vmem>>, vector<1x1x300xf32>
    %123 = vector.shape_cast %122 : vector<1x1x300xf32> to vector<1x300xf32>
    %124 = vector.broadcast %123 : vector<1x300xf32> to vector<2x300xf32>
    %125 = arith.addf %121, %124 : vector<2x300xf32>
    %cst_97 = arith.constant 0.000000e+00 : f32
    %126 = vector.broadcast %cst_97 : f32 to vector<2x300xf32>
    %127 = arith.maximumf %125, %126 : vector<2x300xf32>
    %128 = arith.truncf %127 : vector<2x300xf32> to vector<2x300xbf16>
    %c6_98 = arith.constant 6 : index
    %c0_99 = arith.constant 0 : index
    %c0_100 = arith.constant 0 : index
    %129 = vector.load %arg12[%c6_98, %c0_99, %c0_100] : memref<8x300x6xbf16, #tpu.memory_space<vmem>>, vector<1x300x6xbf16>
    %130 = vector.shape_cast %129 : vector<1x300x6xbf16> to vector<300x6xbf16>
    %cst_101 = arith.constant dense<0.000000e+00> : vector<2x6xf32>
    %131 = tpu.matmul %128, %130, %cst_101 {dimension_numbers = #tpu.dot_dimension_numbers<[1], [0], [0], [1], [0, 0, 1, 1], [], []>} : vector<2x300xbf16>, vector<300x6xbf16>, vector<2x6xf32> -> vector<2x6xf32>
    %132 = vector.extract_strided_slice %33 {offsets = [0, 2800], sizes = [2, 400], strides = [1, 1]} : vector<2x3200xbf16> to vector<2x400xbf16>
    %c7 = arith.constant 7 : index
    %c0_102 = arith.constant 0 : index
    %c0_103 = arith.constant 0 : index
    %133 = vector.load %arg10[%c7, %c0_102, %c0_103] : memref<8x400x300xbf16, #tpu.memory_space<vmem>>, vector<1x400x300xbf16>
    %134 = vector.shape_cast %133 : vector<1x400x300xbf16> to vector<400x300xbf16>
    %cst_104 = arith.constant dense<0.000000e+00> : vector<2x300xf32>
    %135 = tpu.matmul %132, %134, %cst_104 {dimension_numbers = #tpu.dot_dimension_numbers<[1], [0], [0], [1], [0, 0, 1, 1], [], []>} : vector<2x400xbf16>, vector<400x300xbf16>, vector<2x300xf32> -> vector<2x300xf32>
    %c7_105 = arith.constant 7 : index
    %c0_106 = arith.constant 0 : index
    %c0_107 = arith.constant 0 : index
    %136 = vector.load %arg11[%c7_105, %c0_106, %c0_107] : memref<8x1x300xf32, #tpu.memory_space<vmem>>, vector<1x1x300xf32>
    %137 = vector.shape_cast %136 : vector<1x1x300xf32> to vector<1x300xf32>
    %138 = vector.broadcast %137 : vector<1x300xf32> to vector<2x300xf32>
    %139 = arith.addf %135, %138 : vector<2x300xf32>
    %cst_108 = arith.constant 0.000000e+00 : f32
    %140 = vector.broadcast %cst_108 : f32 to vector<2x300xf32>
    %141 = arith.maximumf %139, %140 : vector<2x300xf32>
    %142 = arith.truncf %141 : vector<2x300xf32> to vector<2x300xbf16>
    %c7_109 = arith.constant 7 : index
    %c0_110 = arith.constant 0 : index
    %c0_111 = arith.constant 0 : index
    %143 = vector.load %arg12[%c7_109, %c0_110, %c0_111] : memref<8x300x6xbf16, #tpu.memory_space<vmem>>, vector<1x300x6xbf16>
    %144 = vector.shape_cast %143 : vector<1x300x6xbf16> to vector<300x6xbf16>
    %cst_112 = arith.constant dense<0.000000e+00> : vector<2x6xf32>
    %145 = tpu.matmul %142, %144, %cst_112 {dimension_numbers = #tpu.dot_dimension_numbers<[1], [0], [0], [1], [0, 0, 1, 1], [], []>} : vector<2x300xbf16>, vector<300x6xbf16>, vector<2x6xf32> -> vector<2x6xf32>
    %146 = tpu.concatenate %47, %61, %75, %89, %103, %117, %131, %145 in 1 : vector<2x6xf32>, vector<2x6xf32>, vector<2x6xf32>, vector<2x6xf32>, vector<2x6xf32>, vector<2x6xf32>, vector<2x6xf32>, vector<2x6xf32> -> vector<2x48xf32>
    %c0_113 = arith.constant 0 : index
    %c0_114 = arith.constant 0 : index
    %147 = vector.load %arg13[%c0_113, %c0_114] : memref<1x48xf32, #tpu.memory_space<vmem>>, vector<1x48xf32>
    %148 = vector.broadcast %147 : vector<1x48xf32> to vector<2x48xf32>
    %149 = arith.addf %146, %148 : vector<2x48xf32>
    %150 = arith.negf %149 : vector<2x48xf32>
    %151 = math.exp %150 : vector<2x48xf32>
    %cst_115 = arith.constant 1.000000e+00 : f32
    %152 = vector.broadcast %cst_115 : f32 to vector<2x48xf32>
    %153 = arith.addf %152, %151 : vector<2x48xf32>
    %154 = arith.divf %152, %153 : vector<2x48xf32>
    %c0_116 = arith.constant 0 : index
    %c0_117 = arith.constant 0 : index
    %155 = vector.load %arg14[%c0_116, %c0_117] : memref<2x48xf32, #tpu.memory_space<vmem>>, vector<2x48xf32>
    tpu.vector_store %arg14[%c0_116, %c0_117], %154 {strides = array<i32>} : memref<2x48xf32, #tpu.memory_space<vmem>>, vector<2x48xf32>,
    return
  }
  func.func @transform_0(%arg0: i32) -> (i32, i32) {
    %c0_i32 = arith.constant 0 : i32
    %c0_i32_0 = arith.constant 0 : i32
    %c0_i32_1 = arith.constant 0 : i32
    return %c0_i32, %c0_i32_0 : i32, i32
  }
  func.func @transform_1(%arg0: i32) -> (i32, i32) {
    %c0_i32 = arith.constant 0 : i32
    %c0_i32_0 = arith.constant 0 : i32
    %c0_i32_1 = arith.constant 0 : i32
    return %c0_i32, %c0_i32_0 : i32, i32
  }
  func.func @transform_2(%arg0: i32) -> (i32, i32) {
    %c0_i32 = arith.constant 0 : i32
    %c0_i32_0 = arith.constant 0 : i32
    %c0_i32_1 = arith.constant 0 : i32
    return %c0_i32, %c0_i32_0 : i32, i32
  }
  func.func @transform_3(%arg0: i32) -> (i32, i32) {
    %c0_i32 = arith.constant 0 : i32
    %c0_i32_0 = arith.constant 0 : i32
    %c0_i32_1 = arith.constant 0 : i32
    return %c0_i32, %c0_i32_0 : i32, i32
  }
  func.func @transform_4(%arg0: i32) -> (i32, i32) {
    %c0_i32 = arith.constant 0 : i32
    %c0_i32_0 = arith.constant 0 : i32
    %c0_i32_1 = arith.constant 0 : i32
    return %c0_i32, %c0_i32_0 : i32, i32
  }
  func.func @transform_5(%arg0: i32) -> (i32, i32) {
    %c0_i32 = arith.constant 0 : i32
    %c0_i32_0 = arith.constant 0 : i32
    %c0_i32_1 = arith.constant 0 : i32
    return %c0_i32, %c0_i32_0 : i32, i32
  }
  func.func @transform_6(%arg0: i32) -> (i32, i32) {
    %c0_i32 = arith.constant 0 : i32
    %c0_i32_0 = arith.constant 0 : i32
    %c0_i32_1 = arith.constant 0 : i32
    return %c0_i32, %c0_i32_0 : i32, i32
  }
  func.func @transform_7(%arg0: i32) -> (i32, i32) {
    %c0_i32 = arith.constant 0 : i32
    %c0_i32_0 = arith.constant 0 : i32
    %c0_i32_1 = arith.constant 0 : i32
    return %c0_i32, %c0_i32_0 : i32, i32
  }
  func.func @transform_8(%arg0: i32) -> (i32, i32) {
    %c0_i32 = arith.constant 0 : i32
    %c0_i32_0 = arith.constant 0 : i32
    %c0_i32_1 = arith.constant 0 : i32
    return %c0_i32, %c0_i32_0 : i32, i32
  }
  func.func @transform_9(%arg0: i32) -> (i32, i32, i32) {
    %c0_i32 = arith.constant 0 : i32
    %c0_i32_0 = arith.constant 0 : i32
    %c0_i32_1 = arith.constant 0 : i32
    %c0_i32_2 = arith.constant 0 : i32
    return %c0_i32, %c0_i32_0, %c0_i32_1 : i32, i32, i32
  }
  func.func @transform_10(%arg0: i32) -> (i32, i32, i32) {
    %c0_i32 = arith.constant 0 : i32
    %c0_i32_0 = arith.constant 0 : i32
    %c0_i32_1 = arith.constant 0 : i32
    %c0_i32_2 = arith.constant 0 : i32
    return %c0_i32, %c0_i32_0, %c0_i32_1 : i32, i32, i32
  }
  func.func @transform_11(%arg0: i32) -> (i32, i32, i32) {
    %c0_i32 = arith.constant 0 : i32
    %c0_i32_0 = arith.constant 0 : i32
    %c0_i32_1 = arith.constant 0 : i32
    %c0_i32_2 = arith.constant 0 : i32
    return %c0_i32, %c0_i32_0, %c0_i32_1 : i32, i32, i32
  }
  func.func @transform_12(%arg0: i32) -> (i32, i32) {
    %c0_i32 = arith.constant 0 : i32
    %c0_i32_0 = arith.constant 0 : i32
    %c0_i32_1 = arith.constant 0 : i32
    return %c0_i32, %c0_i32_0 : i32, i32
  }
  func.func @transform_13(%arg0: i32) -> (i32, i32) {
    %c0_i32 = arith.constant 0 : i32
    %c0_i32_0 = arith.constant 0 : i32
    %c0_i32_1 = arith.constant 0 : i32
    return %c0_i32, %c0_i32_0 : i32, i32
  }
}

</mosaic_0001>

<llo_original>
// kernel: actor_forward.1
$region0: #{actor_forward.1}
  #allocation0 [shape = 'u32[]', space=smem, size = 0x4, offset = 0x4, fixed_abs, tag = 'smem constant byte address 0x4 - core index']
  #allocation1 [shape = 'u32[144,128]{1,0:T(1,128)}', space=vmem, size = 0x12000, scoped, tag = 'internal scratch']
  %s0 = inlined_call_operand.hbm [shape: f32[2,16], index: 0, kind: input, shape index: {}]
  %s1 = inlined_call_operand.hbm [shape: bf16[16,400], index: 1, kind: input, shape index: {}]
  %s2 = inlined_call_operand.hbm [shape: f32[1,400], index: 2, kind: input, shape index: {}]
  %s3 = inlined_call_operand.hbm [shape: bf16[400,300], index: 3, kind: input, shape index: {}]
  %s4 = inlined_call_operand.hbm [shape: f32[1,300], index: 4, kind: input, shape index: {}]
  %s5 = inlined_call_operand.hbm [shape: bf16[300,300], index: 5, kind: input, shape index: {}]
  %s6 = inlined_call_operand.hbm [shape: f32[1,300], index: 6, kind: input, shape index: {}]
  %s7 = inlined_call_operand.hbm [shape: bf16[300,3200], index: 7, kind: input, shape index: {}]
  %s8 = inlined_call_operand.hbm [shape: f32[1,3200], index: 8, kind: input, shape index: {}]
  %s9 = inlined_call_operand.hbm [shape: bf16[8,400,300], index: 9, kind: input, shape index: {}]
  %s10 = inlined_call_operand.hbm [shape: f32[8,1,300], index: 10, kind: input, shape index: {}]
  %s11 = inlined_call_operand.vmem [shape: bf16[8,300,6], index: 11, kind: input, shape index: {}]
  %s12 = inlined_call_operand.hbm [shape: f32[1,48], index: 12, kind: input, shape index: {}]
  %s13 = inlined_call_operand.vmem [shape: f32[2,48], index: 13, kind: output, shape index: {}]
  %s14 = sld [smem:[#allocation0]]
  $region110: #{actor_forward.1} parent=0
    _
  %s16 = ssub.s32 1, %s14
  %s17 = scalar_select 0, %s16, %s14
  $region1: #{actor_forward.1} parent=0
    #allocation2 [shape = 'u8[1024]{0}', space=vmem, size = 0x400, scoped, tag = 'input window, operand 0, single buffered']
    #allocation3 [shape = 's32[1]{0}', space=sflag, size = 0x4, scoped, tag = 'scoped memory for actor_forward.1']
    #allocation4 [shape = 'u8[16384]{0}', space=vmem, size = 0x4000, scoped, tag = 'input window, operand 1, single buffered']
    #allocation5 [shape = 's32[1]{0}', space=sflag, size = 0x4, scoped, tag = 'scoped memory for actor_forward.1']
    #allocation6 [shape = 'u8[2048]{0}', space=vmem, size = 0x800, scoped, tag = 'input window, operand 2, single buffered']
    #allocation7 [shape = 'u8[307200]{0}', space=vmem, size = 0x4b000, scoped, tag = 'input window, operand 3, single buffered']
    #allocation8 [shape = 's32[1]{0}', space=sflag, size = 0x4, scoped, tag = 'scoped memory for actor_forward.1']
    #allocation9 [shape = 'u8[1536]{0}', space=vmem, size = 0x800, scoped, tag = 'input window, operand 4, single buffered']
    #allocation10 [shape = 'u8[233472]{0}', space=vmem, size = 0x39000, scoped, tag = 'input window, operand 5, single buffered']
    #allocation11 [shape = 's32[1]{0}', space=sflag, size = 0x4, scoped, tag = 'scoped memory for actor_forward.1']
    #allocation12 [shape = 'u8[1536]{0}', space=vmem, size = 0x800, scoped, tag = 'input window, operand 6, single buffered']
    #allocation13 [shape = 'u8[1945600]{0}', space=vmem, size = 0x1db000, scoped, tag = 'input window, operand 7, single buffered']
    #allocation14 [shape = 's32[1]{0}', space=sflag, size = 0x4, scoped, tag = 'scoped memory for actor_forward.1']
    #allocation15 [shape = 'u8[12800]{0}', space=vmem, size = 0x3400, scoped, tag = 'input window, operand 8, single buffered']
    #allocation16 [shape = 'u8[2457600]{0}', space=vmem, size = 0x258000, scoped, tag = 'input window, operand 9, single buffered']
    #allocation17 [shape = 's32[1]{0}', space=sflag, size = 0x4, scoped, tag = 'scoped memory for actor_forward.1']
    #allocation18 [shape = 'u8[12288]{0}', space=vmem, size = 0x3000, scoped, tag = 'input window, operand 10, single buffered']
    #allocation19 [shape = 'u8[512]{0}', space=vmem, size = 0x400, scoped, tag = 'input window, operand 12, single buffered']
    #allocation20 [shape = 's32[1]{0}', space=sflag, size = 0x4, scoped, tag = 'scoped memory for actor_forward.1']
    %18 = vsyncpa [#allocation3], 0
    %19 = vsyncpa [#allocation5], 0
    %20 = vsyncpa [#allocation8], 0
    %21 = vsyncpa [#allocation11], 0
    %22 = vsyncpa [#allocation14], 0
    %23 = vsyncpa [#allocation17], 0
    %24 = vsyncpa [#allocation20], 0
    // Predicated region
    $region2: #{actor_forward.1} parent=1 // pred_check
      _
    $region3: #{actor_forward.1} parent=1 // pred_check_branch
      %26 = sbr.rel (0) target = $region5
    $region4: #{actor_forward.1} parent=1 // pred_region
      %s28 = ssub.s32 32, 32
      %29 = vsyncadd [#allocation3], %s28
      %s31 = sshll.u32 [#allocation2], 4
      %s32 = int_to_ptr.vmem [resolvable:$true] %s31
      %34 = dma.hbm_to_vmem [thread:$0]  %s0, 32, %s32, [#allocation3]
    $region5: #{actor_forward.1} parent=1 // pred_fallthru
      _
    // Predicated region
    $region6: #{actor_forward.1} parent=1 // pred_check
      _
    $region7: #{actor_forward.1} parent=1 // pred_check_branch
      %36 = sbr.rel (0) target = $region9
    $region8: #{actor_forward.1} parent=1 // pred_region
      %s38 = ssub.s32 512, 512
      %39 = vsyncadd [#allocation5], %s38
      %s40 = sshll.u32 [#allocation4], 4
      %s41 = int_to_ptr.vmem [resolvable:$true] %s40
      %46 = dma.hbm_to_vmem [thread:$0]  %s1, 512, %s41, [#allocation5], 256, 256, 16
    $region9: #{actor_forward.1} parent=1 // pred_fallthru
      _
    // Predicated region
    $region10: #{actor_forward.1} parent=1 // pred_check
      _
    $region11: #{actor_forward.1} parent=1 // pred_check_branch
      %48 = sbr.rel (0) target = $region13
    $region12: #{actor_forward.1} parent=1 // pred_region
      %s50 = ssub.s32 64, 64
      %51 = vsyncadd [#allocation5], %s50
      %s53 = sshll.u32 [#allocation6], 4
      %s54 = int_to_ptr.vmem [resolvable:$true] %s53
      %56 = dma.hbm_to_vmem [thread:$0]  %s2, 64, %s54, [#allocation5]
    $region13: #{actor_forward.1} parent=1 // pred_fallthru
      _
    // Predicated region
    $region14: #{actor_forward.1} parent=1 // pred_check
      _
    $region15: #{actor_forward.1} parent=1 // pred_check_branch
      %58 = sbr.rel (0) target = $region17
    $region16: #{actor_forward.1} parent=1 // pred_region
      %s60 = ssub.s32 9600, 9600
      %61 = vsyncadd [#allocation8], %s60
      %s62 = sshll.u32 [#allocation7], 4
      %s63 = int_to_ptr.vmem [resolvable:$true] %s62
      %68 = dma.hbm_to_vmem [thread:$0]  %s3, 9600, %s63, [#allocation8], 192, 192, 12
    $region17: #{actor_forward.1} parent=1 // pred_fallthru
      _
    // Predicated region
    $region18: #{actor_forward.1} parent=1 // pred_check
      _
    $region19: #{actor_forward.1} parent=1 // pred_check_branch
      %70 = sbr.rel (0) target = $region21
    $region20: #{actor_forward.1} parent=1 // pred_region
      %s72 = ssub.s32 48, 48
      %73 = vsyncadd [#allocation8], %s72
      %s75 = sshll.u32 [#allocation9], 4
      %s76 = int_to_ptr.vmem [resolvable:$true] %s75
      %78 = dma.hbm_to_vmem [thread:$0]  %s4, 48, %s76, [#allocation8]
    $region21: #{actor_forward.1} parent=1 // pred_fallthru
      _
    // Predicated region
    $region22: #{actor_forward.1} parent=1 // pred_check
      _
    $region23: #{actor_forward.1} parent=1 // pred_check_branch
      %80 = sbr.rel (0) target = $region25
    $region24: #{actor_forward.1} parent=1 // pred_region
      %s82 = ssub.s32 7296, 7296
      %83 = vsyncadd [#allocation11], %s82
      %s84 = sshll.u32 [#allocation10], 4
      %s85 = int_to_ptr.vmem [resolvable:$true] %s84
      %90 = dma.hbm_to_vmem [thread:$0]  %s5, 7296, %s85, [#allocation11], 192, 192, 12
    $region25: #{actor_forward.1} parent=1 // pred_fallthru
      _
    // Predicated region
    $region26: #{actor_forward.1} parent=1 // pred_check
      _
    $region27: #{actor_forward.1} parent=1 // pred_check_branch
      %92 = sbr.rel (0) target = $region29
    $region28: #{actor_forward.1} parent=1 // pred_region
      %s94 = ssub.s32 48, 48
      %95 = vsyncadd [#allocation11], %s94
      %s97 = sshll.u32 [#allocation12], 4
      %s98 = int_to_ptr.vmem [resolvable:$true] %s97
      %100 = dma.hbm_to_vmem [thread:$0]  %s6, 48, %s98, [#allocation11]
    $region29: #{actor_forward.1} parent=1 // pred_fallthru
      _
    // Predicated region
    $region30: #{actor_forward.1} parent=1 // pred_check
      _
    $region31: #{actor_forward.1} parent=1 // pred_check_branch
      %102 = sbr.rel (0) target = $region33
    $region32: #{actor_forward.1} parent=1 // pred_region
      %s104 = ssub.s32 60800, 60800
      %105 = vsyncadd [#allocation14], %s104
      %s106 = sshll.u32 [#allocation13], 4
      %s107 = int_to_ptr.vmem [resolvable:$true] %s106
      %112 = dma.hbm_to_vmem [thread:$0]  %s7, 60800, %s107, [#allocation14], 1600, 1600, 100
    $region33: #{actor_forward.1} parent=1 // pred_fallthru
      _
    // Predicated region
    $region34: #{actor_forward.1} parent=1 // pred_check
      _
    $region35: #{actor_forward.1} parent=1 // pred_check_branch
      %114 = sbr.rel (0) target = $region37
    $region36: #{actor_forward.1} parent=1 // pred_region
      %s116 = ssub.s32 400, 400
      %117 = vsyncadd [#allocation14], %s116
      %s119 = sshll.u32 [#allocation15], 4
      %s120 = int_to_ptr.vmem [resolvable:$true] %s119
      %122 = dma.hbm_to_vmem [thread:$0]  %s8, 400, %s120, [#allocation14]
    $region37: #{actor_forward.1} parent=1 // pred_fallthru
      _
    // Predicated region
    $region38: #{actor_forward.1} parent=1 // pred_check
      _
    $region39: #{actor_forward.1} parent=1 // pred_check_branch
      %124 = sbr.rel (0) target = $region41
    $region40: #{actor_forward.1} parent=1 // pred_region
      %s126 = ssub.s32 76800, 76800
      %127 = vsyncadd [#allocation17], %s126
      %s128 = sshll.u32 [#allocation16], 4
      %s129 = int_to_ptr.vmem [resolvable:$true] %s128
      %134 = dma.hbm_to_vmem [thread:$0]  %s9, 76800, %s129, [#allocation17], 192, 192, 12
    $region41: #{actor_forward.1} parent=1 // pred_fallthru
      _
    // Predicated region
    $region42: #{actor_forward.1} parent=1 // pred_check
      _
    $region43: #{actor_forward.1} parent=1 // pred_check_branch
      %136 = sbr.rel (0) target = $region45
    $region44: #{actor_forward.1} parent=1 // pred_region
      %s138 = ssub.s32 384, 384
      %139 = vsyncadd [#allocation17], %s138
      %s140 = sshll.u32 [#allocation18], 4
      %s141 = int_to_ptr.vmem [resolvable:$true] %s140
      %146 = dma.hbm_to_vmem [thread:$0]  %s10, 384, %s141, [#allocation17], 48, 48, 3
    $region45: #{actor_forward.1} parent=1 // pred_fallthru
      _
    // Predicated region
    $region46: #{actor_forward.1} parent=1 // pred_check
      _
    $region47: #{actor_forward.1} parent=1 // pred_check_branch
      %148 = sbr.rel (0) target = $region49
    $region48: #{actor_forward.1} parent=1 // pred_region
      _
    $region49: #{actor_forward.1} parent=1 // pred_fallthru
      _
    // Predicated region
    $region50: #{actor_forward.1} parent=1 // pred_check
      _
    $region51: #{actor_forward.1} parent=1 // pred_check_branch
      %150 = sbr.rel (0) target = $region53
    $region52: #{actor_forward.1} parent=1 // pred_region
      %s152 = ssub.s32 16, 16
      %153 = vsyncadd [#allocation20], %s152
      %s155 = sshll.u32 [#allocation19], 4
      %s156 = int_to_ptr.vmem [resolvable:$true] %s155
      %158 = dma.hbm_to_vmem [thread:$0]  %s12, 16, %s156, [#allocation20]
    $region53: #{actor_forward.1} parent=1 // pred_fallthru
      _
    // Predicated region
    $region54: #{actor_forward.1} parent=1 // pred_check
      _
    $region55: #{actor_forward.1} parent=1 // pred_check_branch
      %160 = sbr.rel (0) target = $region57
    $region56: #{actor_forward.1} parent=1 // pred_region
      %161 = dma.done [#allocation3], 32
    $region57: #{actor_forward.1} parent=1 // pred_fallthru
      _
    // Predicated region
    $region58: #{actor_forward.1} parent=1 // pred_check
      _
    $region59: #{actor_forward.1} parent=1 // pred_check_branch
      %163 = sbr.rel (0) target = $region61
    $region60: #{actor_forward.1} parent=1 // pred_region
      %164 = dma.done [#allocation5], 512
    $region61: #{actor_forward.1} parent=1 // pred_fallthru
      _
    // Predicated region
    $region62: #{actor_forward.1} parent=1 // pred_check
      _
    $region63: #{actor_forward.1} parent=1 // pred_check_branch
      %166 = sbr.rel (0) target = $region65
    $region64: #{actor_forward.1} parent=1 // pred_region
      %167 = dma.done [#allocation5], 64
    $region65: #{actor_forward.1} parent=1 // pred_fallthru
      _
    // Predicated region
    $region66: #{actor_forward.1} parent=1 // pred_check
      _
    $region67: #{actor_forward.1} parent=1 // pred_check_branch
      %169 = sbr.rel (0) target = $region69
    $region68: #{actor_forward.1} parent=1 // pred_region
      %170 = dma.done [#allocation8], 9600
    $region69: #{actor_forward.1} parent=1 // pred_fallthru
      _
    // Predicated region
    $region70: #{actor_forward.1} parent=1 // pred_check
      _
    $region71: #{actor_forward.1} parent=1 // pred_check_branch
      %172 = sbr.rel (0) target = $region73
    $region72: #{actor_forward.1} parent=1 // pred_region
      %173 = dma.done [#allocation8], 48
    $region73: #{actor_forward.1} parent=1 // pred_fallthru
      _
    // Predicated region
    $region74: #{actor_forward.1} parent=1 // pred_check
      _
    $region75: #{actor_forward.1} parent=1 // pred_check_branch
      %175 = sbr.rel (0) target = $region77
    $region76: #{actor_forward.1} parent=1 // pred_region
      %176 = dma.done [#allocation11], 7296
    $region77: #{actor_forward.1} parent=1 // pred_fallthru
      _
    // Predicated region
    $region78: #{actor_forward.1} parent=1 // pred_check
      _
    $region79: #{actor_forward.1} parent=1 // pred_check_branch
      %178 = sbr.rel (0) target = $region81
    $region80: #{actor_forward.1} parent=1 // pred_region
      %179 = dma.done [#allocation11], 48
    $region81: #{actor_forward.1} parent=1 // pred_fallthru
      _
    // Predicated region
    $region82: #{actor_forward.1} parent=1 // pred_check
      _
    $region83: #{actor_forward.1} parent=1 // pred_check_branch
      %181 = sbr.rel (0) target = $region85
    $region84: #{actor_forward.1} parent=1 // pred_region
      %182 = dma.done [#allocation14], 60800
    $region85: #{actor_forward.1} parent=1 // pred_fallthru
      _
    // Predicated region
    $region86: #{actor_forward.1} parent=1 // pred_check
      _
    $region87: #{actor_forward.1} parent=1 // pred_check_branch
      %184 = sbr.rel (0) target = $region89
    $region88: #{actor_forward.1} parent=1 // pred_region
      %185 = dma.done [#allocation14], 400
    $region89: #{actor_forward.1} parent=1 // pred_fallthru
      _
    // Predicated region
    $region90: #{actor_forward.1} parent=1 // pred_check
      _
    $region91: #{actor_forward.1} parent=1 // pred_check_branch
      %187 = sbr.rel (0) target = $region93
    $region92: #{actor_forward.1} parent=1 // pred_region
      %188 = dma.done [#allocation17], 76800
    $region93: #{actor_forward.1} parent=1 // pred_fallthru
      _
    // Predicated region
    $region94: #{actor_forward.1} parent=1 // pred_check
      _
    $region95: #{actor_forward.1} parent=1 // pred_check_branch
      %190 = sbr.rel (0) target = $region97
    $region96: #{actor_forward.1} parent=1 // pred_region
      %191 = dma.done [#allocation17], 384
    $region97: #{actor_forward.1} parent=1 // pred_fallthru
      _
    // Predicated region
    $region98: #{actor_forward.1} parent=1 // pred_check
      _
    $region99: #{actor_forward.1} parent=1 // pred_check_branch
      %193 = sbr.rel (0) target = $region101
    $region100: #{actor_forward.1} parent=1 // pred_region
      %194 = dma.done [#allocation20], 16
    $region101: #{actor_forward.1} parent=1 // pred_fallthru
      _
    %v196 = vld [vmem:[#allocation2] sm:$0x3]
    %v197 = vpack.c.bf16 %v196, %v196
    %v198 = vld [vmem:[#allocation4] sm:$0xff]
    %v199 = vld [vmem:[#allocation4 + $0x8] sm:$0xff]
    %v200 = vld [vmem:[#allocation4 + $0x10] sm:$0xff]
    %v201 = vld [vmem:[#allocation4 + $0x18] sm:$0xff]
    %v202 = vld [vmem:[#allocation6] sm:$0xf]
    %v204 = vlaneseq
    %v205 = vshrl.u32 %v204, 7
    %v206 = vsub.s32 0, %v205
    %v207 = vrot.slane %v202, %v206
    %v208 = vlaneseq
    %v209 = vshrl.u32 %v208, 7
    %v210 = vsub.s32 1, %v209
    %v211 = vrot.slane %v202, %v210
    %v212 = vlaneseq
    %v213 = vshrl.u32 %v212, 7
    %v214 = vsub.s32 2, %v213
    %v215 = vrot.slane %v202, %v214
    %v216 = vlaneseq
    %v217 = vshrl.u32 %v216, 7
    %v218 = vsub.s32 3, %v217
    %v219 = vrot.slane %v202, %v218
    %v228 = vunpack.c.l.b16 %v198
    %v229 = vunpack.c.h.b16 %v198
    %v230 = vunpack.c.l.b16 %v199
    %v231 = vunpack.c.h.b16 %v199
    %v232 = vunpack.c.l.b16 %v200
    %v233 = vunpack.c.h.b16 %v200
    %v234 = vunpack.c.l.b16 %v201
    %v235 = vunpack.c.h.b16 %v201
    %v236 = vpack.c.b16 %v232, %v228
    %v237 = vpack.c.b16 %v233, %v229
    %v238 = vpack.c.b16 %v234, %v230
    %v239 = vpack.c.b16 %v235, %v231
    %vm244 = vcmask 130048
    %v246 = vsel %vm244, %v197, 0
    %248 = vmatprep.subr.bf16.mxu0 %v237
    %249 = vmatpush1.bf16.msra.mxu0 %v236
    %250 = vmatprep.subr.bf16.mxu0 0
    %251 = vmatpush1.bf16.msra.mxu0 0
    %252 = vmatprep.subr.bf16.mxu0 0
    %253 = vmatpush1.bf16.msra.mxu0 0
    %254 = vmatprep.subr.bf16.mxu0 0
    %255 = vmatpush1.bf16.msra.mxu0 0
    %256 = vmatprep.subr.bf16.mxu0 0
    %257 = vmatpush1.bf16.msra.mxu0 0
    %258 = vmatprep.subr.bf16.mxu0 0
    %259 = vmatpush1.bf16.msra.mxu0 0
    %260 = vmatprep.subr.bf16.mxu0 0
    %261 = vmatpush1.bf16.msra.mxu0 0
    %262 = vmatprep.subr.bf16.mxu0 0
    %263 = vmatpush1.bf16.msra.mxu0 0
    %264 = vmatprep.subr.bf16.mxu0 0
    %265 = vmatpush1.bf16.msra.mxu0 0
    %266 = vmatprep.subr.bf16.mxu0 0
    %267 = vmatpush1.bf16.msra.mxu0 0
    %268 = vmatprep.subr.bf16.mxu0 0
    %269 = vmatpush1.bf16.msra.mxu0 0
    %270 = vmatprep.subr.bf16.mxu0 0
    %271 = vmatpush1.bf16.msra.mxu0 0
    %272 = vmatprep.subr.bf16.mxu0 0
    %273 = vmatpush1.bf16.msra.mxu0 0
    %274 = vmatprep.subr.bf16.mxu0 0
    %275 = vmatpush1.bf16.msra.mxu0 0
    %276 = vmatprep.subr.bf16.mxu0 0
    %277 = vmatpush1.bf16.msra.mxu0 0
    %278 = vmatprep.subr.bf16.mxu0 0
    %279 = vmatpush1.bf16.msra.mxu0 0
    %280 = vmatprep.mubr.bf16.mxu0 0
    %281 = vmatmul.mubr.bf16.gmra.mrb[0].mxu0 %v246
    %v282 = vpop.f32.mrb[0].mxu0
    %v283 = vadd.f32 %v207, %v282
    %v284 = vpop.f32.mrb[0].mxu0
    %v285 = vadd.f32 %v211, %v284
    %v286 = vpop.f32.mrb[0].mxu0
    %v287 = vpop.f32.mrb[0].mxu0
    %288 = vdwg.mxu0
    %289 = vmatprep.subr.bf16.mxu0 %v239
    %290 = vmatpush1.bf16.msra.mxu0 %v238
    %291 = vmatprep.subr.bf16.mxu0 0
    %292 = vmatpush1.bf16.msra.mxu0 0
    %293 = vmatprep.subr.bf16.mxu0 0
    %294 = vmatpush1.bf16.msra.mxu0 0
    %295 = vmatprep.subr.bf16.mxu0 0
    %296 = vmatpush1.bf16.msra.mxu0 0
    %297 = vmatprep.subr.bf16.mxu0 0
    %298 = vmatpush1.bf16.msra.mxu0 0
    %299 = vmatprep.subr.bf16.mxu0 0
    %300 = vmatpush1.bf16.msra.mxu0 0
    %301 = vmatprep.subr.bf16.mxu0 0
    %302 = vmatpush1.bf16.msra.mxu0 0
    %303 = vmatprep.subr.bf16.mxu0 0
    %304 = vmatpush1.bf16.msra.mxu0 0
    %305 = vmatprep.subr.bf16.mxu0 0
    %306 = vmatpush1.bf16.msra.mxu0 0
    %307 = vmatprep.subr.bf16.mxu0 0
    %308 = vmatpush1.bf16.msra.mxu0 0
    %309 = vmatprep.subr.bf16.mxu0 0
    %310 = vmatpush1.bf16.msra.mxu0 0
    %311 = vmatprep.subr.bf16.mxu0 0
    %312 = vmatpush1.bf16.msra.mxu0 0
    %313 = vmatprep.subr.bf16.mxu0 0
    %314 = vmatpush1.bf16.msra.mxu0 0
    %315 = vmatprep.subr.bf16.mxu0 0
    %316 = vmatpush1.bf16.msra.mxu0 0
    %317 = vmatprep.subr.bf16.mxu0 0
    %318 = vmatpush1.bf16.msra.mxu0 0
    %319 = vmatprep.subr.bf16.mxu0 0
    %320 = vmatpush1.bf16.msra.mxu0 0
    %321 = vmatprep.mubr.bf16.mxu0 0
    %322 = vmatmul.mubr.bf16.gmra.mrb[0].mxu0 %v246
    %v323 = vpop.f32.mrb[0].mxu0
    %v324 = vadd.f32 %v215, %v323
    %v325 = vpop.f32.mrb[0].mxu0
    %v326 = vadd.f32 %v219, %v325
    %v327 = vpop.f32.mrb[0].mxu0
    %v328 = vpop.f32.mrb[0].mxu0
    %329 = vdwg.mxu0
    %v330 = vmax.f32 %v283, 0.0
    %v331 = vmax.f32 %v285, 0.0
    %v332 = vmax.f32 %v324, 0.0
    %v333 = vmax.f32 %v326, 0.0
    %v334 = vpack.c.bf16 %v330, %v330
    %v335 = vpack.c.bf16 %v331, %v331
    %v336 = vpack.c.bf16 %v332, %v332
    %v337 = vpack.c.bf16 %v333, %v333
    %v338 = vld [vmem:[#allocation7] sm:$0xff]
    %v339 = vld [vmem:[#allocation7 + $0x8] sm:$0xf]
    %v340 = vld [vmem:[#allocation7 + $0xc] sm:$0xff]
    %v341 = vld [vmem:[#allocation7 + $0x14] sm:$0xf]
    %v342 = vld [vmem:[#allocation7 + $0x18] sm:$0xff]
    %v343 = vld [vmem:[#allocation7 + $0x20] sm:$0xf]
    %v344 = vld [vmem:[#allocation7 + $0x24] sm:$0xff]
    %v345 = vld [vmem:[#allocation7 + $0x2c] sm:$0xf]
    %v346 = vld [vmem:[#allocation7 + $0x30] sm:$0xff]
    %v347 = vld [vmem:[#allocation7 + $0x38] sm:$0xf]
    %v348 = vld [vmem:[#allocation7 + $0x3c] sm:$0xff]
    %v349 = vld [vmem:[#allocation7 + $0x44] sm:$0xf]
    %v350 = vld [vmem:[#allocation7 + $0x48] sm:$0xff]
    %v351 = vld [vmem:[#allocation7 + $0x50] sm:$0xf]
    %v352 = vld [vmem:[#allocation7 + $0x54] sm:$0xff]
    %v353 = vld [vmem:[#allocation7 + $0x5c] sm:$0xf]
    %v354 = vld [vmem:[#allocation7 + $0x60] sm:$0xff]
    %v355 = vld [vmem:[#allocation7 + $0x68] sm:$0xf]
    %v356 = vld [vmem:[#allocation7 + $0x6c] sm:$0xff]
    %v357 = vld [vmem:[#allocation7 + $0x74] sm:$0xf]
    %v358 = vld [vmem:[#allocation7 + $0x78] sm:$0xff]
    %v359 = vld [vmem:[#allocation7 + $0x80] sm:$0xf]
    %v360 = vld [vmem:[#allocation7 + $0x84] sm:$0xff]
    %v361 = vld [vmem:[#allocation7 + $0x8c] sm:$0xf]
    %v362 = vld [vmem:[#allocation7 + $0x90] sm:$0xff]
    %v363 = vld [vmem:[#allocation7 + $0x98] sm:$0xf]
    %v364 = vld [vmem:[#allocation7 + $0x9c] sm:$0xff]
    %v365 = vld [vmem:[#allocation7 + $0xa4] sm:$0xf]
    %v366 = vld [vmem:[#allocation7 + $0xa8] sm:$0xff]
    %v367 = vld [vmem:[#allocation7 + $0xb0] sm:$0xf]
    %v368 = vld [vmem:[#allocation7 + $0xb4] sm:$0xff]
    %v369 = vld [vmem:[#allocation7 + $0xbc] sm:$0xf]
    %v370 = vld [vmem:[#allocation7 + $0xc0] sm:$0xff]
    %v371 = vld [vmem:[#allocation7 + $0xc8] sm:$0xf]
    %v372 = vld [vmem:[#allocation7 + $0xcc] sm:$0xff]
    %v373 = vld [vmem:[#allocation7 + $0xd4] sm:$0xf]
    %v374 = vld [vmem:[#allocation7 + $0xd8] sm:$0xff]
    %v375 = vld [vmem:[#allocation7 + $0xe0] sm:$0xf]
    %v376 = vld [vmem:[#allocation7 + $0xe4] sm:$0xff]
    %v377 = vld [vmem:[#allocation7 + $0xec] sm:$0xf]
    %v378 = vld [vmem:[#allocation7 + $0xf0] sm:$0xff]
    %v379 = vld [vmem:[#allocation7 + $0xf8] sm:$0xf]
    %v380 = vld [vmem:[#allocation7 + $0xfc] sm:$0xff]
    %v381 = vld [vmem:[#allocation7 + $0x104] sm:$0xf]
    %v382 = vld [vmem:[#allocation7 + $0x108] sm:$0xff]
    %v383 = vld [vmem:[#allocation7 + $0x110] sm:$0xf]
    %v384 = vld [vmem:[#allocation7 + $0x114] sm:$0xff]
    %v385 = vld [vmem:[#allocation7 + $0x11c] sm:$0xf]
    %v386 = vld [vmem:[#allocation7 + $0x120] sm:$0xff]
    %v387 = vld [vmem:[#allocation7 + $0x128] sm:$0xf]
    %v388 = vld [vmem:[#allocation7 + $0x12c] sm:$0xff]
    %v389 = vld [vmem:[#allocation7 + $0x134] sm:$0xf]
    %v390 = vld [vmem:[#allocation7 + $0x138] sm:$0xff]
    %v391 = vld [vmem:[#allocation7 + $0x140] sm:$0xf]
    %v392 = vld [vmem:[#allocation7 + $0x144] sm:$0xff]
    %v393 = vld [vmem:[#allocation7 + $0x14c] sm:$0xf]
    %v394 = vld [vmem:[#allocation7 + $0x150] sm:$0xff]
    %v395 = vld [vmem:[#allocation7 + $0x158] sm:$0xf]
    %v396 = vld [vmem:[#allocation7 + $0x15c] sm:$0xff]
    %v397 = vld [vmem:[#allocation7 + $0x164] sm:$0xf]
    %v398 = vld [vmem:[#allocation7 + $0x168] sm:$0xff]
    %v399 = vld [vmem:[#allocation7 + $0x170] sm:$0xf]
    %v400 = vld [vmem:[#allocation7 + $0x174] sm:$0xff]
    %v401 = vld [vmem:[#allocation7 + $0x17c] sm:$0xf]
    %v402 = vld [vmem:[#allocation7 + $0x180] sm:$0xff]
    %v403 = vld [vmem:[#allocation7 + $0x188] sm:$0xf]
    %v404 = vld [vmem:[#allocation7 + $0x18c] sm:$0xff]
    %v405 = vld [vmem:[#allocation7 + $0x194] sm:$0xf]
    %v406 = vld [vmem:[#allocation7 + $0x198] sm:$0xff]
    %v407 = vld [vmem:[#allocation7 + $0x1a0] sm:$0xf]
    %v408 = vld [vmem:[#allocation7 + $0x1a4] sm:$0xff]
    %v409 = vld [vmem:[#allocation7 + $0x1ac] sm:$0xf]
    %v410 = vld [vmem:[#allocation7 + $0x1b0] sm:$0xff]
    %v411 = vld [vmem:[#allocation7 + $0x1b8] sm:$0xf]
    %v412 = vld [vmem:[#allocation7 + $0x1bc] sm:$0xff]
    %v413 = vld [vmem:[#allocation7 + $0x1c4] sm:$0xf]
    %v414 = vld [vmem:[#allocation7 + $0x1c8] sm:$0xff]
    %v415 = vld [vmem:[#allocation7 + $0x1d0] sm:$0xf]
    %v416 = vld [vmem:[#allocation7 + $0x1d4] sm:$0xff]
    %v417 = vld [vmem:[#allocation7 + $0x1dc] sm:$0xf]
    %v418 = vld [vmem:[#allocation7 + $0x1e0] sm:$0xff]
    %v419 = vld [vmem:[#allocation7 + $0x1e8] sm:$0xf]
    %v420 = vld [vmem:[#allocation7 + $0x1ec] sm:$0xff]
    %v421 = vld [vmem:[#allocation7 + $0x1f4] sm:$0xf]
    %v422 = vld [vmem:[#allocation7 + $0x1f8] sm:$0xff]
    %v423 = vld [vmem:[#allocation7 + $0x200] sm:$0xf]
    %v424 = vld [vmem:[#allocation7 + $0x204] sm:$0xff]
    %v425 = vld [vmem:[#allocation7 + $0x20c] sm:$0xf]
    %v426 = vld [vmem:[#allocation7 + $0x210] sm:$0xff]
    %v427 = vld [vmem:[#allocation7 + $0x218] sm:$0xf]
    %v428 = vld [vmem:[#allocation7 + $0x21c] sm:$0xff]
    %v429 = vld [vmem:[#allocation7 + $0x224] sm:$0xf]
    %v430 = vld [vmem:[#allocation7 + $0x228] sm:$0xff]
    %v431 = vld [vmem:[#allocation7 + $0x230] sm:$0xf]
    %v432 = vld [vmem:[#allocation7 + $0x234] sm:$0xff]
    %v433 = vld [vmem:[#allocation7 + $0x23c] sm:$0xf]
    %v434 = vld [vmem:[#allocation7 + $0x240] sm:$0xff]
    %v435 = vld [vmem:[#allocation7 + $0x248] sm:$0xf]
    %v436 = vld [vmem:[#allocation7 + $0x24c] sm:$0xff]
    %v437 = vld [vmem:[#allocation7 + $0x254] sm:$0xf]
    %v438 = vld [vmem:[#allocation9] sm:$0x7]
    %v440 = vlaneseq
    %v441 = vshrl.u32 %v440, 7
    %v442 = vsub.s32 0, %v441
    %v443 = vrot.slane %v438, %v442
    %v444 = vlaneseq
    %v445 = vshrl.u32 %v444, 7
    %v446 = vsub.s32 1, %v445
    %v447 = vrot.slane %v438, %v446
    %v448 = vlaneseq
    %v449 = vshrl.u32 %v448, 7
    %v450 = vsub.s32 2, %v449
    %v451 = vrot.slane %v438, %v450
    %v555 = vunpack.c.l.b16 %v338
    %v556 = vunpack.c.h.b16 %v338
    %v557 = vunpack.c.l.b16 %v339
    %v558 = vunpack.c.l.b16 %v340
    %v559 = vunpack.c.h.b16 %v340
    %v560 = vunpack.c.l.b16 %v341
    %v561 = vunpack.c.l.b16 %v342
    %v562 = vunpack.c.h.b16 %v342
    %v563 = vunpack.c.l.b16 %v343
    %v564 = vunpack.c.l.b16 %v344
    %v565 = vunpack.c.h.b16 %v344
    %v566 = vunpack.c.l.b16 %v345
    %v567 = vunpack.c.l.b16 %v346
    %v568 = vunpack.c.h.b16 %v346
    %v569 = vunpack.c.l.b16 %v347
    %v570 = vunpack.c.l.b16 %v348
    %v571 = vunpack.c.h.b16 %v348
    %v572 = vunpack.c.l.b16 %v349
    %v573 = vunpack.c.l.b16 %v350
    %v574 = vunpack.c.h.b16 %v350
    %v575 = vunpack.c.l.b16 %v351
    %v576 = vunpack.c.l.b16 %v352
    %v577 = vunpack.c.h.b16 %v352
    %v578 = vunpack.c.l.b16 %v353
    %v579 = vunpack.c.l.b16 %v354
    %v580 = vunpack.c.h.b16 %v354
    %v581 = vunpack.c.l.b16 %v355
    %v582 = vunpack.c.l.b16 %v356
    %v583 = vunpack.c.h.b16 %v356
    %v584 = vunpack.c.l.b16 %v357
    %v585 = vunpack.c.l.b16 %v358
    %v586 = vunpack.c.h.b16 %v358
    %v587 = vunpack.c.l.b16 %v359
    %v588 = vunpack.c.l.b16 %v360
    %v589 = vunpack.c.h.b16 %v360
    %v590 = vunpack.c.l.b16 %v361
    %v591 = vunpack.c.l.b16 %v362
    %v592 = vunpack.c.h.b16 %v362
    %v593 = vunpack.c.l.b16 %v363
    %v594 = vunpack.c.l.b16 %v364
    %v595 = vunpack.c.h.b16 %v364
    %v596 = vunpack.c.l.b16 %v365
    %v597 = vunpack.c.l.b16 %v366
    %v598 = vunpack.c.h.b16 %v366
    %v599 = vunpack.c.l.b16 %v367
    %v600 = vunpack.c.l.b16 %v368
    %v601 = vunpack.c.h.b16 %v368
    %v602 = vunpack.c.l.b16 %v369
    %v603 = vunpack.c.l.b16 %v370
    %v604 = vunpack.c.h.b16 %v370
    %v605 = vunpack.c.l.b16 %v371
    %v606 = vunpack.c.l.b16 %v372
    %v607 = vunpack.c.h.b16 %v372
    %v608 = vunpack.c.l.b16 %v373
    %v609 = vunpack.c.l.b16 %v374
    %v610 = vunpack.c.h.b16 %v374
    %v611 = vunpack.c.l.b16 %v375
    %v612 = vunpack.c.l.b16 %v376
    %v613 = vunpack.c.h.b16 %v376
    %v614 = vunpack.c.l.b16 %v377
    %v615 = vunpack.c.l.b16 %v378
    %v616 = vunpack.c.h.b16 %v378
    %v617 = vunpack.c.l.b16 %v379
    %v618 = vunpack.c.l.b16 %v380
    %v619 = vunpack.c.h.b16 %v380
    %v620 = vunpack.c.l.b16 %v381
    %v621 = vunpack.c.l.b16 %v382
    %v622 = vunpack.c.h.b16 %v382
    %v623 = vunpack.c.l.b16 %v383
    %v624 = vunpack.c.l.b16 %v384
    %v625 = vunpack.c.h.b16 %v384
    %v626 = vunpack.c.l.b16 %v385
    %v627 = vunpack.c.l.b16 %v386
    %v628 = vunpack.c.h.b16 %v386
    %v629 = vunpack.c.l.b16 %v387
    %v630 = vunpack.c.l.b16 %v388
    %v631 = vunpack.c.h.b16 %v388
    %v632 = vunpack.c.l.b16 %v389
    %v633 = vunpack.c.l.b16 %v390
    %v634 = vunpack.c.h.b16 %v390
    %v635 = vunpack.c.l.b16 %v391
    %v636 = vunpack.c.l.b16 %v392
    %v637 = vunpack.c.h.b16 %v392
    %v638 = vunpack.c.l.b16 %v393
    %v639 = vunpack.c.l.b16 %v394
    %v640 = vunpack.c.h.b16 %v394
    %v641 = vunpack.c.l.b16 %v395
    %v642 = vunpack.c.l.b16 %v396
    %v643 = vunpack.c.h.b16 %v396
    %v644 = vunpack.c.l.b16 %v397
    %v645 = vunpack.c.l.b16 %v398
    %v646 = vunpack.c.h.b16 %v398
    %v647 = vunpack.c.l.b16 %v399
    %v648 = vunpack.c.l.b16 %v400
    %v649 = vunpack.c.h.b16 %v400
    %v650 = vunpack.c.l.b16 %v401
    %v651 = vunpack.c.l.b16 %v402
    %v652 = vunpack.c.h.b16 %v402
    %v653 = vunpack.c.l.b16 %v403
    %v654 = vunpack.c.l.b16 %v404
    %v655 = vunpack.c.h.b16 %v404
    %v656 = vunpack.c.l.b16 %v405
    %v657 = vunpack.c.l.b16 %v406
    %v658 = vunpack.c.h.b16 %v406
    %v659 = vunpack.c.l.b16 %v407
    %v660 = vunpack.c.l.b16 %v408
    %v661 = vunpack.c.h.b16 %v408
    %v662 = vunpack.c.l.b16 %v409
    %v663 = vunpack.c.l.b16 %v410
    %v664 = vunpack.c.h.b16 %v410
    %v665 = vunpack.c.l.b16 %v411
    %v666 = vunpack.c.l.b16 %v412
    %v667 = vunpack.c.h.b16 %v412
    %v668 = vunpack.c.l.b16 %v413
    %v669 = vunpack.c.l.b16 %v414
    %v670 = vunpack.c.h.b16 %v414
    %v671 = vunpack.c.l.b16 %v415
    %v672 = vunpack.c.l.b16 %v416
    %v673 = vunpack.c.h.b16 %v416
    %v674 = vunpack.c.l.b16 %v417
    %v675 = vunpack.c.l.b16 %v418
    %v676 = vunpack.c.h.b16 %v418
    %v677 = vunpack.c.l.b16 %v419
    %v678 = vunpack.c.l.b16 %v420
    %v679 = vunpack.c.h.b16 %v420
    %v680 = vunpack.c.l.b16 %v421
    %v681 = vunpack.c.l.b16 %v422
    %v682 = vunpack.c.h.b16 %v422
    %v683 = vunpack.c.l.b16 %v423
    %v684 = vunpack.c.l.b16 %v424
    %v685 = vunpack.c.h.b16 %v424
    %v686 = vunpack.c.l.b16 %v425
    %v687 = vunpack.c.l.b16 %v426
    %v688 = vunpack.c.h.b16 %v426
    %v689 = vunpack.c.l.b16 %v427
    %v690 = vunpack.c.l.b16 %v428
    %v691 = vunpack.c.h.b16 %v428
    %v692 = vunpack.c.l.b16 %v429
    %v693 = vunpack.c.l.b16 %v430
    %v694 = vunpack.c.h.b16 %v430
    %v695 = vunpack.c.l.b16 %v431
    %v696 = vunpack.c.l.b16 %v432
    %v697 = vunpack.c.h.b16 %v432
    %v698 = vunpack.c.l.b16 %v433
    %v699 = vunpack.c.l.b16 %v434
    %v700 = vunpack.c.h.b16 %v434
    %v701 = vunpack.c.l.b16 %v435
    %v702 = vunpack.c.l.b16 %v436
    %v703 = vunpack.c.h.b16 %v436
    %v704 = vunpack.c.l.b16 %v437
    %v705 = vpack.c.b16 %v558, %v555
    %v706 = vpack.c.b16 %v559, %v556
    %v707 = vpack.c.b16 %v560, %v557
    %v708 = vpack.c.b16 %v564, %v561
    %v709 = vpack.c.b16 %v565, %v562
    %v710 = vpack.c.b16 %v566, %v563
    %v711 = vpack.c.b16 %v570, %v567
    %v712 = vpack.c.b16 %v571, %v568
    %v713 = vpack.c.b16 %v572, %v569
    %v714 = vpack.c.b16 %v576, %v573
    %v715 = vpack.c.b16 %v577, %v574
    %v716 = vpack.c.b16 %v578, %v575
    %v717 = vpack.c.b16 %v582, %v579
    %v718 = vpack.c.b16 %v583, %v580
    %v719 = vpack.c.b16 %v584, %v581
    %v720 = vpack.c.b16 %v588, %v585
    %v721 = vpack.c.b16 %v589, %v586
    %v722 = vpack.c.b16 %v590, %v587
    %v723 = vpack.c.b16 %v594, %v591
    %v724 = vpack.c.b16 %v595, %v592
    %v725 = vpack.c.b16 %v596, %v593
    %v726 = vpack.c.b16 %v600, %v597
    %v727 = vpack.c.b16 %v601, %v598
    %v728 = vpack.c.b16 %v602, %v599
    %v729 = vpack.c.b16 %v606, %v603
    %v730 = vpack.c.b16 %v607, %v604
    %v731 = vpack.c.b16 %v608, %v605
    %v732 = vpack.c.b16 %v612, %v609
    %v733 = vpack.c.b16 %v613, %v610
    %v734 = vpack.c.b16 %v614, %v611
    %v735 = vpack.c.b16 %v618, %v615
    %v736 = vpack.c.b16 %v619, %v616
    %v737 = vpack.c.b16 %v620, %v617
    %v738 = vpack.c.b16 %v624, %v621
    %v739 = vpack.c.b16 %v625, %v622
    %v740 = vpack.c.b16 %v626, %v623
    %v741 = vpack.c.b16 %v630, %v627
    %v742 = vpack.c.b16 %v631, %v628
    %v743 = vpack.c.b16 %v632, %v629
    %v744 = vpack.c.b16 %v636, %v633
    %v745 = vpack.c.b16 %v637, %v634
    %v746 = vpack.c.b16 %v638, %v635
    %v747 = vpack.c.b16 %v642, %v639
    %v748 = vpack.c.b16 %v643, %v640
    %v749 = vpack.c.b16 %v644, %v641
    %v750 = vpack.c.b16 %v648, %v645
    %v751 = vpack.c.b16 %v649, %v646
    %v752 = vpack.c.b16 %v650, %v647
    %v753 = vpack.c.b16 %v654, %v651
    %v754 = vpack.c.b16 %v655, %v652
    %v755 = vpack.c.b16 %v656, %v653
    %v756 = vpack.c.b16 %v660, %v657
    %v757 = vpack.c.b16 %v661, %v658
    %v758 = vpack.c.b16 %v662, %v659
    %v759 = vpack.c.b16 %v666, %v663
    %v760 = vpack.c.b16 %v667, %v664
    %v761 = vpack.c.b16 %v668, %v665
    %v762 = vpack.c.b16 %v672, %v669
    %v763 = vpack.c.b16 %v673, %v670
    %v764 = vpack.c.b16 %v674, %v671
    %v765 = vpack.c.b16 %v678, %v675
    %v766 = vpack.c.b16 %v679, %v676
    %v767 = vpack.c.b16 %v680, %v677
    %v768 = vpack.c.b16 %v684, %v681
    %v769 = vpack.c.b16 %v685, %v682
    %v770 = vpack.c.b16 %v686, %v683
    %v771 = vpack.c.b16 %v690, %v687
    %v772 = vpack.c.b16 %v691, %v688
    %v773 = vpack.c.b16 %v692, %v689
    %v774 = vpack.c.b16 %v696, %v693
    %v775 = vpack.c.b16 %v697, %v694
    %v776 = vpack.c.b16 %v698, %v695
    %v777 = vpack.c.b16 %v702, %v699
    %v778 = vpack.c.b16 %v703, %v700
    %v779 = vpack.c.b16 %v704, %v701
    %v856 = vsel %vm244, %v337, 0
    %858 = vmatprep.subr.bf16.mxu0 %v706
    %859 = vmatpush1.bf16.msra.mxu0 %v705
    %860 = vmatprep.subr.bf16.mxu0 %v709
    %861 = vmatpush1.bf16.msra.mxu0 %v708
    %862 = vmatprep.subr.bf16.mxu0 %v712
    %863 = vmatpush1.bf16.msra.mxu0 %v711
    %864 = vmatprep.subr.bf16.mxu0 %v715
    %865 = vmatpush1.bf16.msra.mxu0 %v714
    %866 = vmatprep.subr.bf16.mxu0 %v718
    %867 = vmatpush1.bf16.msra.mxu0 %v717
    %868 = vmatprep.subr.bf16.mxu0 %v721
    %869 = vmatpush1.bf16.msra.mxu0 %v720
    %870 = vmatprep.subr.bf16.mxu0 %v724
    %871 = vmatpush1.bf16.msra.mxu0 %v723
    %872 = vmatprep.subr.bf16.mxu0 %v727
    %873 = vmatpush1.bf16.msra.mxu0 %v726
    %874 = vmatprep.subr.bf16.mxu0 %v730
    %875 = vmatpush1.bf16.msra.mxu0 %v729
    %876 = vmatprep.subr.bf16.mxu0 %v733
    %877 = vmatpush1.bf16.msra.mxu0 %v732
    %878 = vmatprep.subr.bf16.mxu0 %v736
    %879 = vmatpush1.bf16.msra.mxu0 %v735
    %880 = vmatprep.subr.bf16.mxu0 %v739
    %881 = vmatpush1.bf16.msra.mxu0 %v738
    %882 = vmatprep.subr.bf16.mxu0 %v742
    %883 = vmatpush1.bf16.msra.mxu0 %v741
    %884 = vmatprep.subr.bf16.mxu0 %v745
    %885 = vmatpush1.bf16.msra.mxu0 %v744
    %886 = vmatprep.subr.bf16.mxu0 %v748
    %887 = vmatpush1.bf16.msra.mxu0 %v747
    %888 = vmatprep.subr.bf16.mxu0 %v751
    %889 = vmatpush1.bf16.msra.mxu0 %v750
    %890 = vmatprep.mubr.bf16.mxu0 %v335
    %891 = vmatmul.mubr.bf16.gmra.mrb[0].mxu0 %v334
    %v892 = vpop.f32.mrb[0].mxu0
    %v893 = vadd.f32 %v443, %v892
    %v894 = vpop.f32.mrb[0].mxu0
    %v895 = vadd.f32 %v447, %v894
    %v896 = vpop.f32.mrb[0].mxu0
    %v897 = vpop.f32.mrb[0].mxu0
    %898 = vdwg.mxu0
    %899 = vmatprep.subr.bf16.mxu0 %v754
    %900 = vmatpush1.bf16.msra.mxu0 %v753
    %901 = vmatprep.subr.bf16.mxu0 %v757
    %902 = vmatpush1.bf16.msra.mxu0 %v756
    %903 = vmatprep.subr.bf16.mxu0 %v760
    %904 = vmatpush1.bf16.msra.mxu0 %v759
    %905 = vmatprep.subr.bf16.mxu0 %v763
    %906 = vmatpush1.bf16.msra.mxu0 %v762
    %907 = vmatprep.subr.bf16.mxu0 %v766
    %908 = vmatpush1.bf16.msra.mxu0 %v765
    %909 = vmatprep.subr.bf16.mxu0 %v769
    %910 = vmatpush1.bf16.msra.mxu0 %v768
    %911 = vmatprep.subr.bf16.mxu0 %v772
    %912 = vmatpush1.bf16.msra.mxu0 %v771
    %913 = vmatprep.subr.bf16.mxu0 %v775
    %914 = vmatpush1.bf16.msra.mxu0 %v774
    %915 = vmatprep.subr.bf16.mxu0 %v778
    %916 = vmatpush1.bf16.msra.mxu0 %v777
    %917 = vmatprep.subr.bf16.mxu0 0
    %918 = vmatpush1.bf16.msra.mxu0 0
    %919 = vmatprep.subr.bf16.mxu0 0
    %920 = vmatpush1.bf16.msra.mxu0 0
    %921 = vmatprep.subr.bf16.mxu0 0
    %922 = vmatpush1.bf16.msra.mxu0 0
    %923 = vmatprep.subr.bf16.mxu0 0
    %924 = vmatpush1.bf16.msra.mxu0 0
    %925 = vmatprep.subr.bf16.mxu0 0
    %926 = vmatpush1.bf16.msra.mxu0 0
    %927 = vmatprep.subr.bf16.mxu0 0
    %928 = vmatpush1.bf16.msra.mxu0 0
    %929 = vmatprep.subr.bf16.mxu0 0
    %930 = vmatpush1.bf16.msra.mxu0 0
    %931 = vmatprep.mubr.bf16.mxu0 %v856
    %932 = vmatmul.mubr.bf16.gmra.mrb[0].mxu0 %v336
    %v933 = vpop.f32.mrb[0].mxu0
    %v934 = vadd.f32 %v893, %v933
    %v935 = vpop.f32.mrb[0].mxu0
    %v936 = vadd.f32 %v895, %v935
    %v937 = vpop.f32.mrb[0].mxu0
    %v938 = vpop.f32.mrb[0].mxu0
    %939 = vdwg.mxu0
    %940 = vmatprep.subr.bf16.mxu0 0
    %941 = vmatpush1.bf16.msra.mxu0 %v707
    %942 = vmatprep.subr.bf16.mxu0 0
    %943 = vmatpush1.bf16.msra.mxu0 %v710
    %944 = vmatprep.subr.bf16.mxu0 0
    %945 = vmatpush1.bf16.msra.mxu0 %v713
    %946 = vmatprep.subr.bf16.mxu0 0
    %947 = vmatpush1.bf16.msra.mxu0 %v716
    %948 = vmatprep.subr.bf16.mxu0 0
    %949 = vmatpush1.bf16.msra.mxu0 %v719
    %950 = vmatprep.subr.bf16.mxu0 0
    %951 = vmatpush1.bf16.msra.mxu0 %v722
    %952 = vmatprep.subr.bf16.mxu0 0
    %953 = vmatpush1.bf16.msra.mxu0 %v725
    %954 = vmatprep.subr.bf16.mxu0 0
    %955 = vmatpush1.bf16.msra.mxu0 %v728
    %956 = vmatprep.subr.bf16.mxu0 0
    %957 = vmatpush1.bf16.msra.mxu0 %v731
    %958 = vmatprep.subr.bf16.mxu0 0
    %959 = vmatpush1.bf16.msra.mxu0 %v734
    %960 = vmatprep.subr.bf16.mxu0 0
    %961 = vmatpush1.bf16.msra.mxu0 %v737
    %962 = vmatprep.subr.bf16.mxu0 0
    %963 = vmatpush1.bf16.msra.mxu0 %v740
    %964 = vmatprep.subr.bf16.mxu0 0
    %965 = vmatpush1.bf16.msra.mxu0 %v743
    %966 = vmatprep.subr.bf16.mxu0 0
    %967 = vmatpush1.bf16.msra.mxu0 %v746
    %968 = vmatprep.subr.bf16.mxu0 0
    %969 = vmatpush1.bf16.msra.mxu0 %v749
    %970 = vmatprep.subr.bf16.mxu0 0
    %971 = vmatpush1.bf16.msra.mxu0 %v752
    %972 = vmatprep.mubr.bf16.mxu0 %v335
    %973 = vmatmul.mubr.bf16.gmra.mrb[0].mxu0 %v334
    %v974 = vpop.f32.mrb[0].mxu0
    %v975 = vadd.f32 %v451, %v974
    %v976 = vpop.f32.mrb[0].mxu0
    %v977 = vpop.f32.mrb[0].mxu0
    %v978 = vpop.f32.mrb[0].mxu0
    %979 = vdwg.mxu0
    %980 = vmatprep.subr.bf16.mxu0 0
    %981 = vmatpush1.bf16.msra.mxu0 %v755
    %982 = vmatprep.subr.bf16.mxu0 0
    %983 = vmatpush1.bf16.msra.mxu0 %v758
    %984 = vmatprep.subr.bf16.mxu0 0
    %985 = vmatpush1.bf16.msra.mxu0 %v761
    %986 = vmatprep.subr.bf16.mxu0 0
    %987 = vmatpush1.bf16.msra.mxu0 %v764
    %988 = vmatprep.subr.bf16.mxu0 0
    %989 = vmatpush1.bf16.msra.mxu0 %v767
    %990 = vmatprep.subr.bf16.mxu0 0
    %991 = vmatpush1.bf16.msra.mxu0 %v770
    %992 = vmatprep.subr.bf16.mxu0 0
    %993 = vmatpush1.bf16.msra.mxu0 %v773
    %994 = vmatprep.subr.bf16.mxu0 0
    %995 = vmatpush1.bf16.msra.mxu0 %v776
    %996 = vmatprep.subr.bf16.mxu0 0
    %997 = vmatpush1.bf16.msra.mxu0 %v779
    %998 = vmatprep.subr.bf16.mxu0 0
    %999 = vmatpush1.bf16.msra.mxu0 0
    %1000 = vmatprep.subr.bf16.mxu0 0
    %1001 = vmatpush1.bf16.msra.mxu0 0
    %1002 = vmatprep.subr.bf16.mxu0 0
    %1003 = vmatpush1.bf16.msra.mxu0 0
    %1004 = vmatprep.subr.bf16.mxu0 0
    %1005 = vmatpush1.bf16.msra.mxu0 0
    %1006 = vmatprep.subr.bf16.mxu0 0
    %1007 = vmatpush1.bf16.msra.mxu0 0
    %1008 = vmatprep.subr.bf16.mxu0 0
    %1009 = vmatpush1.bf16.msra.mxu0 0
    %1010 = vmatprep.subr.bf16.mxu0 0
    %1011 = vmatpush1.bf16.msra.mxu0 0
    %1012 = vmatprep.mubr.bf16.mxu0 %v856
    %1013 = vmatmul.mubr.bf16.gmra.mrb[0].mxu0 %v336
    %v1014 = vpop.f32.mrb[0].mxu0
    %v1015 = vadd.f32 %v975, %v1014
    %v1016 = vpop.f32.mrb[0].mxu0
    %v1017 = vpop.f32.mrb[0].mxu0
    %v1018 = vpop.f32.mrb[0].mxu0
    %1019 = vdwg.mxu0
    %v1020 = vmax.f32 %v934, 0.0
    %v1021 = vmax.f32 %v936, 0.0
    %v1022 = vmax.f32 %v1015, 0.0
    %v1023 = vpack.c.bf16 %v1020, %v1020
    %v1024 = vpack.c.bf16 %v1021, %v1021
    %v1025 = vpack.c.bf16 %v1022, %v1022
    %v1026 = vld [vmem:[#allocation10] sm:$0xff]
    %v1027 = vld [vmem:[#allocation10 + $0x8] sm:$0xf]
    %v1028 = vld [vmem:[#allocation10 + $0xc] sm:$0xff]
    %v1029 = vld [vmem:[#allocation10 + $0x14] sm:$0xf]
    %v1030 = vld [vmem:[#allocation10 + $0x18] sm:$0xff]
    %v1031 = vld [vmem:[#allocation10 + $0x20] sm:$0xf]
    %v1032 = vld [vmem:[#allocation10 + $0x24] sm:$0xff]
    %v1033 = vld [vmem:[#allocation10 + $0x2c] sm:$0xf]
    %v1034 = vld [vmem:[#allocation10 + $0x30] sm:$0xff]
    %v1035 = vld [vmem:[#allocation10 + $0x38] sm:$0xf]
    %v1036 = vld [vmem:[#allocation10 + $0x3c] sm:$0xff]
    %v1037 = vld [vmem:[#allocation10 + $0x44] sm:$0xf]
    %v1038 = vld [vmem:[#allocation10 + $0x48] sm:$0xff]
    %v1039 = vld [vmem:[#allocation10 + $0x50] sm:$0xf]
    %v1040 = vld [vmem:[#allocation10 + $0x54] sm:$0xff]
    %v1041 = vld [vmem:[#allocation10 + $0x5c] sm:$0xf]
    %v1042 = vld [vmem:[#allocation10 + $0x60] sm:$0xff]
    %v1043 = vld [vmem:[#allocation10 + $0x68] sm:$0xf]
    %v1044 = vld [vmem:[#allocation10 + $0x6c] sm:$0xff]
    %v1045 = vld [vmem:[#allocation10 + $0x74] sm:$0xf]
    %v1046 = vld [vmem:[#allocation10 + $0x78] sm:$0xff]
    %v1047 = vld [vmem:[#allocation10 + $0x80] sm:$0xf]
    %v1048 = vld [vmem:[#allocation10 + $0x84] sm:$0xff]
    %v1049 = vld [vmem:[#allocation10 + $0x8c] sm:$0xf]
    %v1050 = vld [vmem:[#allocation10 + $0x90] sm:$0xff]
    %v1051 = vld [vmem:[#allocation10 + $0x98] sm:$0xf]
    %v1052 = vld [vmem:[#allocation10 + $0x9c] sm:$0xff]
    %v1053 = vld [vmem:[#allocation10 + $0xa4] sm:$0xf]
    %v1054 = vld [vmem:[#allocation10 + $0xa8] sm:$0xff]
    %v1055 = vld [vmem:[#allocation10 + $0xb0] sm:$0xf]
    %v1056 = vld [vmem:[#allocation10 + $0xb4] sm:$0xff]
    %v1057 = vld [vmem:[#allocation10 + $0xbc] sm:$0xf]
    %v1058 = vld [vmem:[#allocation10 + $0xc0] sm:$0xff]
    %v1059 = vld [vmem:[#allocation10 + $0xc8] sm:$0xf]
    %v1060 = vld [vmem:[#allocation10 + $0xcc] sm:$0xff]
    %v1061 = vld [vmem:[#allocation10 + $0xd4] sm:$0xf]
    %v1062 = vld [vmem:[#allocation10 + $0xd8] sm:$0xff]
    %v1063 = vld [vmem:[#allocation10 + $0xe0] sm:$0xf]
    %v1064 = vld [vmem:[#allocation10 + $0xe4] sm:$0xff]
    %v1065 = vld [vmem:[#allocation10 + $0xec] sm:$0xf]
    %v1066 = vld [vmem:[#allocation10 + $0xf0] sm:$0xff]
    %v1067 = vld [vmem:[#allocation10 + $0xf8] sm:$0xf]
    %v1068 = vld [vmem:[#allocation10 + $0xfc] sm:$0xff]
    %v1069 = vld [vmem:[#allocation10 + $0x104] sm:$0xf]
    %v1070 = vld [vmem:[#allocation10 + $0x108] sm:$0xff]
    %v1071 = vld [vmem:[#allocation10 + $0x110] sm:$0xf]
    %v1072 = vld [vmem:[#allocation10 + $0x114] sm:$0xff]
    %v1073 = vld [vmem:[#allocation10 + $0x11c] sm:$0xf]
    %v1074 = vld [vmem:[#allocation10 + $0x120] sm:$0xff]
    %v1075 = vld [vmem:[#allocation10 + $0x128] sm:$0xf]
    %v1076 = vld [vmem:[#allocation10 + $0x12c] sm:$0xff]
    %v1077 = vld [vmem:[#allocation10 + $0x134] sm:$0xf]
    %v1078 = vld [vmem:[#allocation10 + $0x138] sm:$0xff]
    %v1079 = vld [vmem:[#allocation10 + $0x140] sm:$0xf]
    %v1080 = vld [vmem:[#allocation10 + $0x144] sm:$0xff]
    %v1081 = vld [vmem:[#allocation10 + $0x14c] sm:$0xf]
    %v1082 = vld [vmem:[#allocation10 + $0x150] sm:$0xff]
    %v1083 = vld [vmem:[#allocation10 + $0x158] sm:$0xf]
    %v1084 = vld [vmem:[#allocation10 + $0x15c] sm:$0xff]
    %v1085 = vld [vmem:[#allocation10 + $0x164] sm:$0xf]
    %v1086 = vld [vmem:[#allocation10 + $0x168] sm:$0xff]
    %v1087 = vld [vmem:[#allocation10 + $0x170] sm:$0xf]
    %v1088 = vld [vmem:[#allocation10 + $0x174] sm:$0xff]
    %v1089 = vld [vmem:[#allocation10 + $0x17c] sm:$0xf]
    %v1090 = vld [vmem:[#allocation10 + $0x180] sm:$0xff]
    %v1091 = vld [vmem:[#allocation10 + $0x188] sm:$0xf]
    %v1092 = vld [vmem:[#allocation10 + $0x18c] sm:$0xff]
    %v1093 = vld [vmem:[#allocation10 + $0x194] sm:$0xf]
    %v1094 = vld [vmem:[#allocation10 + $0x198] sm:$0xff]
    %v1095 = vld [vmem:[#allocation10 + $0x1a0] sm:$0xf]
    %v1096 = vld [vmem:[#allocation10 + $0x1a4] sm:$0xff]
    %v1097 = vld [vmem:[#allocation10 + $0x1ac] sm:$0xf]
    %v1098 = vld [vmem:[#allocation10 + $0x1b0] sm:$0xff]
    %v1099 = vld [vmem:[#allocation10 + $0x1b8] sm:$0xf]
    %v1100 = vld [vmem:[#allocation10 + $0x1bc] sm:$0x33]
    %v1101 = vld [vmem:[#allocation10 + $0x1c4] sm:$0x3]
    %v1102 = vld [vmem:[#allocation12] sm:$0x7]
    %v1104 = vlaneseq
    %v1105 = vshrl.u32 %v1104, 7
    %v1106 = vsub.s32 0, %v1105
    %v1107 = vrot.slane %v1102, %v1106
    %v1108 = vlaneseq
    %v1109 = vshrl.u32 %v1108, 7
    %v1110 = vsub.s32 1, %v1109
    %v1111 = vrot.slane %v1102, %v1110
    %v1112 = vlaneseq
    %v1113 = vshrl.u32 %v1112, 7
    %v1114 = vsub.s32 2, %v1113
    %v1115 = vrot.slane %v1102, %v1114
    %v1195 = vunpack.c.l.b16 %v1026
    %v1196 = vunpack.c.h.b16 %v1026
    %v1197 = vunpack.c.l.b16 %v1027
    %v1198 = vunpack.c.l.b16 %v1028
    %v1199 = vunpack.c.h.b16 %v1028
    %v1200 = vunpack.c.l.b16 %v1029
    %v1201 = vunpack.c.l.b16 %v1030
    %v1202 = vunpack.c.h.b16 %v1030
    %v1203 = vunpack.c.l.b16 %v1031
    %v1204 = vunpack.c.l.b16 %v1032
    %v1205 = vunpack.c.h.b16 %v1032
    %v1206 = vunpack.c.l.b16 %v1033
    %v1207 = vunpack.c.l.b16 %v1034
    %v1208 = vunpack.c.h.b16 %v1034
    %v1209 = vunpack.c.l.b16 %v1035
    %v1210 = vunpack.c.l.b16 %v1036
    %v1211 = vunpack.c.h.b16 %v1036
    %v1212 = vunpack.c.l.b16 %v1037
    %v1213 = vunpack.c.l.b16 %v1038
    %v1214 = vunpack.c.h.b16 %v1038
    %v1215 = vunpack.c.l.b16 %v1039
    %v1216 = vunpack.c.l.b16 %v1040
    %v1217 = vunpack.c.h.b16 %v1040
    %v1218 = vunpack.c.l.b16 %v1041
    %v1219 = vunpack.c.l.b16 %v1042
    %v1220 = vunpack.c.h.b16 %v1042
    %v1221 = vunpack.c.l.b16 %v1043
    %v1222 = vunpack.c.l.b16 %v1044
    %v1223 = vunpack.c.h.b16 %v1044
    %v1224 = vunpack.c.l.b16 %v1045
    %v1225 = vunpack.c.l.b16 %v1046
    %v1226 = vunpack.c.h.b16 %v1046
    %v1227 = vunpack.c.l.b16 %v1047
    %v1228 = vunpack.c.l.b16 %v1048
    %v1229 = vunpack.c.h.b16 %v1048
    %v1230 = vunpack.c.l.b16 %v1049
    %v1231 = vunpack.c.l.b16 %v1050
    %v1232 = vunpack.c.h.b16 %v1050
    %v1233 = vunpack.c.l.b16 %v1051
    %v1234 = vunpack.c.l.b16 %v1052
    %v1235 = vunpack.c.h.b16 %v1052
    %v1236 = vunpack.c.l.b16 %v1053
    %v1237 = vunpack.c.l.b16 %v1054
    %v1238 = vunpack.c.h.b16 %v1054
    %v1239 = vunpack.c.l.b16 %v1055
    %v1240 = vunpack.c.l.b16 %v1056
    %v1241 = vunpack.c.h.b16 %v1056
    %v1242 = vunpack.c.l.b16 %v1057
    %v1243 = vunpack.c.l.b16 %v1058
    %v1244 = vunpack.c.h.b16 %v1058
    %v1245 = vunpack.c.l.b16 %v1059
    %v1246 = vunpack.c.l.b16 %v1060
    %v1247 = vunpack.c.h.b16 %v1060
    %v1248 = vunpack.c.l.b16 %v1061
    %v1249 = vunpack.c.l.b16 %v1062
    %v1250 = vunpack.c.h.b16 %v1062
    %v1251 = vunpack.c.l.b16 %v1063
    %v1252 = vunpack.c.l.b16 %v1064
    %v1253 = vunpack.c.h.b16 %v1064
    %v1254 = vunpack.c.l.b16 %v1065
    %v1255 = vunpack.c.l.b16 %v1066
    %v1256 = vunpack.c.h.b16 %v1066
    %v1257 = vunpack.c.l.b16 %v1067
    %v1258 = vunpack.c.l.b16 %v1068
    %v1259 = vunpack.c.h.b16 %v1068
    %v1260 = vunpack.c.l.b16 %v1069
    %v1261 = vunpack.c.l.b16 %v1070
    %v1262 = vunpack.c.h.b16 %v1070
    %v1263 = vunpack.c.l.b16 %v1071
    %v1264 = vunpack.c.l.b16 %v1072
    %v1265 = vunpack.c.h.b16 %v1072
    %v1266 = vunpack.c.l.b16 %v1073
    %v1267 = vunpack.c.l.b16 %v1074
    %v1268 = vunpack.c.h.b16 %v1074
    %v1269 = vunpack.c.l.b16 %v1075
    %v1270 = vunpack.c.l.b16 %v1076
    %v1271 = vunpack.c.h.b16 %v1076
    %v1272 = vunpack.c.l.b16 %v1077
    %v1273 = vunpack.c.l.b16 %v1078
    %v1274 = vunpack.c.h.b16 %v1078
    %v1275 = vunpack.c.l.b16 %v1079
    %v1276 = vunpack.c.l.b16 %v1080
    %v1277 = vunpack.c.h.b16 %v1080
    %v1278 = vunpack.c.l.b16 %v1081
    %v1279 = vunpack.c.l.b16 %v1082
    %v1280 = vunpack.c.h.b16 %v1082
    %v1281 = vunpack.c.l.b16 %v1083
    %v1282 = vunpack.c.l.b16 %v1084
    %v1283 = vunpack.c.h.b16 %v1084
    %v1284 = vunpack.c.l.b16 %v1085
    %v1285 = vunpack.c.l.b16 %v1086
    %v1286 = vunpack.c.h.b16 %v1086
    %v1287 = vunpack.c.l.b16 %v1087
    %v1288 = vunpack.c.l.b16 %v1088
    %v1289 = vunpack.c.h.b16 %v1088
    %v1290 = vunpack.c.l.b16 %v1089
    %v1291 = vunpack.c.l.b16 %v1090
    %v1292 = vunpack.c.h.b16 %v1090
    %v1293 = vunpack.c.l.b16 %v1091
    %v1294 = vunpack.c.l.b16 %v1092
    %v1295 = vunpack.c.h.b16 %v1092
    %v1296 = vunpack.c.l.b16 %v1093
    %v1297 = vunpack.c.l.b16 %v1094
    %v1298 = vunpack.c.h.b16 %v1094
    %v1299 = vunpack.c.l.b16 %v1095
    %v1300 = vunpack.c.l.b16 %v1096
    %v1301 = vunpack.c.h.b16 %v1096
    %v1302 = vunpack.c.l.b16 %v1097
    %v1303 = vunpack.c.l.b16 %v1098
    %v1304 = vunpack.c.h.b16 %v1098
    %v1305 = vunpack.c.l.b16 %v1099
    %v1306 = vunpack.c.l.b16 %v1100
    %v1307 = vunpack.c.h.b16 %v1100
    %v1308 = vunpack.c.l.b16 %v1101
    %v1309 = vpack.c.b16 %v1198, %v1195
    %v1310 = vpack.c.b16 %v1199, %v1196
    %v1311 = vpack.c.b16 %v1200, %v1197
    %v1312 = vpack.c.b16 %v1204, %v1201
    %v1313 = vpack.c.b16 %v1205, %v1202
    %v1314 = vpack.c.b16 %v1206, %v1203
    %v1315 = vpack.c.b16 %v1210, %v1207
    %v1316 = vpack.c.b16 %v1211, %v1208
    %v1317 = vpack.c.b16 %v1212, %v1209
    %v1318 = vpack.c.b16 %v1216, %v1213
    %v1319 = vpack.c.b16 %v1217, %v1214
    %v1320 = vpack.c.b16 %v1218, %v1215
    %v1321 = vpack.c.b16 %v1222, %v1219
    %v1322 = vpack.c.b16 %v1223, %v1220
    %v1323 = vpack.c.b16 %v1224, %v1221
    %v1324 = vpack.c.b16 %v1228, %v1225
    %v1325 = vpack.c.b16 %v1229, %v1226
    %v1326 = vpack.c.b16 %v1230, %v1227
    %v1327 = vpack.c.b16 %v1234, %v1231
    %v1328 = vpack.c.b16 %v1235, %v1232
    %v1329 = vpack.c.b16 %v1236, %v1233
    %v1330 = vpack.c.b16 %v1240, %v1237
    %v1331 = vpack.c.b16 %v1241, %v1238
    %v1332 = vpack.c.b16 %v1242, %v1239
    %v1333 = vpack.c.b16 %v1246, %v1243
    %v1334 = vpack.c.b16 %v1247, %v1244
    %v1335 = vpack.c.b16 %v1248, %v1245
    %v1336 = vpack.c.b16 %v1252, %v1249
    %v1337 = vpack.c.b16 %v1253, %v1250
    %v1338 = vpack.c.b16 %v1254, %v1251
    %v1339 = vpack.c.b16 %v1258, %v1255
    %v1340 = vpack.c.b16 %v1259, %v1256
    %v1341 = vpack.c.b16 %v1260, %v1257
    %v1342 = vpack.c.b16 %v1264, %v1261
    %v1343 = vpack.c.b16 %v1265, %v1262
    %v1344 = vpack.c.b16 %v1266, %v1263
    %v1345 = vpack.c.b16 %v1270, %v1267
    %v1346 = vpack.c.b16 %v1271, %v1268
    %v1347 = vpack.c.b16 %v1272, %v1269
    %v1348 = vpack.c.b16 %v1276, %v1273
    %v1349 = vpack.c.b16 %v1277, %v1274
    %v1350 = vpack.c.b16 %v1278, %v1275
    %v1351 = vpack.c.b16 %v1282, %v1279
    %v1352 = vpack.c.b16 %v1283, %v1280
    %v1353 = vpack.c.b16 %v1284, %v1281
    %v1354 = vpack.c.b16 %v1288, %v1285
    %v1355 = vpack.c.b16 %v1289, %v1286
    %v1356 = vpack.c.b16 %v1290, %v1287
    %v1357 = vpack.c.b16 %v1294, %v1291
    %v1358 = vpack.c.b16 %v1295, %v1292
    %v1359 = vpack.c.b16 %v1296, %v1293
    %v1360 = vpack.c.b16 %v1300, %v1297
    %v1361 = vpack.c.b16 %v1301, %v1298
    %v1362 = vpack.c.b16 %v1302, %v1299
    %v1363 = vpack.c.b16 %v1306, %v1303
    %v1364 = vpack.c.b16 %v1307, %v1304
    %v1365 = vpack.c.b16 %v1308, %v1305
    %vm1420 = vcmask 359424
    %v1422 = vsel %vm1420, %v1025, 0
    %vm1424 = vcmask 1045504
    %v1426 = vsel %vm1424, %v1363, 0
    %v1429 = vsel %vm1424, %v1364, 0
    %v1432 = vsel %vm1424, %v1365, 0
    %1434 = vmatprep.subr.bf16.mxu0 %v1310
    %1435 = vmatpush1.bf16.msra.mxu0 %v1309
    %1436 = vmatprep.subr.bf16.mxu0 %v1313
    %1437 = vmatpush1.bf16.msra.mxu0 %v1312
    %1438 = vmatprep.subr.bf16.mxu0 %v1316
    %1439 = vmatpush1.bf16.msra.mxu0 %v1315
    %1440 = vmatprep.subr.bf16.mxu0 %v1319
    %1441 = vmatpush1.bf16.msra.mxu0 %v1318
    %1442 = vmatprep.subr.bf16.mxu0 %v1322
    %1443 = vmatpush1.bf16.msra.mxu0 %v1321
    %1444 = vmatprep.subr.bf16.mxu0 %v1325
    %1445 = vmatpush1.bf16.msra.mxu0 %v1324
    %1446 = vmatprep.subr.bf16.mxu0 %v1328
    %1447 = vmatpush1.bf16.msra.mxu0 %v1327
    %1448 = vmatprep.subr.bf16.mxu0 %v1331
    %1449 = vmatpush1.bf16.msra.mxu0 %v1330
    %1450 = vmatprep.subr.bf16.mxu0 %v1334
    %1451 = vmatpush1.bf16.msra.mxu0 %v1333
    %1452 = vmatprep.subr.bf16.mxu0 %v1337
    %1453 = vmatpush1.bf16.msra.mxu0 %v1336
    %1454 = vmatprep.subr.bf16.mxu0 %v1340
    %1455 = vmatpush1.bf16.msra.mxu0 %v1339
    %1456 = vmatprep.subr.bf16.mxu0 %v1343
    %1457 = vmatpush1.bf16.msra.mxu0 %v1342
    %1458 = vmatprep.subr.bf16.mxu0 %v1346
    %1459 = vmatpush1.bf16.msra.mxu0 %v1345
    %1460 = vmatprep.subr.bf16.mxu0 %v1349
    %1461 = vmatpush1.bf16.msra.mxu0 %v1348
    %1462 = vmatprep.subr.bf16.mxu0 %v1352
    %1463 = vmatpush1.bf16.msra.mxu0 %v1351
    %1464 = vmatprep.subr.bf16.mxu0 %v1355
    %1465 = vmatpush1.bf16.msra.mxu0 %v1354
    %1466 = vmatprep.mubr.bf16.mxu0 %v1024
    %1467 = vmatmul.mubr.bf16.gmra.mrb[0].mxu0 %v1023
    %v1468 = vpop.f32.mrb[0].mxu0
    %v1469 = vadd.f32 %v1107, %v1468
    %v1470 = vpop.f32.mrb[0].mxu0
    %v1471 = vadd.f32 %v1111, %v1470
    %v1472 = vpop.f32.mrb[0].mxu0
    %v1473 = vpop.f32.mrb[0].mxu0
    %1474 = vdwg.mxu0
    %1475 = vmatprep.subr.bf16.mxu0 %v1358
    %1476 = vmatpush1.bf16.msra.mxu0 %v1357
    %1477 = vmatprep.subr.bf16.mxu0 %v1361
    %1478 = vmatpush1.bf16.msra.mxu0 %v1360
    %1479 = vmatprep.subr.bf16.mxu0 %v1429
    %1480 = vmatpush1.bf16.msra.mxu0 %v1426
    %1481 = vmatprep.subr.bf16.mxu0 0
    %1482 = vmatpush1.bf16.msra.mxu0 0
    %1483 = vmatprep.subr.bf16.mxu0 0
    %1484 = vmatpush1.bf16.msra.mxu0 0
    %1485 = vmatprep.subr.bf16.mxu0 0
    %1486 = vmatpush1.bf16.msra.mxu0 0
    %1487 = vmatprep.subr.bf16.mxu0 0
    %1488 = vmatpush1.bf16.msra.mxu0 0
    %1489 = vmatprep.subr.bf16.mxu0 0
    %1490 = vmatpush1.bf16.msra.mxu0 0
    %1491 = vmatprep.subr.bf16.mxu0 0
    %1492 = vmatpush1.bf16.msra.mxu0 0
    %1493 = vmatprep.subr.bf16.mxu0 0
    %1494 = vmatpush1.bf16.msra.mxu0 0
    %1495 = vmatprep.subr.bf16.mxu0 0
    %1496 = vmatpush1.bf16.msra.mxu0 0
    %1497 = vmatprep.subr.bf16.mxu0 0
    %1498 = vmatpush1.bf16.msra.mxu0 0
    %1499 = vmatprep.subr.bf16.mxu0 0
    %1500 = vmatpush1.bf16.msra.mxu0 0
    %1501 = vmatprep.subr.bf16.mxu0 0
    %1502 = vmatpush1.bf16.msra.mxu0 0
    %1503 = vmatprep.subr.bf16.mxu0 0
    %1504 = vmatpush1.bf16.msra.mxu0 0
    %1505 = vmatprep.subr.bf16.mxu0 0
    %1506 = vmatpush1.bf16.msra.mxu0 0
    %1507 = vmatprep.mubr.bf16.mxu0 0
    %1508 = vmatmul.mubr.bf16.gmra.mrb[0].mxu0 %v1422
    %v1509 = vpop.f32.mrb[0].mxu0
    %v1510 = vadd.f32 %v1469, %v1509
    %v1511 = vpop.f32.mrb[0].mxu0
    %v1512 = vadd.f32 %v1471, %v1511
    %v1513 = vpop.f32.mrb[0].mxu0
    %v1514 = vpop.f32.mrb[0].mxu0
    %1515 = vdwg.mxu0
    %1516 = vmatprep.subr.bf16.mxu0 0
    %1517 = vmatpush1.bf16.msra.mxu0 %v1311
    %1518 = vmatprep.subr.bf16.mxu0 0
    %1519 = vmatpush1.bf16.msra.mxu0 %v1314
    %1520 = vmatprep.subr.bf16.mxu0 0
    %1521 = vmatpush1.bf16.msra.mxu0 %v1317
    %1522 = vmatprep.subr.bf16.mxu0 0
    %1523 = vmatpush1.bf16.msra.mxu0 %v1320
    %1524 = vmatprep.subr.bf16.mxu0 0
    %1525 = vmatpush1.bf16.msra.mxu0 %v1323
    %1526 = vmatprep.subr.bf16.mxu0 0
    %1527 = vmatpush1.bf16.msra.mxu0 %v1326
    %1528 = vmatprep.subr.bf16.mxu0 0
    %1529 = vmatpush1.bf16.msra.mxu0 %v1329
    %1530 = vmatprep.subr.bf16.mxu0 0
    %1531 = vmatpush1.bf16.msra.mxu0 %v1332
    %1532 = vmatprep.subr.bf16.mxu0 0
    %1533 = vmatpush1.bf16.msra.mxu0 %v1335
    %1534 = vmatprep.subr.bf16.mxu0 0
    %1535 = vmatpush1.bf16.msra.mxu0 %v1338
    %1536 = vmatprep.subr.bf16.mxu0 0
    %1537 = vmatpush1.bf16.msra.mxu0 %v1341
    %1538 = vmatprep.subr.bf16.mxu0 0
    %1539 = vmatpush1.bf16.msra.mxu0 %v1344
    %1540 = vmatprep.subr.bf16.mxu0 0
    %1541 = vmatpush1.bf16.msra.mxu0 %v1347
    %1542 = vmatprep.subr.bf16.mxu0 0
    %1543 = vmatpush1.bf16.msra.mxu0 %v1350
    %1544 = vmatprep.subr.bf16.mxu0 0
    %1545 = vmatpush1.bf16.msra.mxu0 %v1353
    %1546 = vmatprep.subr.bf16.mxu0 0
    %1547 = vmatpush1.bf16.msra.mxu0 %v1356
    %1548 = vmatprep.mubr.bf16.mxu0 %v1024
    %1549 = vmatmul.mubr.bf16.gmra.mrb[0].mxu0 %v1023
    %v1550 = vpop.f32.mrb[0].mxu0
    %v1551 = vadd.f32 %v1115, %v1550
    %v1552 = vpop.f32.mrb[0].mxu0
    %v1553 = vpop.f32.mrb[0].mxu0
    %v1554 = vpop.f32.mrb[0].mxu0
    %1555 = vdwg.mxu0
    %1556 = vmatprep.subr.bf16.mxu0 0
    %1557 = vmatpush1.bf16.msra.mxu0 %v1359
    %1558 = vmatprep.subr.bf16.mxu0 0
    %1559 = vmatpush1.bf16.msra.mxu0 %v1362
    %1560 = vmatprep.subr.bf16.mxu0 0
    %1561 = vmatpush1.bf16.msra.mxu0 %v1432
    %1562 = vmatprep.subr.bf16.mxu0 0
    %1563 = vmatpush1.bf16.msra.mxu0 0
    %1564 = vmatprep.subr.bf16.mxu0 0
    %1565 = vmatpush1.bf16.msra.mxu0 0
    %1566 = vmatprep.subr.bf16.mxu0 0
    %1567 = vmatpush1.bf16.msra.mxu0 0
    %1568 = vmatprep.subr.bf16.mxu0 0
    %1569 = vmatpush1.bf16.msra.mxu0 0
    %1570 = vmatprep.subr.bf16.mxu0 0
    %1571 = vmatpush1.bf16.msra.mxu0 0
    %1572 = vmatprep.subr.bf16.mxu0 0
    %1573 = vmatpush1.bf16.msra.mxu0 0
    %1574 = vmatprep.subr.bf16.mxu0 0
    %1575 = vmatpush1.bf16.msra.mxu0 0
    %1576 = vmatprep.subr.bf16.mxu0 0
    %1577 = vmatpush1.bf16.msra.mxu0 0
    %1578 = vmatprep.subr.bf16.mxu0 0
    %1579 = vmatpush1.bf16.msra.mxu0 0
    %1580 = vmatprep.subr.bf16.mxu0 0
    %1581 = vmatpush1.bf16.msra.mxu0 0
    %1582 = vmatprep.subr.bf16.mxu0 0
    %1583 = vmatpush1.bf16.msra.mxu0 0
    %1584 = vmatprep.subr.bf16.mxu0 0
    %1585 = vmatpush1.bf16.msra.mxu0 0
    %1586 = vmatprep.subr.bf16.mxu0 0
    %1587 = vmatpush1.bf16.msra.mxu0 0
    %1588 = vmatprep.mubr.bf16.mxu0 0
    %1589 = vmatmul.mubr.bf16.gmra.mrb[0].mxu0 %v1422
    %v1590 = vpop.f32.mrb[0].mxu0
    %v1591 = vadd.f32 %v1551, %v1590
    %v1592 = vpop.f32.mrb[0].mxu0
    %v1593 = vpop.f32.mrb[0].mxu0
    %v1594 = vpop.f32.mrb[0].mxu0
    %1595 = vdwg.mxu0
    %v1596 = vmax.f32 %v1510, 0.0
    %v1597 = vmax.f32 %v1512, 0.0
    %v1598 = vmax.f32 %v1591, 0.0
    %v1599 = vpack.c.bf16 %v1596, %v1596
    %v1600 = vpack.c.bf16 %v1597, %v1597
    %v1601 = vpack.c.bf16 %v1598, %v1598
    %v1602 = vld [vmem:[#allocation13] sm:$0xff]
    %v1603 = vld [vmem:[#allocation13 + $0x8] sm:$0xff]
    %v1604 = vld [vmem:[#allocation13 + $0x10] sm:$0xff]
    %v1605 = vld [vmem:[#allocation13 + $0x18] sm:$0xff]
    %v1606 = vld [vmem:[#allocation13 + $0x20] sm:$0xff]
    %v1607 = vld [vmem:[#allocation13 + $0x28] sm:$0xff]
    %v1608 = vld [vmem:[#allocation13 + $0x30] sm:$0xff]
    %v1609 = vld [vmem:[#allocation13 + $0x38] sm:$0xff]
    %v1610 = vld [vmem:[#allocation13 + $0x40] sm:$0xff]
    %v1611 = vld [vmem:[#allocation13 + $0x48] sm:$0xff]
    %v1612 = vld [vmem:[#allocation13 + $0x50] sm:$0xff]
    %v1613 = vld [vmem:[#allocation13 + $0x58] sm:$0xff]
    %v1614 = vld [vmem:[#allocation13 + $0x60] sm:$0xf]
    %v1615 = vld [vmem:[#allocation13 + $0x64] sm:$0xff]
    %v1616 = vld [vmem:[#allocation13 + $0x6c] sm:$0xff]
    %v1617 = vld [vmem:[#allocation13 + $0x74] sm:$0xff]
    %v1618 = vld [vmem:[#allocation13 + $0x7c] sm:$0xff]
    %v1619 = vld [vmem:[#allocation13 + $0x84] sm:$0xff]
    %v1620 = vld [vmem:[#allocation13 + $0x8c] sm:$0xff]
    %v1621 = vld [vmem:[#allocation13 + $0x94] sm:$0xff]
    %v1622 = vld [vmem:[#allocation13 + $0x9c] sm:$0xff]
    %v1623 = vld [vmem:[#allocation13 + $0xa4] sm:$0xff]
    %v1624 = vld [vmem:[#allocation13 + $0xac] sm:$0xff]
    %v1625 = vld [vmem:[#allocation13 + $0xb4] sm:$0xff]
    %v1626 = vld [vmem:[#allocation13 + $0xbc] sm:$0xff]
    %v1627 = vld [vmem:[#allocation13 + $0xc4] sm:$0xf]
    %v1628 = vld [vmem:[#allocation13 + $0xc8] sm:$0xff]
    %v1629 = vld [vmem:[#allocation13 + $0xd0] sm:$0xff]
    %v1630 = vld [vmem:[#allocation13 + $0xd8] sm:$0xff]
    %v1631 = vld [vmem:[#allocation13 + $0xe0] sm:$0xff]
    %v1632 = vld [vmem:[#allocation13 + $0xe8] sm:$0xff]
    %v1633 = vld [vmem:[#allocation13 + $0xf0] sm:$0xff]
    %v1634 = vld [vmem:[#allocation13 + $0xf8] sm:$0xff]
    %v1635 = vld [vmem:[#allocation13 + $0x100] sm:$0xff]
    %v1636 = vld [vmem:[#allocation13 + $0x108] sm:$0xff]
    %v1637 = vld [vmem:[#allocation13 + $0x110] sm:$0xff]
    %v1638 = vld [vmem:[#allocation13 + $0x118] sm:$0xff]
    %v1639 = vld [vmem:[#allocation13 + $0x120] sm:$0xff]
    %v1640 = vld [vmem:[#allocation13 + $0x128] sm:$0xf]
    %v1641 = vld [vmem:[#allocation13 + $0x12c] sm:$0xff]
    %v1642 = vld [vmem:[#allocation13 + $0x134] sm:$0xff]
    %v1643 = vld [vmem:[#allocation13 + $0x13c] sm:$0xff]
    %v1644 = vld [vmem:[#allocation13 + $0x144] sm:$0xff]
    %v1645 = vld [vmem:[#allocation13 + $0x14c] sm:$0xff]
    %v1646 = vld [vmem:[#allocation13 + $0x154] sm:$0xff]
    %v1647 = vld [vmem:[#allocation13 + $0x15c] sm:$0xff]
    %v1648 = vld [vmem:[#allocation13 + $0x164] sm:$0xff]
    %v1649 = vld [vmem:[#allocation13 + $0x16c] sm:$0xff]
    %v1650 = vld [vmem:[#allocation13 + $0x174] sm:$0xff]
    %v1651 = vld [vmem:[#allocation13 + $0x17c] sm:$0xff]
    %v1652 = vld [vmem:[#allocation13 + $0x184] sm:$0xff]
    %v1653 = vld [vmem:[#allocation13 + $0x18c] sm:$0xf]
    %v1654 = vld [vmem:[#allocation13 + $0x190] sm:$0xff]
    %v1655 = vld [vmem:[#allocation13 + $0x198] sm:$0xff]
    %v1656 = vld [vmem:[#allocation13 + $0x1a0] sm:$0xff]
    %v1657 = vld [vmem:[#allocation13 + $0x1a8] sm:$0xff]
    %v1658 = vld [vmem:[#allocation13 + $0x1b0] sm:$0xff]
    %v1659 = vld [vmem:[#allocation13 + $0x1b8] sm:$0xff]
    %v1660 = vld [vmem:[#allocation13 + $0x1c0] sm:$0xff]
    %v1661 = vld [vmem:[#allocation13 + $0x1c8] sm:$0xff]
    %v1662 = vld [vmem:[#allocation13 + $0x1d0] sm:$0xff]
    %v1663 = vld [vmem:[#allocation13 + $0x1d8] sm:$0xff]
    %v1664 = vld [vmem:[#allocation13 + $0x1e0] sm:$0xff]
    %v1665 = vld [vmem:[#allocation13 + $0x1e8] sm:$0xff]
    %v1666 = vld [vmem:[#allocation13 + $0x1f0] sm:$0xf]
    %v1667 = vld [vmem:[#allocation13 + $0x1f4] sm:$0xff]
    %v1668 = vld [vmem:[#allocation13 + $0x1fc] sm:$0xff]
    %v1669 = vld [vmem:[#allocation13 + $0x204] sm:$0xff]
    %v1670 = vld [vmem:[#allocation13 + $0x20c] sm:$0xff]
    %v1671 = vld [vmem:[#allocation13 + $0x214] sm:$0xff]
    %v1672 = vld [vmem:[#allocation13 + $0x21c] sm:$0xff]
    %v1673 = vld [vmem:[#allocation13 + $0x224] sm:$0xff]
    %v1674 = vld [vmem:[#allocation13 + $0x22c] sm:$0xff]
    %v1675 = vld [vmem:[#allocation13 + $0x234] sm:$0xff]
    %v1676 = vld [vmem:[#allocation13 + $0x23c] sm:$0xff]
    %v1677 = vld [vmem:[#allocation13 + $0x244] sm:$0xff]
    %v1678 = vld [vmem:[#allocation13 + $0x24c] sm:$0xff]
    %v1679 = vld [vmem:[#allocation13 + $0x254] sm:$0xf]
    %v1680 = vld [vmem:[#allocation13 + $0x258] sm:$0xff]
    %v1681 = vld [vmem:[#allocation13 + $0x260] sm:$0xff]
    %v1682 = vld [vmem:[#allocation13 + $0x268] sm:$0xff]
    %v1683 = vld [vmem:[#allocation13 + $0x270] sm:$0xff]
    %v1684 = vld [vmem:[#allocation13 + $0x278] sm:$0xff]
    %v1685 = vld [vmem:[#allocation13 + $0x280] sm:$0xff]
    %v1686 = vld [vmem:[#allocation13 + $0x288] sm:$0xff]
    %v1687 = vld [vmem:[#allocation13 + $0x290] sm:$0xff]
    %v1688 = vld [vmem:[#allocation13 + $0x298] sm:$0xff]
    %v1689 = vld [vmem:[#allocation13 + $0x2a0] sm:$0xff]
    %v1690 = vld [vmem:[#allocation13 + $0x2a8] sm:$0xff]
    %v1691 = vld [vmem:[#allocation13 + $0x2b0] sm:$0xff]
    %v1692 = vld [vmem:[#allocation13 + $0x2b8] sm:$0xf]
    %v1693 = vld [vmem:[#allocation13 + $0x2bc] sm:$0xff]
    %v1694 = vld [vmem:[#allocation13 + $0x2c4] sm:$0xff]
    %v1695 = vld [vmem:[#allocation13 + $0x2cc] sm:$0xff]
    %v1696 = vld [vmem:[#allocation13 + $0x2d4] sm:$0xff]
    %v1697 = vld [vmem:[#allocation13 + $0x2dc] sm:$0xff]
    %v1698 = vld [vmem:[#allocation13 + $0x2e4] sm:$0xff]
    %v1699 = vld [vmem:[#allocation13 + $0x2ec] sm:$0xff]
    %v1700 = vld [vmem:[#allocation13 + $0x2f4] sm:$0xff]
    %v1701 = vld [vmem:[#allocation13 + $0x2fc] sm:$0xff]
    %v1702 = vld [vmem:[#allocation13 + $0x304] sm:$0xff]
    %v1703 = vld [vmem:[#allocation13 + $0x30c] sm:$0xff]
    %v1704 = vld [vmem:[#allocation13 + $0x314] sm:$0xff]
    %v1705 = vld [vmem:[#allocation13 + $0x31c] sm:$0xf]
    %v1706 = vld [vmem:[#allocation13 + $0x320] sm:$0xff]
    %v1707 = vld [vmem:[#allocation13 + $0x328] sm:$0xff]
    %v1708 = vld [vmem:[#allocation13 + $0x330] sm:$0xff]
    %v1709 = vld [vmem:[#allocation13 + $0x338] sm:$0xff]
    %v1710 = vld [vmem:[#allocation13 + $0x340] sm:$0xff]
    %v1711 = vld [vmem:[#allocation13 + $0x348] sm:$0xff]
    %v1712 = vld [vmem:[#allocation13 + $0x350] sm:$0xff]
    %v1713 = vld [vmem:[#allocation13 + $0x358] sm:$0xff]
    %v1714 = vld [vmem:[#allocation13 + $0x360] sm:$0xff]
    %v1715 = vld [vmem:[#allocation13 + $0x368] sm:$0xff]
    %v1716 = vld [vmem:[#allocation13 + $0x370] sm:$0xff]
    %v1717 = vld [vmem:[#allocation13 + $0x378] sm:$0xff]
    %v1718 = vld [vmem:[#allocation13 + $0x380] sm:$0xf]
    %v1719 = vld [vmem:[#allocation13 + $0x384] sm:$0xff]
    %v1720 = vld [vmem:[#allocation13 + $0x38c] sm:$0xff]
    %v1721 = vld [vmem:[#allocation13 + $0x394] sm:$0xff]
    %v1722 = vld [vmem:[#allocation13 + $0x39c] sm:$0xff]
    %v1723 = vld [vmem:[#allocation13 + $0x3a4] sm:$0xff]
    %v1724 = vld [vmem:[#allocation13 + $0x3ac] sm:$0xff]
    %v1725 = vld [vmem:[#allocation13 + $0x3b4] sm:$0xff]
    %v1726 = vld [vmem:[#allocation13 + $0x3bc] sm:$0xff]
    %v1727 = vld [vmem:[#allocation13 + $0x3c4] sm:$0xff]
    %v1728 = vld [vmem:[#allocation13 + $0x3cc] sm:$0xff]
    %v1729 = vld [vmem:[#allocation13 + $0x3d4] sm:$0xff]
    %v1730 = vld [vmem:[#allocation13 + $0x3dc] sm:$0xff]
    %v1731 = vld [vmem:[#allocation13 + $0x3e4] sm:$0xf]
    %v1732 = vld [vmem:[#allocation13 + $0x3e8] sm:$0xff]
    %v1733 = vld [vmem:[#allocation13 + $0x3f0] sm:$0xff]
    %v1734 = vld [vmem:[#allocation13 + $0x3f8] sm:$0xff]
    %v1735 = vld [vmem:[#allocation13 + $0x400] sm:$0xff]
    %v1736 = vld [vmem:[#allocation13 + $0x408] sm:$0xff]
    %v1737 = vld [vmem:[#allocation13 + $0x410] sm:$0xff]
    %v1738 = vld [vmem:[#allocation13 + $0x418] sm:$0xff]
    %v1739 = vld [vmem:[#allocation13 + $0x420] sm:$0xff]
    %v1740 = vld [vmem:[#allocation13 + $0x428] sm:$0xff]
    %v1741 = vld [vmem:[#allocation13 + $0x430] sm:$0xff]
    %v1742 = vld [vmem:[#allocation13 + $0x438] sm:$0xff]
    %v1743 = vld [vmem:[#allocation13 + $0x440] sm:$0xff]
    %v1744 = vld [vmem:[#allocation13 + $0x448] sm:$0xf]
    %v1745 = vld [vmem:[#allocation13 + $0x44c] sm:$0xff]
    %v1746 = vld [vmem:[#allocation13 + $0x454] sm:$0xff]
    %v1747 = vld [vmem:[#allocation13 + $0x45c] sm:$0xff]
    %v1748 = vld [vmem:[#allocation13 + $0x464] sm:$0xff]
    %v1749 = vld [vmem:[#allocation13 + $0x46c] sm:$0xff]
    %v1750 = vld [vmem:[#allocation13 + $0x474] sm:$0xff]
    %v1751 = vld [vmem:[#allocation13 + $0x47c] sm:$0xff]
    %v1752 = vld [vmem:[#allocation13 + $0x484] sm:$0xff]
    %v1753 = vld [vmem:[#allocation13 + $0x48c] sm:$0xff]
    %v1754 = vld [vmem:[#allocation13 + $0x494] sm:$0xff]
    %v1755 = vld [vmem:[#allocation13 + $0x49c] sm:$0xff]
    %v1756 = vld [vmem:[#allocation13 + $0x4a4] sm:$0xff]
    %v1757 = vld [vmem:[#allocation13 + $0x4ac] sm:$0xf]
    %v1758 = vld [vmem:[#allocation13 + $0x4b0] sm:$0xff]
    %v1759 = vld [vmem:[#allocation13 + $0x4b8] sm:$0xff]
    %v1760 = vld [vmem:[#allocation13 + $0x4c0] sm:$0xff]
    %v1761 = vld [vmem:[#allocation13 + $0x4c8] sm:$0xff]
    %v1762 = vld [vmem:[#allocation13 + $0x4d0] sm:$0xff]
    %v1763 = vld [vmem:[#allocation13 + $0x4d8] sm:$0xff]
    %v1764 = vld [vmem:[#allocation13 + $0x4e0] sm:$0xff]
    %v1765 = vld [vmem:[#allocation13 + $0x4e8] sm:$0xff]
    %v1766 = vld [vmem:[#allocation13 + $0x4f0] sm:$0xff]
    %v1767 = vld [vmem:[#allocation13 + $0x4f8] sm:$0xff]
    %v1768 = vld [vmem:[#allocation13 + $0x500] sm:$0xff]
    %v1769 = vld [vmem:[#allocation13 + $0x508] sm:$0xff]
    %v1770 = vld [vmem:[#allocation13 + $0x510] sm:$0xf]
    %v1771 = vld [vmem:[#allocation13 + $0x514] sm:$0xff]
    %v1772 = vld [vmem:[#allocation13 + $0x51c] sm:$0xff]
    %v1773 = vld [vmem:[#allocation13 + $0x524] sm:$0xff]
    %v1774 = vld [vmem:[#allocation13 + $0x52c] sm:$0xff]
    %v1775 = vld [vmem:[#allocation13 + $0x534] sm:$0xff]
    %v1776 = vld [vmem:[#allocation13 + $0x53c] sm:$0xff]
    %v1777 = vld [vmem:[#allocation13 + $0x544] sm:$0xff]
    %v1778 = vld [vmem:[#allocation13 + $0x54c] sm:$0xff]
    %v1779 = vld [vmem:[#allocation13 + $0x554] sm:$0xff]
    %v1780 = vld [vmem:[#allocation13 + $0x55c] sm:$0xff]
    %v1781 = vld [vmem:[#allocation13 + $0x564] sm:$0xff]
    %v1782 = vld [vmem:[#allocation13 + $0x56c] sm:$0xff]
    %v1783 = vld [vmem:[#allocation13 + $0x574] sm:$0xf]
    %v1784 = vld [vmem:[#allocation13 + $0x578] sm:$0xff]
    %v1785 = vld [vmem:[#allocation13 + $0x580] sm:$0xff]
    %v1786 = vld [vmem:[#allocation13 + $0x588] sm:$0xff]
    %v1787 = vld [vmem:[#allocation13 + $0x590] sm:$0xff]
    %v1788 = vld [vmem:[#allocation13 + $0x598] sm:$0xff]
    %v1789 = vld [vmem:[#allocation13 + $0x5a0] sm:$0xff]
    %v1790 = vld [vmem:[#allocation13 + $0x5a8] sm:$0xff]
    %v1791 = vld [vmem:[#allocation13 + $0x5b0] sm:$0xff]
    %v1792 = vld [vmem:[#allocation13 + $0x5b8] sm:$0xff]
    %v1793 = vld [vmem:[#allocation13 + $0x5c0] sm:$0xff]
    %v1794 = vld [vmem:[#allocation13 + $0x5c8] sm:$0xff]
    %v1795 = vld [vmem:[#allocation13 + $0x5d0] sm:$0xff]
    %v1796 = vld [vmem:[#allocation13 + $0x5d8] sm:$0xf]
    %v1797 = vld [vmem:[#allocation13 + $0x5dc] sm:$0xff]
    %v1798 = vld [vmem:[#allocation13 + $0x5e4] sm:$0xff]
    %v1799 = vld [vmem:[#allocation13 + $0x5ec] sm:$0xff]
    %v1800 = vld [vmem:[#allocation13 + $0x5f4] sm:$0xff]
    %v1801 = vld [vmem:[#allocation13 + $0x5fc] sm:$0xff]
    %v1802 = vld [vmem:[#allocation13 + $0x604] sm:$0xff]
    %v1803 = vld [vmem:[#allocation13 + $0x60c] sm:$0xff]
    %v1804 = vld [vmem:[#allocation13 + $0x614] sm:$0xff]
    %v1805 = vld [vmem:[#allocation13 + $0x61c] sm:$0xff]
    %v1806 = vld [vmem:[#allocation13 + $0x624] sm:$0xff]
    %v1807 = vld [vmem:[#allocation13 + $0x62c] sm:$0xff]
    %v1808 = vld [vmem:[#allocation13 + $0x634] sm:$0xff]
    %v1809 = vld [vmem:[#allocation13 + $0x63c] sm:$0xf]
    %v1810 = vld [vmem:[#allocation13 + $0x640] sm:$0xff]
    %v1811 = vld [vmem:[#allocation13 + $0x648] sm:$0xff]
    %v1812 = vld [vmem:[#allocation13 + $0x650] sm:$0xff]
    %v1813 = vld [vmem:[#allocation13 + $0x658] sm:$0xff]
    %v1814 = vld [vmem:[#allocation13 + $0x660] sm:$0xff]
    %v1815 = vld [vmem:[#allocation13 + $0x668] sm:$0xff]
    %v1816 = vld [vmem:[#allocation13 + $0x670] sm:$0xff]
    %v1817 = vld [vmem:[#allocation13 + $0x678] sm:$0xff]
    %v1818 = vld [vmem:[#allocation13 + $0x680] sm:$0xff]
    %v1819 = vld [vmem:[#allocation13 + $0x688] sm:$0xff]
    %v1820 = vld [vmem:[#allocation13 + $0x690] sm:$0xff]
    %v1821 = vld [vmem:[#allocation13 + $0x698] sm:$0xff]
    %v1822 = vld [vmem:[#allocation13 + $0x6a0] sm:$0xf]
    %v1823 = vld [vmem:[#allocation13 + $0x6a4] sm:$0xff]
    %v1824 = vld [vmem:[#allocation13 + $0x6ac] sm:$0xff]
    %v1825 = vld [vmem:[#allocation13 + $0x6b4] sm:$0xff]
    %v1826 = vld [vmem:[#allocation13 + $0x6bc] sm:$0xff]
    %v1827 = vld [vmem:[#allocation13 + $0x6c4] sm:$0xff]
    %v1828 = vld [vmem:[#allocation13 + $0x6cc] sm:$0xff]
    %v1829 = vld [vmem:[#allocation13 + $0x6d4] sm:$0xff]
    %v1830 = vld [vmem:[#allocation13 + $0x6dc] sm:$0xff]
    %v1831 = vld [vmem:[#allocation13 + $0x6e4] sm:$0xff]
    %v1832 = vld [vmem:[#allocation13 + $0x6ec] sm:$0xff]
    %v1833 = vld [vmem:[#allocation13 + $0x6f4] sm:$0xff]
    %v1834 = vld [vmem:[#allocation13 + $0x6fc] sm:$0xff]
    %v1835 = vld [vmem:[#allocation13 + $0x704] sm:$0xf]
    %v1836 = vld [vmem:[#allocation13 + $0x708] sm:$0xff]
    %v1837 = vld [vmem:[#allocation13 + $0x710] sm:$0xff]
    %v1838 = vld [vmem:[#allocation13 + $0x718] sm:$0xff]
    %v1839 = vld [vmem:[#allocation13 + $0x720] sm:$0xff]
    %v1840 = vld [vmem:[#allocation13 + $0x728] sm:$0xff]
    %v1841 = vld [vmem:[#allocation13 + $0x730] sm:$0xff]
    %v1842 = vld [vmem:[#allocation13 + $0x738] sm:$0xff]
    %v1843 = vld [vmem:[#allocation13 + $0x740] sm:$0xff]
    %v1844 = vld [vmem:[#allocation13 + $0x748] sm:$0xff]
    %v1845 = vld [vmem:[#allocation13 + $0x750] sm:$0xff]
    %v1846 = vld [vmem:[#allocation13 + $0x758] sm:$0xff]
    %v1847 = vld [vmem:[#allocation13 + $0x760] sm:$0xff]
    %v1848 = vld [vmem:[#allocation13 + $0x768] sm:$0xf]
    %v1849 = vld [vmem:[#allocation13 + $0x76c] sm:$0xff]
    %v1850 = vld [vmem:[#allocation13 + $0x774] sm:$0xff]
    %v1851 = vld [vmem:[#allocation13 + $0x77c] sm:$0xff]
    %v1852 = vld [vmem:[#allocation13 + $0x784] sm:$0xff]
    %v1853 = vld [vmem:[#allocation13 + $0x78c] sm:$0xff]
    %v1854 = vld [vmem:[#allocation13 + $0x794] sm:$0xff]
    %v1855 = vld [vmem:[#allocation13 + $0x79c] sm:$0xff]
    %v1856 = vld [vmem:[#allocation13 + $0x7a4] sm:$0xff]
    %v1857 = vld [vmem:[#allocation13 + $0x7ac] sm:$0xff]
    %v1858 = vld [vmem:[#allocation13 + $0x7b4] sm:$0xff]
    %v1859 = vld [vmem:[#allocation13 + $0x7bc] sm:$0xff]
    %v1860 = vld [vmem:[#allocation13 + $0x7c4] sm:$0xff]
    %v1861 = vld [vmem:[#allocation13 + $0x7cc] sm:$0xf]
    %v1862 = vld [vmem:[#allocation13 + $0x7d0] sm:$0xff]
    %v1863 = vld [vmem:[#allocation13 + $0x7d8] sm:$0xff]
    %v1864 = vld [vmem:[#allocation13 + $0x7e0] sm:$0xff]
    %v1865 = vld [vmem:[#allocation13 + $0x7e8] sm:$0xff]
    %v1866 = vld [vmem:[#allocation13 + $0x7f0] sm:$0xff]
    %v1867 = vld [vmem:[#allocation13 + $0x7f8] sm:$0xff]
    %v1868 = vld [vmem:[#allocation13 + $0x800] sm:$0xff]
    %v1869 = vld [vmem:[#allocation13 + $0x808] sm:$0xff]
    %v1870 = vld [vmem:[#allocation13 + $0x810] sm:$0xff]
    %v1871 = vld [vmem:[#allocation13 + $0x818] sm:$0xff]
    %v1872 = vld [vmem:[#allocation13 + $0x820] sm:$0xff]
    %v1873 = vld [vmem:[#allocation13 + $0x828] sm:$0xff]
    %v1874 = vld [vmem:[#allocation13 + $0x830] sm:$0xf]
    %v1875 = vld [vmem:[#allocation13 + $0x834] sm:$0xff]
    %v1876 = vld [vmem:[#allocation13 + $0x83c] sm:$0xff]
    %v1877 = vld [vmem:[#allocation13 + $0x844] sm:$0xff]
    %v1878 = vld [vmem:[#allocation13 + $0x84c] sm:$0xff]
    %v1879 = vld [vmem:[#allocation13 + $0x854] sm:$0xff]
    %v1880 = vld [vmem:[#allocation13 + $0x85c] sm:$0xff]
    %v1881 = vld [vmem:[#allocation13 + $0x864] sm:$0xff]
    %v1882 = vld [vmem:[#allocation13 + $0x86c] sm:$0xff]
    %v1883 = vld [vmem:[#allocation13 + $0x874] sm:$0xff]
    %v1884 = vld [vmem:[#allocation13 + $0x87c] sm:$0xff]
    %v1885 = vld [vmem:[#allocation13 + $0x884] sm:$0xff]
    %v1886 = vld [vmem:[#allocation13 + $0x88c] sm:$0xff]
    %v1887 = vld [vmem:[#allocation13 + $0x894] sm:$0xf]
    %v1888 = vld [vmem:[#allocation13 + $0x898] sm:$0xff]
    %v1889 = vld [vmem:[#allocation13 + $0x8a0] sm:$0xff]
    %v1890 = vld [vmem:[#allocation13 + $0x8a8] sm:$0xff]
    %v1891 = vld [vmem:[#allocation13 + $0x8b0] sm:$0xff]
    %v1892 = vld [vmem:[#allocation13 + $0x8b8] sm:$0xff]
    %v1893 = vld [vmem:[#allocation13 + $0x8c0] sm:$0xff]
    %v1894 = vld [vmem:[#allocation13 + $0x8c8] sm:$0xff]
    %v1895 = vld [vmem:[#allocation13 + $0x8d0] sm:$0xff]
    %v1896 = vld [vmem:[#allocation13 + $0x8d8] sm:$0xff]
    %v1897 = vld [vmem:[#allocation13 + $0x8e0] sm:$0xff]
    %v1898 = vld [vmem:[#allocation13 + $0x8e8] sm:$0xff]
    %v1899 = vld [vmem:[#allocation13 + $0x8f0] sm:$0xff]
    %v1900 = vld [vmem:[#allocation13 + $0x8f8] sm:$0xf]
    %v1901 = vld [vmem:[#allocation13 + $0x8fc] sm:$0xff]
    %v1902 = vld [vmem:[#allocation13 + $0x904] sm:$0xff]
    %v1903 = vld [vmem:[#allocation13 + $0x90c] sm:$0xff]
    %v1904 = vld [vmem:[#allocation13 + $0x914] sm:$0xff]
    %v1905 = vld [vmem:[#allocation13 + $0x91c] sm:$0xff]
    %v1906 = vld [vmem:[#allocation13 + $0x924] sm:$0xff]
    %v1907 = vld [vmem:[#allocation13 + $0x92c] sm:$0xff]
    %v1908 = vld [vmem:[#allocation13 + $0x934] sm:$0xff]
    %v1909 = vld [vmem:[#allocation13 + $0x93c] sm:$0xff]
    %v1910 = vld [vmem:[#allocation13 + $0x944] sm:$0xff]
    %v1911 = vld [vmem:[#allocation13 + $0x94c] sm:$0xff]
    %v1912 = vld [vmem:[#allocation13 + $0x954] sm:$0xff]
    %v1913 = vld [vmem:[#allocation13 + $0x95c] sm:$0xf]
    %v1914 = vld [vmem:[#allocation13 + $0x960] sm:$0xff]
    %v1915 = vld [vmem:[#allocation13 + $0x968] sm:$0xff]
    %v1916 = vld [vmem:[#allocation13 + $0x970] sm:$0xff]
    %v1917 = vld [vmem:[#allocation13 + $0x978] sm:$0xff]
    %v1918 = vld [vmem:[#allocation13 + $0x980] sm:$0xff]
    %v1919 = vld [vmem:[#allocation13 + $0x988] sm:$0xff]
    %v1920 = vld [vmem:[#allocation13 + $0x990] sm:$0xff]
    %v1921 = vld [vmem:[#allocation13 + $0x998] sm:$0xff]
    %v1922 = vld [vmem:[#allocation13 + $0x9a0] sm:$0xff]
    %v1923 = vld [vmem:[#allocation13 + $0x9a8] sm:$0xff]
    %v1924 = vld [vmem:[#allocation13 + $0x9b0] sm:$0xff]
    %v1925 = vld [vmem:[#allocation13 + $0x9b8] sm:$0xff]
    %v1926 = vld [vmem:[#allocation13 + $0x9c0] sm:$0xf]
    %v1927 = vld [vmem:[#allocation13 + $0x9c4] sm:$0xff]
    %v1928 = vld [vmem:[#allocation13 + $0x9cc] sm:$0xff]
    %v1929 = vld [vmem:[#allocation13 + $0x9d4] sm:$0xff]
    %v1930 = vld [vmem:[#allocation13 + $0x9dc] sm:$0xff]
    %v1931 = vld [vmem:[#allocation13 + $0x9e4] sm:$0xff]
    %v1932 = vld [vmem:[#allocation13 + $0x9ec] sm:$0xff]
    %v1933 = vld [vmem:[#allocation13 + $0x9f4] sm:$0xff]
    %v1934 = vld [vmem:[#allocation13 + $0x9fc] sm:$0xff]
    %v1935 = vld [vmem:[#allocation13 + $0xa04] sm:$0xff]
    %v1936 = vld [vmem:[#allocation13 + $0xa0c] sm:$0xff]
    %v1937 = vld [vmem:[#allocation13 + $0xa14] sm:$0xff]
    %v1938 = vld [vmem:[#allocation13 + $0xa1c] sm:$0xff]
    %v1939 = vld [vmem:[#allocation13 + $0xa24] sm:$0xf]
    %v1940 = vld [vmem:[#allocation13 + $0xa28] sm:$0xff]
    %v1941 = vld [vmem:[#allocation13 + $0xa30] sm:$0xff]
    %v1942 = vld [vmem:[#allocation13 + $0xa38] sm:$0xff]
    %v1943 = vld [vmem:[#allocation13 + $0xa40] sm:$0xff]
    %v1944 = vld [vmem:[#allocation13 + $0xa48] sm:$0xff]
    %v1945 = vld [vmem:[#allocation13 + $0xa50] sm:$0xff]
    %v1946 = vld [vmem:[#allocation13 + $0xa58] sm:$0xff]
    %v1947 = vld [vmem:[#allocation13 + $0xa60] sm:$0xff]
    %v1948 = vld [vmem:[#allocation13 + $0xa68] sm:$0xff]
    %v1949 = vld [vmem:[#allocation13 + $0xa70] sm:$0xff]
    %v1950 = vld [vmem:[#allocation13 + $0xa78] sm:$0xff]
    %v1951 = vld [vmem:[#allocation13 + $0xa80] sm:$0xff]
    %v1952 = vld [vmem:[#allocation13 + $0xa88] sm:$0xf]
    %v1953 = vld [vmem:[#allocation13 + $0xa8c] sm:$0xff]
    %v1954 = vld [vmem:[#allocation13 + $0xa94] sm:$0xff]
    %v1955 = vld [vmem:[#allocation13 + $0xa9c] sm:$0xff]
    %v1956 = vld [vmem:[#allocation13 + $0xaa4] sm:$0xff]
    %v1957 = vld [vmem:[#allocation13 + $0xaac] sm:$0xff]
    %v1958 = vld [vmem:[#allocation13 + $0xab4] sm:$0xff]
    %v1959 = vld [vmem:[#allocation13 + $0xabc] sm:$0xff]
    %v1960 = vld [vmem:[#allocation13 + $0xac4] sm:$0xff]
    %v1961 = vld [vmem:[#allocation13 + $0xacc] sm:$0xff]
    %v1962 = vld [vmem:[#allocation13 + $0xad4] sm:$0xff]
    %v1963 = vld [vmem:[#allocation13 + $0xadc] sm:$0xff]
    %v1964 = vld [vmem:[#allocation13 + $0xae4] sm:$0xff]
    %v1965 = vld [vmem:[#allocation13 + $0xaec] sm:$0xf]
    %v1966 = vld [vmem:[#allocation13 + $0xaf0] sm:$0xff]
    %v1967 = vld [vmem:[#allocation13 + $0xaf8] sm:$0xff]
    %v1968 = vld [vmem:[#allocation13 + $0xb00] sm:$0xff]
    %v1969 = vld [vmem:[#allocation13 + $0xb08] sm:$0xff]
    %v1970 = vld [vmem:[#allocation13 + $0xb10] sm:$0xff]
    %v1971 = vld [vmem:[#allocation13 + $0xb18] sm:$0xff]
    %v1972 = vld [vmem:[#allocation13 + $0xb20] sm:$0xff]
    %v1973 = vld [vmem:[#allocation13 + $0xb28] sm:$0xff]
    %v1974 = vld [vmem:[#allocation13 + $0xb30] sm:$0xff]
    %v1975 = vld [vmem:[#allocation13 + $0xb38] sm:$0xff]
    %v1976 = vld [vmem:[#allocation13 + $0xb40] sm:$0xff]
    %v1977 = vld [vmem:[#allocation13 + $0xb48] sm:$0xff]
    %v1978 = vld [vmem:[#allocation13 + $0xb50] sm:$0xf]
    %v1979 = vld [vmem:[#allocation13 + $0xb54] sm:$0xff]
    %v1980 = vld [vmem:[#allocation13 + $0xb5c] sm:$0xff]
    %v1981 = vld [vmem:[#allocation13 + $0xb64] sm:$0xff]
    %v1982 = vld [vmem:[#allocation13 + $0xb6c] sm:$0xff]
    %v1983 = vld [vmem:[#allocation13 + $0xb74] sm:$0xff]
    %v1984 = vld [vmem:[#allocation13 + $0xb7c] sm:$0xff]
    %v1985 = vld [vmem:[#allocation13 + $0xb84] sm:$0xff]
    %v1986 = vld [vmem:[#allocation13 + $0xb8c] sm:$0xff]
    %v1987 = vld [vmem:[#allocation13 + $0xb94] sm:$0xff]
    %v1988 = vld [vmem:[#allocation13 + $0xb9c] sm:$0xff]
    %v1989 = vld [vmem:[#allocation13 + $0xba4] sm:$0xff]
    %v1990 = vld [vmem:[#allocation13 + $0xbac] sm:$0xff]
    %v1991 = vld [vmem:[#allocation13 + $0xbb4] sm:$0xf]
    %v1992 = vld [vmem:[#allocation13 + $0xbb8] sm:$0xff]
    %v1993 = vld [vmem:[#allocation13 + $0xbc0] sm:$0xff]
    %v1994 = vld [vmem:[#allocation13 + $0xbc8] sm:$0xff]
    %v1995 = vld [vmem:[#allocation13 + $0xbd0] sm:$0xff]
    %v1996 = vld [vmem:[#allocation13 + $0xbd8] sm:$0xff]
    %v1997 = vld [vmem:[#allocation13 + $0xbe0] sm:$0xff]
    %v1998 = vld [vmem:[#allocation13 + $0xbe8] sm:$0xff]
    %v1999 = vld [vmem:[#allocation13 + $0xbf0] sm:$0xff]
    %v2000 = vld [vmem:[#allocation13 + $0xbf8] sm:$0xff]
    %v2001 = vld [vmem:[#allocation13 + $0xc00] sm:$0xff]
    %v2002 = vld [vmem:[#allocation13 + $0xc08] sm:$0xff]
    %v2003 = vld [vmem:[#allocation13 + $0xc10] sm:$0xff]
    %v2004 = vld [vmem:[#allocation13 + $0xc18] sm:$0xf]
    %v2005 = vld [vmem:[#allocation13 + $0xc1c] sm:$0xff]
    %v2006 = vld [vmem:[#allocation13 + $0xc24] sm:$0xff]
    %v2007 = vld [vmem:[#allocation13 + $0xc2c] sm:$0xff]
    %v2008 = vld [vmem:[#allocation13 + $0xc34] sm:$0xff]
    %v2009 = vld [vmem:[#allocation13 + $0xc3c] sm:$0xff]
    %v2010 = vld [vmem:[#allocation13 + $0xc44] sm:$0xff]
    %v2011 = vld [vmem:[#allocation13 + $0xc4c] sm:$0xff]
    %v2012 = vld [vmem:[#allocation13 + $0xc54] sm:$0xff]
    %v2013 = vld [vmem:[#allocation13 + $0xc5c] sm:$0xff]
    %v2014 = vld [vmem:[#allocation13 + $0xc64] sm:$0xff]
    %v2015 = vld [vmem:[#allocation13 + $0xc6c] sm:$0xff]
    %v2016 = vld [vmem:[#allocation13 + $0xc74] sm:$0xff]
    %v2017 = vld [vmem:[#allocation13 + $0xc7c] sm:$0xf]
    %v2018 = vld [vmem:[#allocation13 + $0xc80] sm:$0xff]
    %v2019 = vld [vmem:[#allocation13 + $0xc88] sm:$0xff]
    %v2020 = vld [vmem:[#allocation13 + $0xc90] sm:$0xff]
    %v2021 = vld [vmem:[#allocation13 + $0xc98] sm:$0xff]
    %v2022 = vld [vmem:[#allocation13 + $0xca0] sm:$0xff]
    %v2023 = vld [vmem:[#allocation13 + $0xca8] sm:$0xff]
    %v2024 = vld [vmem:[#allocation13 + $0xcb0] sm:$0xff]
    %v2025 = vld [vmem:[#allocation13 + $0xcb8] sm:$0xff]
    %v2026 = vld [vmem:[#allocation13 + $0xcc0] sm:$0xff]
    %v2027 = vld [vmem:[#allocation13 + $0xcc8] sm:$0xff]
    %v2028 = vld [vmem:[#allocation13 + $0xcd0] sm:$0xff]
    %v2029 = vld [vmem:[#allocation13 + $0xcd8] sm:$0xff]
    %v2030 = vld [vmem:[#allocation13 + $0xce0] sm:$0xf]
    %v2031 = vld [vmem:[#allocation13 + $0xce4] sm:$0xff]
    %v2032 = vld [vmem:[#allocation13 + $0xcec] sm:$0xff]
    %v2033 = vld [vmem:[#allocation13 + $0xcf4] sm:$0xff]
    %v2034 = vld [vmem:[#allocation13 + $0xcfc] sm:$0xff]
    %v2035 = vld [vmem:[#allocation13 + $0xd04] sm:$0xff]
    %v2036 = vld [vmem:[#allocation13 + $0xd0c] sm:$0xff]
    %v2037 = vld [vmem:[#allocation13 + $0xd14] sm:$0xff]
    %v2038 = vld [vmem:[#allocation13 + $0xd1c] sm:$0xff]
    %v2039 = vld [vmem:[#allocation13 + $0xd24] sm:$0xff]
    %v2040 = vld [vmem:[#allocation13 + $0xd2c] sm:$0xff]
    %v2041 = vld [vmem:[#allocation13 + $0xd34] sm:$0xff]
    %v2042 = vld [vmem:[#allocation13 + $0xd3c] sm:$0xff]
    %v2043 = vld [vmem:[#allocation13 + $0xd44] sm:$0xf]
    %v2044 = vld [vmem:[#allocation13 + $0xd48] sm:$0xff]
    %v2045 = vld [vmem:[#allocation13 + $0xd50] sm:$0xff]
    %v2046 = vld [vmem:[#allocation13 + $0xd58] sm:$0xff]
    %v2047 = vld [vmem:[#allocation13 + $0xd60] sm:$0xff]
    %v2048 = vld [vmem:[#allocation13 + $0xd68] sm:$0xff]
    %v2049 = vld [vmem:[#allocation13 + $0xd70] sm:$0xff]
    %v2050 = vld [vmem:[#allocation13 + $0xd78] sm:$0xff]
    %v2051 = vld [vmem:[#allocation13 + $0xd80] sm:$0xff]
    %v2052 = vld [vmem:[#allocation13 + $0xd88] sm:$0xff]
    %v2053 = vld [vmem:[#allocation13 + $0xd90] sm:$0xff]
    %v2054 = vld [vmem:[#allocation13 + $0xd98] sm:$0xff]
    %v2055 = vld [vmem:[#allocation13 + $0xda0] sm:$0xff]
    %v2056 = vld [vmem:[#allocation13 + $0xda8] sm:$0xf]
    %v2057 = vld [vmem:[#allocation13 + $0xdac] sm:$0xff]
    %v2058 = vld [vmem:[#allocation13 + $0xdb4] sm:$0xff]
    %v2059 = vld [vmem:[#allocation13 + $0xdbc] sm:$0xff]
    %v2060 = vld [vmem:[#allocation13 + $0xdc4] sm:$0xff]
    %v2061 = vld [vmem:[#allocation13 + $0xdcc] sm:$0xff]
    %v2062 = vld [vmem:[#allocation13 + $0xdd4] sm:$0xff]
    %v2063 = vld [vmem:[#allocation13 + $0xddc] sm:$0xff]
    %v2064 = vld [vmem:[#allocation13 + $0xde4] sm:$0xff]
    %v2065 = vld [vmem:[#allocation13 + $0xdec] sm:$0xff]
    %v2066 = vld [vmem:[#allocation13 + $0xdf4] sm:$0xff]
    %v2067 = vld [vmem:[#allocation13 + $0xdfc] sm:$0xff]
    %v2068 = vld [vmem:[#allocation13 + $0xe04] sm:$0xff]
    %v2069 = vld [vmem:[#allocation13 + $0xe0c] sm:$0xf]
    %v2070 = vld [vmem:[#allocation13 + $0xe10] sm:$0xff]
    %v2071 = vld [vmem:[#allocation13 + $0xe18] sm:$0xff]
    %v2072 = vld [vmem:[#allocation13 + $0xe20] sm:$0xff]
    %v2073 = vld [vmem:[#allocation13 + $0xe28] sm:$0xff]
    %v2074 = vld [vmem:[#allocation13 + $0xe30] sm:$0xff]
    %v2075 = vld [vmem:[#allocation13 + $0xe38] sm:$0xff]
    %v2076 = vld [vmem:[#allocation13 + $0xe40] sm:$0xff]
    %v2077 = vld [vmem:[#allocation13 + $0xe48] sm:$0xff]
    %v2078 = vld [vmem:[#allocation13 + $0xe50] sm:$0xff]
    %v2079 = vld [vmem:[#allocation13 + $0xe58] sm:$0xff]
    %v2080 = vld [vmem:[#allocation13 + $0xe60] sm:$0xff]
    %v2081 = vld [vmem:[#allocation13 + $0xe68] sm:$0xff]
    %v2082 = vld [vmem:[#allocation13 + $0xe70] sm:$0xf]
    %v2083 = vld [vmem:[#allocation13 + $0xe74] sm:$0x33]
    %v2084 = vld [vmem:[#allocation13 + $0xe7c] sm:$0x33]
    %v2085 = vld [vmem:[#allocation13 + $0xe84] sm:$0x33]
    %v2086 = vld [vmem:[#allocation13 + $0xe8c] sm:$0x33]
    %v2087 = vld [vmem:[#allocation13 + $0xe94] sm:$0x33]
    %v2088 = vld [vmem:[#allocation13 + $0xe9c] sm:$0x33]
    %v2089 = vld [vmem:[#allocation13 + $0xea4] sm:$0x33]
    %v2090 = vld [vmem:[#allocation13 + $0xeac] sm:$0x33]
    %v2091 = vld [vmem:[#allocation13 + $0xeb4] sm:$0x33]
    %v2092 = vld [vmem:[#allocation13 + $0xebc] sm:$0x33]
    %v2093 = vld [vmem:[#allocation13 + $0xec4] sm:$0x33]
    %v2094 = vld [vmem:[#allocation13 + $0xecc] sm:$0x33]
    %v2095 = vld [vmem:[#allocation13 + $0xed4] sm:$0x3]
    %v2096 = vld [vmem:[#allocation15] sm:$0xff]
    %v2097 = vld [vmem:[#allocation15 + $0x8] sm:$0xff]
    %v2098 = vld [vmem:[#allocation15 + $0x10] sm:$0xff]
    %v2099 = vld [vmem:[#allocation15 + $0x18] sm:$0x1]
    %v2104 = vlaneseq
    %v2105 = vshrl.u32 %v2104, 7
    %v2106 = vsub.s32 0, %v2105
    %v2107 = vrot.slane %v2096, %v2106
    %v2108 = vlaneseq
    %v2109 = vshrl.u32 %v2108, 7
    %v2110 = vsub.s32 1, %v2109
    %v2111 = vrot.slane %v2096, %v2110
    %v2112 = vlaneseq
    %v2113 = vshrl.u32 %v2112, 7
    %v2114 = vsub.s32 2, %v2113
    %v2115 = vrot.slane %v2096, %v2114
    %v2116 = vlaneseq
    %v2117 = vshrl.u32 %v2116, 7
    %v2118 = vsub.s32 3, %v2117
    %v2119 = vrot.slane %v2096, %v2118
    %v2120 = vlaneseq
    %v2121 = vshrl.u32 %v2120, 7
    %v2122 = vsub.s32 4, %v2121
    %v2123 = vrot.slane %v2096, %v2122
    %v2124 = vlaneseq
    %v2125 = vshrl.u32 %v2124, 7
    %v2126 = vsub.s32 5, %v2125
    %v2127 = vrot.slane %v2096, %v2126
    %v2128 = vlaneseq
    %v2129 = vshrl.u32 %v2128, 7
    %v2130 = vsub.s32 6, %v2129
    %v2131 = vrot.slane %v2096, %v2130
    %v2132 = vlaneseq
    %v2133 = vshrl.u32 %v2132, 7
    %v2134 = vsub.s32 7, %v2133
    %v2135 = vrot.slane %v2096, %v2134
    %v2136 = vlaneseq
    %v2137 = vshrl.u32 %v2136, 7
    %v2138 = vsub.s32 0, %v2137
    %v2139 = vrot.slane %v2097, %v2138
    %v2140 = vlaneseq
    %v2141 = vshrl.u32 %v2140, 7
    %v2142 = vsub.s32 1, %v2141
    %v2143 = vrot.slane %v2097, %v2142
    %v2144 = vlaneseq
    %v2145 = vshrl.u32 %v2144, 7
    %v2146 = vsub.s32 2, %v2145
    %v2147 = vrot.slane %v2097, %v2146
    %v2148 = vlaneseq
    %v2149 = vshrl.u32 %v2148, 7
    %v2150 = vsub.s32 3, %v2149
    %v2151 = vrot.slane %v2097, %v2150
    %v2152 = vlaneseq
    %v2153 = vshrl.u32 %v2152, 7
    %v2154 = vsub.s32 4, %v2153
    %v2155 = vrot.slane %v2097, %v2154
    %v2156 = vlaneseq
    %v2157 = vshrl.u32 %v2156, 7
    %v2158 = vsub.s32 5, %v2157
    %v2159 = vrot.slane %v2097, %v2158
    %v2160 = vlaneseq
    %v2161 = vshrl.u32 %v2160, 7
    %v2162 = vsub.s32 6, %v2161
    %v2163 = vrot.slane %v2097, %v2162
    %v2164 = vlaneseq
    %v2165 = vshrl.u32 %v2164, 7
    %v2166 = vsub.s32 7, %v2165
    %v2167 = vrot.slane %v2097, %v2166
    %v2168 = vlaneseq
    %v2169 = vshrl.u32 %v2168, 7
    %v2170 = vsub.s32 0, %v2169
    %v2171 = vrot.slane %v2098, %v2170
    %v2172 = vlaneseq
    %v2173 = vshrl.u32 %v2172, 7
    %v2174 = vsub.s32 1, %v2173
    %v2175 = vrot.slane %v2098, %v2174
    %v2176 = vlaneseq
    %v2177 = vshrl.u32 %v2176, 7
    %v2178 = vsub.s32 2, %v2177
    %v2179 = vrot.slane %v2098, %v2178
    %v2180 = vlaneseq
    %v2181 = vshrl.u32 %v2180, 7
    %v2182 = vsub.s32 3, %v2181
    %v2183 = vrot.slane %v2098, %v2182
    %v2184 = vlaneseq
    %v2185 = vshrl.u32 %v2184, 7
    %v2186 = vsub.s32 4, %v2185
    %v2187 = vrot.slane %v2098, %v2186
    %v2188 = vlaneseq
    %v2189 = vshrl.u32 %v2188, 7
    %v2190 = vsub.s32 5, %v2189
    %v2191 = vrot.slane %v2098, %v2190
    %v2192 = vlaneseq
    %v2193 = vshrl.u32 %v2192, 7
    %v2194 = vsub.s32 6, %v2193
    %v2195 = vrot.slane %v2098, %v2194
    %v2196 = vlaneseq
    %v2197 = vshrl.u32 %v2196, 7
    %v2198 = vsub.s32 7, %v2197
    %v2199 = vrot.slane %v2098, %v2198
    %v2200 = vlaneseq
    %v2201 = vshrl.u32 %v2200, 7
    %v2202 = vsub.s32 0, %v2201
    %v2203 = vrot.slane %v2099, %v2202
    %v2723 = vunpack.c.l.b16 %v1602
    %v2724 = vunpack.c.h.b16 %v1602
    %v2725 = vunpack.c.l.b16 %v1603
    %v2726 = vunpack.c.h.b16 %v1603
    %v2727 = vunpack.c.l.b16 %v1604
    %v2728 = vunpack.c.h.b16 %v1604
    %v2729 = vunpack.c.l.b16 %v1605
    %v2730 = vunpack.c.h.b16 %v1605
    %v2731 = vunpack.c.l.b16 %v1606
    %v2732 = vunpack.c.h.b16 %v1606
    %v2733 = vunpack.c.l.b16 %v1607
    %v2734 = vunpack.c.h.b16 %v1607
    %v2735 = vunpack.c.l.b16 %v1608
    %v2736 = vunpack.c.h.b16 %v1608
    %v2737 = vunpack.c.l.b16 %v1609
    %v2738 = vunpack.c.h.b16 %v1609
    %v2739 = vunpack.c.l.b16 %v1610
    %v2740 = vunpack.c.h.b16 %v1610
    %v2741 = vunpack.c.l.b16 %v1611
    %v2742 = vunpack.c.h.b16 %v1611
    %v2743 = vunpack.c.l.b16 %v1612
    %v2744 = vunpack.c.h.b16 %v1612
    %v2745 = vunpack.c.l.b16 %v1613
    %v2746 = vunpack.c.h.b16 %v1613
    %v2747 = vunpack.c.l.b16 %v1614
    %v2748 = vunpack.c.l.b16 %v1615
    %v2749 = vunpack.c.h.b16 %v1615
    %v2750 = vunpack.c.l.b16 %v1616
    %v2751 = vunpack.c.h.b16 %v1616
    %v2752 = vunpack.c.l.b16 %v1617
    %v2753 = vunpack.c.h.b16 %v1617
    %v2754 = vunpack.c.l.b16 %v1618
    %v2755 = vunpack.c.h.b16 %v1618
    %v2756 = vunpack.c.l.b16 %v1619
    %v2757 = vunpack.c.h.b16 %v1619
    %v2758 = vunpack.c.l.b16 %v1620
    %v2759 = vunpack.c.h.b16 %v1620
    %v2760 = vunpack.c.l.b16 %v1621
    %v2761 = vunpack.c.h.b16 %v1621
    %v2762 = vunpack.c.l.b16 %v1622
    %v2763 = vunpack.c.h.b16 %v1622
    %v2764 = vunpack.c.l.b16 %v1623
    %v2765 = vunpack.c.h.b16 %v1623
    %v2766 = vunpack.c.l.b16 %v1624
    %v2767 = vunpack.c.h.b16 %v1624
    %v2768 = vunpack.c.l.b16 %v1625
    %v2769 = vunpack.c.h.b16 %v1625
    %v2770 = vunpack.c.l.b16 %v1626
    %v2771 = vunpack.c.h.b16 %v1626
    %v2772 = vunpack.c.l.b16 %v1627
    %v2773 = vunpack.c.l.b16 %v1628
    %v2774 = vunpack.c.h.b16 %v1628
    %v2775 = vunpack.c.l.b16 %v1629
    %v2776 = vunpack.c.h.b16 %v1629
    %v2777 = vunpack.c.l.b16 %v1630
    %v2778 = vunpack.c.h.b16 %v1630
    %v2779 = vunpack.c.l.b16 %v1631
    %v2780 = vunpack.c.h.b16 %v1631
    %v2781 = vunpack.c.l.b16 %v1632
    %v2782 = vunpack.c.h.b16 %v1632
    %v2783 = vunpack.c.l.b16 %v1633
    %v2784 = vunpack.c.h.b16 %v1633
    %v2785 = vunpack.c.l.b16 %v1634
    %v2786 = vunpack.c.h.b16 %v1634
    %v2787 = vunpack.c.l.b16 %v1635
    %v2788 = vunpack.c.h.b16 %v1635
    %v2789 = vunpack.c.l.b16 %v1636
    %v2790 = vunpack.c.h.b16 %v1636
    %v2791 = vunpack.c.l.b16 %v1637
    %v2792 = vunpack.c.h.b16 %v1637
    %v2793 = vunpack.c.l.b16 %v1638
    %v2794 = vunpack.c.h.b16 %v1638
    %v2795 = vunpack.c.l.b16 %v1639
    %v2796 = vunpack.c.h.b16 %v1639
    %v2797 = vunpack.c.l.b16 %v1640
    %v2798 = vunpack.c.l.b16 %v1641
    %v2799 = vunpack.c.h.b16 %v1641
    %v2800 = vunpack.c.l.b16 %v1642
    %v2801 = vunpack.c.h.b16 %v1642
    %v2802 = vunpack.c.l.b16 %v1643
    %v2803 = vunpack.c.h.b16 %v1643
    %v2804 = vunpack.c.l.b16 %v1644
    %v2805 = vunpack.c.h.b16 %v1644
    %v2806 = vunpack.c.l.b16 %v1645
    %v2807 = vunpack.c.h.b16 %v1645
    %v2808 = vunpack.c.l.b16 %v1646
    %v2809 = vunpack.c.h.b16 %v1646
    %v2810 = vunpack.c.l.b16 %v1647
    %v2811 = vunpack.c.h.b16 %v1647
    %v2812 = vunpack.c.l.b16 %v1648
    %v2813 = vunpack.c.h.b16 %v1648
    %v2814 = vunpack.c.l.b16 %v1649
    %v2815 = vunpack.c.h.b16 %v1649
    %v2816 = vunpack.c.l.b16 %v1650
    %v2817 = vunpack.c.h.b16 %v1650
    %v2818 = vunpack.c.l.b16 %v1651
    %v2819 = vunpack.c.h.b16 %v1651
    %v2820 = vunpack.c.l.b16 %v1652
    %v2821 = vunpack.c.h.b16 %v1652
    %v2822 = vunpack.c.l.b16 %v1653
    %v2823 = vunpack.c.l.b16 %v1654
    %v2824 = vunpack.c.h.b16 %v1654
    %v2825 = vunpack.c.l.b16 %v1655
    %v2826 = vunpack.c.h.b16 %v1655
    %v2827 = vunpack.c.l.b16 %v1656
    %v2828 = vunpack.c.h.b16 %v1656
    %v2829 = vunpack.c.l.b16 %v1657
    %v2830 = vunpack.c.h.b16 %v1657
    %v2831 = vunpack.c.l.b16 %v1658
    %v2832 = vunpack.c.h.b16 %v1658
    %v2833 = vunpack.c.l.b16 %v1659
    %v2834 = vunpack.c.h.b16 %v1659
    %v2835 = vunpack.c.l.b16 %v1660
    %v2836 = vunpack.c.h.b16 %v1660
    %v2837 = vunpack.c.l.b16 %v1661
    %v2838 = vunpack.c.h.b16 %v1661
    %v2839 = vunpack.c.l.b16 %v1662
    %v2840 = vunpack.c.h.b16 %v1662
    %v2841 = vunpack.c.l.b16 %v1663
    %v2842 = vunpack.c.h.b16 %v1663
    %v2843 = vunpack.c.l.b16 %v1664
    %v2844 = vunpack.c.h.b16 %v1664
    %v2845 = vunpack.c.l.b16 %v1665
    %v2846 = vunpack.c.h.b16 %v1665
    %v2847 = vunpack.c.l.b16 %v1666
    %v2848 = vunpack.c.l.b16 %v1667
    %v2849 = vunpack.c.h.b16 %v1667
    %v2850 = vunpack.c.l.b16 %v1668
    %v2851 = vunpack.c.h.b16 %v1668
    %v2852 = vunpack.c.l.b16 %v1669
    %v2853 = vunpack.c.h.b16 %v1669
    %v2854 = vunpack.c.l.b16 %v1670
    %v2855 = vunpack.c.h.b16 %v1670
    %v2856 = vunpack.c.l.b16 %v1671
    %v2857 = vunpack.c.h.b16 %v1671
    %v2858 = vunpack.c.l.b16 %v1672
    %v2859 = vunpack.c.h.b16 %v1672
    %v2860 = vunpack.c.l.b16 %v1673
    %v2861 = vunpack.c.h.b16 %v1673
    %v2862 = vunpack.c.l.b16 %v1674
    %v2863 = vunpack.c.h.b16 %v1674
    %v2864 = vunpack.c.l.b16 %v1675
    %v2865 = vunpack.c.h.b16 %v1675
    %v2866 = vunpack.c.l.b16 %v1676
    %v2867 = vunpack.c.h.b16 %v1676
    %v2868 = vunpack.c.l.b16 %v1677
    %v2869 = vunpack.c.h.b16 %v1677
    %v2870 = vunpack.c.l.b16 %v1678
    %v2871 = vunpack.c.h.b16 %v1678
    %v2872 = vunpack.c.l.b16 %v1679
    %v2873 = vunpack.c.l.b16 %v1680
    %v2874 = vunpack.c.h.b16 %v1680
    %v2875 = vunpack.c.l.b16 %v1681
    %v2876 = vunpack.c.h.b16 %v1681
    %v2877 = vunpack.c.l.b16 %v1682
    %v2878 = vunpack.c.h.b16 %v1682
    %v2879 = vunpack.c.l.b16 %v1683
    %v2880 = vunpack.c.h.b16 %v1683
    %v2881 = vunpack.c.l.b16 %v1684
    %v2882 = vunpack.c.h.b16 %v1684
    %v2883 = vunpack.c.l.b16 %v1685
    %v2884 = vunpack.c.h.b16 %v1685
    %v2885 = vunpack.c.l.b16 %v1686
    %v2886 = vunpack.c.h.b16 %v1686
    %v2887 = vunpack.c.l.b16 %v1687
    %v2888 = vunpack.c.h.b16 %v1687
    %v2889 = vunpack.c.l.b16 %v1688
    %v2890 = vunpack.c.h.b16 %v1688
    %v2891 = vunpack.c.l.b16 %v1689
    %v2892 = vunpack.c.h.b16 %v1689
    %v2893 = vunpack.c.l.b16 %v1690
    %v2894 = vunpack.c.h.b16 %v1690
    %v2895 = vunpack.c.l.b16 %v1691
    %v2896 = vunpack.c.h.b16 %v1691
    %v2897 = vunpack.c.l.b16 %v1692
    %v2898 = vunpack.c.l.b16 %v1693
    %v2899 = vunpack.c.h.b16 %v1693
    %v2900 = vunpack.c.l.b16 %v1694
    %v2901 = vunpack.c.h.b16 %v1694
    %v2902 = vunpack.c.l.b16 %v1695
    %v2903 = vunpack.c.h.b16 %v1695
    %v2904 = vunpack.c.l.b16 %v1696
    %v2905 = vunpack.c.h.b16 %v1696
    %v2906 = vunpack.c.l.b16 %v1697
    %v2907 = vunpack.c.h.b16 %v1697
    %v2908 = vunpack.c.l.b16 %v1698
    %v2909 = vunpack.c.h.b16 %v1698
    %v2910 = vunpack.c.l.b16 %v1699
    %v2911 = vunpack.c.h.b16 %v1699
    %v2912 = vunpack.c.l.b16 %v1700
    %v2913 = vunpack.c.h.b16 %v1700
    %v2914 = vunpack.c.l.b16 %v1701
    %v2915 = vunpack.c.h.b16 %v1701
    %v2916 = vunpack.c.l.b16 %v1702
    %v2917 = vunpack.c.h.b16 %v1702
    %v2918 = vunpack.c.l.b16 %v1703
    %v2919 = vunpack.c.h.b16 %v1703
    %v2920 = vunpack.c.l.b16 %v1704
    %v2921 = vunpack.c.h.b16 %v1704
    %v2922 = vunpack.c.l.b16 %v1705
    %v2923 = vunpack.c.l.b16 %v1706
    %v2924 = vunpack.c.h.b16 %v1706
    %v2925 = vunpack.c.l.b16 %v1707
    %v2926 = vunpack.c.h.b16 %v1707
    %v2927 = vunpack.c.l.b16 %v1708
    %v2928 = vunpack.c.h.b16 %v1708
    %v2929 = vunpack.c.l.b16 %v1709
    %v2930 = vunpack.c.h.b16 %v1709
    %v2931 = vunpack.c.l.b16 %v1710
    %v2932 = vunpack.c.h.b16 %v1710
    %v2933 = vunpack.c.l.b16 %v1711
    %v2934 = vunpack.c.h.b16 %v1711
    %v2935 = vunpack.c.l.b16 %v1712
    %v2936 = vunpack.c.h.b16 %v1712
    %v2937 = vunpack.c.l.b16 %v1713
    %v2938 = vunpack.c.h.b16 %v1713
    %v2939 = vunpack.c.l.b16 %v1714
    %v2940 = vunpack.c.h.b16 %v1714
    %v2941 = vunpack.c.l.b16 %v1715
    %v2942 = vunpack.c.h.b16 %v1715
    %v2943 = vunpack.c.l.b16 %v1716
    %v2944 = vunpack.c.h.b16 %v1716
    %v2945 = vunpack.c.l.b16 %v1717
    %v2946 = vunpack.c.h.b16 %v1717
    %v2947 = vunpack.c.l.b16 %v1718
    %v2948 = vunpack.c.l.b16 %v1719
    %v2949 = vunpack.c.h.b16 %v1719
    %v2950 = vunpack.c.l.b16 %v1720
    %v2951 = vunpack.c.h.b16 %v1720
    %v2952 = vunpack.c.l.b16 %v1721
    %v2953 = vunpack.c.h.b16 %v1721
    %v2954 = vunpack.c.l.b16 %v1722
    %v2955 = vunpack.c.h.b16 %v1722
    %v2956 = vunpack.c.l.b16 %v1723
    %v2957 = vunpack.c.h.b16 %v1723
    %v2958 = vunpack.c.l.b16 %v1724
    %v2959 = vunpack.c.h.b16 %v1724
    %v2960 = vunpack.c.l.b16 %v1725
    %v2961 = vunpack.c.h.b16 %v1725
    %v2962 = vunpack.c.l.b16 %v1726
    %v2963 = vunpack.c.h.b16 %v1726
    %v2964 = vunpack.c.l.b16 %v1727
    %v2965 = vunpack.c.h.b16 %v1727
    %v2966 = vunpack.c.l.b16 %v1728
    %v2967 = vunpack.c.h.b16 %v1728
    %v2968 = vunpack.c.l.b16 %v1729
    %v2969 = vunpack.c.h.b16 %v1729
    %v2970 = vunpack.c.l.b16 %v1730
    %v2971 = vunpack.c.h.b16 %v1730
    %v2972 = vunpack.c.l.b16 %v1731
    %v2973 = vunpack.c.l.b16 %v1732
    %v2974 = vunpack.c.h.b16 %v1732
    %v2975 = vunpack.c.l.b16 %v1733
    %v2976 = vunpack.c.h.b16 %v1733
    %v2977 = vunpack.c.l.b16 %v1734
    %v2978 = vunpack.c.h.b16 %v1734
    %v2979 = vunpack.c.l.b16 %v1735
    %v2980 = vunpack.c.h.b16 %v1735
    %v2981 = vunpack.c.l.b16 %v1736
    %v2982 = vunpack.c.h.b16 %v1736
    %v2983 = vunpack.c.l.b16 %v1737
    %v2984 = vunpack.c.h.b16 %v1737
    %v2985 = vunpack.c.l.b16 %v1738
    %v2986 = vunpack.c.h.b16 %v1738
    %v2987 = vunpack.c.l.b16 %v1739
    %v2988 = vunpack.c.h.b16 %v1739
    %v2989 = vunpack.c.l.b16 %v1740
    %v2990 = vunpack.c.h.b16 %v1740
    %v2991 = vunpack.c.l.b16 %v1741
    %v2992 = vunpack.c.h.b16 %v1741
    %v2993 = vunpack.c.l.b16 %v1742
    %v2994 = vunpack.c.h.b16 %v1742
    %v2995 = vunpack.c.l.b16 %v1743
    %v2996 = vunpack.c.h.b16 %v1743
    %v2997 = vunpack.c.l.b16 %v1744
    %v2998 = vunpack.c.l.b16 %v1745
    %v2999 = vunpack.c.h.b16 %v1745
    %v3000 = vunpack.c.l.b16 %v1746
    %v3001 = vunpack.c.h.b16 %v1746
    %v3002 = vunpack.c.l.b16 %v1747
    %v3003 = vunpack.c.h.b16 %v1747
    %v3004 = vunpack.c.l.b16 %v1748
    %v3005 = vunpack.c.h.b16 %v1748
    %v3006 = vunpack.c.l.b16 %v1749
    %v3007 = vunpack.c.h.b16 %v1749
    %v3008 = vunpack.c.l.b16 %v1750
    %v3009 = vunpack.c.h.b16 %v1750
    %v3010 = vunpack.c.l.b16 %v1751
    %v3011 = vunpack.c.h.b16 %v1751
    %v3012 = vunpack.c.l.b16 %v1752
    %v3013 = vunpack.c.h.b16 %v1752
    %v3014 = vunpack.c.l.b16 %v1753
    %v3015 = vunpack.c.h.b16 %v1753
    %v3016 = vunpack.c.l.b16 %v1754
    %v3017 = vunpack.c.h.b16 %v1754
    %v3018 = vunpack.c.l.b16 %v1755
    %v3019 = vunpack.c.h.b16 %v1755
    %v3020 = vunpack.c.l.b16 %v1756
    %v3021 = vunpack.c.h.b16 %v1756
    %v3022 = vunpack.c.l.b16 %v1757
    %v3023 = vunpack.c.l.b16 %v1758
    %v3024 = vunpack.c.h.b16 %v1758
    %v3025 = vunpack.c.l.b16 %v1759
    %v3026 = vunpack.c.h.b16 %v1759
    %v3027 = vunpack.c.l.b16 %v1760
    %v3028 = vunpack.c.h.b16 %v1760
    %v3029 = vunpack.c.l.b16 %v1761
    %v3030 = vunpack.c.h.b16 %v1761
    %v3031 = vunpack.c.l.b16 %v1762
    %v3032 = vunpack.c.h.b16 %v1762
    %v3033 = vunpack.c.l.b16 %v1763
    %v3034 = vunpack.c.h.b16 %v1763
    %v3035 = vunpack.c.l.b16 %v1764
    %v3036 = vunpack.c.h.b16 %v1764
    %v3037 = vunpack.c.l.b16 %v1765
    %v3038 = vunpack.c.h.b16 %v1765
    %v3039 = vunpack.c.l.b16 %v1766
    %v3040 = vunpack.c.h.b16 %v1766
    %v3041 = vunpack.c.l.b16 %v1767
    %v3042 = vunpack.c.h.b16 %v1767
    %v3043 = vunpack.c.l.b16 %v1768
    %v3044 = vunpack.c.h.b16 %v1768
    %v3045 = vunpack.c.l.b16 %v1769
    %v3046 = vunpack.c.h.b16 %v1769
    %v3047 = vunpack.c.l.b16 %v1770
    %v3048 = vunpack.c.l.b16 %v1771
    %v3049 = vunpack.c.h.b16 %v1771
    %v3050 = vunpack.c.l.b16 %v1772
    %v3051 = vunpack.c.h.b16 %v1772
    %v3052 = vunpack.c.l.b16 %v1773
    %v3053 = vunpack.c.h.b16 %v1773
    %v3054 = vunpack.c.l.b16 %v1774
    %v3055 = vunpack.c.h.b16 %v1774
    %v3056 = vunpack.c.l.b16 %v1775
    %v3057 = vunpack.c.h.b16 %v1775
    %v3058 = vunpack.c.l.b16 %v1776
    %v3059 = vunpack.c.h.b16 %v1776
    %v3060 = vunpack.c.l.b16 %v1777
    %v3061 = vunpack.c.h.b16 %v1777
    %v3062 = vunpack.c.l.b16 %v1778
    %v3063 = vunpack.c.h.b16 %v1778
    %v3064 = vunpack.c.l.b16 %v1779
    %v3065 = vunpack.c.h.b16 %v1779
    %v3066 = vunpack.c.l.b16 %v1780
    %v3067 = vunpack.c.h.b16 %v1780
    %v3068 = vunpack.c.l.b16 %v1781
    %v3069 = vunpack.c.h.b16 %v1781
    %v3070 = vunpack.c.l.b16 %v1782
    %v3071 = vunpack.c.h.b16 %v1782
    %v3072 = vunpack.c.l.b16 %v1783
    %v3073 = vunpack.c.l.b16 %v1784
    %v3074 = vunpack.c.h.b16 %v1784
    %v3075 = vunpack.c.l.b16 %v1785
    %v3076 = vunpack.c.h.b16 %v1785
    %v3077 = vunpack.c.l.b16 %v1786
    %v3078 = vunpack.c.h.b16 %v1786
    %v3079 = vunpack.c.l.b16 %v1787
    %v3080 = vunpack.c.h.b16 %v1787
    %v3081 = vunpack.c.l.b16 %v1788
    %v3082 = vunpack.c.h.b16 %v1788
    %v3083 = vunpack.c.l.b16 %v1789
    %v3084 = vunpack.c.h.b16 %v1789
    %v3085 = vunpack.c.l.b16 %v1790
    %v3086 = vunpack.c.h.b16 %v1790
    %v3087 = vunpack.c.l.b16 %v1791
    %v3088 = vunpack.c.h.b16 %v1791
    %v3089 = vunpack.c.l.b16 %v1792
    %v3090 = vunpack.c.h.b16 %v1792
    %v3091 = vunpack.c.l.b16 %v1793
    %v3092 = vunpack.c.h.b16 %v1793
    %v3093 = vunpack.c.l.b16 %v1794
    %v3094 = vunpack.c.h.b16 %v1794
    %v3095 = vunpack.c.l.b16 %v1795
    %v3096 = vunpack.c.h.b16 %v1795
    %v3097 = vunpack.c.l.b16 %v1796
    %v3098 = vunpack.c.l.b16 %v1797
    %v3099 = vunpack.c.h.b16 %v1797
    %v3100 = vunpack.c.l.b16 %v1798
    %v3101 = vunpack.c.h.b16 %v1798
    %v3102 = vunpack.c.l.b16 %v1799
    %v3103 = vunpack.c.h.b16 %v1799
    %v3104 = vunpack.c.l.b16 %v1800
    %v3105 = vunpack.c.h.b16 %v1800
    %v3106 = vunpack.c.l.b16 %v1801
    %v3107 = vunpack.c.h.b16 %v1801
    %v3108 = vunpack.c.l.b16 %v1802
    %v3109 = vunpack.c.h.b16 %v1802
    %v3110 = vunpack.c.l.b16 %v1803
    %v3111 = vunpack.c.h.b16 %v1803
    %v3112 = vunpack.c.l.b16 %v1804
    %v3113 = vunpack.c.h.b16 %v1804
    %v3114 = vunpack.c.l.b16 %v1805
    %v3115 = vunpack.c.h.b16 %v1805
    %v3116 = vunpack.c.l.b16 %v1806
    %v3117 = vunpack.c.h.b16 %v1806
    %v3118 = vunpack.c.l.b16 %v1807
    %v3119 = vunpack.c.h.b16 %v1807
    %v3120 = vunpack.c.l.b16 %v1808
    %v3121 = vunpack.c.h.b16 %v1808
    %v3122 = vunpack.c.l.b16 %v1809
    %v3123 = vunpack.c.l.b16 %v1810
    %v3124 = vunpack.c.h.b16 %v1810
    %v3125 = vunpack.c.l.b16 %v1811
    %v3126 = vunpack.c.h.b16 %v1811
    %v3127 = vunpack.c.l.b16 %v1812
    %v3128 = vunpack.c.h.b16 %v1812
    %v3129 = vunpack.c.l.b16 %v1813
    %v3130 = vunpack.c.h.b16 %v1813
    %v3131 = vunpack.c.l.b16 %v1814
    %v3132 = vunpack.c.h.b16 %v1814
    %v3133 = vunpack.c.l.b16 %v1815
    %v3134 = vunpack.c.h.b16 %v1815
    %v3135 = vunpack.c.l.b16 %v1816
    %v3136 = vunpack.c.h.b16 %v1816
    %v3137 = vunpack.c.l.b16 %v1817
    %v3138 = vunpack.c.h.b16 %v1817
    %v3139 = vunpack.c.l.b16 %v1818
    %v3140 = vunpack.c.h.b16 %v1818
    %v3141 = vunpack.c.l.b16 %v1819
    %v3142 = vunpack.c.h.b16 %v1819
    %v3143 = vunpack.c.l.b16 %v1820
    %v3144 = vunpack.c.h.b16 %v1820
    %v3145 = vunpack.c.l.b16 %v1821
    %v3146 = vunpack.c.h.b16 %v1821
    %v3147 = vunpack.c.l.b16 %v1822
    %v3148 = vunpack.c.l.b16 %v1823
    %v3149 = vunpack.c.h.b16 %v1823
    %v3150 = vunpack.c.l.b16 %v1824
    %v3151 = vunpack.c.h.b16 %v1824
    %v3152 = vunpack.c.l.b16 %v1825
    %v3153 = vunpack.c.h.b16 %v1825
    %v3154 = vunpack.c.l.b16 %v1826
    %v3155 = vunpack.c.h.b16 %v1826
    %v3156 = vunpack.c.l.b16 %v1827
    %v3157 = vunpack.c.h.b16 %v1827
    %v3158 = vunpack.c.l.b16 %v1828
    %v3159 = vunpack.c.h.b16 %v1828
    %v3160 = vunpack.c.l.b16 %v1829
    %v3161 = vunpack.c.h.b16 %v1829
    %v3162 = vunpack.c.l.b16 %v1830
    %v3163 = vunpack.c.h.b16 %v1830
    %v3164 = vunpack.c.l.b16 %v1831
    %v3165 = vunpack.c.h.b16 %v1831
    %v3166 = vunpack.c.l.b16 %v1832
    %v3167 = vunpack.c.h.b16 %v1832
    %v3168 = vunpack.c.l.b16 %v1833
    %v3169 = vunpack.c.h.b16 %v1833
    %v3170 = vunpack.c.l.b16 %v1834
    %v3171 = vunpack.c.h.b16 %v1834
    %v3172 = vunpack.c.l.b16 %v1835
    %v3173 = vunpack.c.l.b16 %v1836
    %v3174 = vunpack.c.h.b16 %v1836
    %v3175 = vunpack.c.l.b16 %v1837
    %v3176 = vunpack.c.h.b16 %v1837
    %v3177 = vunpack.c.l.b16 %v1838
    %v3178 = vunpack.c.h.b16 %v1838
    %v3179 = vunpack.c.l.b16 %v1839
    %v3180 = vunpack.c.h.b16 %v1839
    %v3181 = vunpack.c.l.b16 %v1840
    %v3182 = vunpack.c.h.b16 %v1840
    %v3183 = vunpack.c.l.b16 %v1841
    %v3184 = vunpack.c.h.b16 %v1841
    %v3185 = vunpack.c.l.b16 %v1842
    %v3186 = vunpack.c.h.b16 %v1842
    %v3187 = vunpack.c.l.b16 %v1843
    %v3188 = vunpack.c.h.b16 %v1843
    %v3189 = vunpack.c.l.b16 %v1844
    %v3190 = vunpack.c.h.b16 %v1844
    %v3191 = vunpack.c.l.b16 %v1845
    %v3192 = vunpack.c.h.b16 %v1845
    %v3193 = vunpack.c.l.b16 %v1846
    %v3194 = vunpack.c.h.b16 %v1846
    %v3195 = vunpack.c.l.b16 %v1847
    %v3196 = vunpack.c.h.b16 %v1847
    %v3197 = vunpack.c.l.b16 %v1848
    %v3198 = vunpack.c.l.b16 %v1849
    %v3199 = vunpack.c.h.b16 %v1849
    %v3200 = vunpack.c.l.b16 %v1850
    %v3201 = vunpack.c.h.b16 %v1850
    %v3202 = vunpack.c.l.b16 %v1851
    %v3203 = vunpack.c.h.b16 %v1851
    %v3204 = vunpack.c.l.b16 %v1852
    %v3205 = vunpack.c.h.b16 %v1852
    %v3206 = vunpack.c.l.b16 %v1853
    %v3207 = vunpack.c.h.b16 %v1853
    %v3208 = vunpack.c.l.b16 %v1854
    %v3209 = vunpack.c.h.b16 %v1854
    %v3210 = vunpack.c.l.b16 %v1855
    %v3211 = vunpack.c.h.b16 %v1855
    %v3212 = vunpack.c.l.b16 %v1856
    %v3213 = vunpack.c.h.b16 %v1856
    %v3214 = vunpack.c.l.b16 %v1857
    %v3215 = vunpack.c.h.b16 %v1857
    %v3216 = vunpack.c.l.b16 %v1858
    %v3217 = vunpack.c.h.b16 %v1858
    %v3218 = vunpack.c.l.b16 %v1859
    %v3219 = vunpack.c.h.b16 %v1859
    %v3220 = vunpack.c.l.b16 %v1860
    %v3221 = vunpack.c.h.b16 %v1860
    %v3222 = vunpack.c.l.b16 %v1861
    %v3223 = vunpack.c.l.b16 %v1862
    %v3224 = vunpack.c.h.b16 %v1862
    %v3225 = vunpack.c.l.b16 %v1863
    %v3226 = vunpack.c.h.b16 %v1863
    %v3227 = vunpack.c.l.b16 %v1864
    %v3228 = vunpack.c.h.b16 %v1864
    %v3229 = vunpack.c.l.b16 %v1865
    %v3230 = vunpack.c.h.b16 %v1865
    %v3231 = vunpack.c.l.b16 %v1866
    %v3232 = vunpack.c.h.b16 %v1866
    %v3233 = vunpack.c.l.b16 %v1867
    %v3234 = vunpack.c.h.b16 %v1867
    %v3235 = vunpack.c.l.b16 %v1868
    %v3236 = vunpack.c.h.b16 %v1868
    %v3237 = vunpack.c.l.b16 %v1869
    %v3238 = vunpack.c.h.b16 %v1869
    %v3239 = vunpack.c.l.b16 %v1870
    %v3240 = vunpack.c.h.b16 %v1870
    %v3241 = vunpack.c.l.b16 %v1871
    %v3242 = vunpack.c.h.b16 %v1871
    %v3243 = vunpack.c.l.b16 %v1872
    %v3244 = vunpack.c.h.b16 %v1872
    %v3245 = vunpack.c.l.b16 %v1873
    %v3246 = vunpack.c.h.b16 %v1873
    %v3247 = vunpack.c.l.b16 %v1874
    %v3248 = vunpack.c.l.b16 %v1875
    %v3249 = vunpack.c.h.b16 %v1875
    %v3250 = vunpack.c.l.b16 %v1876
    %v3251 = vunpack.c.h.b16 %v1876
    %v3252 = vunpack.c.l.b16 %v1877
    %v3253 = vunpack.c.h.b16 %v1877
    %v3254 = vunpack.c.l.b16 %v1878
    %v3255 = vunpack.c.h.b16 %v1878
    %v3256 = vunpack.c.l.b16 %v1879
    %v3257 = vunpack.c.h.b16 %v1879
    %v3258 = vunpack.c.l.b16 %v1880
    %v3259 = vunpack.c.h.b16 %v1880
    %v3260 = vunpack.c.l.b16 %v1881
    %v3261 = vunpack.c.h.b16 %v1881
    %v3262 = vunpack.c.l.b16 %v1882
    %v3263 = vunpack.c.h.b16 %v1882
    %v3264 = vunpack.c.l.b16 %v1883
    %v3265 = vunpack.c.h.b16 %v1883
    %v3266 = vunpack.c.l.b16 %v1884
    %v3267 = vunpack.c.h.b16 %v1884
    %v3268 = vunpack.c.l.b16 %v1885
    %v3269 = vunpack.c.h.b16 %v1885
    %v3270 = vunpack.c.l.b16 %v1886
    %v3271 = vunpack.c.h.b16 %v1886
    %v3272 = vunpack.c.l.b16 %v1887
    %v3273 = vunpack.c.l.b16 %v1888
    %v3274 = vunpack.c.h.b16 %v1888
    %v3275 = vunpack.c.l.b16 %v1889
    %v3276 = vunpack.c.h.b16 %v1889
    %v3277 = vunpack.c.l.b16 %v1890
    %v3278 = vunpack.c.h.b16 %v1890
    %v3279 = vunpack.c.l.b16 %v1891
    %v3280 = vunpack.c.h.b16 %v1891
    %v3281 = vunpack.c.l.b16 %v1892
    %v3282 = vunpack.c.h.b16 %v1892
    %v3283 = vunpack.c.l.b16 %v1893
    %v3284 = vunpack.c.h.b16 %v1893
    %v3285 = vunpack.c.l.b16 %v1894
    %v3286 = vunpack.c.h.b16 %v1894
    %v3287 = vunpack.c.l.b16 %v1895
    %v3288 = vunpack.c.h.b16 %v1895
    %v3289 = vunpack.c.l.b16 %v1896
    %v3290 = vunpack.c.h.b16 %v1896
    %v3291 = vunpack.c.l.b16 %v1897
    %v3292 = vunpack.c.h.b16 %v1897
    %v3293 = vunpack.c.l.b16 %v1898
    %v3294 = vunpack.c.h.b16 %v1898
    %v3295 = vunpack.c.l.b16 %v1899
    %v3296 = vunpack.c.h.b16 %v1899
    %v3297 = vunpack.c.l.b16 %v1900
    %v3298 = vunpack.c.l.b16 %v1901
    %v3299 = vunpack.c.h.b16 %v1901
    %v3300 = vunpack.c.l.b16 %v1902
    %v3301 = vunpack.c.h.b16 %v1902
    %v3302 = vunpack.c.l.b16 %v1903
    %v3303 = vunpack.c.h.b16 %v1903
    %v3304 = vunpack.c.l.b16 %v1904
    %v3305 = vunpack.c.h.b16 %v1904
    %v3306 = vunpack.c.l.b16 %v1905
    %v3307 = vunpack.c.h.b16 %v1905
    %v3308 = vunpack.c.l.b16 %v1906
    %v3309 = vunpack.c.h.b16 %v1906
    %v3310 = vunpack.c.l.b16 %v1907
    %v3311 = vunpack.c.h.b16 %v1907
    %v3312 = vunpack.c.l.b16 %v1908
    %v3313 = vunpack.c.h.b16 %v1908
    %v3314 = vunpack.c.l.b16 %v1909
    %v3315 = vunpack.c.h.b16 %v1909
    %v3316 = vunpack.c.l.b16 %v1910
    %v3317 = vunpack.c.h.b16 %v1910
    %v3318 = vunpack.c.l.b16 %v1911
    %v3319 = vunpack.c.h.b16 %v1911
    %v3320 = vunpack.c.l.b16 %v1912
    %v3321 = vunpack.c.h.b16 %v1912
    %v3322 = vunpack.c.l.b16 %v1913
    %v3323 = vunpack.c.l.b16 %v1914
    %v3324 = vunpack.c.h.b16 %v1914
    %v3325 = vunpack.c.l.b16 %v1915
    %v3326 = vunpack.c.h.b16 %v1915
    %v3327 = vunpack.c.l.b16 %v1916
    %v3328 = vunpack.c.h.b16 %v1916
    %v3329 = vunpack.c.l.b16 %v1917
    %v3330 = vunpack.c.h.b16 %v1917
    %v3331 = vunpack.c.l.b16 %v1918
    %v3332 = vunpack.c.h.b16 %v1918
    %v3333 = vunpack.c.l.b16 %v1919
    %v3334 = vunpack.c.h.b16 %v1919
    %v3335 = vunpack.c.l.b16 %v1920
    %v3336 = vunpack.c.h.b16 %v1920
    %v3337 = vunpack.c.l.b16 %v1921
    %v3338 = vunpack.c.h.b16 %v1921
    %v3339 = vunpack.c.l.b16 %v1922
    %v3340 = vunpack.c.h.b16 %v1922
    %v3341 = vunpack.c.l.b16 %v1923
    %v3342 = vunpack.c.h.b16 %v1923
    %v3343 = vunpack.c.l.b16 %v1924
    %v3344 = vunpack.c.h.b16 %v1924
    %v3345 = vunpack.c.l.b16 %v1925
    %v3346 = vunpack.c.h.b16 %v1925
    %v3347 = vunpack.c.l.b16 %v1926
    %v3348 = vunpack.c.l.b16 %v1927
    %v3349 = vunpack.c.h.b16 %v1927
    %v3350 = vunpack.c.l.b16 %v1928
    %v3351 = vunpack.c.h.b16 %v1928
    %v3352 = vunpack.c.l.b16 %v1929
    %v3353 = vunpack.c.h.b16 %v1929
    %v3354 = vunpack.c.l.b16 %v1930
    %v3355 = vunpack.c.h.b16 %v1930
    %v3356 = vunpack.c.l.b16 %v1931
    %v3357 = vunpack.c.h.b16 %v1931
    %v3358 = vunpack.c.l.b16 %v1932
    %v3359 = vunpack.c.h.b16 %v1932
    %v3360 = vunpack.c.l.b16 %v1933
    %v3361 = vunpack.c.h.b16 %v1933
    %v3362 = vunpack.c.l.b16 %v1934
    %v3363 = vunpack.c.h.b16 %v1934
    %v3364 = vunpack.c.l.b16 %v1935
    %v3365 = vunpack.c.h.b16 %v1935
    %v3366 = vunpack.c.l.b16 %v1936
    %v3367 = vunpack.c.h.b16 %v1936
    %v3368 = vunpack.c.l.b16 %v1937
    %v3369 = vunpack.c.h.b16 %v1937
    %v3370 = vunpack.c.l.b16 %v1938
    %v3371 = vunpack.c.h.b16 %v1938
    %v3372 = vunpack.c.l.b16 %v1939
    %v3373 = vunpack.c.l.b16 %v1940
    %v3374 = vunpack.c.h.b16 %v1940
    %v3375 = vunpack.c.l.b16 %v1941
    %v3376 = vunpack.c.h.b16 %v1941
    %v3377 = vunpack.c.l.b16 %v1942
    %v3378 = vunpack.c.h.b16 %v1942
    %v3379 = vunpack.c.l.b16 %v1943
    %v3380 = vunpack.c.h.b16 %v1943
    %v3381 = vunpack.c.l.b16 %v1944
    %v3382 = vunpack.c.h.b16 %v1944
    %v3383 = vunpack.c.l.b16 %v1945
    %v3384 = vunpack.c.h.b16 %v1945
    %v3385 = vunpack.c.l.b16 %v1946
    %v3386 = vunpack.c.h.b16 %v1946
    %v3387 = vunpack.c.l.b16 %v1947
    %v3388 = vunpack.c.h.b16 %v1947
    %v3389 = vunpack.c.l.b16 %v1948
    %v3390 = vunpack.c.h.b16 %v1948
    %v3391 = vunpack.c.l.b16 %v1949
    %v3392 = vunpack.c.h.b16 %v1949
    %v3393 = vunpack.c.l.b16 %v1950
    %v3394 = vunpack.c.h.b16 %v1950
    %v3395 = vunpack.c.l.b16 %v1951
    %v3396 = vunpack.c.h.b16 %v1951
    %v3397 = vunpack.c.l.b16 %v1952
    %v3398 = vunpack.c.l.b16 %v1953
    %v3399 = vunpack.c.h.b16 %v1953
    %v3400 = vunpack.c.l.b16 %v1954
    %v3401 = vunpack.c.h.b16 %v1954
    %v3402 = vunpack.c.l.b16 %v1955
    %v3403 = vunpack.c.h.b16 %v1955
    %v3404 = vunpack.c.l.b16 %v1956
    %v3405 = vunpack.c.h.b16 %v1956
    %v3406 = vunpack.c.l.b16 %v1957
    %v3407 = vunpack.c.h.b16 %v1957
    %v3408 = vunpack.c.l.b16 %v1958
    %v3409 = vunpack.c.h.b16 %v1958
    %v3410 = vunpack.c.l.b16 %v1959
    %v3411 = vunpack.c.h.b16 %v1959
    %v3412 = vunpack.c.l.b16 %v1960
    %v3413 = vunpack.c.h.b16 %v1960
    %v3414 = vunpack.c.l.b16 %v1961
    %v3415 = vunpack.c.h.b16 %v1961
    %v3416 = vunpack.c.l.b16 %v1962
    %v3417 = vunpack.c.h.b16 %v1962
    %v3418 = vunpack.c.l.b16 %v1963
    %v3419 = vunpack.c.h.b16 %v1963
    %v3420 = vunpack.c.l.b16 %v1964
    %v3421 = vunpack.c.h.b16 %v1964
    %v3422 = vunpack.c.l.b16 %v1965
    %v3423 = vunpack.c.l.b16 %v1966
    %v3424 = vunpack.c.h.b16 %v1966
    %v3425 = vunpack.c.l.b16 %v1967
    %v3426 = vunpack.c.h.b16 %v1967
    %v3427 = vunpack.c.l.b16 %v1968
    %v3428 = vunpack.c.h.b16 %v1968
    %v3429 = vunpack.c.l.b16 %v1969
    %v3430 = vunpack.c.h.b16 %v1969
    %v3431 = vunpack.c.l.b16 %v1970
    %v3432 = vunpack.c.h.b16 %v1970
    %v3433 = vunpack.c.l.b16 %v1971
    %v3434 = vunpack.c.h.b16 %v1971
    %v3435 = vunpack.c.l.b16 %v1972
    %v3436 = vunpack.c.h.b16 %v1972
    %v3437 = vunpack.c.l.b16 %v1973
    %v3438 = vunpack.c.h.b16 %v1973
    %v3439 = vunpack.c.l.b16 %v1974
    %v3440 = vunpack.c.h.b16 %v1974
    %v3441 = vunpack.c.l.b16 %v1975
    %v3442 = vunpack.c.h.b16 %v1975
    %v3443 = vunpack.c.l.b16 %v1976
    %v3444 = vunpack.c.h.b16 %v1976
    %v3445 = vunpack.c.l.b16 %v1977
    %v3446 = vunpack.c.h.b16 %v1977
    %v3447 = vunpack.c.l.b16 %v1978
    %v3448 = vunpack.c.l.b16 %v1979
    %v3449 = vunpack.c.h.b16 %v1979
    %v3450 = vunpack.c.l.b16 %v1980
    %v3451 = vunpack.c.h.b16 %v1980
    %v3452 = vunpack.c.l.b16 %v1981
    %v3453 = vunpack.c.h.b16 %v1981
    %v3454 = vunpack.c.l.b16 %v1982
    %v3455 = vunpack.c.h.b16 %v1982
    %v3456 = vunpack.c.l.b16 %v1983
    %v3457 = vunpack.c.h.b16 %v1983
    %v3458 = vunpack.c.l.b16 %v1984
    %v3459 = vunpack.c.h.b16 %v1984
    %v3460 = vunpack.c.l.b16 %v1985
    %v3461 = vunpack.c.h.b16 %v1985
    %v3462 = vunpack.c.l.b16 %v1986
    %v3463 = vunpack.c.h.b16 %v1986
    %v3464 = vunpack.c.l.b16 %v1987
    %v3465 = vunpack.c.h.b16 %v1987
    %v3466 = vunpack.c.l.b16 %v1988
    %v3467 = vunpack.c.h.b16 %v1988
    %v3468 = vunpack.c.l.b16 %v1989
    %v3469 = vunpack.c.h.b16 %v1989
    %v3470 = vunpack.c.l.b16 %v1990
    %v3471 = vunpack.c.h.b16 %v1990
    %v3472 = vunpack.c.l.b16 %v1991
    %v3473 = vunpack.c.l.b16 %v1992
    %v3474 = vunpack.c.h.b16 %v1992
    %v3475 = vunpack.c.l.b16 %v1993
    %v3476 = vunpack.c.h.b16 %v1993
    %v3477 = vunpack.c.l.b16 %v1994
    %v3478 = vunpack.c.h.b16 %v1994
    %v3479 = vunpack.c.l.b16 %v1995
    %v3480 = vunpack.c.h.b16 %v1995
    %v3481 = vunpack.c.l.b16 %v1996
    %v3482 = vunpack.c.h.b16 %v1996
    %v3483 = vunpack.c.l.b16 %v1997
    %v3484 = vunpack.c.h.b16 %v1997
    %v3485 = vunpack.c.l.b16 %v1998
    %v3486 = vunpack.c.h.b16 %v1998
    %v3487 = vunpack.c.l.b16 %v1999
    %v3488 = vunpack.c.h.b16 %v1999
    %v3489 = vunpack.c.l.b16 %v2000
    %v3490 = vunpack.c.h.b16 %v2000
    %v3491 = vunpack.c.l.b16 %v2001
    %v3492 = vunpack.c.h.b16 %v2001
    %v3493 = vunpack.c.l.b16 %v2002
    %v3494 = vunpack.c.h.b16 %v2002
    %v3495 = vunpack.c.l.b16 %v2003
    %v3496 = vunpack.c.h.b16 %v2003
    %v3497 = vunpack.c.l.b16 %v2004
    %v3498 = vunpack.c.l.b16 %v2005
    %v3499 = vunpack.c.h.b16 %v2005
    %v3500 = vunpack.c.l.b16 %v2006
    %v3501 = vunpack.c.h.b16 %v2006
    %v3502 = vunpack.c.l.b16 %v2007
    %v3503 = vunpack.c.h.b16 %v2007
    %v3504 = vunpack.c.l.b16 %v2008
    %v3505 = vunpack.c.h.b16 %v2008
    %v3506 = vunpack.c.l.b16 %v2009
    %v3507 = vunpack.c.h.b16 %v2009
    %v3508 = vunpack.c.l.b16 %v2010
    %v3509 = vunpack.c.h.b16 %v2010
    %v3510 = vunpack.c.l.b16 %v2011
    %v3511 = vunpack.c.h.b16 %v2011
    %v3512 = vunpack.c.l.b16 %v2012
    %v3513 = vunpack.c.h.b16 %v2012
    %v3514 = vunpack.c.l.b16 %v2013
    %v3515 = vunpack.c.h.b16 %v2013
    %v3516 = vunpack.c.l.b16 %v2014
    %v3517 = vunpack.c.h.b16 %v2014
    %v3518 = vunpack.c.l.b16 %v2015
    %v3519 = vunpack.c.h.b16 %v2015
    %v3520 = vunpack.c.l.b16 %v2016
    %v3521 = vunpack.c.h.b16 %v2016
    %v3522 = vunpack.c.l.b16 %v2017
    %v3523 = vunpack.c.l.b16 %v2018
    %v3524 = vunpack.c.h.b16 %v2018
    %v3525 = vunpack.c.l.b16 %v2019
    %v3526 = vunpack.c.h.b16 %v2019
    %v3527 = vunpack.c.l.b16 %v2020
    %v3528 = vunpack.c.h.b16 %v2020
    %v3529 = vunpack.c.l.b16 %v2021
    %v3530 = vunpack.c.h.b16 %v2021
    %v3531 = vunpack.c.l.b16 %v2022
    %v3532 = vunpack.c.h.b16 %v2022
    %v3533 = vunpack.c.l.b16 %v2023
    %v3534 = vunpack.c.h.b16 %v2023
    %v3535 = vunpack.c.l.b16 %v2024
    %v3536 = vunpack.c.h.b16 %v2024
    %v3537 = vunpack.c.l.b16 %v2025
    %v3538 = vunpack.c.h.b16 %v2025
    %v3539 = vunpack.c.l.b16 %v2026
    %v3540 = vunpack.c.h.b16 %v2026
    %v3541 = vunpack.c.l.b16 %v2027
    %v3542 = vunpack.c.h.b16 %v2027
    %v3543 = vunpack.c.l.b16 %v2028
    %v3544 = vunpack.c.h.b16 %v2028
    %v3545 = vunpack.c.l.b16 %v2029
    %v3546 = vunpack.c.h.b16 %v2029
    %v3547 = vunpack.c.l.b16 %v2030
    %v3548 = vunpack.c.l.b16 %v2031
    %v3549 = vunpack.c.h.b16 %v2031
    %v3550 = vunpack.c.l.b16 %v2032
    %v3551 = vunpack.c.h.b16 %v2032
    %v3552 = vunpack.c.l.b16 %v2033
    %v3553 = vunpack.c.h.b16 %v2033
    %v3554 = vunpack.c.l.b16 %v2034
    %v3555 = vunpack.c.h.b16 %v2034
    %v3556 = vunpack.c.l.b16 %v2035
    %v3557 = vunpack.c.h.b16 %v2035
    %v3558 = vunpack.c.l.b16 %v2036
    %v3559 = vunpack.c.h.b16 %v2036
    %v3560 = vunpack.c.l.b16 %v2037
    %v3561 = vunpack.c.h.b16 %v2037
    %v3562 = vunpack.c.l.b16 %v2038
    %v3563 = vunpack.c.h.b16 %v2038
    %v3564 = vunpack.c.l.b16 %v2039
    %v3565 = vunpack.c.h.b16 %v2039
    %v3566 = vunpack.c.l.b16 %v2040
    %v3567 = vunpack.c.h.b16 %v2040
    %v3568 = vunpack.c.l.b16 %v2041
    %v3569 = vunpack.c.h.b16 %v2041
    %v3570 = vunpack.c.l.b16 %v2042
    %v3571 = vunpack.c.h.b16 %v2042
    %v3572 = vunpack.c.l.b16 %v2043
    %v3573 = vunpack.c.l.b16 %v2044
    %v3574 = vunpack.c.h.b16 %v2044
    %v3575 = vunpack.c.l.b16 %v2045
    %v3576 = vunpack.c.h.b16 %v2045
    %v3577 = vunpack.c.l.b16 %v2046
    %v3578 = vunpack.c.h.b16 %v2046
    %v3579 = vunpack.c.l.b16 %v2047
    %v3580 = vunpack.c.h.b16 %v2047
    %v3581 = vunpack.c.l.b16 %v2048
    %v3582 = vunpack.c.h.b16 %v2048
    %v3583 = vunpack.c.l.b16 %v2049
    %v3584 = vunpack.c.h.b16 %v2049
    %v3585 = vunpack.c.l.b16 %v2050
    %v3586 = vunpack.c.h.b16 %v2050
    %v3587 = vunpack.c.l.b16 %v2051
    %v3588 = vunpack.c.h.b16 %v2051
    %v3589 = vunpack.c.l.b16 %v2052
    %v3590 = vunpack.c.h.b16 %v2052
    %v3591 = vunpack.c.l.b16 %v2053
    %v3592 = vunpack.c.h.b16 %v2053
    %v3593 = vunpack.c.l.b16 %v2054
    %v3594 = vunpack.c.h.b16 %v2054
    %v3595 = vunpack.c.l.b16 %v2055
    %v3596 = vunpack.c.h.b16 %v2055
    %v3597 = vunpack.c.l.b16 %v2056
    %v3598 = vunpack.c.l.b16 %v2057
    %v3599 = vunpack.c.h.b16 %v2057
    %v3600 = vunpack.c.l.b16 %v2058
    %v3601 = vunpack.c.h.b16 %v2058
    %v3602 = vunpack.c.l.b16 %v2059
    %v3603 = vunpack.c.h.b16 %v2059
    %v3604 = vunpack.c.l.b16 %v2060
    %v3605 = vunpack.c.h.b16 %v2060
    %v3606 = vunpack.c.l.b16 %v2061
    %v3607 = vunpack.c.h.b16 %v2061
    %v3608 = vunpack.c.l.b16 %v2062
    %v3609 = vunpack.c.h.b16 %v2062
    %v3610 = vunpack.c.l.b16 %v2063
    %v3611 = vunpack.c.h.b16 %v2063
    %v3612 = vunpack.c.l.b16 %v2064
    %v3613 = vunpack.c.h.b16 %v2064
    %v3614 = vunpack.c.l.b16 %v2065
    %v3615 = vunpack.c.h.b16 %v2065
    %v3616 = vunpack.c.l.b16 %v2066
    %v3617 = vunpack.c.h.b16 %v2066
    %v3618 = vunpack.c.l.b16 %v2067
    %v3619 = vunpack.c.h.b16 %v2067
    %v3620 = vunpack.c.l.b16 %v2068
    %v3621 = vunpack.c.h.b16 %v2068
    %v3622 = vunpack.c.l.b16 %v2069
    %v3623 = vunpack.c.l.b16 %v2070
    %v3624 = vunpack.c.h.b16 %v2070
    %v3625 = vunpack.c.l.b16 %v2071
    %v3626 = vunpack.c.h.b16 %v2071
    %v3627 = vunpack.c.l.b16 %v2072
    %v3628 = vunpack.c.h.b16 %v2072
    %v3629 = vunpack.c.l.b16 %v2073
    %v3630 = vunpack.c.h.b16 %v2073
    %v3631 = vunpack.c.l.b16 %v2074
    %v3632 = vunpack.c.h.b16 %v2074
    %v3633 = vunpack.c.l.b16 %v2075
    %v3634 = vunpack.c.h.b16 %v2075
    %v3635 = vunpack.c.l.b16 %v2076
    %v3636 = vunpack.c.h.b16 %v2076
    %v3637 = vunpack.c.l.b16 %v2077
    %v3638 = vunpack.c.h.b16 %v2077
    %v3639 = vunpack.c.l.b16 %v2078
    %v3640 = vunpack.c.h.b16 %v2078
    %v3641 = vunpack.c.l.b16 %v2079
    %v3642 = vunpack.c.h.b16 %v2079
    %v3643 = vunpack.c.l.b16 %v2080
    %v3644 = vunpack.c.h.b16 %v2080
    %v3645 = vunpack.c.l.b16 %v2081
    %v3646 = vunpack.c.h.b16 %v2081
    %v3647 = vunpack.c.l.b16 %v2082
    %v3648 = vunpack.c.l.b16 %v2083
    %v3649 = vunpack.c.h.b16 %v2083
    %v3650 = vunpack.c.l.b16 %v2084
    %v3651 = vunpack.c.h.b16 %v2084
    %v3652 = vunpack.c.l.b16 %v2085
    %v3653 = vunpack.c.h.b16 %v2085
    %v3654 = vunpack.c.l.b16 %v2086
    %v3655 = vunpack.c.h.b16 %v2086
    %v3656 = vunpack.c.l.b16 %v2087
    %v3657 = vunpack.c.h.b16 %v2087
    %v3658 = vunpack.c.l.b16 %v2088
    %v3659 = vunpack.c.h.b16 %v2088
    %v3660 = vunpack.c.l.b16 %v2089
    %v3661 = vunpack.c.h.b16 %v2089
    %v3662 = vunpack.c.l.b16 %v2090
    %v3663 = vunpack.c.h.b16 %v2090
    %v3664 = vunpack.c.l.b16 %v2091
    %v3665 = vunpack.c.h.b16 %v2091
    %v3666 = vunpack.c.l.b16 %v2092
    %v3667 = vunpack.c.h.b16 %v2092
    %v3668 = vunpack.c.l.b16 %v2093
    %v3669 = vunpack.c.h.b16 %v2093
    %v3670 = vunpack.c.l.b16 %v2094
    %v3671 = vunpack.c.h.b16 %v2094
    %v3672 = vunpack.c.l.b16 %v2095
    %v3673 = vpack.c.b16 %v2748, %v2723
    %v3674 = vpack.c.b16 %v2749, %v2724
    %v3675 = vpack.c.b16 %v2750, %v2725
    %v3676 = vpack.c.b16 %v2751, %v2726
    %v3677 = vpack.c.b16 %v2752, %v2727
    %v3678 = vpack.c.b16 %v2753, %v2728
    %v3679 = vpack.c.b16 %v2754, %v2729
    %v3680 = vpack.c.b16 %v2755, %v2730
    %v3681 = vpack.c.b16 %v2756, %v2731
    %v3682 = vpack.c.b16 %v2757, %v2732
    %v3683 = vpack.c.b16 %v2758, %v2733
    %v3684 = vpack.c.b16 %v2759, %v2734
    %v3685 = vpack.c.b16 %v2760, %v2735
    %v3686 = vpack.c.b16 %v2761, %v2736
    %v3687 = vpack.c.b16 %v2762, %v2737
    %v3688 = vpack.c.b16 %v2763, %v2738
    %v3689 = vpack.c.b16 %v2764, %v2739
    %v3690 = vpack.c.b16 %v2765, %v2740
    %v3691 = vpack.c.b16 %v2766, %v2741
    %v3692 = vpack.c.b16 %v2767, %v2742
    %v3693 = vpack.c.b16 %v2768, %v2743
    %v3694 = vpack.c.b16 %v2769, %v2744
    %v3695 = vpack.c.b16 %v2770, %v2745
    %v3696 = vpack.c.b16 %v2771, %v2746
    %v3697 = vpack.c.b16 %v2772, %v2747
    %v3698 = vpack.c.b16 %v2798, %v2773
    %v3699 = vpack.c.b16 %v2799, %v2774
    %v3700 = vpack.c.b16 %v2800, %v2775
    %v3701 = vpack.c.b16 %v2801, %v2776
    %v3702 = vpack.c.b16 %v2802, %v2777
    %v3703 = vpack.c.b16 %v2803, %v2778
    %v3704 = vpack.c.b16 %v2804, %v2779
    %v3705 = vpack.c.b16 %v2805, %v2780
    %v3706 = vpack.c.b16 %v2806, %v2781
    %v3707 = vpack.c.b16 %v2807, %v2782
    %v3708 = vpack.c.b16 %v2808, %v2783
    %v3709 = vpack.c.b16 %v2809, %v2784
    %v3710 = vpack.c.b16 %v2810, %v2785
    %v3711 = vpack.c.b16 %v2811, %v2786
    %v3712 = vpack.c.b16 %v2812, %v2787
    %v3713 = vpack.c.b16 %v2813, %v2788
    %v3714 = vpack.c.b16 %v2814, %v2789
    %v3715 = vpack.c.b16 %v2815, %v2790
    %v3716 = vpack.c.b16 %v2816, %v2791
    %v3717 = vpack.c.b16 %v2817, %v2792
    %v3718 = vpack.c.b16 %v2818, %v2793
    %v3719 = vpack.c.b16 %v2819, %v2794
    %v3720 = vpack.c.b16 %v2820, %v2795
    %v3721 = vpack.c.b16 %v2821, %v2796
    %v3722 = vpack.c.b16 %v2822, %v2797
    %v3723 = vpack.c.b16 %v2848, %v2823
    %v3724 = vpack.c.b16 %v2849, %v2824
    %v3725 = vpack.c.b16 %v2850, %v2825
    %v3726 = vpack.c.b16 %v2851, %v2826
    %v3727 = vpack.c.b16 %v2852, %v2827
    %v3728 = vpack.c.b16 %v2853, %v2828
    %v3729 = vpack.c.b16 %v2854, %v2829
    %v3730 = vpack.c.b16 %v2855, %v2830
    %v3731 = vpack.c.b16 %v2856, %v2831
    %v3732 = vpack.c.b16 %v2857, %v2832
    %v3733 = vpack.c.b16 %v2858, %v2833
    %v3734 = vpack.c.b16 %v2859, %v2834
    %v3735 = vpack.c.b16 %v2860, %v2835
    %v3736 = vpack.c.b16 %v2861, %v2836
    %v3737 = vpack.c.b16 %v2862, %v2837
    %v3738 = vpack.c.b16 %v2863, %v2838
    %v3739 = vpack.c.b16 %v2864, %v2839
    %v3740 = vpack.c.b16 %v2865, %v2840
    %v3741 = vpack.c.b16 %v2866, %v2841
    %v3742 = vpack.c.b16 %v2867, %v2842
    %v3743 = vpack.c.b16 %v2868, %v2843
    %v3744 = vpack.c.b16 %v2869, %v2844
    %v3745 = vpack.c.b16 %v2870, %v2845
    %v3746 = vpack.c.b16 %v2871, %v2846
    %v3747 = vpack.c.b16 %v2872, %v2847
    %v3748 = vpack.c.b16 %v2898, %v2873
    %v3749 = vpack.c.b16 %v2899, %v2874
    %v3750 = vpack.c.b16 %v2900, %v2875
    %v3751 = vpack.c.b16 %v2901, %v2876
    %v3752 = vpack.c.b16 %v2902, %v2877
    %v3753 = vpack.c.b16 %v2903, %v2878
    %v3754 = vpack.c.b16 %v2904, %v2879
    %v3755 = vpack.c.b16 %v2905, %v2880
    %v3756 = vpack.c.b16 %v2906, %v2881
    %v3757 = vpack.c.b16 %v2907, %v2882
    %v3758 = vpack.c.b16 %v2908, %v2883
    %v3759 = vpack.c.b16 %v2909, %v2884
    %v3760 = vpack.c.b16 %v2910, %v2885
    %v3761 = vpack.c.b16 %v2911, %v2886
    %v3762 = vpack.c.b16 %v2912, %v2887
    %v3763 = vpack.c.b16 %v2913, %v2888
    %v3764 = vpack.c.b16 %v2914, %v2889
    %v3765 = vpack.c.b16 %v2915, %v2890
    %v3766 = vpack.c.b16 %v2916, %v2891
    %v3767 = vpack.c.b16 %v2917, %v2892
    %v3768 = vpack.c.b16 %v2918, %v2893
    %v3769 = vpack.c.b16 %v2919, %v2894
    %v3770 = vpack.c.b16 %v2920, %v2895
    %v3771 = vpack.c.b16 %v2921, %v2896
    %v3772 = vpack.c.b16 %v2922, %v2897
    %v3773 = vpack.c.b16 %v2948, %v2923
    %v3774 = vpack.c.b16 %v2949, %v2924
    %v3775 = vpack.c.b16 %v2950, %v2925
    %v3776 = vpack.c.b16 %v2951, %v2926
    %v3777 = vpack.c.b16 %v2952, %v2927
    %v3778 = vpack.c.b16 %v2953, %v2928
    %v3779 = vpack.c.b16 %v2954, %v2929
    %v3780 = vpack.c.b16 %v2955, %v2930
    %v3781 = vpack.c.b16 %v2956, %v2931
    %v3782 = vpack.c.b16 %v2957, %v2932
    %v3783 = vpack.c.b16 %v2958, %v2933
    %v3784 = vpack.c.b16 %v2959, %v2934
    %v3785 = vpack.c.b16 %v2960, %v2935
    %v3786 = vpack.c.b16 %v2961, %v2936
    %v3787 = vpack.c.b16 %v2962, %v2937
    %v3788 = vpack.c.b16 %v2963, %v2938
    %v3789 = vpack.c.b16 %v2964, %v2939
    %v3790 = vpack.c.b16 %v2965, %v2940
    %v3791 = vpack.c.b16 %v2966, %v2941
    %v3792 = vpack.c.b16 %v2967, %v2942
    %v3793 = vpack.c.b16 %v2968, %v2943
    %v3794 = vpack.c.b16 %v2969, %v2944
    %v3795 = vpack.c.b16 %v2970, %v2945
    %v3796 = vpack.c.b16 %v2971, %v2946
    %v3797 = vpack.c.b16 %v2972, %v2947
    %v3798 = vpack.c.b16 %v2998, %v2973
    %v3799 = vpack.c.b16 %v2999, %v2974
    %v3800 = vpack.c.b16 %v3000, %v2975
    %v3801 = vpack.c.b16 %v3001, %v2976
    %v3802 = vpack.c.b16 %v3002, %v2977
    %v3803 = vpack.c.b16 %v3003, %v2978
    %v3804 = vpack.c.b16 %v3004, %v2979
    %v3805 = vpack.c.b16 %v3005, %v2980
    %v3806 = vpack.c.b16 %v3006, %v2981
    %v3807 = vpack.c.b16 %v3007, %v2982
    %v3808 = vpack.c.b16 %v3008, %v2983
    %v3809 = vpack.c.b16 %v3009, %v2984
    %v3810 = vpack.c.b16 %v3010, %v2985
    %v3811 = vpack.c.b16 %v3011, %v2986
    %v3812 = vpack.c.b16 %v3012, %v2987
    %v3813 = vpack.c.b16 %v3013, %v2988
    %v3814 = vpack.c.b16 %v3014, %v2989
    %v3815 = vpack.c.b16 %v3015, %v2990
    %v3816 = vpack.c.b16 %v3016, %v2991
    %v3817 = vpack.c.b16 %v3017, %v2992
    %v3818 = vpack.c.b16 %v3018, %v2993
    %v3819 = vpack.c.b16 %v3019, %v2994
    %v3820 = vpack.c.b16 %v3020, %v2995
    %v3821 = vpack.c.b16 %v3021, %v2996
    %v3822 = vpack.c.b16 %v3022, %v2997
    %v3823 = vpack.c.b16 %v3048, %v3023
    %v3824 = vpack.c.b16 %v3049, %v3024
    %v3825 = vpack.c.b16 %v3050, %v3025
    %v3826 = vpack.c.b16 %v3051, %v3026
    %v3827 = vpack.c.b16 %v3052, %v3027
    %v3828 = vpack.c.b16 %v3053, %v3028
    %v3829 = vpack.c.b16 %v3054, %v3029
    %v3830 = vpack.c.b16 %v3055, %v3030
    %v3831 = vpack.c.b16 %v3056, %v3031
    %v3832 = vpack.c.b16 %v3057, %v3032
    %v3833 = vpack.c.b16 %v3058, %v3033
    %v3834 = vpack.c.b16 %v3059, %v3034
    %v3835 = vpack.c.b16 %v3060, %v3035
    %v3836 = vpack.c.b16 %v3061, %v3036
    %v3837 = vpack.c.b16 %v3062, %v3037
    %v3838 = vpack.c.b16 %v3063, %v3038
    %v3839 = vpack.c.b16 %v3064, %v3039
    %v3840 = vpack.c.b16 %v3065, %v3040
    %v3841 = vpack.c.b16 %v3066, %v3041
    %v3842 = vpack.c.b16 %v3067, %v3042
    %v3843 = vpack.c.b16 %v3068, %v3043
    %v3844 = vpack.c.b16 %v3069, %v3044
    %v3845 = vpack.c.b16 %v3070, %v3045
    %v3846 = vpack.c.b16 %v3071, %v3046
    %v3847 = vpack.c.b16 %v3072, %v3047
    %v3848 = vpack.c.b16 %v3098, %v3073
    %v3849 = vpack.c.b16 %v3099, %v3074
    %v3850 = vpack.c.b16 %v3100, %v3075
    %v3851 = vpack.c.b16 %v3101, %v3076
    %v3852 = vpack.c.b16 %v3102, %v3077
    %v3853 = vpack.c.b16 %v3103, %v3078
    %v3854 = vpack.c.b16 %v3104, %v3079
    %v3855 = vpack.c.b16 %v3105, %v3080
    %v3856 = vpack.c.b16 %v3106, %v3081
    %v3857 = vpack.c.b16 %v3107, %v3082
    %v3858 = vpack.c.b16 %v3108, %v3083
    %v3859 = vpack.c.b16 %v3109, %v3084
    %v3860 = vpack.c.b16 %v3110, %v3085
    %v3861 = vpack.c.b16 %v3111, %v3086
    %v3862 = vpack.c.b16 %v3112, %v3087
    %v3863 = vpack.c.b16 %v3113, %v3088
    %v3864 = vpack.c.b16 %v3114, %v3089
    %v3865 = vpack.c.b16 %v3115, %v3090
    %v3866 = vpack.c.b16 %v3116, %v3091
    %v3867 = vpack.c.b16 %v3117, %v3092
    %v3868 = vpack.c.b16 %v3118, %v3093
    %v3869 = vpack.c.b16 %v3119, %v3094
    %v3870 = vpack.c.b16 %v3120, %v3095
    %v3871 = vpack.c.b16 %v3121, %v3096
    %v3872 = vpack.c.b16 %v3122, %v3097
    %v3873 = vpack.c.b16 %v3148, %v3123
    %v3874 = vpack.c.b16 %v3149, %v3124
    %v3875 = vpack.c.b16 %v3150, %v3125
    %v3876 = vpack.c.b16 %v3151, %v3126
    %v3877 = vpack.c.b16 %v3152, %v3127
    %v3878 = vpack.c.b16 %v3153, %v3128
    %v3879 = vpack.c.b16 %v3154, %v3129
    %v3880 = vpack.c.b16 %v3155, %v3130
    %v3881 = vpack.c.b16 %v3156, %v3131
    %v3882 = vpack.c.b16 %v3157, %v3132
    %v3883 = vpack.c.b16 %v3158, %v3133
    %v3884 = vpack.c.b16 %v3159, %v3134
    %v3885 = vpack.c.b16 %v3160, %v3135
    %v3886 = vpack.c.b16 %v3161, %v3136
    %v3887 = vpack.c.b16 %v3162, %v3137
    %v3888 = vpack.c.b16 %v3163, %v3138
    %v3889 = vpack.c.b16 %v3164, %v3139
    %v3890 = vpack.c.b16 %v3165, %v3140
    %v3891 = vpack.c.b16 %v3166, %v3141
    %v3892 = vpack.c.b16 %v3167, %v3142
    %v3893 = vpack.c.b16 %v3168, %v3143
    %v3894 = vpack.c.b16 %v3169, %v3144
    %v3895 = vpack.c.b16 %v3170, %v3145
    %v3896 = vpack.c.b16 %v3171, %v3146
    %v3897 = vpack.c.b16 %v3172, %v3147
    %v3898 = vpack.c.b16 %v3198, %v3173
    %v3899 = vpack.c.b16 %v3199, %v3174
    %v3900 = vpack.c.b16 %v3200, %v3175
    %v3901 = vpack.c.b16 %v3201, %v3176
    %v3902 = vpack.c.b16 %v3202, %v3177
    %v3903 = vpack.c.b16 %v3203, %v3178
    %v3904 = vpack.c.b16 %v3204, %v3179
    %v3905 = vpack.c.b16 %v3205, %v3180
    %v3906 = vpack.c.b16 %v3206, %v3181
    %v3907 = vpack.c.b16 %v3207, %v3182
    %v3908 = vpack.c.b16 %v3208, %v3183
    %v3909 = vpack.c.b16 %v3209, %v3184
    %v3910 = vpack.c.b16 %v3210, %v3185
    %v3911 = vpack.c.b16 %v3211, %v3186
    %v3912 = vpack.c.b16 %v3212, %v3187
    %v3913 = vpack.c.b16 %v3213, %v3188
    %v3914 = vpack.c.b16 %v3214, %v3189
    %v3915 = vpack.c.b16 %v3215, %v3190
    %v3916 = vpack.c.b16 %v3216, %v3191
    %v3917 = vpack.c.b16 %v3217, %v3192
    %v3918 = vpack.c.b16 %v3218, %v3193
    %v3919 = vpack.c.b16 %v3219, %v3194
    %v3920 = vpack.c.b16 %v3220, %v3195
    %v3921 = vpack.c.b16 %v3221, %v3196
    %v3922 = vpack.c.b16 %v3222, %v3197
    %v3923 = vpack.c.b16 %v3248, %v3223
    %v3924 = vpack.c.b16 %v3249, %v3224
    %v3925 = vpack.c.b16 %v3250, %v3225
    %v3926 = vpack.c.b16 %v3251, %v3226
    %v3927 = vpack.c.b16 %v3252, %v3227
    %v3928 = vpack.c.b16 %v3253, %v3228
    %v3929 = vpack.c.b16 %v3254, %v3229
    %v3930 = vpack.c.b16 %v3255, %v3230
    %v3931 = vpack.c.b16 %v3256, %v3231
    %v3932 = vpack.c.b16 %v3257, %v3232
    %v3933 = vpack.c.b16 %v3258, %v3233
    %v3934 = vpack.c.b16 %v3259, %v3234
    %v3935 = vpack.c.b16 %v3260, %v3235
    %v3936 = vpack.c.b16 %v3261, %v3236
    %v3937 = vpack.c.b16 %v3262, %v3237
    %v3938 = vpack.c.b16 %v3263, %v3238
    %v3939 = vpack.c.b16 %v3264, %v3239
    %v3940 = vpack.c.b16 %v3265, %v3240
    %v3941 = vpack.c.b16 %v3266, %v3241
    %v3942 = vpack.c.b16 %v3267, %v3242
    %v3943 = vpack.c.b16 %v3268, %v3243
    %v3944 = vpack.c.b16 %v3269, %v3244
    %v3945 = vpack.c.b16 %v3270, %v3245
    %v3946 = vpack.c.b16 %v3271, %v3246
    %v3947 = vpack.c.b16 %v3272, %v3247
    %v3948 = vpack.c.b16 %v3298, %v3273
    %v3949 = vpack.c.b16 %v3299, %v3274
    %v3950 = vpack.c.b16 %v3300, %v3275
    %v3951 = vpack.c.b16 %v3301, %v3276
    %v3952 = vpack.c.b16 %v3302, %v3277
    %v3953 = vpack.c.b16 %v3303, %v3278
    %v3954 = vpack.c.b16 %v3304, %v3279
    %v3955 = vpack.c.b16 %v3305, %v3280
    %v3956 = vpack.c.b16 %v3306, %v3281
    %v3957 = vpack.c.b16 %v3307, %v3282
    %v3958 = vpack.c.b16 %v3308, %v3283
    %v3959 = vpack.c.b16 %v3309, %v3284
    %v3960 = vpack.c.b16 %v3310, %v3285
    %v3961 = vpack.c.b16 %v3311, %v3286
    %v3962 = vpack.c.b16 %v3312, %v3287
    %v3963 = vpack.c.b16 %v3313, %v3288
    %v3964 = vpack.c.b16 %v3314, %v3289
    %v3965 = vpack.c.b16 %v3315, %v3290
    %v3966 = vpack.c.b16 %v3316, %v3291
    %v3967 = vpack.c.b16 %v3317, %v3292
    %v3968 = vpack.c.b16 %v3318, %v3293
    %v3969 = vpack.c.b16 %v3319, %v3294
    %v3970 = vpack.c.b16 %v3320, %v3295
    %v3971 = vpack.c.b16 %v3321, %v3296
    %v3972 = vpack.c.b16 %v3322, %v3297
    %v3973 = vpack.c.b16 %v3348, %v3323
    %v3974 = vpack.c.b16 %v3349, %v3324
    %v3975 = vpack.c.b16 %v3350, %v3325
    %v3976 = vpack.c.b16 %v3351, %v3326
    %v3977 = vpack.c.b16 %v3352, %v3327
    %v3978 = vpack.c.b16 %v3353, %v3328
    %v3979 = vpack.c.b16 %v3354, %v3329
    %v3980 = vpack.c.b16 %v3355, %v3330
    %v3981 = vpack.c.b16 %v3356, %v3331
    %v3982 = vpack.c.b16 %v3357, %v3332
    %v3983 = vpack.c.b16 %v3358, %v3333
    %v3984 = vpack.c.b16 %v3359, %v3334
    %v3985 = vpack.c.b16 %v3360, %v3335
    %v3986 = vpack.c.b16 %v3361, %v3336
    %v3987 = vpack.c.b16 %v3362, %v3337
    %v3988 = vpack.c.b16 %v3363, %v3338
    %v3989 = vpack.c.b16 %v3364, %v3339
    %v3990 = vpack.c.b16 %v3365, %v3340
    %v3991 = vpack.c.b16 %v3366, %v3341
    %v3992 = vpack.c.b16 %v3367, %v3342
    %v3993 = vpack.c.b16 %v3368, %v3343
    %v3994 = vpack.c.b16 %v3369, %v3344
    %v3995 = vpack.c.b16 %v3370, %v3345
    %v3996 = vpack.c.b16 %v3371, %v3346
    %v3997 = vpack.c.b16 %v3372, %v3347
    %v3998 = vpack.c.b16 %v3398, %v3373
    %v3999 = vpack.c.b16 %v3399, %v3374
    %v4000 = vpack.c.b16 %v3400, %v3375
    %v4001 = vpack.c.b16 %v3401, %v3376
    %v4002 = vpack.c.b16 %v3402, %v3377
    %v4003 = vpack.c.b16 %v3403, %v3378
    %v4004 = vpack.c.b16 %v3404, %v3379
    %v4005 = vpack.c.b16 %v3405, %v3380
    %v4006 = vpack.c.b16 %v3406, %v3381
    %v4007 = vpack.c.b16 %v3407, %v3382
    %v4008 = vpack.c.b16 %v3408, %v3383
    %v4009 = vpack.c.b16 %v3409, %v3384
    %v4010 = vpack.c.b16 %v3410, %v3385
    %v4011 = vpack.c.b16 %v3411, %v3386
    %v4012 = vpack.c.b16 %v3412, %v3387
    %v4013 = vpack.c.b16 %v3413, %v3388
    %v4014 = vpack.c.b16 %v3414, %v3389
    %v4015 = vpack.c.b16 %v3415, %v3390
    %v4016 = vpack.c.b16 %v3416, %v3391
    %v4017 = vpack.c.b16 %v3417, %v3392
    %v4018 = vpack.c.b16 %v3418, %v3393
    %v4019 = vpack.c.b16 %v3419, %v3394
    %v4020 = vpack.c.b16 %v3420, %v3395
    %v4021 = vpack.c.b16 %v3421, %v3396
    %v4022 = vpack.c.b16 %v3422, %v3397
    %v4023 = vpack.c.b16 %v3448, %v3423
    %v4024 = vpack.c.b16 %v3449, %v3424
    %v4025 = vpack.c.b16 %v3450, %v3425
    %v4026 = vpack.c.b16 %v3451, %v3426
    %v4027 = vpack.c.b16 %v3452, %v3427
    %v4028 = vpack.c.b16 %v3453, %v3428
    %v4029 = vpack.c.b16 %v3454, %v3429
    %v4030 = vpack.c.b16 %v3455, %v3430
    %v4031 = vpack.c.b16 %v3456, %v3431
    %v4032 = vpack.c.b16 %v3457, %v3432
    %v4033 = vpack.c.b16 %v3458, %v3433
    %v4034 = vpack.c.b16 %v3459, %v3434
    %v4035 = vpack.c.b16 %v3460, %v3435
    %v4036 = vpack.c.b16 %v3461, %v3436
    %v4037 = vpack.c.b16 %v3462, %v3437
    %v4038 = vpack.c.b16 %v3463, %v3438
    %v4039 = vpack.c.b16 %v3464, %v3439
    %v4040 = vpack.c.b16 %v3465, %v3440
    %v4041 = vpack.c.b16 %v3466, %v3441
    %v4042 = vpack.c.b16 %v3467, %v3442
    %v4043 = vpack.c.b16 %v3468, %v3443
    %v4044 = vpack.c.b16 %v3469, %v3444
    %v4045 = vpack.c.b16 %v3470, %v3445
    %v4046 = vpack.c.b16 %v3471, %v3446
    %v4047 = vpack.c.b16 %v3472, %v3447
    %v4048 = vpack.c.b16 %v3498, %v3473
    %v4049 = vpack.c.b16 %v3499, %v3474
    %v4050 = vpack.c.b16 %v3500, %v3475
    %v4051 = vpack.c.b16 %v3501, %v3476
    %v4052 = vpack.c.b16 %v3502, %v3477
    %v4053 = vpack.c.b16 %v3503, %v3478
    %v4054 = vpack.c.b16 %v3504, %v3479
    %v4055 = vpack.c.b16 %v3505, %v3480
    %v4056 = vpack.c.b16 %v3506, %v3481
    %v4057 = vpack.c.b16 %v3507, %v3482
    %v4058 = vpack.c.b16 %v3508, %v3483
    %v4059 = vpack.c.b16 %v3509, %v3484
    %v4060 = vpack.c.b16 %v3510, %v3485
    %v4061 = vpack.c.b16 %v3511, %v3486
    %v4062 = vpack.c.b16 %v3512, %v3487
    %v4063 = vpack.c.b16 %v3513, %v3488
    %v4064 = vpack.c.b16 %v3514, %v3489
    %v4065 = vpack.c.b16 %v3515, %v3490
    %v4066 = vpack.c.b16 %v3516, %v3491
    %v4067 = vpack.c.b16 %v3517, %v3492
    %v4068 = vpack.c.b16 %v3518, %v3493
    %v4069 = vpack.c.b16 %v3519, %v3494
    %v4070 = vpack.c.b16 %v3520, %v3495
    %v4071 = vpack.c.b16 %v3521, %v3496
    %v4072 = vpack.c.b16 %v3522, %v3497
    %v4073 = vpack.c.b16 %v3548, %v3523
    %v4074 = vpack.c.b16 %v3549, %v3524
    %v4075 = vpack.c.b16 %v3550, %v3525
    %v4076 = vpack.c.b16 %v3551, %v3526
    %v4077 = vpack.c.b16 %v3552, %v3527
    %v4078 = vpack.c.b16 %v3553, %v3528
    %v4079 = vpack.c.b16 %v3554, %v3529
    %v4080 = vpack.c.b16 %v3555, %v3530
    %v4081 = vpack.c.b16 %v3556, %v3531
    %v4082 = vpack.c.b16 %v3557, %v3532
    %v4083 = vpack.c.b16 %v3558, %v3533
    %v4084 = vpack.c.b16 %v3559, %v3534
    %v4085 = vpack.c.b16 %v3560, %v3535
    %v4086 = vpack.c.b16 %v3561, %v3536
    %v4087 = vpack.c.b16 %v3562, %v3537
    %v4088 = vpack.c.b16 %v3563, %v3538
    %v4089 = vpack.c.b16 %v3564, %v3539
    %v4090 = vpack.c.b16 %v3565, %v3540
    %v4091 = vpack.c.b16 %v3566, %v3541
    %v4092 = vpack.c.b16 %v3567, %v3542
    %v4093 = vpack.c.b16 %v3568, %v3543
    %v4094 = vpack.c.b16 %v3569, %v3544
    %v4095 = vpack.c.b16 %v3570, %v3545
    %v4096 = vpack.c.b16 %v3571, %v3546
    %v4097 = vpack.c.b16 %v3572, %v3547
    %v4098 = vpack.c.b16 %v3598, %v3573
    %v4099 = vpack.c.b16 %v3599, %v3574
    %v4100 = vpack.c.b16 %v3600, %v3575
    %v4101 = vpack.c.b16 %v3601, %v3576
    %v4102 = vpack.c.b16 %v3602, %v3577
    %v4103 = vpack.c.b16 %v3603, %v3578
    %v4104 = vpack.c.b16 %v3604, %v3579
    %v4105 = vpack.c.b16 %v3605, %v3580
    %v4106 = vpack.c.b16 %v3606, %v3581
    %v4107 = vpack.c.b16 %v3607, %v3582
    %v4108 = vpack.c.b16 %v3608, %v3583
    %v4109 = vpack.c.b16 %v3609, %v3584
    %v4110 = vpack.c.b16 %v3610, %v3585
    %v4111 = vpack.c.b16 %v3611, %v3586
    %v4112 = vpack.c.b16 %v3612, %v3587
    %v4113 = vpack.c.b16 %v3613, %v3588
    %v4114 = vpack.c.b16 %v3614, %v3589
    %v4115 = vpack.c.b16 %v3615, %v3590
    %v4116 = vpack.c.b16 %v3616, %v3591
    %v4117 = vpack.c.b16 %v3617, %v3592
    %v4118 = vpack.c.b16 %v3618, %v3593
    %v4119 = vpack.c.b16 %v3619, %v3594
    %v4120 = vpack.c.b16 %v3620, %v3595
    %v4121 = vpack.c.b16 %v3621, %v3596
    %v4122 = vpack.c.b16 %v3622, %v3597
    %v4123 = vpack.c.b16 %v3648, %v3623
    %v4124 = vpack.c.b16 %v3649, %v3624
    %v4125 = vpack.c.b16 %v3650, %v3625
    %v4126 = vpack.c.b16 %v3651, %v3626
    %v4127 = vpack.c.b16 %v3652, %v3627
    %v4128 = vpack.c.b16 %v3653, %v3628
    %v4129 = vpack.c.b16 %v3654, %v3629
    %v4130 = vpack.c.b16 %v3655, %v3630
    %v4131 = vpack.c.b16 %v3656, %v3631
    %v4132 = vpack.c.b16 %v3657, %v3632
    %v4133 = vpack.c.b16 %v3658, %v3633
    %v4134 = vpack.c.b16 %v3659, %v3634
    %v4135 = vpack.c.b16 %v3660, %v3635
    %v4136 = vpack.c.b16 %v3661, %v3636
    %v4137 = vpack.c.b16 %v3662, %v3637
    %v4138 = vpack.c.b16 %v3663, %v3638
    %v4139 = vpack.c.b16 %v3664, %v3639
    %v4140 = vpack.c.b16 %v3665, %v3640
    %v4141 = vpack.c.b16 %v3666, %v3641
    %v4142 = vpack.c.b16 %v3667, %v3642
    %v4143 = vpack.c.b16 %v3668, %v3643
    %v4144 = vpack.c.b16 %v3669, %v3644
    %v4145 = vpack.c.b16 %v3670, %v3645
    %v4146 = vpack.c.b16 %v3671, %v3646
    %v4147 = vpack.c.b16 %v3672, %v3647
    %v4599 = vsel %vm1420, %v1601, 0
    %v4602 = vsel %vm1424, %v4123, 0
    %v4605 = vsel %vm1424, %v4124, 0
    %v4608 = vsel %vm1424, %v4125, 0
    %v4611 = vsel %vm1424, %v4126, 0
    %v4614 = vsel %vm1424, %v4127, 0
    %v4617 = vsel %vm1424, %v4128, 0
    %v4620 = vsel %vm1424, %v4129, 0
    %v4623 = vsel %vm1424, %v4130, 0
    %v4626 = vsel %vm1424, %v4131, 0
    %v4629 = vsel %vm1424, %v4132, 0
    %v4632 = vsel %vm1424, %v4133, 0
    %v4635 = vsel %vm1424, %v4134, 0
    %v4638 = vsel %vm1424, %v4135, 0
    %v4641 = vsel %vm1424, %v4136, 0
    %v4644 = vsel %vm1424, %v4137, 0
    %v4647 = vsel %vm1424, %v4138, 0
    %v4650 = vsel %vm1424, %v4139, 0
    %v4653 = vsel %vm1424, %v4140, 0
    %v4656 = vsel %vm1424, %v4141, 0
    %v4659 = vsel %vm1424, %v4142, 0
    %v4662 = vsel %vm1424, %v4143, 0
    %v4665 = vsel %vm1424, %v4144, 0
    %v4668 = vsel %vm1424, %v4145, 0
    %v4671 = vsel %vm1424, %v4146, 0
    %v4674 = vsel %vm1424, %v4147, 0
    %4676 = vmatprep.subr.bf16.mxu0 %v3674
    %4677 = vmatpush1.bf16.msra.mxu0 %v3673
    %4678 = vmatprep.subr.bf16.mxu0 %v3699
    %4679 = vmatpush1.bf16.msra.mxu0 %v3698
    %4680 = vmatprep.subr.bf16.mxu0 %v3724
    %4681 = vmatpush1.bf16.msra.mxu0 %v3723
    %4682 = vmatprep.subr.bf16.mxu0 %v3749
    %4683 = vmatpush1.bf16.msra.mxu0 %v3748
    %4684 = vmatprep.subr.bf16.mxu0 %v3774
    %4685 = vmatpush1.bf16.msra.mxu0 %v3773
    %4686 = vmatprep.subr.bf16.mxu0 %v3799
    %4687 = vmatpush1.bf16.msra.mxu0 %v3798
    %4688 = vmatprep.subr.bf16.mxu0 %v3824
    %4689 = vmatpush1.bf16.msra.mxu0 %v3823
    %4690 = vmatprep.subr.bf16.mxu0 %v3849
    %4691 = vmatpush1.bf16.msra.mxu0 %v3848
    %4692 = vmatprep.subr.bf16.mxu0 %v3874
    %4693 = vmatpush1.bf16.msra.mxu0 %v3873
    %4694 = vmatprep.subr.bf16.mxu0 %v3899
    %4695 = vmatpush1.bf16.msra.mxu0 %v3898
    %4696 = vmatprep.subr.bf16.mxu0 %v3924
    %4697 = vmatpush1.bf16.msra.mxu0 %v3923
    %4698 = vmatprep.subr.bf16.mxu0 %v3949
    %4699 = vmatpush1.bf16.msra.mxu0 %v3948
    %4700 = vmatprep.subr.bf16.mxu0 %v3974
    %4701 = vmatpush1.bf16.msra.mxu0 %v3973
    %4702 = vmatprep.subr.bf16.mxu0 %v3999
    %4703 = vmatpush1.bf16.msra.mxu0 %v3998
    %4704 = vmatprep.subr.bf16.mxu0 %v4024
    %4705 = vmatpush1.bf16.msra.mxu0 %v4023
    %4706 = vmatprep.subr.bf16.mxu0 %v4049
    %4707 = vmatpush1.bf16.msra.mxu0 %v4048
    %4708 = vmatprep.mubr.bf16.mxu0 %v1600
    %4709 = vmatmul.mubr.bf16.gmra.mrb[0].mxu0 %v1599
    %v4710 = vpop.f32.mrb[0].mxu0
    %v4711 = vadd.f32 %v2107, %v4710
    %v4712 = vpop.f32.mrb[0].mxu0
    %v4713 = vadd.f32 %v2111, %v4712
    %v4714 = vpop.f32.mrb[0].mxu0
    %v4715 = vpop.f32.mrb[0].mxu0
    %4716 = vdwg.mxu0
    %4717 = vmatprep.subr.bf16.mxu0 %v4074
    %4718 = vmatpush1.bf16.msra.mxu0 %v4073
    %4719 = vmatprep.subr.bf16.mxu0 %v4099
    %4720 = vmatpush1.bf16.msra.mxu0 %v4098
    %4721 = vmatprep.subr.bf16.mxu0 %v4605
    %4722 = vmatpush1.bf16.msra.mxu0 %v4602
    %4723 = vmatprep.subr.bf16.mxu0 0
    %4724 = vmatpush1.bf16.msra.mxu0 0
    %4725 = vmatprep.subr.bf16.mxu0 0
    %4726 = vmatpush1.bf16.msra.mxu0 0
    %4727 = vmatprep.subr.bf16.mxu0 0
    %4728 = vmatpush1.bf16.msra.mxu0 0
    %4729 = vmatprep.subr.bf16.mxu0 0
    %4730 = vmatpush1.bf16.msra.mxu0 0
    %4731 = vmatprep.subr.bf16.mxu0 0
    %4732 = vmatpush1.bf16.msra.mxu0 0
    %4733 = vmatprep.subr.bf16.mxu0 0
    %4734 = vmatpush1.bf16.msra.mxu0 0
    %4735 = vmatprep.subr.bf16.mxu0 0
    %4736 = vmatpush1.bf16.msra.mxu0 0
    %4737 = vmatprep.subr.bf16.mxu0 0
    %4738 = vmatpush1.bf16.msra.mxu0 0
    %4739 = vmatprep.subr.bf16.mxu0 0
    %4740 = vmatpush1.bf16.msra.mxu0 0
    %4741 = vmatprep.subr.bf16.mxu0 0
    %4742 = vmatpush1.bf16.msra.mxu0 0
    %4743 = vmatprep.subr.bf16.mxu0 0
    %4744 = vmatpush1.bf16.msra.mxu0 0
    %4745 = vmatprep.subr.bf16.mxu0 0
    %4746 = vmatpush1.bf16.msra.mxu0 0
    %4747 = vmatprep.subr.bf16.mxu0 0
    %4748 = vmatpush1.bf16.msra.mxu0 0
    %4749 = vmatprep.mubr.bf16.mxu0 0
    %4750 = vmatmul.mubr.bf16.gmra.mrb[0].mxu0 %v4599
    %v4751 = vpop.f32.mrb[0].mxu0
    %v4752 = vadd.f32 %v4711, %v4751
    %v4753 = vpop.f32.mrb[0].mxu0
    %v4754 = vadd.f32 %v4713, %v4753
    %v4755 = vpop.f32.mrb[0].mxu0
    %v4756 = vpop.f32.mrb[0].mxu0
    %4757 = vdwg.mxu0
    %4758 = vmatprep.subr.bf16.mxu0 %v3676
    %4759 = vmatpush1.bf16.msra.mxu0 %v3675
    %4760 = vmatprep.subr.bf16.mxu0 %v3701
    %4761 = vmatpush1.bf16.msra.mxu0 %v3700
    %4762 = vmatprep.subr.bf16.mxu0 %v3726
    %4763 = vmatpush1.bf16.msra.mxu0 %v3725
    %4764 = vmatprep.subr.bf16.mxu0 %v3751
    %4765 = vmatpush1.bf16.msra.mxu0 %v3750
    %4766 = vmatprep.subr.bf16.mxu0 %v3776
    %4767 = vmatpush1.bf16.msra.mxu0 %v3775
    %4768 = vmatprep.subr.bf16.mxu0 %v3801
    %4769 = vmatpush1.bf16.msra.mxu0 %v3800
    %4770 = vmatprep.subr.bf16.mxu0 %v3826
    %4771 = vmatpush1.bf16.msra.mxu0 %v3825
    %4772 = vmatprep.subr.bf16.mxu0 %v3851
    %4773 = vmatpush1.bf16.msra.mxu0 %v3850
    %4774 = vmatprep.subr.bf16.mxu0 %v3876
    %4775 = vmatpush1.bf16.msra.mxu0 %v3875
    %4776 = vmatprep.subr.bf16.mxu0 %v3901
    %4777 = vmatpush1.bf16.msra.mxu0 %v3900
    %4778 = vmatprep.subr.bf16.mxu0 %v3926
    %4779 = vmatpush1.bf16.msra.mxu0 %v3925
    %4780 = vmatprep.subr.bf16.mxu0 %v3951
    %4781 = vmatpush1.bf16.msra.mxu0 %v3950
    %4782 = vmatprep.subr.bf16.mxu0 %v3976
    %4783 = vmatpush1.bf16.msra.mxu0 %v3975
    %4784 = vmatprep.subr.bf16.mxu0 %v4001
    %4785 = vmatpush1.bf16.msra.mxu0 %v4000
    %4786 = vmatprep.subr.bf16.mxu0 %v4026
    %4787 = vmatpush1.bf16.msra.mxu0 %v4025
    %4788 = vmatprep.subr.bf16.mxu0 %v4051
    %4789 = vmatpush1.bf16.msra.mxu0 %v4050
    %4790 = vmatprep.mubr.bf16.mxu0 %v1600
    %4791 = vmatmul.mubr.bf16.gmra.mrb[0].mxu0 %v1599
    %v4792 = vpop.f32.mrb[0].mxu0
    %v4793 = vadd.f32 %v2115, %v4792
    %v4794 = vpop.f32.mrb[0].mxu0
    %v4795 = vadd.f32 %v2119, %v4794
    %v4796 = vpop.f32.mrb[0].mxu0
    %v4797 = vpop.f32.mrb[0].mxu0
    %4798 = vdwg.mxu0
    %4799 = vmatprep.subr.bf16.mxu0 %v4076
    %4800 = vmatpush1.bf16.msra.mxu0 %v4075
    %4801 = vmatprep.subr.bf16.mxu0 %v4101
    %4802 = vmatpush1.bf16.msra.mxu0 %v4100
    %4803 = vmatprep.subr.bf16.mxu0 %v4611
    %4804 = vmatpush1.bf16.msra.mxu0 %v4608
    %4805 = vmatprep.subr.bf16.mxu0 0
    %4806 = vmatpush1.bf16.msra.mxu0 0
    %4807 = vmatprep.subr.bf16.mxu0 0
    %4808 = vmatpush1.bf16.msra.mxu0 0
    %4809 = vmatprep.subr.bf16.mxu0 0
    %4810 = vmatpush1.bf16.msra.mxu0 0
    %4811 = vmatprep.subr.bf16.mxu0 0
    %4812 = vmatpush1.bf16.msra.mxu0 0
    %4813 = vmatprep.subr.bf16.mxu0 0
    %4814 = vmatpush1.bf16.msra.mxu0 0
    %4815 = vmatprep.subr.bf16.mxu0 0
    %4816 = vmatpush1.bf16.msra.mxu0 0
    %4817 = vmatprep.subr.bf16.mxu0 0
    %4818 = vmatpush1.bf16.msra.mxu0 0
    %4819 = vmatprep.subr.bf16.mxu0 0
    %4820 = vmatpush1.bf16.msra.mxu0 0
    %4821 = vmatprep.subr.bf16.mxu0 0
    %4822 = vmatpush1.bf16.msra.mxu0 0
    %4823 = vmatprep.subr.bf16.mxu0 0
    %4824 = vmatpush1.bf16.msra.mxu0 0
    %4825 = vmatprep.subr.bf16.mxu0 0
    %4826 = vmatpush1.bf16.msra.mxu0 0
    %4827 = vmatprep.subr.bf16.mxu0 0
    %4828 = vmatpush1.bf16.msra.mxu0 0
    %4829 = vmatprep.subr.bf16.mxu0 0
    %4830 = vmatpush1.bf16.msra.mxu0 0
    %4831 = vmatprep.mubr.bf16.mxu0 0
    %4832 = vmatmul.mubr.bf16.gmra.mrb[0].mxu0 %v4599
    %v4833 = vpop.f32.mrb[0].mxu0
    %v4834 = vadd.f32 %v4793, %v4833
    %v4835 = vpop.f32.mrb[0].mxu0
    %v4836 = vadd.f32 %v4795, %v4835
    %v4837 = vpop.f32.mrb[0].mxu0
    %v4838 = vpop.f32.mrb[0].mxu0
    %4839 = vdwg.mxu0
    %4840 = vmatprep.subr.bf16.mxu0 %v3678
    %4841 = vmatpush1.bf16.msra.mxu0 %v3677
    %4842 = vmatprep.subr.bf16.mxu0 %v3703
    %4843 = vmatpush1.bf16.msra.mxu0 %v3702
    %4844 = vmatprep.subr.bf16.mxu0 %v3728
    %4845 = vmatpush1.bf16.msra.mxu0 %v3727
    %4846 = vmatprep.subr.bf16.mxu0 %v3753
    %4847 = vmatpush1.bf16.msra.mxu0 %v3752
    %4848 = vmatprep.subr.bf16.mxu0 %v3778
    %4849 = vmatpush1.bf16.msra.mxu0 %v3777
    %4850 = vmatprep.subr.bf16.mxu0 %v3803
    %4851 = vmatpush1.bf16.msra.mxu0 %v3802
    %4852 = vmatprep.subr.bf16.mxu0 %v3828
    %4853 = vmatpush1.bf16.msra.mxu0 %v3827
    %4854 = vmatprep.subr.bf16.mxu0 %v3853
    %4855 = vmatpush1.bf16.msra.mxu0 %v3852
    %4856 = vmatprep.subr.bf16.mxu0 %v3878
    %4857 = vmatpush1.bf16.msra.mxu0 %v3877
    %4858 = vmatprep.subr.bf16.mxu0 %v3903
    %4859 = vmatpush1.bf16.msra.mxu0 %v3902
    %4860 = vmatprep.subr.bf16.mxu0 %v3928
    %4861 = vmatpush1.bf16.msra.mxu0 %v3927
    %4862 = vmatprep.subr.bf16.mxu0 %v3953
    %4863 = vmatpush1.bf16.msra.mxu0 %v3952
    %4864 = vmatprep.subr.bf16.mxu0 %v3978
    %4865 = vmatpush1.bf16.msra.mxu0 %v3977
    %4866 = vmatprep.subr.bf16.mxu0 %v4003
    %4867 = vmatpush1.bf16.msra.mxu0 %v4002
    %4868 = vmatprep.subr.bf16.mxu0 %v4028
    %4869 = vmatpush1.bf16.msra.mxu0 %v4027
    %4870 = vmatprep.subr.bf16.mxu0 %v4053
    %4871 = vmatpush1.bf16.msra.mxu0 %v4052
    %4872 = vmatprep.mubr.bf16.mxu0 %v1600
    %4873 = vmatmul.mubr.bf16.gmra.mrb[0].mxu0 %v1599
    %v4874 = vpop.f32.mrb[0].mxu0
    %v4875 = vadd.f32 %v2123, %v4874
    %v4876 = vpop.f32.mrb[0].mxu0
    %v4877 = vadd.f32 %v2127, %v4876
    %v4878 = vpop.f32.mrb[0].mxu0
    %v4879 = vpop.f32.mrb[0].mxu0
    %4880 = vdwg.mxu0
    %4881 = vmatprep.subr.bf16.mxu0 %v4078
    %4882 = vmatpush1.bf16.msra.mxu0 %v4077
    %4883 = vmatprep.subr.bf16.mxu0 %v4103
    %4884 = vmatpush1.bf16.msra.mxu0 %v4102
    %4885 = vmatprep.subr.bf16.mxu0 %v4617
    %4886 = vmatpush1.bf16.msra.mxu0 %v4614
    %4887 = vmatprep.subr.bf16.mxu0 0
    %4888 = vmatpush1.bf16.msra.mxu0 0
    %4889 = vmatprep.subr.bf16.mxu0 0
    %4890 = vmatpush1.bf16.msra.mxu0 0
    %4891 = vmatprep.subr.bf16.mxu0 0
    %4892 = vmatpush1.bf16.msra.mxu0 0
    %4893 = vmatprep.subr.bf16.mxu0 0
    %4894 = vmatpush1.bf16.msra.mxu0 0
    %4895 = vmatprep.subr.bf16.mxu0 0
    %4896 = vmatpush1.bf16.msra.mxu0 0
    %4897 = vmatprep.subr.bf16.mxu0 0
    %4898 = vmatpush1.bf16.msra.mxu0 0
    %4899 = vmatprep.subr.bf16.mxu0 0
    %4900 = vmatpush1.bf16.msra.mxu0 0
    %4901 = vmatprep.subr.bf16.mxu0 0
    %4902 = vmatpush1.bf16.msra.mxu0 0
    %4903 = vmatprep.subr.bf16.mxu0 0
    %4904 = vmatpush1.bf16.msra.mxu0 0
    %4905 = vmatprep.subr.bf16.mxu0 0
    %4906 = vmatpush1.bf16.msra.mxu0 0
    %4907 = vmatprep.subr.bf16.mxu0 0
    %4908 = vmatpush1.bf16.msra.mxu0 0
    %4909 = vmatprep.subr.bf16.mxu0 0
    %4910 = vmatpush1.bf16.msra.mxu0 0
    %4911 = vmatprep.subr.bf16.mxu0 0
    %4912 = vmatpush1.bf16.msra.mxu0 0
    %4913 = vmatprep.mubr.bf16.mxu0 0
    %4914 = vmatmul.mubr.bf16.gmra.mrb[0].mxu0 %v4599
    %v4915 = vpop.f32.mrb[0].mxu0
    %v4916 = vadd.f32 %v4875, %v4915
    %v4917 = vpop.f32.mrb[0].mxu0
    %v4918 = vadd.f32 %v4877, %v4917
    %v4919 = vpop.f32.mrb[0].mxu0
    %v4920 = vpop.f32.mrb[0].mxu0
    %4921 = vdwg.mxu0
    %4922 = vmatprep.subr.bf16.mxu0 %v3680
    %4923 = vmatpush1.bf16.msra.mxu0 %v3679
    %4924 = vmatprep.subr.bf16.mxu0 %v3705
    %4925 = vmatpush1.bf16.msra.mxu0 %v3704
    %4926 = vmatprep.subr.bf16.mxu0 %v3730
    %4927 = vmatpush1.bf16.msra.mxu0 %v3729
    %4928 = vmatprep.subr.bf16.mxu0 %v3755
    %4929 = vmatpush1.bf16.msra.mxu0 %v3754
    %4930 = vmatprep.subr.bf16.mxu0 %v3780
    %4931 = vmatpush1.bf16.msra.mxu0 %v3779
    %4932 = vmatprep.subr.bf16.mxu0 %v3805
    %4933 = vmatpush1.bf16.msra.mxu0 %v3804
    %4934 = vmatprep.subr.bf16.mxu0 %v3830
    %4935 = vmatpush1.bf16.msra.mxu0 %v3829
    %4936 = vmatprep.subr.bf16.mxu0 %v3855
    %4937 = vmatpush1.bf16.msra.mxu0 %v3854
    %4938 = vmatprep.subr.bf16.mxu0 %v3880
    %4939 = vmatpush1.bf16.msra.mxu0 %v3879
    %4940 = vmatprep.subr.bf16.mxu0 %v3905
    %4941 = vmatpush1.bf16.msra.mxu0 %v3904
    %4942 = vmatprep.subr.bf16.mxu0 %v3930
    %4943 = vmatpush1.bf16.msra.mxu0 %v3929
    %4944 = vmatprep.subr.bf16.mxu0 %v3955
    %4945 = vmatpush1.bf16.msra.mxu0 %v3954
    %4946 = vmatprep.subr.bf16.mxu0 %v3980
    %4947 = vmatpush1.bf16.msra.mxu0 %v3979
    %4948 = vmatprep.subr.bf16.mxu0 %v4005
    %4949 = vmatpush1.bf16.msra.mxu0 %v4004
    %4950 = vmatprep.subr.bf16.mxu0 %v4030
    %4951 = vmatpush1.bf16.msra.mxu0 %v4029
    %4952 = vmatprep.subr.bf16.mxu0 %v4055
    %4953 = vmatpush1.bf16.msra.mxu0 %v4054
    %4954 = vmatprep.mubr.bf16.mxu0 %v1600
    %4955 = vmatmul.mubr.bf16.gmra.mrb[0].mxu0 %v1599
    %v4956 = vpop.f32.mrb[0].mxu0
    %v4957 = vadd.f32 %v2131, %v4956
    %v4958 = vpop.f32.mrb[0].mxu0
    %v4959 = vadd.f32 %v2135, %v4958
    %v4960 = vpop.f32.mrb[0].mxu0
    %v4961 = vpop.f32.mrb[0].mxu0
    %4962 = vdwg.mxu0
    %4963 = vmatprep.subr.bf16.mxu0 %v4080
    %4964 = vmatpush1.bf16.msra.mxu0 %v4079
    %4965 = vmatprep.subr.bf16.mxu0 %v4105
    %4966 = vmatpush1.bf16.msra.mxu0 %v4104
    %4967 = vmatprep.subr.bf16.mxu0 %v4623
    %4968 = vmatpush1.bf16.msra.mxu0 %v4620
    %4969 = vmatprep.subr.bf16.mxu0 0
    %4970 = vmatpush1.bf16.msra.mxu0 0
    %4971 = vmatprep.subr.bf16.mxu0 0
    %4972 = vmatpush1.bf16.msra.mxu0 0
    %4973 = vmatprep.subr.bf16.mxu0 0
    %4974 = vmatpush1.bf16.msra.mxu0 0
    %4975 = vmatprep.subr.bf16.mxu0 0
    %4976 = vmatpush1.bf16.msra.mxu0 0
    %4977 = vmatprep.subr.bf16.mxu0 0
    %4978 = vmatpush1.bf16.msra.mxu0 0
    %4979 = vmatprep.subr.bf16.mxu0 0
    %4980 = vmatpush1.bf16.msra.mxu0 0
    %4981 = vmatprep.subr.bf16.mxu0 0
    %4982 = vmatpush1.bf16.msra.mxu0 0
    %4983 = vmatprep.subr.bf16.mxu0 0
    %4984 = vmatpush1.bf16.msra.mxu0 0
    %4985 = vmatprep.subr.bf16.mxu0 0
    %4986 = vmatpush1.bf16.msra.mxu0 0
    %4987 = vmatprep.subr.bf16.mxu0 0
    %4988 = vmatpush1.bf16.msra.mxu0 0
    %4989 = vmatprep.subr.bf16.mxu0 0
    %4990 = vmatpush1.bf16.msra.mxu0 0
    %4991 = vmatprep.subr.bf16.mxu0 0
    %4992 = vmatpush1.bf16.msra.mxu0 0
    %4993 = vmatprep.subr.bf16.mxu0 0
    %4994 = vmatpush1.bf16.msra.mxu0 0
    %4995 = vmatprep.mubr.bf16.mxu0 0
    %4996 = vmatmul.mubr.bf16.gmra.mrb[0].mxu0 %v4599
    %v4997 = vpop.f32.mrb[0].mxu0
    %v4998 = vadd.f32 %v4957, %v4997
    %v4999 = vpop.f32.mrb[0].mxu0
    %v5000 = vadd.f32 %v4959, %v4999
    %v5001 = vpop.f32.mrb[0].mxu0
    %v5002 = vpop.f32.mrb[0].mxu0
    %5003 = vdwg.mxu0
    %5004 = vmatprep.subr.bf16.mxu0 %v3682
    %5005 = vmatpush1.bf16.msra.mxu0 %v3681
    %5006 = vmatprep.subr.bf16.mxu0 %v3707
    %5007 = vmatpush1.bf16.msra.mxu0 %v3706
    %5008 = vmatprep.subr.bf16.mxu0 %v3732
    %5009 = vmatpush1.bf16.msra.mxu0 %v3731
    %5010 = vmatprep.subr.bf16.mxu0 %v3757
    %5011 = vmatpush1.bf16.msra.mxu0 %v3756
    %5012 = vmatprep.subr.bf16.mxu0 %v3782
    %5013 = vmatpush1.bf16.msra.mxu0 %v3781
    %5014 = vmatprep.subr.bf16.mxu0 %v3807
    %5015 = vmatpush1.bf16.msra.mxu0 %v3806
    %5016 = vmatprep.subr.bf16.mxu0 %v3832
    %5017 = vmatpush1.bf16.msra.mxu0 %v3831
    %5018 = vmatprep.subr.bf16.mxu0 %v3857
    %5019 = vmatpush1.bf16.msra.mxu0 %v3856
    %5020 = vmatprep.subr.bf16.mxu0 %v3882
    %5021 = vmatpush1.bf16.msra.mxu0 %v3881
    %5022 = vmatprep.subr.bf16.mxu0 %v3907
    %5023 = vmatpush1.bf16.msra.mxu0 %v3906
    %5024 = vmatprep.subr.bf16.mxu0 %v3932
    %5025 = vmatpush1.bf16.msra.mxu0 %v3931
    %5026 = vmatprep.subr.bf16.mxu0 %v3957
    %5027 = vmatpush1.bf16.msra.mxu0 %v3956
    %5028 = vmatprep.subr.bf16.mxu0 %v3982
    %5029 = vmatpush1.bf16.msra.mxu0 %v3981
    %5030 = vmatprep.subr.bf16.mxu0 %v4007
    %5031 = vmatpush1.bf16.msra.mxu0 %v4006
    %5032 = vmatprep.subr.bf16.mxu0 %v4032
    %5033 = vmatpush1.bf16.msra.mxu0 %v4031
    %5034 = vmatprep.subr.bf16.mxu0 %v4057
    %5035 = vmatpush1.bf16.msra.mxu0 %v4056
    %5036 = vmatprep.mubr.bf16.mxu0 %v1600
    %5037 = vmatmul.mubr.bf16.gmra.mrb[0].mxu0 %v1599
    %v5038 = vpop.f32.mrb[0].mxu0
    %v5039 = vadd.f32 %v2139, %v5038
    %v5040 = vpop.f32.mrb[0].mxu0
    %v5041 = vadd.f32 %v2143, %v5040
    %v5042 = vpop.f32.mrb[0].mxu0
    %v5043 = vpop.f32.mrb[0].mxu0
    %5044 = vdwg.mxu0
    %5045 = vmatprep.subr.bf16.mxu0 %v4082
    %5046 = vmatpush1.bf16.msra.mxu0 %v4081
    %5047 = vmatprep.subr.bf16.mxu0 %v4107
    %5048 = vmatpush1.bf16.msra.mxu0 %v4106
    %5049 = vmatprep.subr.bf16.mxu0 %v4629
    %5050 = vmatpush1.bf16.msra.mxu0 %v4626
    %5051 = vmatprep.subr.bf16.mxu0 0
    %5052 = vmatpush1.bf16.msra.mxu0 0
    %5053 = vmatprep.subr.bf16.mxu0 0
    %5054 = vmatpush1.bf16.msra.mxu0 0
    %5055 = vmatprep.subr.bf16.mxu0 0
    %5056 = vmatpush1.bf16.msra.mxu0 0
    %5057 = vmatprep.subr.bf16.mxu0 0
    %5058 = vmatpush1.bf16.msra.mxu0 0
    %5059 = vmatprep.subr.bf16.mxu0 0
    %5060 = vmatpush1.bf16.msra.mxu0 0
    %5061 = vmatprep.subr.bf16.mxu0 0
    %5062 = vmatpush1.bf16.msra.mxu0 0
    %5063 = vmatprep.subr.bf16.mxu0 0
    %5064 = vmatpush1.bf16.msra.mxu0 0
    %5065 = vmatprep.subr.bf16.mxu0 0
    %5066 = vmatpush1.bf16.msra.mxu0 0
    %5067 = vmatprep.subr.bf16.mxu0 0
    %5068 = vmatpush1.bf16.msra.mxu0 0
    %5069 = vmatprep.subr.bf16.mxu0 0
    %5070 = vmatpush1.bf16.msra.mxu0 0
    %5071 = vmatprep.subr.bf16.mxu0 0
    %5072 = vmatpush1.bf16.msra.mxu0 0
    %5073 = vmatprep.subr.bf16.mxu0 0
    %5074 = vmatpush1.bf16.msra.mxu0 0
    %5075 = vmatprep.subr.bf16.mxu0 0
    %5076 = vmatpush1.bf16.msra.mxu0 0
    %5077 = vmatprep.mubr.bf16.mxu0 0
    %5078 = vmatmul.mubr.bf16.gmra.mrb[0].mxu0 %v4599
    %v5079 = vpop.f32.mrb[0].mxu0
    %v5080 = vadd.f32 %v5039, %v5079
    %v5081 = vpop.f32.mrb[0].mxu0
    %v5082 = vadd.f32 %v5041, %v5081
    %v5083 = vpop.f32.mrb[0].mxu0
    %v5084 = vpop.f32.mrb[0].mxu0
    %5085 = vdwg.mxu0
    %5086 = vmatprep.subr.bf16.mxu0 %v3684
    %5087 = vmatpush1.bf16.msra.mxu0 %v3683
    %5088 = vmatprep.subr.bf16.mxu0 %v3709
    %5089 = vmatpush1.bf16.msra.mxu0 %v3708
    %5090 = vmatprep.subr.bf16.mxu0 %v3734
    %5091 = vmatpush1.bf16.msra.mxu0 %v3733
    %5092 = vmatprep.subr.bf16.mxu0 %v3759
    %5093 = vmatpush1.bf16.msra.mxu0 %v3758
    %5094 = vmatprep.subr.bf16.mxu0 %v3784
    %5095 = vmatpush1.bf16.msra.mxu0 %v3783
    %5096 = vmatprep.subr.bf16.mxu0 %v3809
    %5097 = vmatpush1.bf16.msra.mxu0 %v3808
    %5098 = vmatprep.subr.bf16.mxu0 %v3834
    %5099 = vmatpush1.bf16.msra.mxu0 %v3833
    %5100 = vmatprep.subr.bf16.mxu0 %v3859
    %5101 = vmatpush1.bf16.msra.mxu0 %v3858
    %5102 = vmatprep.subr.bf16.mxu0 %v3884
    %5103 = vmatpush1.bf16.msra.mxu0 %v3883
    %5104 = vmatprep.subr.bf16.mxu0 %v3909
    %5105 = vmatpush1.bf16.msra.mxu0 %v3908
    %5106 = vmatprep.subr.bf16.mxu0 %v3934
    %5107 = vmatpush1.bf16.msra.mxu0 %v3933
    %5108 = vmatprep.subr.bf16.mxu0 %v3959
    %5109 = vmatpush1.bf16.msra.mxu0 %v3958
    %5110 = vmatprep.subr.bf16.mxu0 %v3984
    %5111 = vmatpush1.bf16.msra.mxu0 %v3983
    %5112 = vmatprep.subr.bf16.mxu0 %v4009
    %5113 = vmatpush1.bf16.msra.mxu0 %v4008
    %5114 = vmatprep.subr.bf16.mxu0 %v4034
    %5115 = vmatpush1.bf16.msra.mxu0 %v4033
    %5116 = vmatprep.subr.bf16.mxu0 %v4059
    %5117 = vmatpush1.bf16.msra.mxu0 %v4058
    %5118 = vmatprep.mubr.bf16.mxu0 %v1600
    %5119 = vmatmul.mubr.bf16.gmra.mrb[0].mxu0 %v1599
    %v5120 = vpop.f32.mrb[0].mxu0
    %v5121 = vadd.f32 %v2147, %v5120
    %v5122 = vpop.f32.mrb[0].mxu0
    %v5123 = vadd.f32 %v2151, %v5122
    %v5124 = vpop.f32.mrb[0].mxu0
    %v5125 = vpop.f32.mrb[0].mxu0
    %5126 = vdwg.mxu0
    %5127 = vmatprep.subr.bf16.mxu0 %v4084
    %5128 = vmatpush1.bf16.msra.mxu0 %v4083
    %5129 = vmatprep.subr.bf16.mxu0 %v4109
    %5130 = vmatpush1.bf16.msra.mxu0 %v4108
    %5131 = vmatprep.subr.bf16.mxu0 %v4635
    %5132 = vmatpush1.bf16.msra.mxu0 %v4632
    %5133 = vmatprep.subr.bf16.mxu0 0
    %5134 = vmatpush1.bf16.msra.mxu0 0
    %5135 = vmatprep.subr.bf16.mxu0 0
    %5136 = vmatpush1.bf16.msra.mxu0 0
    %5137 = vmatprep.subr.bf16.mxu0 0
    %5138 = vmatpush1.bf16.msra.mxu0 0
    %5139 = vmatprep.subr.bf16.mxu0 0
    %5140 = vmatpush1.bf16.msra.mxu0 0
    %5141 = vmatprep.subr.bf16.mxu0 0
    %5142 = vmatpush1.bf16.msra.mxu0 0
    %5143 = vmatprep.subr.bf16.mxu0 0
    %5144 = vmatpush1.bf16.msra.mxu0 0
    %5145 = vmatprep.subr.bf16.mxu0 0
    %5146 = vmatpush1.bf16.msra.mxu0 0
    %5147 = vmatprep.subr.bf16.mxu0 0
    %5148 = vmatpush1.bf16.msra.mxu0 0
    %5149 = vmatprep.subr.bf16.mxu0 0
    %5150 = vmatpush1.bf16.msra.mxu0 0
    %5151 = vmatprep.subr.bf16.mxu0 0
    %5152 = vmatpush1.bf16.msra.mxu0 0
    %5153 = vmatprep.subr.bf16.mxu0 0
    %5154 = vmatpush1.bf16.msra.mxu0 0
    %5155 = vmatprep.subr.bf16.mxu0 0
    %5156 = vmatpush1.bf16.msra.mxu0 0
    %5157 = vmatprep.subr.bf16.mxu0 0
    %5158 = vmatpush1.bf16.msra.mxu0 0
    %5159 = vmatprep.mubr.bf16.mxu0 0
    %5160 = vmatmul.mubr.bf16.gmra.mrb[0].mxu0 %v4599
    %v5161 = vpop.f32.mrb[0].mxu0
    %v5162 = vadd.f32 %v5121, %v5161
    %v5163 = vpop.f32.mrb[0].mxu0
    %v5164 = vadd.f32 %v5123, %v5163
    %v5165 = vpop.f32.mrb[0].mxu0
    %v5166 = vpop.f32.mrb[0].mxu0
    %5167 = vdwg.mxu0
    %5168 = vmatprep.subr.bf16.mxu0 %v3686
    %5169 = vmatpush1.bf16.msra.mxu0 %v3685
    %5170 = vmatprep.subr.bf16.mxu0 %v3711
    %5171 = vmatpush1.bf16.msra.mxu0 %v3710
    %5172 = vmatprep.subr.bf16.mxu0 %v3736
    %5173 = vmatpush1.bf16.msra.mxu0 %v3735
    %5174 = vmatprep.subr.bf16.mxu0 %v3761
    %5175 = vmatpush1.bf16.msra.mxu0 %v3760
    %5176 = vmatprep.subr.bf16.mxu0 %v3786
    %5177 = vmatpush1.bf16.msra.mxu0 %v3785
    %5178 = vmatprep.subr.bf16.mxu0 %v3811
    %5179 = vmatpush1.bf16.msra.mxu0 %v3810
    %5180 = vmatprep.subr.bf16.mxu0 %v3836
    %5181 = vmatpush1.bf16.msra.mxu0 %v3835
    %5182 = vmatprep.subr.bf16.mxu0 %v3861
    %5183 = vmatpush1.bf16.msra.mxu0 %v3860
    %5184 = vmatprep.subr.bf16.mxu0 %v3886
    %5185 = vmatpush1.bf16.msra.mxu0 %v3885
    %5186 = vmatprep.subr.bf16.mxu0 %v3911
    %5187 = vmatpush1.bf16.msra.mxu0 %v3910
    %5188 = vmatprep.subr.bf16.mxu0 %v3936
    %5189 = vmatpush1.bf16.msra.mxu0 %v3935
    %5190 = vmatprep.subr.bf16.mxu0 %v3961
    %5191 = vmatpush1.bf16.msra.mxu0 %v3960
    %5192 = vmatprep.subr.bf16.mxu0 %v3986
    %5193 = vmatpush1.bf16.msra.mxu0 %v3985
    %5194 = vmatprep.subr.bf16.mxu0 %v4011
    %5195 = vmatpush1.bf16.msra.mxu0 %v4010
    %5196 = vmatprep.subr.bf16.mxu0 %v4036
    %5197 = vmatpush1.bf16.msra.mxu0 %v4035
    %5198 = vmatprep.subr.bf16.mxu0 %v4061
    %5199 = vmatpush1.bf16.msra.mxu0 %v4060
    %5200 = vmatprep.mubr.bf16.mxu0 %v1600
    %5201 = vmatmul.mubr.bf16.gmra.mrb[0].mxu0 %v1599
    %v5202 = vpop.f32.mrb[0].mxu0
    %v5203 = vadd.f32 %v2155, %v5202
    %v5204 = vpop.f32.mrb[0].mxu0
    %v5205 = vadd.f32 %v2159, %v5204
    %v5206 = vpop.f32.mrb[0].mxu0
    %v5207 = vpop.f32.mrb[0].mxu0
    %5208 = vdwg.mxu0
    %5209 = vmatprep.subr.bf16.mxu0 %v4086
    %5210 = vmatpush1.bf16.msra.mxu0 %v4085
    %5211 = vmatprep.subr.bf16.mxu0 %v4111
    %5212 = vmatpush1.bf16.msra.mxu0 %v4110
    %5213 = vmatprep.subr.bf16.mxu0 %v4641
    %5214 = vmatpush1.bf16.msra.mxu0 %v4638
    %5215 = vmatprep.subr.bf16.mxu0 0
    %5216 = vmatpush1.bf16.msra.mxu0 0
    %5217 = vmatprep.subr.bf16.mxu0 0
    %5218 = vmatpush1.bf16.msra.mxu0 0
    %5219 = vmatprep.subr.bf16.mxu0 0
    %5220 = vmatpush1.bf16.msra.mxu0 0
    %5221 = vmatprep.subr.bf16.mxu0 0
    %5222 = vmatpush1.bf16.msra.mxu0 0
    %5223 = vmatprep.subr.bf16.mxu0 0
    %5224 = vmatpush1.bf16.msra.mxu0 0
    %5225 = vmatprep.subr.bf16.mxu0 0
    %5226 = vmatpush1.bf16.msra.mxu0 0
    %5227 = vmatprep.subr.bf16.mxu0 0
    %5228 = vmatpush1.bf16.msra.mxu0 0
    %5229 = vmatprep.subr.bf16.mxu0 0
    %5230 = vmatpush1.bf16.msra.mxu0 0
    %5231 = vmatprep.subr.bf16.mxu0 0
    %5232 = vmatpush1.bf16.msra.mxu0 0
    %5233 = vmatprep.subr.bf16.mxu0 0
    %5234 = vmatpush1.bf16.msra.mxu0 0
    %5235 = vmatprep.subr.bf16.mxu0 0
    %5236 = vmatpush1.bf16.msra.mxu0 0
    %5237 = vmatprep.subr.bf16.mxu0 0
    %5238 = vmatpush1.bf16.msra.mxu0 0
    %5239 = vmatprep.subr.bf16.mxu0 0
    %5240 = vmatpush1.bf16.msra.mxu0 0
    %5241 = vmatprep.mubr.bf16.mxu0 0
    %5242 = vmatmul.mubr.bf16.gmra.mrb[0].mxu0 %v4599
    %v5243 = vpop.f32.mrb[0].mxu0
    %v5244 = vadd.f32 %v5203, %v5243
    %v5245 = vpop.f32.mrb[0].mxu0
    %v5246 = vadd.f32 %v5205, %v5245
    %v5247 = vpop.f32.mrb[0].mxu0
    %v5248 = vpop.f32.mrb[0].mxu0
    %5249 = vdwg.mxu0
    %5250 = vmatprep.subr.bf16.mxu0 %v3688
    %5251 = vmatpush1.bf16.msra.mxu0 %v3687
    %5252 = vmatprep.subr.bf16.mxu0 %v3713
    %5253 = vmatpush1.bf16.msra.mxu0 %v3712
    %5254 = vmatprep.subr.bf16.mxu0 %v3738
    %5255 = vmatpush1.bf16.msra.mxu0 %v3737
    %5256 = vmatprep.subr.bf16.mxu0 %v3763
    %5257 = vmatpush1.bf16.msra.mxu0 %v3762
    %5258 = vmatprep.subr.bf16.mxu0 %v3788
    %5259 = vmatpush1.bf16.msra.mxu0 %v3787
    %5260 = vmatprep.subr.bf16.mxu0 %v3813
    %5261 = vmatpush1.bf16.msra.mxu0 %v3812
    %5262 = vmatprep.subr.bf16.mxu0 %v3838
    %5263 = vmatpush1.bf16.msra.mxu0 %v3837
    %5264 = vmatprep.subr.bf16.mxu0 %v3863
    %5265 = vmatpush1.bf16.msra.mxu0 %v3862
    %5266 = vmatprep.subr.bf16.mxu0 %v3888
    %5267 = vmatpush1.bf16.msra.mxu0 %v3887
    %5268 = vmatprep.subr.bf16.mxu0 %v3913
    %5269 = vmatpush1.bf16.msra.mxu0 %v3912
    %5270 = vmatprep.subr.bf16.mxu0 %v3938
    %5271 = vmatpush1.bf16.msra.mxu0 %v3937
    %5272 = vmatprep.subr.bf16.mxu0 %v3963
    %5273 = vmatpush1.bf16.msra.mxu0 %v3962
    %5274 = vmatprep.subr.bf16.mxu0 %v3988
    %5275 = vmatpush1.bf16.msra.mxu0 %v3987
    %5276 = vmatprep.subr.bf16.mxu0 %v4013
    %5277 = vmatpush1.bf16.msra.mxu0 %v4012
    %5278 = vmatprep.subr.bf16.mxu0 %v4038
    %5279 = vmatpush1.bf16.msra.mxu0 %v4037
    %5280 = vmatprep.subr.bf16.mxu0 %v4063
    %5281 = vmatpush1.bf16.msra.mxu0 %v4062
    %5282 = vmatprep.mubr.bf16.mxu0 %v1600
    %5283 = vmatmul.mubr.bf16.gmra.mrb[0].mxu0 %v1599
    %v5284 = vpop.f32.mrb[0].mxu0
    %v5285 = vadd.f32 %v2163, %v5284
    %v5286 = vpop.f32.mrb[0].mxu0
    %v5287 = vadd.f32 %v2167, %v5286
    %v5288 = vpop.f32.mrb[0].mxu0
    %v5289 = vpop.f32.mrb[0].mxu0
    %5290 = vdwg.mxu0
    %5291 = vmatprep.subr.bf16.mxu0 %v4088
    %5292 = vmatpush1.bf16.msra.mxu0 %v4087
    %5293 = vmatprep.subr.bf16.mxu0 %v4113
    %5294 = vmatpush1.bf16.msra.mxu0 %v4112
    %5295 = vmatprep.subr.bf16.mxu0 %v4647
    %5296 = vmatpush1.bf16.msra.mxu0 %v4644
    %5297 = vmatprep.subr.bf16.mxu0 0
    %5298 = vmatpush1.bf16.msra.mxu0 0
    %5299 = vmatprep.subr.bf16.mxu0 0
    %5300 = vmatpush1.bf16.msra.mxu0 0
    %5301 = vmatprep.subr.bf16.mxu0 0
    %5302 = vmatpush1.bf16.msra.mxu0 0
    %5303 = vmatprep.subr.bf16.mxu0 0
    %5304 = vmatpush1.bf16.msra.mxu0 0
    %5305 = vmatprep.subr.bf16.mxu0 0
    %5306 = vmatpush1.bf16.msra.mxu0 0
    %5307 = vmatprep.subr.bf16.mxu0 0
    %5308 = vmatpush1.bf16.msra.mxu0 0
    %5309 = vmatprep.subr.bf16.mxu0 0
    %5310 = vmatpush1.bf16.msra.mxu0 0
    %5311 = vmatprep.subr.bf16.mxu0 0
    %5312 = vmatpush1.bf16.msra.mxu0 0
    %5313 = vmatprep.subr.bf16.mxu0 0
    %5314 = vmatpush1.bf16.msra.mxu0 0
    %5315 = vmatprep.subr.bf16.mxu0 0
    %5316 = vmatpush1.bf16.msra.mxu0 0
    %5317 = vmatprep.subr.bf16.mxu0 0
    %5318 = vmatpush1.bf16.msra.mxu0 0
    %5319 = vmatprep.subr.bf16.mxu0 0
    %5320 = vmatpush1.bf16.msra.mxu0 0
    %5321 = vmatprep.subr.bf16.mxu0 0
    %5322 = vmatpush1.bf16.msra.mxu0 0
    %5323 = vmatprep.mubr.bf16.mxu0 0
    %5324 = vmatmul.mubr.bf16.gmra.mrb[0].mxu0 %v4599
    %v5325 = vpop.f32.mrb[0].mxu0
    %v5326 = vadd.f32 %v5285, %v5325
    %v5327 = vpop.f32.mrb[0].mxu0
    %v5328 = vadd.f32 %v5287, %v5327
    %v5329 = vpop.f32.mrb[0].mxu0
    %v5330 = vpop.f32.mrb[0].mxu0
    %5331 = vdwg.mxu0
    %5332 = vmatprep.subr.bf16.mxu0 %v3690
    %5333 = vmatpush1.bf16.msra.mxu0 %v3689
    %5334 = vmatprep.subr.bf16.mxu0 %v3715
    %5335 = vmatpush1.bf16.msra.mxu0 %v3714
    %5336 = vmatprep.subr.bf16.mxu0 %v3740
    %5337 = vmatpush1.bf16.msra.mxu0 %v3739
    %5338 = vmatprep.subr.bf16.mxu0 %v3765
    %5339 = vmatpush1.bf16.msra.mxu0 %v3764
    %5340 = vmatprep.subr.bf16.mxu0 %v3790
    %5341 = vmatpush1.bf16.msra.mxu0 %v3789
    %5342 = vmatprep.subr.bf16.mxu0 %v3815
    %5343 = vmatpush1.bf16.msra.mxu0 %v3814
    %5344 = vmatprep.subr.bf16.mxu0 %v3840
    %5345 = vmatpush1.bf16.msra.mxu0 %v3839
    %5346 = vmatprep.subr.bf16.mxu0 %v3865
    %5347 = vmatpush1.bf16.msra.mxu0 %v3864
    %5348 = vmatprep.subr.bf16.mxu0 %v3890
    %5349 = vmatpush1.bf16.msra.mxu0 %v3889
    %5350 = vmatprep.subr.bf16.mxu0 %v3915
    %5351 = vmatpush1.bf16.msra.mxu0 %v3914
    %5352 = vmatprep.subr.bf16.mxu0 %v3940
    %5353 = vmatpush1.bf16.msra.mxu0 %v3939
    %5354 = vmatprep.subr.bf16.mxu0 %v3965
    %5355 = vmatpush1.bf16.msra.mxu0 %v3964
    %5356 = vmatprep.subr.bf16.mxu0 %v3990
    %5357 = vmatpush1.bf16.msra.mxu0 %v3989
    %5358 = vmatprep.subr.bf16.mxu0 %v4015
    %5359 = vmatpush1.bf16.msra.mxu0 %v4014
    %5360 = vmatprep.subr.bf16.mxu0 %v4040
    %5361 = vmatpush1.bf16.msra.mxu0 %v4039
    %5362 = vmatprep.subr.bf16.mxu0 %v4065
    %5363 = vmatpush1.bf16.msra.mxu0 %v4064
    %5364 = vmatprep.mubr.bf16.mxu0 %v1600
    %5365 = vmatmul.mubr.bf16.gmra.mrb[0].mxu0 %v1599
    %v5366 = vpop.f32.mrb[0].mxu0
    %v5367 = vadd.f32 %v2171, %v5366
    %v5368 = vpop.f32.mrb[0].mxu0
    %v5369 = vadd.f32 %v2175, %v5368
    %v5370 = vpop.f32.mrb[0].mxu0
    %v5371 = vpop.f32.mrb[0].mxu0
    %5372 = vdwg.mxu0
    %5373 = vmatprep.subr.bf16.mxu0 %v4090
    %5374 = vmatpush1.bf16.msra.mxu0 %v4089
    %5375 = vmatprep.subr.bf16.mxu0 %v4115
    %5376 = vmatpush1.bf16.msra.mxu0 %v4114
    %5377 = vmatprep.subr.bf16.mxu0 %v4653
    %5378 = vmatpush1.bf16.msra.mxu0 %v4650
    %5379 = vmatprep.subr.bf16.mxu0 0
    %5380 = vmatpush1.bf16.msra.mxu0 0
    %5381 = vmatprep.subr.bf16.mxu0 0
    %5382 = vmatpush1.bf16.msra.mxu0 0
    %5383 = vmatprep.subr.bf16.mxu0 0
    %5384 = vmatpush1.bf16.msra.mxu0 0
    %5385 = vmatprep.subr.bf16.mxu0 0
    %5386 = vmatpush1.bf16.msra.mxu0 0
    %5387 = vmatprep.subr.bf16.mxu0 0
    %5388 = vmatpush1.bf16.msra.mxu0 0
    %5389 = vmatprep.subr.bf16.mxu0 0
    %5390 = vmatpush1.bf16.msra.mxu0 0
    %5391 = vmatprep.subr.bf16.mxu0 0
    %5392 = vmatpush1.bf16.msra.mxu0 0
    %5393 = vmatprep.subr.bf16.mxu0 0
    %5394 = vmatpush1.bf16.msra.mxu0 0
    %5395 = vmatprep.subr.bf16.mxu0 0
    %5396 = vmatpush1.bf16.msra.mxu0 0
    %5397 = vmatprep.subr.bf16.mxu0 0
    %5398 = vmatpush1.bf16.msra.mxu0 0
    %5399 = vmatprep.subr.bf16.mxu0 0
    %5400 = vmatpush1.bf16.msra.mxu0 0
    %5401 = vmatprep.subr.bf16.mxu0 0
    %5402 = vmatpush1.bf16.msra.mxu0 0
    %5403 = vmatprep.subr.bf16.mxu0 0
    %5404 = vmatpush1.bf16.msra.mxu0 0
    %5405 = vmatprep.mubr.bf16.mxu0 0
    %5406 = vmatmul.mubr.bf16.gmra.mrb[0].mxu0 %v4599
    %v5407 = vpop.f32.mrb[0].mxu0
    %v5408 = vadd.f32 %v5367, %v5407
    %v5409 = vpop.f32.mrb[0].mxu0
    %v5410 = vadd.f32 %v5369, %v5409
    %v5411 = vpop.f32.mrb[0].mxu0
    %v5412 = vpop.f32.mrb[0].mxu0
    %5413 = vdwg.mxu0
    %5414 = vmatprep.subr.bf16.mxu0 %v3692
    %5415 = vmatpush1.bf16.msra.mxu0 %v3691
    %5416 = vmatprep.subr.bf16.mxu0 %v3717
    %5417 = vmatpush1.bf16.msra.mxu0 %v3716
    %5418 = vmatprep.subr.bf16.mxu0 %v3742
    %5419 = vmatpush1.bf16.msra.mxu0 %v3741
    %5420 = vmatprep.subr.bf16.mxu0 %v3767
    %5421 = vmatpush1.bf16.msra.mxu0 %v3766
    %5422 = vmatprep.subr.bf16.mxu0 %v3792
    %5423 = vmatpush1.bf16.msra.mxu0 %v3791
    %5424 = vmatprep.subr.bf16.mxu0 %v3817
    %5425 = vmatpush1.bf16.msra.mxu0 %v3816
    %5426 = vmatprep.subr.bf16.mxu0 %v3842
    %5427 = vmatpush1.bf16.msra.mxu0 %v3841
    %5428 = vmatprep.subr.bf16.mxu0 %v3867
    %5429 = vmatpush1.bf16.msra.mxu0 %v3866
    %5430 = vmatprep.subr.bf16.mxu0 %v3892
    %5431 = vmatpush1.bf16.msra.mxu0 %v3891
    %5432 = vmatprep.subr.bf16.mxu0 %v3917
    %5433 = vmatpush1.bf16.msra.mxu0 %v3916
    %5434 = vmatprep.subr.bf16.mxu0 %v3942
    %5435 = vmatpush1.bf16.msra.mxu0 %v3941
    %5436 = vmatprep.subr.bf16.mxu0 %v3967
    %5437 = vmatpush1.bf16.msra.mxu0 %v3966
    %5438 = vmatprep.subr.bf16.mxu0 %v3992
    %5439 = vmatpush1.bf16.msra.mxu0 %v3991
    %5440 = vmatprep.subr.bf16.mxu0 %v4017
    %5441 = vmatpush1.bf16.msra.mxu0 %v4016
    %5442 = vmatprep.subr.bf16.mxu0 %v4042
    %5443 = vmatpush1.bf16.msra.mxu0 %v4041
    %5444 = vmatprep.subr.bf16.mxu0 %v4067
    %5445 = vmatpush1.bf16.msra.mxu0 %v4066
    %5446 = vmatprep.mubr.bf16.mxu0 %v1600
    %5447 = vmatmul.mubr.bf16.gmra.mrb[0].mxu0 %v1599
    %v5448 = vpop.f32.mrb[0].mxu0
    %v5449 = vadd.f32 %v2179, %v5448
    %v5450 = vpop.f32.mrb[0].mxu0
    %v5451 = vadd.f32 %v2183, %v5450
    %v5452 = vpop.f32.mrb[0].mxu0
    %v5453 = vpop.f32.mrb[0].mxu0
    %5454 = vdwg.mxu0
    %5455 = vmatprep.subr.bf16.mxu0 %v4092
    %5456 = vmatpush1.bf16.msra.mxu0 %v4091
    %5457 = vmatprep.subr.bf16.mxu0 %v4117
    %5458 = vmatpush1.bf16.msra.mxu0 %v4116
    %5459 = vmatprep.subr.bf16.mxu0 %v4659
    %5460 = vmatpush1.bf16.msra.mxu0 %v4656
    %5461 = vmatprep.subr.bf16.mxu0 0
    %5462 = vmatpush1.bf16.msra.mxu0 0
    %5463 = vmatprep.subr.bf16.mxu0 0
    %5464 = vmatpush1.bf16.msra.mxu0 0
    %5465 = vmatprep.subr.bf16.mxu0 0
    %5466 = vmatpush1.bf16.msra.mxu0 0
    %5467 = vmatprep.subr.bf16.mxu0 0
    %5468 = vmatpush1.bf16.msra.mxu0 0
    %5469 = vmatprep.subr.bf16.mxu0 0
    %5470 = vmatpush1.bf16.msra.mxu0 0
    %5471 = vmatprep.subr.bf16.mxu0 0
    %5472 = vmatpush1.bf16.msra.mxu0 0
    %5473 = vmatprep.subr.bf16.mxu0 0
    %5474 = vmatpush1.bf16.msra.mxu0 0
    %5475 = vmatprep.subr.bf16.mxu0 0
    %5476 = vmatpush1.bf16.msra.mxu0 0
    %5477 = vmatprep.subr.bf16.mxu0 0
    %5478 = vmatpush1.bf16.msra.mxu0 0
    %5479 = vmatprep.subr.bf16.mxu0 0
    %5480 = vmatpush1.bf16.msra.mxu0 0
    %5481 = vmatprep.subr.bf16.mxu0 0
    %5482 = vmatpush1.bf16.msra.mxu0 0
    %5483 = vmatprep.subr.bf16.mxu0 0
    %5484 = vmatpush1.bf16.msra.mxu0 0
    %5485 = vmatprep.subr.bf16.mxu0 0
    %5486 = vmatpush1.bf16.msra.mxu0 0
    %5487 = vmatprep.mubr.bf16.mxu0 0
    %5488 = vmatmul.mubr.bf16.gmra.mrb[0].mxu0 %v4599
    %v5489 = vpop.f32.mrb[0].mxu0
    %v5490 = vadd.f32 %v5449, %v5489
    %v5491 = vpop.f32.mrb[0].mxu0
    %v5492 = vadd.f32 %v5451, %v5491
    %v5493 = vpop.f32.mrb[0].mxu0
    %v5494 = vpop.f32.mrb[0].mxu0
    %5495 = vdwg.mxu0
    %5496 = vmatprep.subr.bf16.mxu0 %v3694
    %5497 = vmatpush1.bf16.msra.mxu0 %v3693
    %5498 = vmatprep.subr.bf16.mxu0 %v3719
    %5499 = vmatpush1.bf16.msra.mxu0 %v3718
    %5500 = vmatprep.subr.bf16.mxu0 %v3744
    %5501 = vmatpush1.bf16.msra.mxu0 %v3743
    %5502 = vmatprep.subr.bf16.mxu0 %v3769
    %5503 = vmatpush1.bf16.msra.mxu0 %v3768
    %5504 = vmatprep.subr.bf16.mxu0 %v3794
    %5505 = vmatpush1.bf16.msra.mxu0 %v3793
    %5506 = vmatprep.subr.bf16.mxu0 %v3819
    %5507 = vmatpush1.bf16.msra.mxu0 %v3818
    %5508 = vmatprep.subr.bf16.mxu0 %v3844
    %5509 = vmatpush1.bf16.msra.mxu0 %v3843
    %5510 = vmatprep.subr.bf16.mxu0 %v3869
    %5511 = vmatpush1.bf16.msra.mxu0 %v3868
    %5512 = vmatprep.subr.bf16.mxu0 %v3894
    %5513 = vmatpush1.bf16.msra.mxu0 %v3893
    %5514 = vmatprep.subr.bf16.mxu0 %v3919
    %5515 = vmatpush1.bf16.msra.mxu0 %v3918
    %5516 = vmatprep.subr.bf16.mxu0 %v3944
    %5517 = vmatpush1.bf16.msra.mxu0 %v3943
    %5518 = vmatprep.subr.bf16.mxu0 %v3969
    %5519 = vmatpush1.bf16.msra.mxu0 %v3968
    %5520 = vmatprep.subr.bf16.mxu0 %v3994
    %5521 = vmatpush1.bf16.msra.mxu0 %v3993
    %5522 = vmatprep.subr.bf16.mxu0 %v4019
    %5523 = vmatpush1.bf16.msra.mxu0 %v4018
    %5524 = vmatprep.subr.bf16.mxu0 %v4044
    %5525 = vmatpush1.bf16.msra.mxu0 %v4043
    %5526 = vmatprep.subr.bf16.mxu0 %v4069
    %5527 = vmatpush1.bf16.msra.mxu0 %v4068
    %5528 = vmatprep.mubr.bf16.mxu0 %v1600
    %5529 = vmatmul.mubr.bf16.gmra.mrb[0].mxu0 %v1599
    %v5530 = vpop.f32.mrb[0].mxu0
    %v5531 = vadd.f32 %v2187, %v5530
    %v5532 = vpop.f32.mrb[0].mxu0
    %v5533 = vadd.f32 %v2191, %v5532
    %v5534 = vpop.f32.mrb[0].mxu0
    %v5535 = vpop.f32.mrb[0].mxu0
    %5536 = vdwg.mxu0
    %5537 = vmatprep.subr.bf16.mxu0 %v4094
    %5538 = vmatpush1.bf16.msra.mxu0 %v4093
    %5539 = vmatprep.subr.bf16.mxu0 %v4119
    %5540 = vmatpush1.bf16.msra.mxu0 %v4118
    %5541 = vmatprep.subr.bf16.mxu0 %v4665
    %5542 = vmatpush1.bf16.msra.mxu0 %v4662
    %5543 = vmatprep.subr.bf16.mxu0 0
    %5544 = vmatpush1.bf16.msra.mxu0 0
    %5545 = vmatprep.subr.bf16.mxu0 0
    %5546 = vmatpush1.bf16.msra.mxu0 0
    %5547 = vmatprep.subr.bf16.mxu0 0
    %5548 = vmatpush1.bf16.msra.mxu0 0
    %5549 = vmatprep.subr.bf16.mxu0 0
    %5550 = vmatpush1.bf16.msra.mxu0 0
    %5551 = vmatprep.subr.bf16.mxu0 0
    %5552 = vmatpush1.bf16.msra.mxu0 0
    %5553 = vmatprep.subr.bf16.mxu0 0
    %5554 = vmatpush1.bf16.msra.mxu0 0
    %5555 = vmatprep.subr.bf16.mxu0 0
    %5556 = vmatpush1.bf16.msra.mxu0 0
    %5557 = vmatprep.subr.bf16.mxu0 0
    %5558 = vmatpush1.bf16.msra.mxu0 0
    %5559 = vmatprep.subr.bf16.mxu0 0
    %5560 = vmatpush1.bf16.msra.mxu0 0
    %5561 = vmatprep.subr.bf16.mxu0 0
    %5562 = vmatpush1.bf16.msra.mxu0 0
    %5563 = vmatprep.subr.bf16.mxu0 0
    %5564 = vmatpush1.bf16.msra.mxu0 0
    %5565 = vmatprep.subr.bf16.mxu0 0
    %5566 = vmatpush1.bf16.msra.mxu0 0
    %5567 = vmatprep.subr.bf16.mxu0 0
    %5568 = vmatpush1.bf16.msra.mxu0 0
    %5569 = vmatprep.mubr.bf16.mxu0 0
    %5570 = vmatmul.mubr.bf16.gmra.mrb[0].mxu0 %v4599
    %v5571 = vpop.f32.mrb[0].mxu0
    %v5572 = vadd.f32 %v5531, %v5571
    %v5573 = vpop.f32.mrb[0].mxu0
    %v5574 = vadd.f32 %v5533, %v5573
    %v5575 = vpop.f32.mrb[0].mxu0
    %v5576 = vpop.f32.mrb[0].mxu0
    %5577 = vdwg.mxu0
    %5578 = vmatprep.subr.bf16.mxu0 %v3696
    %5579 = vmatpush1.bf16.msra.mxu0 %v3695
    %5580 = vmatprep.subr.bf16.mxu0 %v3721
    %5581 = vmatpush1.bf16.msra.mxu0 %v3720
    %5582 = vmatprep.subr.bf16.mxu0 %v3746
    %5583 = vmatpush1.bf16.msra.mxu0 %v3745
    %5584 = vmatprep.subr.bf16.mxu0 %v3771
    %5585 = vmatpush1.bf16.msra.mxu0 %v3770
    %5586 = vmatprep.subr.bf16.mxu0 %v3796
    %5587 = vmatpush1.bf16.msra.mxu0 %v3795
    %5588 = vmatprep.subr.bf16.mxu0 %v3821
    %5589 = vmatpush1.bf16.msra.mxu0 %v3820
    %5590 = vmatprep.subr.bf16.mxu0 %v3846
    %5591 = vmatpush1.bf16.msra.mxu0 %v3845
    %5592 = vmatprep.subr.bf16.mxu0 %v3871
    %5593 = vmatpush1.bf16.msra.mxu0 %v3870
    %5594 = vmatprep.subr.bf16.mxu0 %v3896
    %5595 = vmatpush1.bf16.msra.mxu0 %v3895
    %5596 = vmatprep.subr.bf16.mxu0 %v3921
    %5597 = vmatpush1.bf16.msra.mxu0 %v3920
    %5598 = vmatprep.subr.bf16.mxu0 %v3946
    %5599 = vmatpush1.bf16.msra.mxu0 %v3945
    %5600 = vmatprep.subr.bf16.mxu0 %v3971
    %5601 = vmatpush1.bf16.msra.mxu0 %v3970
    %5602 = vmatprep.subr.bf16.mxu0 %v3996
    %5603 = vmatpush1.bf16.msra.mxu0 %v3995
    %5604 = vmatprep.subr.bf16.mxu0 %v4021
    %5605 = vmatpush1.bf16.msra.mxu0 %v4020
    %5606 = vmatprep.subr.bf16.mxu0 %v4046
    %5607 = vmatpush1.bf16.msra.mxu0 %v4045
    %5608 = vmatprep.subr.bf16.mxu0 %v4071
    %5609 = vmatpush1.bf16.msra.mxu0 %v4070
    %5610 = vmatprep.mubr.bf16.mxu0 %v1600
    %5611 = vmatmul.mubr.bf16.gmra.mrb[0].mxu0 %v1599
    %v5612 = vpop.f32.mrb[0].mxu0
    %v5613 = vadd.f32 %v2195, %v5612
    %v5614 = vpop.f32.mrb[0].mxu0
    %v5615 = vadd.f32 %v2199, %v5614
    %v5616 = vpop.f32.mrb[0].mxu0
    %v5617 = vpop.f32.mrb[0].mxu0
    %5618 = vdwg.mxu0
    %5619 = vmatprep.subr.bf16.mxu0 %v4096
    %5620 = vmatpush1.bf16.msra.mxu0 %v4095
    %5621 = vmatprep.subr.bf16.mxu0 %v4121
    %5622 = vmatpush1.bf16.msra.mxu0 %v4120
    %5623 = vmatprep.subr.bf16.mxu0 %v4671
    %5624 = vmatpush1.bf16.msra.mxu0 %v4668
    %5625 = vmatprep.subr.bf16.mxu0 0
    %5626 = vmatpush1.bf16.msra.mxu0 0
    %5627 = vmatprep.subr.bf16.mxu0 0
    %5628 = vmatpush1.bf16.msra.mxu0 0
    %5629 = vmatprep.subr.bf16.mxu0 0
    %5630 = vmatpush1.bf16.msra.mxu0 0
    %5631 = vmatprep.subr.bf16.mxu0 0
    %5632 = vmatpush1.bf16.msra.mxu0 0
    %5633 = vmatprep.subr.bf16.mxu0 0
    %5634 = vmatpush1.bf16.msra.mxu0 0
    %5635 = vmatprep.subr.bf16.mxu0 0
    %5636 = vmatpush1.bf16.msra.mxu0 0
    %5637 = vmatprep.subr.bf16.mxu0 0
    %5638 = vmatpush1.bf16.msra.mxu0 0
    %5639 = vmatprep.subr.bf16.mxu0 0
    %5640 = vmatpush1.bf16.msra.mxu0 0
    %5641 = vmatprep.subr.bf16.mxu0 0
    %5642 = vmatpush1.bf16.msra.mxu0 0
    %5643 = vmatprep.subr.bf16.mxu0 0
    %5644 = vmatpush1.bf16.msra.mxu0 0
    %5645 = vmatprep.subr.bf16.mxu0 0
    %5646 = vmatpush1.bf16.msra.mxu0 0
    %5647 = vmatprep.subr.bf16.mxu0 0
    %5648 = vmatpush1.bf16.msra.mxu0 0
    %5649 = vmatprep.subr.bf16.mxu0 0
    %5650 = vmatpush1.bf16.msra.mxu0 0
    %5651 = vmatprep.mubr.bf16.mxu0 0
    %5652 = vmatmul.mubr.bf16.gmra.mrb[0].mxu0 %v4599
    %v5653 = vpop.f32.mrb[0].mxu0
    %v5654 = vadd.f32 %v5613, %v5653
    %v5655 = vpop.f32.mrb[0].mxu0
    %v5656 = vadd.f32 %v5615, %v5655
    %v5657 = vpop.f32.mrb[0].mxu0
    %v5658 = vpop.f32.mrb[0].mxu0
    %5659 = vdwg.mxu0
    %5660 = vmatprep.subr.bf16.mxu0 0
    %5661 = vmatpush1.bf16.msra.mxu0 %v3697
    %5662 = vmatprep.subr.bf16.mxu0 0
    %5663 = vmatpush1.bf16.msra.mxu0 %v3722
    %5664 = vmatprep.subr.bf16.mxu0 0
    %5665 = vmatpush1.bf16.msra.mxu0 %v3747
    %5666 = vmatprep.subr.bf16.mxu0 0
    %5667 = vmatpush1.bf16.msra.mxu0 %v3772
    %5668 = vmatprep.subr.bf16.mxu0 0
    %5669 = vmatpush1.bf16.msra.mxu0 %v3797
    %5670 = vmatprep.subr.bf16.mxu0 0
    %5671 = vmatpush1.bf16.msra.mxu0 %v3822
    %5672 = vmatprep.subr.bf16.mxu0 0
    %5673 = vmatpush1.bf16.msra.mxu0 %v3847
    %5674 = vmatprep.subr.bf16.mxu0 0
    %5675 = vmatpush1.bf16.msra.mxu0 %v3872
    %5676 = vmatprep.subr.bf16.mxu0 0
    %5677 = vmatpush1.bf16.msra.mxu0 %v3897
    %5678 = vmatprep.subr.bf16.mxu0 0
    %5679 = vmatpush1.bf16.msra.mxu0 %v3922
    %5680 = vmatprep.subr.bf16.mxu0 0
    %5681 = vmatpush1.bf16.msra.mxu0 %v3947
    %5682 = vmatprep.subr.bf16.mxu0 0
    %5683 = vmatpush1.bf16.msra.mxu0 %v3972
    %5684 = vmatprep.subr.bf16.mxu0 0
    %5685 = vmatpush1.bf16.msra.mxu0 %v3997
    %5686 = vmatprep.subr.bf16.mxu0 0
    %5687 = vmatpush1.bf16.msra.mxu0 %v4022
    %5688 = vmatprep.subr.bf16.mxu0 0
    %5689 = vmatpush1.bf16.msra.mxu0 %v4047
    %5690 = vmatprep.subr.bf16.mxu0 0
    %5691 = vmatpush1.bf16.msra.mxu0 %v4072
    %5692 = vmatprep.mubr.bf16.mxu0 %v1600
    %5693 = vmatmul.mubr.bf16.gmra.mrb[0].mxu0 %v1599
    %v5694 = vpop.f32.mrb[0].mxu0
    %v5695 = vadd.f32 %v2203, %v5694
    %v5696 = vpop.f32.mrb[0].mxu0
    %v5697 = vpop.f32.mrb[0].mxu0
    %v5698 = vpop.f32.mrb[0].mxu0
    %5699 = vdwg.mxu0
    %5700 = vmatprep.subr.bf16.mxu0 0
    %5701 = vmatpush1.bf16.msra.mxu0 %v4097
    %5702 = vmatprep.subr.bf16.mxu0 0
    %5703 = vmatpush1.bf16.msra.mxu0 %v4122
    %5704 = vmatprep.subr.bf16.mxu0 0
    %5705 = vmatpush1.bf16.msra.mxu0 %v4674
    %5706 = vmatprep.subr.bf16.mxu0 0
    %5707 = vmatpush1.bf16.msra.mxu0 0
    %5708 = vmatprep.subr.bf16.mxu0 0
    %5709 = vmatpush1.bf16.msra.mxu0 0
    %5710 = vmatprep.subr.bf16.mxu0 0
    %5711 = vmatpush1.bf16.msra.mxu0 0
    %5712 = vmatprep.subr.bf16.mxu0 0
    %5713 = vmatpush1.bf16.msra.mxu0 0
    %5714 = vmatprep.subr.bf16.mxu0 0
    %5715 = vmatpush1.bf16.msra.mxu0 0
    %5716 = vmatprep.subr.bf16.mxu0 0
    %5717 = vmatpush1.bf16.msra.mxu0 0
    %5718 = vmatprep.subr.bf16.mxu0 0
    %5719 = vmatpush1.bf16.msra.mxu0 0
    %5720 = vmatprep.subr.bf16.mxu0 0
    %5721 = vmatpush1.bf16.msra.mxu0 0
    %5722 = vmatprep.subr.bf16.mxu0 0
    %5723 = vmatpush1.bf16.msra.mxu0 0
    %5724 = vmatprep.subr.bf16.mxu0 0
    %5725 = vmatpush1.bf16.msra.mxu0 0
    %5726 = vmatprep.subr.bf16.mxu0 0
    %5727 = vmatpush1.bf16.msra.mxu0 0
    %5728 = vmatprep.subr.bf16.mxu0 0
    %5729 = vmatpush1.bf16.msra.mxu0 0
    %5730 = vmatprep.subr.bf16.mxu0 0
    %5731 = vmatpush1.bf16.msra.mxu0 0
    %5732 = vmatprep.mubr.bf16.mxu0 0
    %5733 = vmatmul.mubr.bf16.gmra.mrb[0].mxu0 %v4599
    %v5734 = vpop.f32.mrb[0].mxu0
    %v5735 = vadd.f32 %v5695, %v5734
    %v5736 = vpop.f32.mrb[0].mxu0
    %v5737 = vpop.f32.mrb[0].mxu0
    %v5738 = vpop.f32.mrb[0].mxu0
    %5739 = vdwg.mxu0
    %v5740 = vmax.f32 %v4752, 0.0
    %v5741 = vmax.f32 %v4754, 0.0
    %v5742 = vmax.f32 %v4834, 0.0
    %v5743 = vmax.f32 %v4836, 0.0
    %v5744 = vmax.f32 %v4916, 0.0
    %v5745 = vmax.f32 %v4918, 0.0
    %v5746 = vmax.f32 %v4998, 0.0
    %v5747 = vmax.f32 %v5000, 0.0
    %v5748 = vmax.f32 %v5080, 0.0
    %v5749 = vmax.f32 %v5082, 0.0
    %v5750 = vmax.f32 %v5162, 0.0
    %v5751 = vmax.f32 %v5164, 0.0
    %v5752 = vmax.f32 %v5244, 0.0
    %v5753 = vmax.f32 %v5246, 0.0
    %v5754 = vmax.f32 %v5326, 0.0
    %v5755 = vmax.f32 %v5328, 0.0
    %v5756 = vmax.f32 %v5408, 0.0
    %v5757 = vmax.f32 %v5410, 0.0
    %v5758 = vmax.f32 %v5490, 0.0
    %v5759 = vmax.f32 %v5492, 0.0
    %v5760 = vmax.f32 %v5572, 0.0
    %v5761 = vmax.f32 %v5574, 0.0
    %v5762 = vmax.f32 %v5654, 0.0
    %v5763 = vmax.f32 %v5656, 0.0
    %v5764 = vmax.f32 %v5735, 0.0
    %v5765 = vpack.c.bf16 %v5740, %v5740
    %v5766 = vpack.c.bf16 %v5741, %v5741
    %v5767 = vpack.c.bf16 %v5742, %v5742
    %v5768 = vpack.c.bf16 %v5743, %v5743
    %v5769 = vpack.c.bf16 %v5744, %v5744
    %v5770 = vpack.c.bf16 %v5745, %v5745
    %v5771 = vpack.c.bf16 %v5746, %v5746
    %v5772 = vpack.c.bf16 %v5747, %v5747
    %v5773 = vpack.c.bf16 %v5748, %v5748
    %v5774 = vpack.c.bf16 %v5749, %v5749
    %v5775 = vpack.c.bf16 %v5750, %v5750
    %v5776 = vpack.c.bf16 %v5751, %v5751
    %v5777 = vpack.c.bf16 %v5752, %v5752
    %v5778 = vpack.c.bf16 %v5753, %v5753
    %v5779 = vpack.c.bf16 %v5754, %v5754
    %v5780 = vpack.c.bf16 %v5755, %v5755
    %v5781 = vpack.c.bf16 %v5756, %v5756
    %v5782 = vpack.c.bf16 %v5757, %v5757
    %v5783 = vpack.c.bf16 %v5758, %v5758
    %v5784 = vpack.c.bf16 %v5759, %v5759
    %v5785 = vpack.c.bf16 %v5760, %v5760
    %v5786 = vpack.c.bf16 %v5761, %v5761
    %v5787 = vpack.c.bf16 %v5762, %v5762
    %v5788 = vpack.c.bf16 %v5763, %v5763
    %v5789 = vpack.c.bf16 %v5764, %v5764
    %v5790 = vld [vmem:[#allocation16] sm:$0xff]
    %v5791 = vld [vmem:[#allocation16 + $0x8] sm:$0xf]
    %v5792 = vld [vmem:[#allocation16 + $0xc] sm:$0xff]
    %v5793 = vld [vmem:[#allocation16 + $0x14] sm:$0xf]
    %v5794 = vld [vmem:[#allocation16 + $0x18] sm:$0xff]
    %v5795 = vld [vmem:[#allocation16 + $0x20] sm:$0xf]
    %v5796 = vld [vmem:[#allocation16 + $0x24] sm:$0xff]
    %v5797 = vld [vmem:[#allocation16 + $0x2c] sm:$0xf]
    %v5798 = vld [vmem:[#allocation16 + $0x30] sm:$0xff]
    %v5799 = vld [vmem:[#allocation16 + $0x38] sm:$0xf]
    %v5800 = vld [vmem:[#allocation16 + $0x3c] sm:$0xff]
    %v5801 = vld [vmem:[#allocation16 + $0x44] sm:$0xf]
    %v5802 = vld [vmem:[#allocation16 + $0x48] sm:$0xff]
    %v5803 = vld [vmem:[#allocation16 + $0x50] sm:$0xf]
    %v5804 = vld [vmem:[#allocation16 + $0x54] sm:$0xff]
    %v5805 = vld [vmem:[#allocation16 + $0x5c] sm:$0xf]
    %v5806 = vld [vmem:[#allocation16 + $0x60] sm:$0xff]
    %v5807 = vld [vmem:[#allocation16 + $0x68] sm:$0xf]
    %v5808 = vld [vmem:[#allocation16 + $0x6c] sm:$0xff]
    %v5809 = vld [vmem:[#allocation16 + $0x74] sm:$0xf]
    %v5810 = vld [vmem:[#allocation16 + $0x78] sm:$0xff]
    %v5811 = vld [vmem:[#allocation16 + $0x80] sm:$0xf]
    %v5812 = vld [vmem:[#allocation16 + $0x84] sm:$0xff]
    %v5813 = vld [vmem:[#allocation16 + $0x8c] sm:$0xf]
    %v5814 = vld [vmem:[#allocation16 + $0x90] sm:$0xff]
    %v5815 = vld [vmem:[#allocation16 + $0x98] sm:$0xf]
    %v5816 = vld [vmem:[#allocation16 + $0x9c] sm:$0xff]
    %v5817 = vld [vmem:[#allocation16 + $0xa4] sm:$0xf]
    %v5818 = vld [vmem:[#allocation16 + $0xa8] sm:$0xff]
    %v5819 = vld [vmem:[#allocation16 + $0xb0] sm:$0xf]
    %v5820 = vld [vmem:[#allocation16 + $0xb4] sm:$0xff]
    %v5821 = vld [vmem:[#allocation16 + $0xbc] sm:$0xf]
    %v5822 = vld [vmem:[#allocation16 + $0xc0] sm:$0xff]
    %v5823 = vld [vmem:[#allocation16 + $0xc8] sm:$0xf]
    %v5824 = vld [vmem:[#allocation16 + $0xcc] sm:$0xff]
    %v5825 = vld [vmem:[#allocation16 + $0xd4] sm:$0xf]
    %v5826 = vld [vmem:[#allocation16 + $0xd8] sm:$0xff]
    %v5827 = vld [vmem:[#allocation16 + $0xe0] sm:$0xf]
    %v5828 = vld [vmem:[#allocation16 + $0xe4] sm:$0xff]
    %v5829 = vld [vmem:[#allocation16 + $0xec] sm:$0xf]
    %v5830 = vld [vmem:[#allocation16 + $0xf0] sm:$0xff]
    %v5831 = vld [vmem:[#allocation16 + $0xf8] sm:$0xf]
    %v5832 = vld [vmem:[#allocation16 + $0xfc] sm:$0xff]
    %v5833 = vld [vmem:[#allocation16 + $0x104] sm:$0xf]
    %v5834 = vld [vmem:[#allocation16 + $0x108] sm:$0xff]
    %v5835 = vld [vmem:[#allocation16 + $0x110] sm:$0xf]
    %v5836 = vld [vmem:[#allocation16 + $0x114] sm:$0xff]
    %v5837 = vld [vmem:[#allocation16 + $0x11c] sm:$0xf]
    %v5838 = vld [vmem:[#allocation16 + $0x120] sm:$0xff]
    %v5839 = vld [vmem:[#allocation16 + $0x128] sm:$0xf]
    %v5840 = vld [vmem:[#allocation16 + $0x12c] sm:$0xff]
    %v5841 = vld [vmem:[#allocation16 + $0x134] sm:$0xf]
    %v5842 = vld [vmem:[#allocation16 + $0x138] sm:$0xff]
    %v5843 = vld [vmem:[#allocation16 + $0x140] sm:$0xf]
    %v5844 = vld [vmem:[#allocation16 + $0x144] sm:$0xff]
    %v5845 = vld [vmem:[#allocation16 + $0x14c] sm:$0xf]
    %v5846 = vld [vmem:[#allocation16 + $0x150] sm:$0xff]
    %v5847 = vld [vmem:[#allocation16 + $0x158] sm:$0xf]
    %v5848 = vld [vmem:[#allocation16 + $0x15c] sm:$0xff]
    %v5849 = vld [vmem:[#allocation16 + $0x164] sm:$0xf]
    %v5850 = vld [vmem:[#allocation16 + $0x168] sm:$0xff]
    %v5851 = vld [vmem:[#allocation16 + $0x170] sm:$0xf]
    %v5852 = vld [vmem:[#allocation16 + $0x174] sm:$0xff]
    %v5853 = vld [vmem:[#allocation16 + $0x17c] sm:$0xf]
    %v5854 = vld [vmem:[#allocation16 + $0x180] sm:$0xff]
    %v5855 = vld [vmem:[#allocation16 + $0x188] sm:$0xf]
    %v5856 = vld [vmem:[#allocation16 + $0x18c] sm:$0xff]
    %v5857 = vld [vmem:[#allocation16 + $0x194] sm:$0xf]
    %v5858 = vld [vmem:[#allocation16 + $0x198] sm:$0xff]
    %v5859 = vld [vmem:[#allocation16 + $0x1a0] sm:$0xf]
    %v5860 = vld [vmem:[#allocation16 + $0x1a4] sm:$0xff]
    %v5861 = vld [vmem:[#allocation16 + $0x1ac] sm:$0xf]
    %v5862 = vld [vmem:[#allocation16 + $0x1b0] sm:$0xff]
    %v5863 = vld [vmem:[#allocation16 + $0x1b8] sm:$0xf]
    %v5864 = vld [vmem:[#allocation16 + $0x1bc] sm:$0xff]
    %v5865 = vld [vmem:[#allocation16 + $0x1c4] sm:$0xf]
    %v5866 = vld [vmem:[#allocation16 + $0x1c8] sm:$0xff]
    %v5867 = vld [vmem:[#allocation16 + $0x1d0] sm:$0xf]
    %v5868 = vld [vmem:[#allocation16 + $0x1d4] sm:$0xff]
    %v5869 = vld [vmem:[#allocation16 + $0x1dc] sm:$0xf]
    %v5870 = vld [vmem:[#allocation16 + $0x1e0] sm:$0xff]
    %v5871 = vld [vmem:[#allocation16 + $0x1e8] sm:$0xf]
    %v5872 = vld [vmem:[#allocation16 + $0x1ec] sm:$0xff]
    %v5873 = vld [vmem:[#allocation16 + $0x1f4] sm:$0xf]
    %v5874 = vld [vmem:[#allocation16 + $0x1f8] sm:$0xff]
    %v5875 = vld [vmem:[#allocation16 + $0x200] sm:$0xf]
    %v5876 = vld [vmem:[#allocation16 + $0x204] sm:$0xff]
    %v5877 = vld [vmem:[#allocation16 + $0x20c] sm:$0xf]
    %v5878 = vld [vmem:[#allocation16 + $0x210] sm:$0xff]
    %v5879 = vld [vmem:[#allocation16 + $0x218] sm:$0xf]
    %v5880 = vld [vmem:[#allocation16 + $0x21c] sm:$0xff]
    %v5881 = vld [vmem:[#allocation16 + $0x224] sm:$0xf]
    %v5882 = vld [vmem:[#allocation16 + $0x228] sm:$0xff]
    %v5883 = vld [vmem:[#allocation16 + $0x230] sm:$0xf]
    %v5884 = vld [vmem:[#allocation16 + $0x234] sm:$0xff]
    %v5885 = vld [vmem:[#allocation16 + $0x23c] sm:$0xf]
    %v5886 = vld [vmem:[#allocation16 + $0x240] sm:$0xff]
    %v5887 = vld [vmem:[#allocation16 + $0x248] sm:$0xf]
    %v5888 = vld [vmem:[#allocation16 + $0x24c] sm:$0xff]
    %v5889 = vld [vmem:[#allocation16 + $0x254] sm:$0xf]
    %v5890 = vld [vmem:[#allocation18] sm:$0x7]
    %v5892 = vlaneseq
    %v5893 = vshrl.u32 %v5892, 7
    %v5894 = vsub.s32 0, %v5893
    %v5895 = vrot.slane %v5890, %v5894
    %v5896 = vlaneseq
    %v5897 = vshrl.u32 %v5896, 7
    %v5898 = vsub.s32 1, %v5897
    %v5899 = vrot.slane %v5890, %v5898
    %v5900 = vlaneseq
    %v5901 = vshrl.u32 %v5900, 7
    %v5902 = vsub.s32 2, %v5901
    %v5903 = vrot.slane %v5890, %v5902
    %v6007 = vunpack.c.l.b16 %v5790
    %v6008 = vunpack.c.h.b16 %v5790
    %v6009 = vunpack.c.l.b16 %v5791
    %v6010 = vunpack.c.l.b16 %v5792
    %v6011 = vunpack.c.h.b16 %v5792
    %v6012 = vunpack.c.l.b16 %v5793
    %v6013 = vunpack.c.l.b16 %v5794
    %v6014 = vunpack.c.h.b16 %v5794
    %v6015 = vunpack.c.l.b16 %v5795
    %v6016 = vunpack.c.l.b16 %v5796
    %v6017 = vunpack.c.h.b16 %v5796
    %v6018 = vunpack.c.l.b16 %v5797
    %v6019 = vunpack.c.l.b16 %v5798
    %v6020 = vunpack.c.h.b16 %v5798
    %v6021 = vunpack.c.l.b16 %v5799
    %v6022 = vunpack.c.l.b16 %v5800
    %v6023 = vunpack.c.h.b16 %v5800
    %v6024 = vunpack.c.l.b16 %v5801
    %v6025 = vunpack.c.l.b16 %v5802
    %v6026 = vunpack.c.h.b16 %v5802
    %v6027 = vunpack.c.l.b16 %v5803
    %v6028 = vunpack.c.l.b16 %v5804
    %v6029 = vunpack.c.h.b16 %v5804
    %v6030 = vunpack.c.l.b16 %v5805
    %v6031 = vunpack.c.l.b16 %v5806
    %v6032 = vunpack.c.h.b16 %v5806
    %v6033 = vunpack.c.l.b16 %v5807
    %v6034 = vunpack.c.l.b16 %v5808
    %v6035 = vunpack.c.h.b16 %v5808
    %v6036 = vunpack.c.l.b16 %v5809
    %v6037 = vunpack.c.l.b16 %v5810
    %v6038 = vunpack.c.h.b16 %v5810
    %v6039 = vunpack.c.l.b16 %v5811
    %v6040 = vunpack.c.l.b16 %v5812
    %v6041 = vunpack.c.h.b16 %v5812
    %v6042 = vunpack.c.l.b16 %v5813
    %v6043 = vunpack.c.l.b16 %v5814
    %v6044 = vunpack.c.h.b16 %v5814
    %v6045 = vunpack.c.l.b16 %v5815
    %v6046 = vunpack.c.l.b16 %v5816
    %v6047 = vunpack.c.h.b16 %v5816
    %v6048 = vunpack.c.l.b16 %v5817
    %v6049 = vunpack.c.l.b16 %v5818
    %v6050 = vunpack.c.h.b16 %v5818
    %v6051 = vunpack.c.l.b16 %v5819
    %v6052 = vunpack.c.l.b16 %v5820
    %v6053 = vunpack.c.h.b16 %v5820
    %v6054 = vunpack.c.l.b16 %v5821
    %v6055 = vunpack.c.l.b16 %v5822
    %v6056 = vunpack.c.h.b16 %v5822
    %v6057 = vunpack.c.l.b16 %v5823
    %v6058 = vunpack.c.l.b16 %v5824
    %v6059 = vunpack.c.h.b16 %v5824
    %v6060 = vunpack.c.l.b16 %v5825
    %v6061 = vunpack.c.l.b16 %v5826
    %v6062 = vunpack.c.h.b16 %v5826
    %v6063 = vunpack.c.l.b16 %v5827
    %v6064 = vunpack.c.l.b16 %v5828
    %v6065 = vunpack.c.h.b16 %v5828
    %v6066 = vunpack.c.l.b16 %v5829
    %v6067 = vunpack.c.l.b16 %v5830
    %v6068 = vunpack.c.h.b16 %v5830
    %v6069 = vunpack.c.l.b16 %v5831
    %v6070 = vunpack.c.l.b16 %v5832
    %v6071 = vunpack.c.h.b16 %v5832
    %v6072 = vunpack.c.l.b16 %v5833
    %v6073 = vunpack.c.l.b16 %v5834
    %v6074 = vunpack.c.h.b16 %v5834
    %v6075 = vunpack.c.l.b16 %v5835
    %v6076 = vunpack.c.l.b16 %v5836
    %v6077 = vunpack.c.h.b16 %v5836
    %v6078 = vunpack.c.l.b16 %v5837
    %v6079 = vunpack.c.l.b16 %v5838
    %v6080 = vunpack.c.h.b16 %v5838
    %v6081 = vunpack.c.l.b16 %v5839
    %v6082 = vunpack.c.l.b16 %v5840
    %v6083 = vunpack.c.h.b16 %v5840
    %v6084 = vunpack.c.l.b16 %v5841
    %v6085 = vunpack.c.l.b16 %v5842
    %v6086 = vunpack.c.h.b16 %v5842
    %v6087 = vunpack.c.l.b16 %v5843
    %v6088 = vunpack.c.l.b16 %v5844
    %v6089 = vunpack.c.h.b16 %v5844
    %v6090 = vunpack.c.l.b16 %v5845
    %v6091 = vunpack.c.l.b16 %v5846
    %v6092 = vunpack.c.h.b16 %v5846
    %v6093 = vunpack.c.l.b16 %v5847
    %v6094 = vunpack.c.l.b16 %v5848
    %v6095 = vunpack.c.h.b16 %v5848
    %v6096 = vunpack.c.l.b16 %v5849
    %v6097 = vunpack.c.l.b16 %v5850
    %v6098 = vunpack.c.h.b16 %v5850
    %v6099 = vunpack.c.l.b16 %v5851
    %v6100 = vunpack.c.l.b16 %v5852
    %v6101 = vunpack.c.h.b16 %v5852
    %v6102 = vunpack.c.l.b16 %v5853
    %v6103 = vunpack.c.l.b16 %v5854
    %v6104 = vunpack.c.h.b16 %v5854
    %v6105 = vunpack.c.l.b16 %v5855
    %v6106 = vunpack.c.l.b16 %v5856
    %v6107 = vunpack.c.h.b16 %v5856
    %v6108 = vunpack.c.l.b16 %v5857
    %v6109 = vunpack.c.l.b16 %v5858
    %v6110 = vunpack.c.h.b16 %v5858
    %v6111 = vunpack.c.l.b16 %v5859
    %v6112 = vunpack.c.l.b16 %v5860
    %v6113 = vunpack.c.h.b16 %v5860
    %v6114 = vunpack.c.l.b16 %v5861
    %v6115 = vunpack.c.l.b16 %v5862
    %v6116 = vunpack.c.h.b16 %v5862
    %v6117 = vunpack.c.l.b16 %v5863
    %v6118 = vunpack.c.l.b16 %v5864
    %v6119 = vunpack.c.h.b16 %v5864
    %v6120 = vunpack.c.l.b16 %v5865
    %v6121 = vunpack.c.l.b16 %v5866
    %v6122 = vunpack.c.h.b16 %v5866
    %v6123 = vunpack.c.l.b16 %v5867
    %v6124 = vunpack.c.l.b16 %v5868
    %v6125 = vunpack.c.h.b16 %v5868
    %v6126 = vunpack.c.l.b16 %v5869
    %v6127 = vunpack.c.l.b16 %v5870
    %v6128 = vunpack.c.h.b16 %v5870
    %v6129 = vunpack.c.l.b16 %v5871
    %v6130 = vunpack.c.l.b16 %v5872
    %v6131 = vunpack.c.h.b16 %v5872
    %v6132 = vunpack.c.l.b16 %v5873
    %v6133 = vunpack.c.l.b16 %v5874
    %v6134 = vunpack.c.h.b16 %v5874
    %v6135 = vunpack.c.l.b16 %v5875
    %v6136 = vunpack.c.l.b16 %v5876
    %v6137 = vunpack.c.h.b16 %v5876
    %v6138 = vunpack.c.l.b16 %v5877
    %v6139 = vunpack.c.l.b16 %v5878
    %v6140 = vunpack.c.h.b16 %v5878
    %v6141 = vunpack.c.l.b16 %v5879
    %v6142 = vunpack.c.l.b16 %v5880
    %v6143 = vunpack.c.h.b16 %v5880
    %v6144 = vunpack.c.l.b16 %v5881
    %v6145 = vunpack.c.l.b16 %v5882
    %v6146 = vunpack.c.h.b16 %v5882
    %v6147 = vunpack.c.l.b16 %v5883
    %v6148 = vunpack.c.l.b16 %v5884
    %v6149 = vunpack.c.h.b16 %v5884
    %v6150 = vunpack.c.l.b16 %v5885
    %v6151 = vunpack.c.l.b16 %v5886
    %v6152 = vunpack.c.h.b16 %v5886
    %v6153 = vunpack.c.l.b16 %v5887
    %v6154 = vunpack.c.l.b16 %v5888
    %v6155 = vunpack.c.h.b16 %v5888
    %v6156 = vunpack.c.l.b16 %v5889
    %v6157 = vpack.c.b16 %v6010, %v6007
    %v6158 = vpack.c.b16 %v6011, %v6008
    %v6159 = vpack.c.b16 %v6012, %v6009
    %v6160 = vpack.c.b16 %v6016, %v6013
    %v6161 = vpack.c.b16 %v6017, %v6014
    %v6162 = vpack.c.b16 %v6018, %v6015
    %v6163 = vpack.c.b16 %v6022, %v6019
    %v6164 = vpack.c.b16 %v6023, %v6020
    %v6165 = vpack.c.b16 %v6024, %v6021
    %v6166 = vpack.c.b16 %v6028, %v6025
    %v6167 = vpack.c.b16 %v6029, %v6026
    %v6168 = vpack.c.b16 %v6030, %v6027
    %v6169 = vpack.c.b16 %v6034, %v6031
    %v6170 = vpack.c.b16 %v6035, %v6032
    %v6171 = vpack.c.b16 %v6036, %v6033
    %v6172 = vpack.c.b16 %v6040, %v6037
    %v6173 = vpack.c.b16 %v6041, %v6038
    %v6174 = vpack.c.b16 %v6042, %v6039
    %v6175 = vpack.c.b16 %v6046, %v6043
    %v6176 = vpack.c.b16 %v6047, %v6044
    %v6177 = vpack.c.b16 %v6048, %v6045
    %v6178 = vpack.c.b16 %v6052, %v6049
    %v6179 = vpack.c.b16 %v6053, %v6050
    %v6180 = vpack.c.b16 %v6054, %v6051
    %v6181 = vpack.c.b16 %v6058, %v6055
    %v6182 = vpack.c.b16 %v6059, %v6056
    %v6183 = vpack.c.b16 %v6060, %v6057
    %v6184 = vpack.c.b16 %v6064, %v6061
    %v6185 = vpack.c.b16 %v6065, %v6062
    %v6186 = vpack.c.b16 %v6066, %v6063
    %v6187 = vpack.c.b16 %v6070, %v6067
    %v6188 = vpack.c.b16 %v6071, %v6068
    %v6189 = vpack.c.b16 %v6072, %v6069
    %v6190 = vpack.c.b16 %v6076, %v6073
    %v6191 = vpack.c.b16 %v6077, %v6074
    %v6192 = vpack.c.b16 %v6078, %v6075
    %v6193 = vpack.c.b16 %v6082, %v6079
    %v6194 = vpack.c.b16 %v6083, %v6080
    %v6195 = vpack.c.b16 %v6084, %v6081
    %v6196 = vpack.c.b16 %v6088, %v6085
    %v6197 = vpack.c.b16 %v6089, %v6086
    %v6198 = vpack.c.b16 %v6090, %v6087
    %v6199 = vpack.c.b16 %v6094, %v6091
    %v6200 = vpack.c.b16 %v6095, %v6092
    %v6201 = vpack.c.b16 %v6096, %v6093
    %v6202 = vpack.c.b16 %v6100, %v6097
    %v6203 = vpack.c.b16 %v6101, %v6098
    %v6204 = vpack.c.b16 %v6102, %v6099
    %v6205 = vpack.c.b16 %v6106, %v6103
    %v6206 = vpack.c.b16 %v6107, %v6104
    %v6207 = vpack.c.b16 %v6108, %v6105
    %v6208 = vpack.c.b16 %v6112, %v6109
    %v6209 = vpack.c.b16 %v6113, %v6110
    %v6210 = vpack.c.b16 %v6114, %v6111
    %v6211 = vpack.c.b16 %v6118, %v6115
    %v6212 = vpack.c.b16 %v6119, %v6116
    %v6213 = vpack.c.b16 %v6120, %v6117
    %v6214 = vpack.c.b16 %v6124, %v6121
    %v6215 = vpack.c.b16 %v6125, %v6122
    %v6216 = vpack.c.b16 %v6126, %v6123
    %v6217 = vpack.c.b16 %v6130, %v6127
    %v6218 = vpack.c.b16 %v6131, %v6128
    %v6219 = vpack.c.b16 %v6132, %v6129
    %v6220 = vpack.c.b16 %v6136, %v6133
    %v6221 = vpack.c.b16 %v6137, %v6134
    %v6222 = vpack.c.b16 %v6138, %v6135
    %v6223 = vpack.c.b16 %v6142, %v6139
    %v6224 = vpack.c.b16 %v6143, %v6140
    %v6225 = vpack.c.b16 %v6144, %v6141
    %v6226 = vpack.c.b16 %v6148, %v6145
    %v6227 = vpack.c.b16 %v6149, %v6146
    %v6228 = vpack.c.b16 %v6150, %v6147
    %v6229 = vpack.c.b16 %v6154, %v6151
    %v6230 = vpack.c.b16 %v6155, %v6152
    %v6231 = vpack.c.b16 %v6156, %v6153
    %v6308 = vsel %vm244, %v5768, 0
    %6310 = vmatprep.subr.bf16.mxu0 %v6158
    %6311 = vmatpush1.bf16.msra.mxu0 %v6157
    %6312 = vmatprep.subr.bf16.mxu0 %v6161
    %6313 = vmatpush1.bf16.msra.mxu0 %v6160
    %6314 = vmatprep.subr.bf16.mxu0 %v6164
    %6315 = vmatpush1.bf16.msra.mxu0 %v6163
    %6316 = vmatprep.subr.bf16.mxu0 %v6167
    %6317 = vmatpush1.bf16.msra.mxu0 %v6166
    %6318 = vmatprep.subr.bf16.mxu0 %v6170
    %6319 = vmatpush1.bf16.msra.mxu0 %v6169
    %6320 = vmatprep.subr.bf16.mxu0 %v6173
    %6321 = vmatpush1.bf16.msra.mxu0 %v6172
    %6322 = vmatprep.subr.bf16.mxu0 %v6176
    %6323 = vmatpush1.bf16.msra.mxu0 %v6175
    %6324 = vmatprep.subr.bf16.mxu0 %v6179
    %6325 = vmatpush1.bf16.msra.mxu0 %v6178
    %6326 = vmatprep.subr.bf16.mxu0 %v6182
    %6327 = vmatpush1.bf16.msra.mxu0 %v6181
    %6328 = vmatprep.subr.bf16.mxu0 %v6185
    %6329 = vmatpush1.bf16.msra.mxu0 %v6184
    %6330 = vmatprep.subr.bf16.mxu0 %v6188
    %6331 = vmatpush1.bf16.msra.mxu0 %v6187
    %6332 = vmatprep.subr.bf16.mxu0 %v6191
    %6333 = vmatpush1.bf16.msra.mxu0 %v6190
    %6334 = vmatprep.subr.bf16.mxu0 %v6194
    %6335 = vmatpush1.bf16.msra.mxu0 %v6193
    %6336 = vmatprep.subr.bf16.mxu0 %v6197
    %6337 = vmatpush1.bf16.msra.mxu0 %v6196
    %6338 = vmatprep.subr.bf16.mxu0 %v6200
    %6339 = vmatpush1.bf16.msra.mxu0 %v6199
    %6340 = vmatprep.subr.bf16.mxu0 %v6203
    %6341 = vmatpush1.bf16.msra.mxu0 %v6202
    %6342 = vmatprep.mubr.bf16.mxu0 %v5766
    %6343 = vmatmul.mubr.bf16.gmra.mrb[0].mxu0 %v5765
    %v6344 = vpop.f32.mrb[0].mxu0
    %v6345 = vadd.f32 %v5895, %v6344
    %v6346 = vpop.f32.mrb[0].mxu0
    %v6347 = vadd.f32 %v5899, %v6346
    %v6348 = vpop.f32.mrb[0].mxu0
    %v6349 = vpop.f32.mrb[0].mxu0
    %6350 = vdwg.mxu0
    %6351 = vmatprep.subr.bf16.mxu0 %v6206
    %6352 = vmatpush1.bf16.msra.mxu0 %v6205
    %6353 = vmatprep.subr.bf16.mxu0 %v6209
    %6354 = vmatpush1.bf16.msra.mxu0 %v6208
    %6355 = vmatprep.subr.bf16.mxu0 %v6212
    %6356 = vmatpush1.bf16.msra.mxu0 %v6211
    %6357 = vmatprep.subr.bf16.mxu0 %v6215
    %6358 = vmatpush1.bf16.msra.mxu0 %v6214
    %6359 = vmatprep.subr.bf16.mxu0 %v6218
    %6360 = vmatpush1.bf16.msra.mxu0 %v6217
    %6361 = vmatprep.subr.bf16.mxu0 %v6221
    %6362 = vmatpush1.bf16.msra.mxu0 %v6220
    %6363 = vmatprep.subr.bf16.mxu0 %v6224
    %6364 = vmatpush1.bf16.msra.mxu0 %v6223
    %6365 = vmatprep.subr.bf16.mxu0 %v6227
    %6366 = vmatpush1.bf16.msra.mxu0 %v6226
    %6367 = vmatprep.subr.bf16.mxu0 %v6230
    %6368 = vmatpush1.bf16.msra.mxu0 %v6229
    %6369 = vmatprep.subr.bf16.mxu0 0
    %6370 = vmatpush1.bf16.msra.mxu0 0
    %6371 = vmatprep.subr.bf16.mxu0 0
    %6372 = vmatpush1.bf16.msra.mxu0 0
    %6373 = vmatprep.subr.bf16.mxu0 0
    %6374 = vmatpush1.bf16.msra.mxu0 0
    %6375 = vmatprep.subr.bf16.mxu0 0
    %6376 = vmatpush1.bf16.msra.mxu0 0
    %6377 = vmatprep.subr.bf16.mxu0 0
    %6378 = vmatpush1.bf16.msra.mxu0 0
    %6379 = vmatprep.subr.bf16.mxu0 0
    %6380 = vmatpush1.bf16.msra.mxu0 0
    %6381 = vmatprep.subr.bf16.mxu0 0
    %6382 = vmatpush1.bf16.msra.mxu0 0
    %6383 = vmatprep.mubr.bf16.mxu0 %v6308
    %6384 = vmatmul.mubr.bf16.gmra.mrb[0].mxu0 %v5767
    %v6385 = vpop.f32.mrb[0].mxu0
    %v6386 = vadd.f32 %v6345, %v6385
    %v6387 = vpop.f32.mrb[0].mxu0
    %v6388 = vadd.f32 %v6347, %v6387
    %v6389 = vpop.f32.mrb[0].mxu0
    %v6390 = vpop.f32.mrb[0].mxu0
    %6391 = vdwg.mxu0
    %6392 = vmatprep.subr.bf16.mxu0 0
    %6393 = vmatpush1.bf16.msra.mxu0 %v6159
    %6394 = vmatprep.subr.bf16.mxu0 0
    %6395 = vmatpush1.bf16.msra.mxu0 %v6162
    %6396 = vmatprep.subr.bf16.mxu0 0
    %6397 = vmatpush1.bf16.msra.mxu0 %v6165
    %6398 = vmatprep.subr.bf16.mxu0 0
    %6399 = vmatpush1.bf16.msra.mxu0 %v6168
    %6400 = vmatprep.subr.bf16.mxu0 0
    %6401 = vmatpush1.bf16.msra.mxu0 %v6171
    %6402 = vmatprep.subr.bf16.mxu0 0
    %6403 = vmatpush1.bf16.msra.mxu0 %v6174
    %6404 = vmatprep.subr.bf16.mxu0 0
    %6405 = vmatpush1.bf16.msra.mxu0 %v6177
    %6406 = vmatprep.subr.bf16.mxu0 0
    %6407 = vmatpush1.bf16.msra.mxu0 %v6180
    %6408 = vmatprep.subr.bf16.mxu0 0
    %6409 = vmatpush1.bf16.msra.mxu0 %v6183
    %6410 = vmatprep.subr.bf16.mxu0 0
    %6411 = vmatpush1.bf16.msra.mxu0 %v6186
    %6412 = vmatprep.subr.bf16.mxu0 0
    %6413 = vmatpush1.bf16.msra.mxu0 %v6189
    %6414 = vmatprep.subr.bf16.mxu0 0
    %6415 = vmatpush1.bf16.msra.mxu0 %v6192
    %6416 = vmatprep.subr.bf16.mxu0 0
    %6417 = vmatpush1.bf16.msra.mxu0 %v6195
    %6418 = vmatprep.subr.bf16.mxu0 0
    %6419 = vmatpush1.bf16.msra.mxu0 %v6198
    %6420 = vmatprep.subr.bf16.mxu0 0
    %6421 = vmatpush1.bf16.msra.mxu0 %v6201
    %6422 = vmatprep.subr.bf16.mxu0 0
    %6423 = vmatpush1.bf16.msra.mxu0 %v6204
    %6424 = vmatprep.mubr.bf16.mxu0 %v5766
    %6425 = vmatmul.mubr.bf16.gmra.mrb[0].mxu0 %v5765
    %v6426 = vpop.f32.mrb[0].mxu0
    %v6427 = vadd.f32 %v5903, %v6426
    %v6428 = vpop.f32.mrb[0].mxu0
    %v6429 = vpop.f32.mrb[0].mxu0
    %v6430 = vpop.f32.mrb[0].mxu0
    %6431 = vdwg.mxu0
    %6432 = vmatprep.subr.bf16.mxu0 0
    %6433 = vmatpush1.bf16.msra.mxu0 %v6207
    %6434 = vmatprep.subr.bf16.mxu0 0
    %6435 = vmatpush1.bf16.msra.mxu0 %v6210
    %6436 = vmatprep.subr.bf16.mxu0 0
    %6437 = vmatpush1.bf16.msra.mxu0 %v6213
    %6438 = vmatprep.subr.bf16.mxu0 0
    %6439 = vmatpush1.bf16.msra.mxu0 %v6216
    %6440 = vmatprep.subr.bf16.mxu0 0
    %6441 = vmatpush1.bf16.msra.mxu0 %v6219
    %6442 = vmatprep.subr.bf16.mxu0 0
    %6443 = vmatpush1.bf16.msra.mxu0 %v6222
    %6444 = vmatprep.subr.bf16.mxu0 0
    %6445 = vmatpush1.bf16.msra.mxu0 %v6225
    %6446 = vmatprep.subr.bf16.mxu0 0
    %6447 = vmatpush1.bf16.msra.mxu0 %v6228
    %6448 = vmatprep.subr.bf16.mxu0 0
    %6449 = vmatpush1.bf16.msra.mxu0 %v6231
    %6450 = vmatprep.subr.bf16.mxu0 0
    %6451 = vmatpush1.bf16.msra.mxu0 0
    %6452 = vmatprep.subr.bf16.mxu0 0
    %6453 = vmatpush1.bf16.msra.mxu0 0
    %6454 = vmatprep.subr.bf16.mxu0 0
    %6455 = vmatpush1.bf16.msra.mxu0 0
    %6456 = vmatprep.subr.bf16.mxu0 0
    %6457 = vmatpush1.bf16.msra.mxu0 0
    %6458 = vmatprep.subr.bf16.mxu0 0
    %6459 = vmatpush1.bf16.msra.mxu0 0
    %6460 = vmatprep.subr.bf16.mxu0 0
    %6461 = vmatpush1.bf16.msra.mxu0 0
    %6462 = vmatprep.subr.bf16.mxu0 0
    %6463 = vmatpush1.bf16.msra.mxu0 0
    %6464 = vmatprep.mubr.bf16.mxu0 %v6308
    %6465 = vmatmul.mubr.bf16.gmra.mrb[0].mxu0 %v5767
    %v6466 = vpop.f32.mrb[0].mxu0
    %v6467 = vadd.f32 %v6427, %v6466
    %v6468 = vpop.f32.mrb[0].mxu0
    %v6469 = vpop.f32.mrb[0].mxu0
    %v6470 = vpop.f32.mrb[0].mxu0
    %6471 = vdwg.mxu0
    %v6472 = vmax.f32 %v6386, 0.0
    %v6473 = vmax.f32 %v6388, 0.0
    %v6474 = vmax.f32 %v6467, 0.0
    %v6475 = vpack.c.bf16 %v6472, %v6472
    %v6476 = vpack.c.bf16 %v6473, %v6473
    %v6477 = vpack.c.bf16 %v6474, %v6474
    %v6478 = vld [vmem:[%s11] sm:$0xf]
    %v6479 = vld [vmem:[%s11 + $0x4] sm:$0xf]
    %v6480 = vld [vmem:[%s11 + $0x8] sm:$0xf]
    %v6481 = vld [vmem:[%s11 + $0xc] sm:$0xf]
    %v6482 = vld [vmem:[%s11 + $0x10] sm:$0xf]
    %v6483 = vld [vmem:[%s11 + $0x14] sm:$0xf]
    %v6484 = vld [vmem:[%s11 + $0x18] sm:$0xf]
    %v6485 = vld [vmem:[%s11 + $0x1c] sm:$0xf]
    %v6486 = vld [vmem:[%s11 + $0x20] sm:$0xf]
    %v6487 = vld [vmem:[%s11 + $0x24] sm:$0xf]
    %v6488 = vld [vmem:[%s11 + $0x28] sm:$0xf]
    %v6489 = vld [vmem:[%s11 + $0x2c] sm:$0xf]
    %v6490 = vld [vmem:[%s11 + $0x30] sm:$0xf]
    %v6491 = vld [vmem:[%s11 + $0x34] sm:$0xf]
    %v6492 = vld [vmem:[%s11 + $0x38] sm:$0xf]
    %v6493 = vld [vmem:[%s11 + $0x3c] sm:$0xf]
    %v6494 = vld [vmem:[%s11 + $0x40] sm:$0xf]
    %v6495 = vld [vmem:[%s11 + $0x44] sm:$0xf]
    %v6496 = vld [vmem:[%s11 + $0x48] sm:$0xf]
    %v6497 = vld [vmem:[%s11 + $0x4c] sm:$0xf]
    %v6498 = vld [vmem:[%s11 + $0x50] sm:$0xf]
    %v6499 = vld [vmem:[%s11 + $0x54] sm:$0xf]
    %v6500 = vld [vmem:[%s11 + $0x58] sm:$0xf]
    %v6501 = vld [vmem:[%s11 + $0x5c] sm:$0xf]
    %v6502 = vld [vmem:[%s11 + $0x60] sm:$0xf]
    %v6503 = vld [vmem:[%s11 + $0x64] sm:$0xf]
    %v6504 = vld [vmem:[%s11 + $0x68] sm:$0xf]
    %v6505 = vld [vmem:[%s11 + $0x6c] sm:$0xf]
    %v6506 = vld [vmem:[%s11 + $0x70] sm:$0xf]
    %v6507 = vld [vmem:[%s11 + $0x74] sm:$0xf]
    %v6508 = vld [vmem:[%s11 + $0x78] sm:$0xf]
    %v6509 = vld [vmem:[%s11 + $0x7c] sm:$0xf]
    %v6510 = vld [vmem:[%s11 + $0x80] sm:$0xf]
    %v6511 = vld [vmem:[%s11 + $0x84] sm:$0xf]
    %v6512 = vld [vmem:[%s11 + $0x88] sm:$0xf]
    %v6513 = vld [vmem:[%s11 + $0x8c] sm:$0xf]
    %v6514 = vld [vmem:[%s11 + $0x90] sm:$0xf]
    %v6515 = vld [vmem:[%s11 + $0x94] sm:$0x3]
    %v6554 = vunpack.c.l.b16 %v6478
    %v6555 = vunpack.c.l.b16 %v6479
    %v6556 = vunpack.c.l.b16 %v6480
    %v6557 = vunpack.c.l.b16 %v6481
    %v6558 = vunpack.c.l.b16 %v6482
    %v6559 = vunpack.c.l.b16 %v6483
    %v6560 = vunpack.c.l.b16 %v6484
    %v6561 = vunpack.c.l.b16 %v6485
    %v6562 = vunpack.c.l.b16 %v6486
    %v6563 = vunpack.c.l.b16 %v6487
    %v6564 = vunpack.c.l.b16 %v6488
    %v6565 = vunpack.c.l.b16 %v6489
    %v6566 = vunpack.c.l.b16 %v6490
    %v6567 = vunpack.c.l.b16 %v6491
    %v6568 = vunpack.c.l.b16 %v6492
    %v6569 = vunpack.c.l.b16 %v6493
    %v6570 = vunpack.c.l.b16 %v6494
    %v6571 = vunpack.c.l.b16 %v6495
    %v6572 = vunpack.c.l.b16 %v6496
    %v6573 = vunpack.c.l.b16 %v6497
    %v6574 = vunpack.c.l.b16 %v6498
    %v6575 = vunpack.c.l.b16 %v6499
    %v6576 = vunpack.c.l.b16 %v6500
    %v6577 = vunpack.c.l.b16 %v6501
    %v6578 = vunpack.c.l.b16 %v6502
    %v6579 = vunpack.c.l.b16 %v6503
    %v6580 = vunpack.c.l.b16 %v6504
    %v6581 = vunpack.c.l.b16 %v6505
    %v6582 = vunpack.c.l.b16 %v6506
    %v6583 = vunpack.c.l.b16 %v6507
    %v6584 = vunpack.c.l.b16 %v6508
    %v6585 = vunpack.c.l.b16 %v6509
    %v6586 = vunpack.c.l.b16 %v6510
    %v6587 = vunpack.c.l.b16 %v6511
    %v6588 = vunpack.c.l.b16 %v6512
    %v6589 = vunpack.c.l.b16 %v6513
    %v6590 = vunpack.c.l.b16 %v6514
    %v6591 = vunpack.c.l.b16 %v6515
    %v6592 = vpack.c.b16 %v6555, %v6554
    %v6593 = vpack.c.b16 %v6557, %v6556
    %v6594 = vpack.c.b16 %v6559, %v6558
    %v6595 = vpack.c.b16 %v6561, %v6560
    %v6596 = vpack.c.b16 %v6563, %v6562
    %v6597 = vpack.c.b16 %v6565, %v6564
    %v6598 = vpack.c.b16 %v6567, %v6566
    %v6599 = vpack.c.b16 %v6569, %v6568
    %v6600 = vpack.c.b16 %v6571, %v6570
    %v6601 = vpack.c.b16 %v6573, %v6572
    %v6602 = vpack.c.b16 %v6575, %v6574
    %v6603 = vpack.c.b16 %v6577, %v6576
    %v6604 = vpack.c.b16 %v6579, %v6578
    %v6605 = vpack.c.b16 %v6581, %v6580
    %v6606 = vpack.c.b16 %v6583, %v6582
    %v6607 = vpack.c.b16 %v6585, %v6584
    %v6608 = vpack.c.b16 %v6587, %v6586
    %v6609 = vpack.c.b16 %v6589, %v6588
    %v6610 = vpack.c.b16 %v6591, %v6590
    %v6630 = vsel %vm1420, %v6477, 0
    %v6633 = vsel %vm1424, %v6610, 0
    %6635 = vmatprep.subr.bf16.mxu0 0
    %6636 = vmatpush1.bf16.msra.mxu0 %v6592
    %6637 = vmatprep.subr.bf16.mxu0 0
    %6638 = vmatpush1.bf16.msra.mxu0 %v6593
    %6639 = vmatprep.subr.bf16.mxu0 0
    %6640 = vmatpush1.bf16.msra.mxu0 %v6594
    %6641 = vmatprep.subr.bf16.mxu0 0
    %6642 = vmatpush1.bf16.msra.mxu0 %v6595
    %6643 = vmatprep.subr.bf16.mxu0 0
    %6644 = vmatpush1.bf16.msra.mxu0 %v6596
    %6645 = vmatprep.subr.bf16.mxu0 0
    %6646 = vmatpush1.bf16.msra.mxu0 %v6597
    %6647 = vmatprep.subr.bf16.mxu0 0
    %6648 = vmatpush1.bf16.msra.mxu0 %v6598
    %6649 = vmatprep.subr.bf16.mxu0 0
    %6650 = vmatpush1.bf16.msra.mxu0 %v6599
    %6651 = vmatprep.subr.bf16.mxu0 0
    %6652 = vmatpush1.bf16.msra.mxu0 %v6600
    %6653 = vmatprep.subr.bf16.mxu0 0
    %6654 = vmatpush1.bf16.msra.mxu0 %v6601
    %6655 = vmatprep.subr.bf16.mxu0 0
    %6656 = vmatpush1.bf16.msra.mxu0 %v6602
    %6657 = vmatprep.subr.bf16.mxu0 0
    %6658 = vmatpush1.bf16.msra.mxu0 %v6603
    %6659 = vmatprep.subr.bf16.mxu0 0
    %6660 = vmatpush1.bf16.msra.mxu0 %v6604
    %6661 = vmatprep.subr.bf16.mxu0 0
    %6662 = vmatpush1.bf16.msra.mxu0 %v6605
    %6663 = vmatprep.subr.bf16.mxu0 0
    %6664 = vmatpush1.bf16.msra.mxu0 %v6606
    %6665 = vmatprep.subr.bf16.mxu0 0
    %6666 = vmatpush1.bf16.msra.mxu0 %v6607
    %6667 = vmatprep.mubr.bf16.mxu0 %v6476
    %6668 = vmatmul.mubr.bf16.gmra.mrb[0].mxu0 %v6475
    %v6669 = vpop.f32.mrb[0].mxu0
    %v6670 = vadd.f32 0.0, %v6669
    %v6671 = vpop.f32.mrb[0].mxu0
    %v6672 = vpop.f32.mrb[0].mxu0
    %v6673 = vpop.f32.mrb[0].mxu0
    %6674 = vdwg.mxu0
    %6675 = vmatprep.subr.bf16.mxu0 0
    %6676 = vmatpush1.bf16.msra.mxu0 %v6608
    %6677 = vmatprep.subr.bf16.mxu0 0
    %6678 = vmatpush1.bf16.msra.mxu0 %v6609
    %6679 = vmatprep.subr.bf16.mxu0 0
    %6680 = vmatpush1.bf16.msra.mxu0 %v6633
    %6681 = vmatprep.subr.bf16.mxu0 0
    %6682 = vmatpush1.bf16.msra.mxu0 0
    %6683 = vmatprep.subr.bf16.mxu0 0
    %6684 = vmatpush1.bf16.msra.mxu0 0
    %6685 = vmatprep.subr.bf16.mxu0 0
    %6686 = vmatpush1.bf16.msra.mxu0 0
    %6687 = vmatprep.subr.bf16.mxu0 0
    %6688 = vmatpush1.bf16.msra.mxu0 0
    %6689 = vmatprep.subr.bf16.mxu0 0
    %6690 = vmatpush1.bf16.msra.mxu0 0
    %6691 = vmatprep.subr.bf16.mxu0 0
    %6692 = vmatpush1.bf16.msra.mxu0 0
    %6693 = vmatprep.subr.bf16.mxu0 0
    %6694 = vmatpush1.bf16.msra.mxu0 0
    %6695 = vmatprep.subr.bf16.mxu0 0
    %6696 = vmatpush1.bf16.msra.mxu0 0
    %6697 = vmatprep.subr.bf16.mxu0 0
    %6698 = vmatpush1.bf16.msra.mxu0 0
    %6699 = vmatprep.subr.bf16.mxu0 0
    %6700 = vmatpush1.bf16.msra.mxu0 0
    %6701 = vmatprep.subr.bf16.mxu0 0
    %6702 = vmatpush1.bf16.msra.mxu0 0
    %6703 = vmatprep.subr.bf16.mxu0 0
    %6704 = vmatpush1.bf16.msra.mxu0 0
    %6705 = vmatprep.subr.bf16.mxu0 0
    %6706 = vmatpush1.bf16.msra.mxu0 0
    %6707 = vmatprep.mubr.bf16.mxu0 0
    %6708 = vmatmul.mubr.bf16.gmra.mrb[0].mxu0 %v6630
    %v6709 = vpop.f32.mrb[0].mxu0
    %v6710 = vadd.f32 %v6670, %v6709
    %v6711 = vpop.f32.mrb[0].mxu0
    %v6712 = vpop.f32.mrb[0].mxu0
    %v6713 = vpop.f32.mrb[0].mxu0
    %6714 = vdwg.mxu0
    %s6715 = scalar_lea.vmem [#allocation16], 600
    %v6716 = vld [vmem:[%s6715] sm:$0xff]
    %v6717 = vld [vmem:[%s6715 + $0x8] sm:$0xf]
    %v6718 = vld [vmem:[%s6715 + $0xc] sm:$0xff]
    %v6719 = vld [vmem:[%s6715 + $0x14] sm:$0xf]
    %v6720 = vld [vmem:[%s6715 + $0x18] sm:$0xff]
    %v6721 = vld [vmem:[%s6715 + $0x20] sm:$0xf]
    %v6722 = vld [vmem:[%s6715 + $0x24] sm:$0xff]
    %v6723 = vld [vmem:[%s6715 + $0x2c] sm:$0xf]
    %v6724 = vld [vmem:[%s6715 + $0x30] sm:$0xff]
    %v6725 = vld [vmem:[%s6715 + $0x38] sm:$0xf]
    %v6726 = vld [vmem:[%s6715 + $0x3c] sm:$0xff]
    %v6727 = vld [vmem:[%s6715 + $0x44] sm:$0xf]
    %v6728 = vld [vmem:[%s6715 + $0x48] sm:$0xff]
    %v6729 = vld [vmem:[%s6715 + $0x50] sm:$0xf]
    %v6730 = vld [vmem:[%s6715 + $0x54] sm:$0xff]
    %v6731 = vld [vmem:[%s6715 + $0x5c] sm:$0xf]
    %v6732 = vld [vmem:[%s6715 + $0x60] sm:$0xff]
    %v6733 = vld [vmem:[%s6715 + $0x68] sm:$0xf]
    %v6734 = vld [vmem:[%s6715 + $0x6c] sm:$0xff]
    %v6735 = vld [vmem:[%s6715 + $0x74] sm:$0xf]
    %v6736 = vld [vmem:[%s6715 + $0x78] sm:$0xff]
    %v6737 = vld [vmem:[%s6715 + $0x80] sm:$0xf]
    %v6738 = vld [vmem:[%s6715 + $0x84] sm:$0xff]
    %v6739 = vld [vmem:[%s6715 + $0x8c] sm:$0xf]
    %v6740 = vld [vmem:[%s6715 + $0x90] sm:$0xff]
    %v6741 = vld [vmem:[%s6715 + $0x98] sm:$0xf]
    %v6742 = vld [vmem:[%s6715 + $0x9c] sm:$0xff]
    %v6743 = vld [vmem:[%s6715 + $0xa4] sm:$0xf]
    %v6744 = vld [vmem:[%s6715 + $0xa8] sm:$0xff]
    %v6745 = vld [vmem:[%s6715 + $0xb0] sm:$0xf]
    %v6746 = vld [vmem:[%s6715 + $0xb4] sm:$0xff]
    %v6747 = vld [vmem:[%s6715 + $0xbc] sm:$0xf]
    %v6748 = vld [vmem:[%s6715 + $0xc0] sm:$0xff]
    %v6749 = vld [vmem:[%s6715 + $0xc8] sm:$0xf]
    %v6750 = vld [vmem:[%s6715 + $0xcc] sm:$0xff]
    %v6751 = vld [vmem:[%s6715 + $0xd4] sm:$0xf]
    %v6752 = vld [vmem:[%s6715 + $0xd8] sm:$0xff]
    %v6753 = vld [vmem:[%s6715 + $0xe0] sm:$0xf]
    %v6754 = vld [vmem:[%s6715 + $0xe4] sm:$0xff]
    %v6755 = vld [vmem:[%s6715 + $0xec] sm:$0xf]
    %v6756 = vld [vmem:[%s6715 + $0xf0] sm:$0xff]
    %v6757 = vld [vmem:[%s6715 + $0xf8] sm:$0xf]
    %v6758 = vld [vmem:[%s6715 + $0xfc] sm:$0xff]
    %v6759 = vld [vmem:[%s6715 + $0x104] sm:$0xf]
    %v6760 = vld [vmem:[%s6715 + $0x108] sm:$0xff]
    %v6761 = vld [vmem:[%s6715 + $0x110] sm:$0xf]
    %v6762 = vld [vmem:[%s6715 + $0x114] sm:$0xff]
    %v6763 = vld [vmem:[%s6715 + $0x11c] sm:$0xf]
    %v6764 = vld [vmem:[%s6715 + $0x120] sm:$0xff]
    %v6765 = vld [vmem:[%s6715 + $0x128] sm:$0xf]
    %v6766 = vld [vmem:[%s6715 + $0x12c] sm:$0xff]
    %v6767 = vld [vmem:[%s6715 + $0x134] sm:$0xf]
    %v6768 = vld [vmem:[%s6715 + $0x138] sm:$0xff]
    %v6769 = vld [vmem:[%s6715 + $0x140] sm:$0xf]
    %v6770 = vld [vmem:[%s6715 + $0x144] sm:$0xff]
    %v6771 = vld [vmem:[%s6715 + $0x14c] sm:$0xf]
    %v6772 = vld [vmem:[%s6715 + $0x150] sm:$0xff]
    %v6773 = vld [vmem:[%s6715 + $0x158] sm:$0xf]
    %v6774 = vld [vmem:[%s6715 + $0x15c] sm:$0xff]
    %v6775 = vld [vmem:[%s6715 + $0x164] sm:$0xf]
    %v6776 = vld [vmem:[%s6715 + $0x168] sm:$0xff]
    %v6777 = vld [vmem:[%s6715 + $0x170] sm:$0xf]
    %v6778 = vld [vmem:[%s6715 + $0x174] sm:$0xff]
    %v6779 = vld [vmem:[%s6715 + $0x17c] sm:$0xf]
    %v6780 = vld [vmem:[%s6715 + $0x180] sm:$0xff]
    %v6781 = vld [vmem:[%s6715 + $0x188] sm:$0xf]
    %v6782 = vld [vmem:[%s6715 + $0x18c] sm:$0xff]
    %v6783 = vld [vmem:[%s6715 + $0x194] sm:$0xf]
    %v6784 = vld [vmem:[%s6715 + $0x198] sm:$0xff]
    %v6785 = vld [vmem:[%s6715 + $0x1a0] sm:$0xf]
    %v6786 = vld [vmem:[%s6715 + $0x1a4] sm:$0xff]
    %v6787 = vld [vmem:[%s6715 + $0x1ac] sm:$0xf]
    %v6788 = vld [vmem:[%s6715 + $0x1b0] sm:$0xff]
    %v6789 = vld [vmem:[%s6715 + $0x1b8] sm:$0xf]
    %v6790 = vld [vmem:[%s6715 + $0x1bc] sm:$0xff]
    %v6791 = vld [vmem:[%s6715 + $0x1c4] sm:$0xf]
    %v6792 = vld [vmem:[%s6715 + $0x1c8] sm:$0xff]
    %v6793 = vld [vmem:[%s6715 + $0x1d0] sm:$0xf]
    %v6794 = vld [vmem:[%s6715 + $0x1d4] sm:$0xff]
    %v6795 = vld [vmem:[%s6715 + $0x1dc] sm:$0xf]
    %v6796 = vld [vmem:[%s6715 + $0x1e0] sm:$0xff]
    %v6797 = vld [vmem:[%s6715 + $0x1e8] sm:$0xf]
    %v6798 = vld [vmem:[%s6715 + $0x1ec] sm:$0xff]
    %v6799 = vld [vmem:[%s6715 + $0x1f4] sm:$0xf]
    %v6800 = vld [vmem:[%s6715 + $0x1f8] sm:$0xff]
    %v6801 = vld [vmem:[%s6715 + $0x200] sm:$0xf]
    %v6802 = vld [vmem:[%s6715 + $0x204] sm:$0xff]
    %v6803 = vld [vmem:[%s6715 + $0x20c] sm:$0xf]
    %v6804 = vld [vmem:[%s6715 + $0x210] sm:$0xff]
    %v6805 = vld [vmem:[%s6715 + $0x218] sm:$0xf]
    %v6806 = vld [vmem:[%s6715 + $0x21c] sm:$0xff]
    %v6807 = vld [vmem:[%s6715 + $0x224] sm:$0xf]
    %v6808 = vld [vmem:[%s6715 + $0x228] sm:$0xff]
    %v6809 = vld [vmem:[%s6715 + $0x230] sm:$0xf]
    %v6810 = vld [vmem:[%s6715 + $0x234] sm:$0xff]
    %v6811 = vld [vmem:[%s6715 + $0x23c] sm:$0xf]
    %v6812 = vld [vmem:[%s6715 + $0x240] sm:$0xff]
    %v6813 = vld [vmem:[%s6715 + $0x248] sm:$0xf]
    %v6814 = vld [vmem:[%s6715 + $0x24c] sm:$0xff]
    %v6815 = vld [vmem:[%s6715 + $0x254] sm:$0xf]
    %s6816 = scalar_lea.vmem [#allocation18], 3
    %v6817 = vld [vmem:[%s6816] sm:$0x7]
    %v6819 = vlaneseq
    %v6820 = vshrl.u32 %v6819, 7
    %v6821 = vsub.s32 0, %v6820
    %v6822 = vrot.slane %v6817, %v6821
    %v6823 = vlaneseq
    %v6824 = vshrl.u32 %v6823, 7
    %v6825 = vsub.s32 1, %v6824
    %v6826 = vrot.slane %v6817, %v6825
    %v6827 = vlaneseq
    %v6828 = vshrl.u32 %v6827, 7
    %v6829 = vsub.s32 2, %v6828
    %v6830 = vrot.slane %v6817, %v6829
    %6838 = vrot.lane.b32.xlu0 %v5768, 112
    %v6839 = vpop.permute.xlu0 %6838
    %6840 = vrot.lane.b32.xlu0 %v5769, 112
    %v6841 = vpop.permute.xlu0 %6840
    %6842 = vrot.lane.b32.xlu0 %v5770, 112
    %v6843 = vpop.permute.xlu0 %6842
    %6844 = vrot.lane.b32.xlu0 %v5771, 112
    %v6845 = vpop.permute.xlu0 %6844
    %vm6846 = vcmask 916480
    %v6847 = vsel %vm6846, %v6839, %v6841
    %v6848 = vsel %vm6846, %v6841, %v6843
    %v6849 = vsel %vm6846, %v6843, %v6845
    %v6953 = vunpack.c.l.b16 %v6716
    %v6954 = vunpack.c.h.b16 %v6716
    %v6955 = vunpack.c.l.b16 %v6717
    %v6956 = vunpack.c.l.b16 %v6718
    %v6957 = vunpack.c.h.b16 %v6718
    %v6958 = vunpack.c.l.b16 %v6719
    %v6959 = vunpack.c.l.b16 %v6720
    %v6960 = vunpack.c.h.b16 %v6720
    %v6961 = vunpack.c.l.b16 %v6721
    %v6962 = vunpack.c.l.b16 %v6722
    %v6963 = vunpack.c.h.b16 %v6722
    %v6964 = vunpack.c.l.b16 %v6723
    %v6965 = vunpack.c.l.b16 %v6724
    %v6966 = vunpack.c.h.b16 %v6724
    %v6967 = vunpack.c.l.b16 %v6725
    %v6968 = vunpack.c.l.b16 %v6726
    %v6969 = vunpack.c.h.b16 %v6726
    %v6970 = vunpack.c.l.b16 %v6727
    %v6971 = vunpack.c.l.b16 %v6728
    %v6972 = vunpack.c.h.b16 %v6728
    %v6973 = vunpack.c.l.b16 %v6729
    %v6974 = vunpack.c.l.b16 %v6730
    %v6975 = vunpack.c.h.b16 %v6730
    %v6976 = vunpack.c.l.b16 %v6731
    %v6977 = vunpack.c.l.b16 %v6732
    %v6978 = vunpack.c.h.b16 %v6732
    %v6979 = vunpack.c.l.b16 %v6733
    %v6980 = vunpack.c.l.b16 %v6734
    %v6981 = vunpack.c.h.b16 %v6734
    %v6982 = vunpack.c.l.b16 %v6735
    %v6983 = vunpack.c.l.b16 %v6736
    %v6984 = vunpack.c.h.b16 %v6736
    %v6985 = vunpack.c.l.b16 %v6737
    %v6986 = vunpack.c.l.b16 %v6738
    %v6987 = vunpack.c.h.b16 %v6738
    %v6988 = vunpack.c.l.b16 %v6739
    %v6989 = vunpack.c.l.b16 %v6740
    %v6990 = vunpack.c.h.b16 %v6740
    %v6991 = vunpack.c.l.b16 %v6741
    %v6992 = vunpack.c.l.b16 %v6742
    %v6993 = vunpack.c.h.b16 %v6742
    %v6994 = vunpack.c.l.b16 %v6743
    %v6995 = vunpack.c.l.b16 %v6744
    %v6996 = vunpack.c.h.b16 %v6744
    %v6997 = vunpack.c.l.b16 %v6745
    %v6998 = vunpack.c.l.b16 %v6746
    %v6999 = vunpack.c.h.b16 %v6746
    %v7000 = vunpack.c.l.b16 %v6747
    %v7001 = vunpack.c.l.b16 %v6748
    %v7002 = vunpack.c.h.b16 %v6748
    %v7003 = vunpack.c.l.b16 %v6749
    %v7004 = vunpack.c.l.b16 %v6750
    %v7005 = vunpack.c.h.b16 %v6750
    %v7006 = vunpack.c.l.b16 %v6751
    %v7007 = vunpack.c.l.b16 %v6752
    %v7008 = vunpack.c.h.b16 %v6752
    %v7009 = vunpack.c.l.b16 %v6753
    %v7010 = vunpack.c.l.b16 %v6754
    %v7011 = vunpack.c.h.b16 %v6754
    %v7012 = vunpack.c.l.b16 %v6755
    %v7013 = vunpack.c.l.b16 %v6756
    %v7014 = vunpack.c.h.b16 %v6756
    %v7015 = vunpack.c.l.b16 %v6757
    %v7016 = vunpack.c.l.b16 %v6758
    %v7017 = vunpack.c.h.b16 %v6758
    %v7018 = vunpack.c.l.b16 %v6759
    %v7019 = vunpack.c.l.b16 %v6760
    %v7020 = vunpack.c.h.b16 %v6760
    %v7021 = vunpack.c.l.b16 %v6761
    %v7022 = vunpack.c.l.b16 %v6762
    %v7023 = vunpack.c.h.b16 %v6762
    %v7024 = vunpack.c.l.b16 %v6763
    %v7025 = vunpack.c.l.b16 %v6764
    %v7026 = vunpack.c.h.b16 %v6764
    %v7027 = vunpack.c.l.b16 %v6765
    %v7028 = vunpack.c.l.b16 %v6766
    %v7029 = vunpack.c.h.b16 %v6766
    %v7030 = vunpack.c.l.b16 %v6767
    %v7031 = vunpack.c.l.b16 %v6768
    %v7032 = vunpack.c.h.b16 %v6768
    %v7033 = vunpack.c.l.b16 %v6769
    %v7034 = vunpack.c.l.b16 %v6770
    %v7035 = vunpack.c.h.b16 %v6770
    %v7036 = vunpack.c.l.b16 %v6771
    %v7037 = vunpack.c.l.b16 %v6772
    %v7038 = vunpack.c.h.b16 %v6772
    %v7039 = vunpack.c.l.b16 %v6773
    %v7040 = vunpack.c.l.b16 %v6774
    %v7041 = vunpack.c.h.b16 %v6774
    %v7042 = vunpack.c.l.b16 %v6775
    %v7043 = vunpack.c.l.b16 %v6776
    %v7044 = vunpack.c.h.b16 %v6776
    %v7045 = vunpack.c.l.b16 %v6777
    %v7046 = vunpack.c.l.b16 %v6778
    %v7047 = vunpack.c.h.b16 %v6778
    %v7048 = vunpack.c.l.b16 %v6779
    %v7049 = vunpack.c.l.b16 %v6780
    %v7050 = vunpack.c.h.b16 %v6780
    %v7051 = vunpack.c.l.b16 %v6781
    %v7052 = vunpack.c.l.b16 %v6782
    %v7053 = vunpack.c.h.b16 %v6782
    %v7054 = vunpack.c.l.b16 %v6783
    %v7055 = vunpack.c.l.b16 %v6784
    %v7056 = vunpack.c.h.b16 %v6784
    %v7057 = vunpack.c.l.b16 %v6785
    %v7058 = vunpack.c.l.b16 %v6786
    %v7059 = vunpack.c.h.b16 %v6786
    %v7060 = vunpack.c.l.b16 %v6787
    %v7061 = vunpack.c.l.b16 %v6788
    %v7062 = vunpack.c.h.b16 %v6788
    %v7063 = vunpack.c.l.b16 %v6789
    %v7064 = vunpack.c.l.b16 %v6790
    %v7065 = vunpack.c.h.b16 %v6790
    %v7066 = vunpack.c.l.b16 %v6791
    %v7067 = vunpack.c.l.b16 %v6792
    %v7068 = vunpack.c.h.b16 %v6792
    %v7069 = vunpack.c.l.b16 %v6793
    %v7070 = vunpack.c.l.b16 %v6794
    %v7071 = vunpack.c.h.b16 %v6794
    %v7072 = vunpack.c.l.b16 %v6795
    %v7073 = vunpack.c.l.b16 %v6796
    %v7074 = vunpack.c.h.b16 %v6796
    %v7075 = vunpack.c.l.b16 %v6797
    %v7076 = vunpack.c.l.b16 %v6798
    %v7077 = vunpack.c.h.b16 %v6798
    %v7078 = vunpack.c.l.b16 %v6799
    %v7079 = vunpack.c.l.b16 %v6800
    %v7080 = vunpack.c.h.b16 %v6800
    %v7081 = vunpack.c.l.b16 %v6801
    %v7082 = vunpack.c.l.b16 %v6802
    %v7083 = vunpack.c.h.b16 %v6802
    %v7084 = vunpack.c.l.b16 %v6803
    %v7085 = vunpack.c.l.b16 %v6804
    %v7086 = vunpack.c.h.b16 %v6804
    %v7087 = vunpack.c.l.b16 %v6805
    %v7088 = vunpack.c.l.b16 %v6806
    %v7089 = vunpack.c.h.b16 %v6806
    %v7090 = vunpack.c.l.b16 %v6807
    %v7091 = vunpack.c.l.b16 %v6808
    %v7092 = vunpack.c.h.b16 %v6808
    %v7093 = vunpack.c.l.b16 %v6809
    %v7094 = vunpack.c.l.b16 %v6810
    %v7095 = vunpack.c.h.b16 %v6810
    %v7096 = vunpack.c.l.b16 %v6811
    %v7097 = vunpack.c.l.b16 %v6812
    %v7098 = vunpack.c.h.b16 %v6812
    %v7099 = vunpack.c.l.b16 %v6813
    %v7100 = vunpack.c.l.b16 %v6814
    %v7101 = vunpack.c.h.b16 %v6814
    %v7102 = vunpack.c.l.b16 %v6815
    %v7103 = vpack.c.b16 %v6956, %v6953
    %v7104 = vpack.c.b16 %v6957, %v6954
    %v7105 = vpack.c.b16 %v6958, %v6955
    %v7106 = vpack.c.b16 %v6962, %v6959
    %v7107 = vpack.c.b16 %v6963, %v6960
    %v7108 = vpack.c.b16 %v6964, %v6961
    %v7109 = vpack.c.b16 %v6968, %v6965
    %v7110 = vpack.c.b16 %v6969, %v6966
    %v7111 = vpack.c.b16 %v6970, %v6967
    %v7112 = vpack.c.b16 %v6974, %v6971
    %v7113 = vpack.c.b16 %v6975, %v6972
    %v7114 = vpack.c.b16 %v6976, %v6973
    %v7115 = vpack.c.b16 %v6980, %v6977
    %v7116 = vpack.c.b16 %v6981, %v6978
    %v7117 = vpack.c.b16 %v6982, %v6979
    %v7118 = vpack.c.b16 %v6986, %v6983
    %v7119 = vpack.c.b16 %v6987, %v6984
    %v7120 = vpack.c.b16 %v6988, %v6985
    %v7121 = vpack.c.b16 %v6992, %v6989
    %v7122 = vpack.c.b16 %v6993, %v6990
    %v7123 = vpack.c.b16 %v6994, %v6991
    %v7124 = vpack.c.b16 %v6998, %v6995
    %v7125 = vpack.c.b16 %v6999, %v6996
    %v7126 = vpack.c.b16 %v7000, %v6997
    %v7127 = vpack.c.b16 %v7004, %v7001
    %v7128 = vpack.c.b16 %v7005, %v7002
    %v7129 = vpack.c.b16 %v7006, %v7003
    %v7130 = vpack.c.b16 %v7010, %v7007
    %v7131 = vpack.c.b16 %v7011, %v7008
    %v7132 = vpack.c.b16 %v7012, %v7009
    %v7133 = vpack.c.b16 %v7016, %v7013
    %v7134 = vpack.c.b16 %v7017, %v7014
    %v7135 = vpack.c.b16 %v7018, %v7015
    %v7136 = vpack.c.b16 %v7022, %v7019
    %v7137 = vpack.c.b16 %v7023, %v7020
    %v7138 = vpack.c.b16 %v7024, %v7021
    %v7139 = vpack.c.b16 %v7028, %v7025
    %v7140 = vpack.c.b16 %v7029, %v7026
    %v7141 = vpack.c.b16 %v7030, %v7027
    %v7142 = vpack.c.b16 %v7034, %v7031
    %v7143 = vpack.c.b16 %v7035, %v7032
    %v7144 = vpack.c.b16 %v7036, %v7033
    %v7145 = vpack.c.b16 %v7040, %v7037
    %v7146 = vpack.c.b16 %v7041, %v7038
    %v7147 = vpack.c.b16 %v7042, %v7039
    %v7148 = vpack.c.b16 %v7046, %v7043
    %v7149 = vpack.c.b16 %v7047, %v7044
    %v7150 = vpack.c.b16 %v7048, %v7045
    %v7151 = vpack.c.b16 %v7052, %v7049
    %v7152 = vpack.c.b16 %v7053, %v7050
    %v7153 = vpack.c.b16 %v7054, %v7051
    %v7154 = vpack.c.b16 %v7058, %v7055
    %v7155 = vpack.c.b16 %v7059, %v7056
    %v7156 = vpack.c.b16 %v7060, %v7057
    %v7157 = vpack.c.b16 %v7064, %v7061
    %v7158 = vpack.c.b16 %v7065, %v7062
    %v7159 = vpack.c.b16 %v7066, %v7063
    %v7160 = vpack.c.b16 %v7070, %v7067
    %v7161 = vpack.c.b16 %v7071, %v7068
    %v7162 = vpack.c.b16 %v7072, %v7069
    %v7163 = vpack.c.b16 %v7076, %v7073
    %v7164 = vpack.c.b16 %v7077, %v7074
    %v7165 = vpack.c.b16 %v7078, %v7075
    %v7166 = vpack.c.b16 %v7082, %v7079
    %v7167 = vpack.c.b16 %v7083, %v7080
    %v7168 = vpack.c.b16 %v7084, %v7081
    %v7169 = vpack.c.b16 %v7088, %v7085
    %v7170 = vpack.c.b16 %v7089, %v7086
    %v7171 = vpack.c.b16 %v7090, %v7087
    %v7172 = vpack.c.b16 %v7094, %v7091
    %v7173 = vpack.c.b16 %v7095, %v7092
    %v7174 = vpack.c.b16 %v7096, %v7093
    %v7175 = vpack.c.b16 %v7100, %v7097
    %v7176 = vpack.c.b16 %v7101, %v7098
    %v7177 = vpack.c.b16 %v7102, %v7099
    %v7254 = vsel %vm244, %v6845, 0
    %7256 = vmatprep.subr.bf16.mxu0 %v7104
    %7257 = vmatpush1.bf16.msra.mxu0 %v7103
    %7258 = vmatprep.subr.bf16.mxu0 %v7107
    %7259 = vmatpush1.bf16.msra.mxu0 %v7106
    %7260 = vmatprep.subr.bf16.mxu0 %v7110
    %7261 = vmatpush1.bf16.msra.mxu0 %v7109
    %7262 = vmatprep.subr.bf16.mxu0 %v7113
    %7263 = vmatpush1.bf16.msra.mxu0 %v7112
    %7264 = vmatprep.subr.bf16.mxu0 %v7116
    %7265 = vmatpush1.bf16.msra.mxu0 %v7115
    %7266 = vmatprep.subr.bf16.mxu0 %v7119
    %7267 = vmatpush1.bf16.msra.mxu0 %v7118
    %7268 = vmatprep.subr.bf16.mxu0 %v7122
    %7269 = vmatpush1.bf16.msra.mxu0 %v7121
    %7270 = vmatprep.subr.bf16.mxu0 %v7125
    %7271 = vmatpush1.bf16.msra.mxu0 %v7124
    %7272 = vmatprep.subr.bf16.mxu0 %v7128
    %7273 = vmatpush1.bf16.msra.mxu0 %v7127
    %7274 = vmatprep.subr.bf16.mxu0 %v7131
    %7275 = vmatpush1.bf16.msra.mxu0 %v7130
    %7276 = vmatprep.subr.bf16.mxu0 %v7134
    %7277 = vmatpush1.bf16.msra.mxu0 %v7133
    %7278 = vmatprep.subr.bf16.mxu0 %v7137
    %7279 = vmatpush1.bf16.msra.mxu0 %v7136
    %7280 = vmatprep.subr.bf16.mxu0 %v7140
    %7281 = vmatpush1.bf16.msra.mxu0 %v7139
    %7282 = vmatprep.subr.bf16.mxu0 %v7143
    %7283 = vmatpush1.bf16.msra.mxu0 %v7142
    %7284 = vmatprep.subr.bf16.mxu0 %v7146
    %7285 = vmatpush1.bf16.msra.mxu0 %v7145
    %7286 = vmatprep.subr.bf16.mxu0 %v7149
    %7287 = vmatpush1.bf16.msra.mxu0 %v7148
    %7288 = vmatprep.mubr.bf16.mxu0 %v6848
    %7289 = vmatmul.mubr.bf16.gmra.mrb[0].mxu0 %v6847
    %v7290 = vpop.f32.mrb[0].mxu0
    %v7291 = vadd.f32 %v6822, %v7290
    %v7292 = vpop.f32.mrb[0].mxu0
    %v7293 = vadd.f32 %v6826, %v7292
    %v7294 = vpop.f32.mrb[0].mxu0
    %v7295 = vpop.f32.mrb[0].mxu0
    %7296 = vdwg.mxu0
    %7297 = vmatprep.subr.bf16.mxu0 %v7152
    %7298 = vmatpush1.bf16.msra.mxu0 %v7151
    %7299 = vmatprep.subr.bf16.mxu0 %v7155
    %7300 = vmatpush1.bf16.msra.mxu0 %v7154
    %7301 = vmatprep.subr.bf16.mxu0 %v7158
    %7302 = vmatpush1.bf16.msra.mxu0 %v7157
    %7303 = vmatprep.subr.bf16.mxu0 %v7161
    %7304 = vmatpush1.bf16.msra.mxu0 %v7160
    %7305 = vmatprep.subr.bf16.mxu0 %v7164
    %7306 = vmatpush1.bf16.msra.mxu0 %v7163
    %7307 = vmatprep.subr.bf16.mxu0 %v7167
    %7308 = vmatpush1.bf16.msra.mxu0 %v7166
    %7309 = vmatprep.subr.bf16.mxu0 %v7170
    %7310 = vmatpush1.bf16.msra.mxu0 %v7169
    %7311 = vmatprep.subr.bf16.mxu0 %v7173
    %7312 = vmatpush1.bf16.msra.mxu0 %v7172
    %7313 = vmatprep.subr.bf16.mxu0 %v7176
    %7314 = vmatpush1.bf16.msra.mxu0 %v7175
    %7315 = vmatprep.subr.bf16.mxu0 0
    %7316 = vmatpush1.bf16.msra.mxu0 0
    %7317 = vmatprep.subr.bf16.mxu0 0
    %7318 = vmatpush1.bf16.msra.mxu0 0
    %7319 = vmatprep.subr.bf16.mxu0 0
    %7320 = vmatpush1.bf16.msra.mxu0 0
    %7321 = vmatprep.subr.bf16.mxu0 0
    %7322 = vmatpush1.bf16.msra.mxu0 0
    %7323 = vmatprep.subr.bf16.mxu0 0
    %7324 = vmatpush1.bf16.msra.mxu0 0
    %7325 = vmatprep.subr.bf16.mxu0 0
    %7326 = vmatpush1.bf16.msra.mxu0 0
    %7327 = vmatprep.subr.bf16.mxu0 0
    %7328 = vmatpush1.bf16.msra.mxu0 0
    %7329 = vmatprep.mubr.bf16.mxu0 %v7254
    %7330 = vmatmul.mubr.bf16.gmra.mrb[0].mxu0 %v6849
    %v7331 = vpop.f32.mrb[0].mxu0
    %v7332 = vadd.f32 %v7291, %v7331
    %v7333 = vpop.f32.mrb[0].mxu0
    %v7334 = vadd.f32 %v7293, %v7333
    %v7335 = vpop.f32.mrb[0].mxu0
    %v7336 = vpop.f32.mrb[0].mxu0
    %7337 = vdwg.mxu0
    %7338 = vmatprep.subr.bf16.mxu0 0
    %7339 = vmatpush1.bf16.msra.mxu0 %v7105
    %7340 = vmatprep.subr.bf16.mxu0 0
    %7341 = vmatpush1.bf16.msra.mxu0 %v7108
    %7342 = vmatprep.subr.bf16.mxu0 0
    %7343 = vmatpush1.bf16.msra.mxu0 %v7111
    %7344 = vmatprep.subr.bf16.mxu0 0
    %7345 = vmatpush1.bf16.msra.mxu0 %v7114
    %7346 = vmatprep.subr.bf16.mxu0 0
    %7347 = vmatpush1.bf16.msra.mxu0 %v7117
    %7348 = vmatprep.subr.bf16.mxu0 0
    %7349 = vmatpush1.bf16.msra.mxu0 %v7120
    %7350 = vmatprep.subr.bf16.mxu0 0
    %7351 = vmatpush1.bf16.msra.mxu0 %v7123
    %7352 = vmatprep.subr.bf16.mxu0 0
    %7353 = vmatpush1.bf16.msra.mxu0 %v7126
    %7354 = vmatprep.subr.bf16.mxu0 0
    %7355 = vmatpush1.bf16.msra.mxu0 %v7129
    %7356 = vmatprep.subr.bf16.mxu0 0
    %7357 = vmatpush1.bf16.msra.mxu0 %v7132
    %7358 = vmatprep.subr.bf16.mxu0 0
    %7359 = vmatpush1.bf16.msra.mxu0 %v7135
    %7360 = vmatprep.subr.bf16.mxu0 0
    %7361 = vmatpush1.bf16.msra.mxu0 %v7138
    %7362 = vmatprep.subr.bf16.mxu0 0
    %7363 = vmatpush1.bf16.msra.mxu0 %v7141
    %7364 = vmatprep.subr.bf16.mxu0 0
    %7365 = vmatpush1.bf16.msra.mxu0 %v7144
    %7366 = vmatprep.subr.bf16.mxu0 0
    %7367 = vmatpush1.bf16.msra.mxu0 %v7147
    %7368 = vmatprep.subr.bf16.mxu0 0
    %7369 = vmatpush1.bf16.msra.mxu0 %v7150
    %7370 = vmatprep.mubr.bf16.mxu0 %v6848
    %7371 = vmatmul.mubr.bf16.gmra.mrb[0].mxu0 %v6847
    %v7372 = vpop.f32.mrb[0].mxu0
    %v7373 = vadd.f32 %v6830, %v7372
    %v7374 = vpop.f32.mrb[0].mxu0
    %v7375 = vpop.f32.mrb[0].mxu0
    %v7376 = vpop.f32.mrb[0].mxu0
    %7377 = vdwg.mxu0
    %7378 = vmatprep.subr.bf16.mxu0 0
    %7379 = vmatpush1.bf16.msra.mxu0 %v7153
    %7380 = vmatprep.subr.bf16.mxu0 0
    %7381 = vmatpush1.bf16.msra.mxu0 %v7156
    %7382 = vmatprep.subr.bf16.mxu0 0
    %7383 = vmatpush1.bf16.msra.mxu0 %v7159
    %7384 = vmatprep.subr.bf16.mxu0 0
    %7385 = vmatpush1.bf16.msra.mxu0 %v7162
    %7386 = vmatprep.subr.bf16.mxu0 0
    %7387 = vmatpush1.bf16.msra.mxu0 %v7165
    %7388 = vmatprep.subr.bf16.mxu0 0
    %7389 = vmatpush1.bf16.msra.mxu0 %v7168
    %7390 = vmatprep.subr.bf16.mxu0 0
    %7391 = vmatpush1.bf16.msra.mxu0 %v7171
    %7392 = vmatprep.subr.bf16.mxu0 0
    %7393 = vmatpush1.bf16.msra.mxu0 %v7174
    %7394 = vmatprep.subr.bf16.mxu0 0
    %7395 = vmatpush1.bf16.msra.mxu0 %v7177
    %7396 = vmatprep.subr.bf16.mxu0 0
    %7397 = vmatpush1.bf16.msra.mxu0 0
    %7398 = vmatprep.subr.bf16.mxu0 0
    %7399 = vmatpush1.bf16.msra.mxu0 0
    %7400 = vmatprep.subr.bf16.mxu0 0
    %7401 = vmatpush1.bf16.msra.mxu0 0
    %7402 = vmatprep.subr.bf16.mxu0 0
    %7403 = vmatpush1.bf16.msra.mxu0 0
    %7404 = vmatprep.subr.bf16.mxu0 0
    %7405 = vmatpush1.bf16.msra.mxu0 0
    %7406 = vmatprep.subr.bf16.mxu0 0
    %7407 = vmatpush1.bf16.msra.mxu0 0
    %7408 = vmatprep.subr.bf16.mxu0 0
    %7409 = vmatpush1.bf16.msra.mxu0 0
    %7410 = vmatprep.mubr.bf16.mxu0 %v7254
    %7411 = vmatmul.mubr.bf16.gmra.mrb[0].mxu0 %v6849
    %v7412 = vpop.f32.mrb[0].mxu0
    %v7413 = vadd.f32 %v7373, %v7412
    %v7414 = vpop.f32.mrb[0].mxu0
    %v7415 = vpop.f32.mrb[0].mxu0
    %v7416 = vpop.f32.mrb[0].mxu0
    %7417 = vdwg.mxu0
    %v7418 = vmax.f32 %v7332, 0.0
    %v7419 = vmax.f32 %v7334, 0.0
    %v7420 = vmax.f32 %v7413, 0.0
    %v7421 = vpack.c.bf16 %v7418, %v7418
    %v7422 = vpack.c.bf16 %v7419, %v7419
    %v7423 = vpack.c.bf16 %v7420, %v7420
    %s7424 = scalar_lea.vmem %s11, 152
    %v7425 = vld [vmem:[%s7424] sm:$0xf]
    %v7426 = vld [vmem:[%s7424 + $0x4] sm:$0xf]
    %v7427 = vld [vmem:[%s7424 + $0x8] sm:$0xf]
    %v7428 = vld [vmem:[%s7424 + $0xc] sm:$0xf]
    %v7429 = vld [vmem:[%s7424 + $0x10] sm:$0xf]
    %v7430 = vld [vmem:[%s7424 + $0x14] sm:$0xf]
    %v7431 = vld [vmem:[%s7424 + $0x18] sm:$0xf]
    %v7432 = vld [vmem:[%s7424 + $0x1c] sm:$0xf]
    %v7433 = vld [vmem:[%s7424 + $0x20] sm:$0xf]
    %v7434 = vld [vmem:[%s7424 + $0x24] sm:$0xf]
    %v7435 = vld [vmem:[%s7424 + $0x28] sm:$0xf]
    %v7436 = vld [vmem:[%s7424 + $0x2c] sm:$0xf]
    %v7437 = vld [vmem:[%s7424 + $0x30] sm:$0xf]
    %v7438 = vld [vmem:[%s7424 + $0x34] sm:$0xf]
    %v7439 = vld [vmem:[%s7424 + $0x38] sm:$0xf]
    %v7440 = vld [vmem:[%s7424 + $0x3c] sm:$0xf]
    %v7441 = vld [vmem:[%s7424 + $0x40] sm:$0xf]
    %v7442 = vld [vmem:[%s7424 + $0x44] sm:$0xf]
    %v7443 = vld [vmem:[%s7424 + $0x48] sm:$0xf]
    %v7444 = vld [vmem:[%s7424 + $0x4c] sm:$0xf]
    %v7445 = vld [vmem:[%s7424 + $0x50] sm:$0xf]
    %v7446 = vld [vmem:[%s7424 + $0x54] sm:$0xf]
    %v7447 = vld [vmem:[%s7424 + $0x58] sm:$0xf]
    %v7448 = vld [vmem:[%s7424 + $0x5c] sm:$0xf]
    %v7449 = vld [vmem:[%s7424 + $0x60] sm:$0xf]
    %v7450 = vld [vmem:[%s7424 + $0x64] sm:$0xf]
    %v7451 = vld [vmem:[%s7424 + $0x68] sm:$0xf]
    %v7452 = vld [vmem:[%s7424 + $0x6c] sm:$0xf]
    %v7453 = vld [vmem:[%s7424 + $0x70] sm:$0xf]
    %v7454 = vld [vmem:[%s7424 + $0x74] sm:$0xf]
    %v7455 = vld [vmem:[%s7424 + $0x78] sm:$0xf]
    %v7456 = vld [vmem:[%s7424 + $0x7c] sm:$0xf]
    %v7457 = vld [vmem:[%s7424 + $0x80] sm:$0xf]
    %v7458 = vld [vmem:[%s7424 + $0x84] sm:$0xf]
    %v7459 = vld [vmem:[%s7424 + $0x88] sm:$0xf]
    %v7460 = vld [vmem:[%s7424 + $0x8c] sm:$0xf]
    %v7461 = vld [vmem:[%s7424 + $0x90] sm:$0xf]
    %v7462 = vld [vmem:[%s7424 + $0x94] sm:$0x3]
    %v7501 = vunpack.c.l.b16 %v7425
    %v7502 = vunpack.c.l.b16 %v7426
    %v7503 = vunpack.c.l.b16 %v7427
    %v7504 = vunpack.c.l.b16 %v7428
    %v7505 = vunpack.c.l.b16 %v7429
    %v7506 = vunpack.c.l.b16 %v7430
    %v7507 = vunpack.c.l.b16 %v7431
    %v7508 = vunpack.c.l.b16 %v7432
    %v7509 = vunpack.c.l.b16 %v7433
    %v7510 = vunpack.c.l.b16 %v7434
    %v7511 = vunpack.c.l.b16 %v7435
    %v7512 = vunpack.c.l.b16 %v7436
    %v7513 = vunpack.c.l.b16 %v7437
    %v7514 = vunpack.c.l.b16 %v7438
    %v7515 = vunpack.c.l.b16 %v7439
    %v7516 = vunpack.c.l.b16 %v7440
    %v7517 = vunpack.c.l.b16 %v7441
    %v7518 = vunpack.c.l.b16 %v7442
    %v7519 = vunpack.c.l.b16 %v7443
    %v7520 = vunpack.c.l.b16 %v7444
    %v7521 = vunpack.c.l.b16 %v7445
    %v7522 = vunpack.c.l.b16 %v7446
    %v7523 = vunpack.c.l.b16 %v7447
    %v7524 = vunpack.c.l.b16 %v7448
    %v7525 = vunpack.c.l.b16 %v7449
    %v7526 = vunpack.c.l.b16 %v7450
    %v7527 = vunpack.c.l.b16 %v7451
    %v7528 = vunpack.c.l.b16 %v7452
    %v7529 = vunpack.c.l.b16 %v7453
    %v7530 = vunpack.c.l.b16 %v7454
    %v7531 = vunpack.c.l.b16 %v7455
    %v7532 = vunpack.c.l.b16 %v7456
    %v7533 = vunpack.c.l.b16 %v7457
    %v7534 = vunpack.c.l.b16 %v7458
    %v7535 = vunpack.c.l.b16 %v7459
    %v7536 = vunpack.c.l.b16 %v7460
    %v7537 = vunpack.c.l.b16 %v7461
    %v7538 = vunpack.c.l.b16 %v7462
    %v7539 = vpack.c.b16 %v7502, %v7501
    %v7540 = vpack.c.b16 %v7504, %v7503
    %v7541 = vpack.c.b16 %v7506, %v7505
    %v7542 = vpack.c.b16 %v7508, %v7507
    %v7543 = vpack.c.b16 %v7510, %v7509
    %v7544 = vpack.c.b16 %v7512, %v7511
    %v7545 = vpack.c.b16 %v7514, %v7513
    %v7546 = vpack.c.b16 %v7516, %v7515
    %v7547 = vpack.c.b16 %v7518, %v7517
    %v7548 = vpack.c.b16 %v7520, %v7519
    %v7549 = vpack.c.b16 %v7522, %v7521
    %v7550 = vpack.c.b16 %v7524, %v7523
    %v7551 = vpack.c.b16 %v7526, %v7525
    %v7552 = vpack.c.b16 %v7528, %v7527
    %v7553 = vpack.c.b16 %v7530, %v7529
    %v7554 = vpack.c.b16 %v7532, %v7531
    %v7555 = vpack.c.b16 %v7534, %v7533
    %v7556 = vpack.c.b16 %v7536, %v7535
    %v7557 = vpack.c.b16 %v7538, %v7537
    %v7577 = vsel %vm1420, %v7423, 0
    %v7580 = vsel %vm1424, %v7557, 0
    %7582 = vmatprep.subr.bf16.mxu0 0
    %7583 = vmatpush1.bf16.msra.mxu0 %v7539
    %7584 = vmatprep.subr.bf16.mxu0 0
    %7585 = vmatpush1.bf16.msra.mxu0 %v7540
    %7586 = vmatprep.subr.bf16.mxu0 0
    %7587 = vmatpush1.bf16.msra.mxu0 %v7541
    %7588 = vmatprep.subr.bf16.mxu0 0
    %7589 = vmatpush1.bf16.msra.mxu0 %v7542
    %7590 = vmatprep.subr.bf16.mxu0 0
    %7591 = vmatpush1.bf16.msra.mxu0 %v7543
    %7592 = vmatprep.subr.bf16.mxu0 0
    %7593 = vmatpush1.bf16.msra.mxu0 %v7544
    %7594 = vmatprep.subr.bf16.mxu0 0
    %7595 = vmatpush1.bf16.msra.mxu0 %v7545
    %7596 = vmatprep.subr.bf16.mxu0 0
    %7597 = vmatpush1.bf16.msra.mxu0 %v7546
    %7598 = vmatprep.subr.bf16.mxu0 0
    %7599 = vmatpush1.bf16.msra.mxu0 %v7547
    %7600 = vmatprep.subr.bf16.mxu0 0
    %7601 = vmatpush1.bf16.msra.mxu0 %v7548
    %7602 = vmatprep.subr.bf16.mxu0 0
    %7603 = vmatpush1.bf16.msra.mxu0 %v7549
    %7604 = vmatprep.subr.bf16.mxu0 0
    %7605 = vmatpush1.bf16.msra.mxu0 %v7550
    %7606 = vmatprep.subr.bf16.mxu0 0
    %7607 = vmatpush1.bf16.msra.mxu0 %v7551
    %7608 = vmatprep.subr.bf16.mxu0 0
    %7609 = vmatpush1.bf16.msra.mxu0 %v7552
    %7610 = vmatprep.subr.bf16.mxu0 0
    %7611 = vmatpush1.bf16.msra.mxu0 %v7553
    %7612 = vmatprep.subr.bf16.mxu0 0
    %7613 = vmatpush1.bf16.msra.mxu0 %v7554
    %7614 = vmatprep.mubr.bf16.mxu0 %v7422
    %7615 = vmatmul.mubr.bf16.gmra.mrb[0].mxu0 %v7421
    %v7616 = vpop.f32.mrb[0].mxu0
    %v7617 = vadd.f32 0.0, %v7616
    %v7618 = vpop.f32.mrb[0].mxu0
    %v7619 = vpop.f32.mrb[0].mxu0
    %v7620 = vpop.f32.mrb[0].mxu0
    %7621 = vdwg.mxu0
    %7622 = vmatprep.subr.bf16.mxu0 0
    %7623 = vmatpush1.bf16.msra.mxu0 %v7555
    %7624 = vmatprep.subr.bf16.mxu0 0
    %7625 = vmatpush1.bf16.msra.mxu0 %v7556
    %7626 = vmatprep.subr.bf16.mxu0 0
    %7627 = vmatpush1.bf16.msra.mxu0 %v7580
    %7628 = vmatprep.subr.bf16.mxu0 0
    %7629 = vmatpush1.bf16.msra.mxu0 0
    %7630 = vmatprep.subr.bf16.mxu0 0
    %7631 = vmatpush1.bf16.msra.mxu0 0
    %7632 = vmatprep.subr.bf16.mxu0 0
    %7633 = vmatpush1.bf16.msra.mxu0 0
    %7634 = vmatprep.subr.bf16.mxu0 0
    %7635 = vmatpush1.bf16.msra.mxu0 0
    %7636 = vmatprep.subr.bf16.mxu0 0
    %7637 = vmatpush1.bf16.msra.mxu0 0
    %7638 = vmatprep.subr.bf16.mxu0 0
    %7639 = vmatpush1.bf16.msra.mxu0 0
    %7640 = vmatprep.subr.bf16.mxu0 0
    %7641 = vmatpush1.bf16.msra.mxu0 0
    %7642 = vmatprep.subr.bf16.mxu0 0
    %7643 = vmatpush1.bf16.msra.mxu0 0
    %7644 = vmatprep.subr.bf16.mxu0 0
    %7645 = vmatpush1.bf16.msra.mxu0 0
    %7646 = vmatprep.subr.bf16.mxu0 0
    %7647 = vmatpush1.bf16.msra.mxu0 0
    %7648 = vmatprep.subr.bf16.mxu0 0
    %7649 = vmatpush1.bf16.msra.mxu0 0
    %7650 = vmatprep.subr.bf16.mxu0 0
    %7651 = vmatpush1.bf16.msra.mxu0 0
    %7652 = vmatprep.subr.bf16.mxu0 0
    %7653 = vmatpush1.bf16.msra.mxu0 0
    %7654 = vmatprep.mubr.bf16.mxu0 0
    %7655 = vmatmul.mubr.bf16.gmra.mrb[0].mxu0 %v7577
    %v7656 = vpop.f32.mrb[0].mxu0
    %v7657 = vadd.f32 %v7617, %v7656
    %v7658 = vpop.f32.mrb[0].mxu0
    %v7659 = vpop.f32.mrb[0].mxu0
    %v7660 = vpop.f32.mrb[0].mxu0
    %7661 = vdwg.mxu0
    %s7662 = scalar_lea.vmem [#allocation16], 1200
    %v7663 = vld [vmem:[%s7662] sm:$0xff]
    %v7664 = vld [vmem:[%s7662 + $0x8] sm:$0xf]
    %v7665 = vld [vmem:[%s7662 + $0xc] sm:$0xff]
    %v7666 = vld [vmem:[%s7662 + $0x14] sm:$0xf]
    %v7667 = vld [vmem:[%s7662 + $0x18] sm:$0xff]
    %v7668 = vld [vmem:[%s7662 + $0x20] sm:$0xf]
    %v7669 = vld [vmem:[%s7662 + $0x24] sm:$0xff]
    %v7670 = vld [vmem:[%s7662 + $0x2c] sm:$0xf]
    %v7671 = vld [vmem:[%s7662 + $0x30] sm:$0xff]
    %v7672 = vld [vmem:[%s7662 + $0x38] sm:$0xf]
    %v7673 = vld [vmem:[%s7662 + $0x3c] sm:$0xff]
    %v7674 = vld [vmem:[%s7662 + $0x44] sm:$0xf]
    %v7675 = vld [vmem:[%s7662 + $0x48] sm:$0xff]
    %v7676 = vld [vmem:[%s7662 + $0x50] sm:$0xf]
    %v7677 = vld [vmem:[%s7662 + $0x54] sm:$0xff]
    %v7678 = vld [vmem:[%s7662 + $0x5c] sm:$0xf]
    %v7679 = vld [vmem:[%s7662 + $0x60] sm:$0xff]
    %v7680 = vld [vmem:[%s7662 + $0x68] sm:$0xf]
    %v7681 = vld [vmem:[%s7662 + $0x6c] sm:$0xff]
    %v7682 = vld [vmem:[%s7662 + $0x74] sm:$0xf]
    %v7683 = vld [vmem:[%s7662 + $0x78] sm:$0xff]
    %v7684 = vld [vmem:[%s7662 + $0x80] sm:$0xf]
    %v7685 = vld [vmem:[%s7662 + $0x84] sm:$0xff]
    %v7686 = vld [vmem:[%s7662 + $0x8c] sm:$0xf]
    %v7687 = vld [vmem:[%s7662 + $0x90] sm:$0xff]
    %v7688 = vld [vmem:[%s7662 + $0x98] sm:$0xf]
    %v7689 = vld [vmem:[%s7662 + $0x9c] sm:$0xff]
    %v7690 = vld [vmem:[%s7662 + $0xa4] sm:$0xf]
    %v7691 = vld [vmem:[%s7662 + $0xa8] sm:$0xff]
    %v7692 = vld [vmem:[%s7662 + $0xb0] sm:$0xf]
    %v7693 = vld [vmem:[%s7662 + $0xb4] sm:$0xff]
    %v7694 = vld [vmem:[%s7662 + $0xbc] sm:$0xf]
    %v7695 = vld [vmem:[%s7662 + $0xc0] sm:$0xff]
    %v7696 = vld [vmem:[%s7662 + $0xc8] sm:$0xf]
    %v7697 = vld [vmem:[%s7662 + $0xcc] sm:$0xff]
    %v7698 = vld [vmem:[%s7662 + $0xd4] sm:$0xf]
    %v7699 = vld [vmem:[%s7662 + $0xd8] sm:$0xff]
    %v7700 = vld [vmem:[%s7662 + $0xe0] sm:$0xf]
    %v7701 = vld [vmem:[%s7662 + $0xe4] sm:$0xff]
    %v7702 = vld [vmem:[%s7662 + $0xec] sm:$0xf]
    %v7703 = vld [vmem:[%s7662 + $0xf0] sm:$0xff]
    %v7704 = vld [vmem:[%s7662 + $0xf8] sm:$0xf]
    %v7705 = vld [vmem:[%s7662 + $0xfc] sm:$0xff]
    %v7706 = vld [vmem:[%s7662 + $0x104] sm:$0xf]
    %v7707 = vld [vmem:[%s7662 + $0x108] sm:$0xff]
    %v7708 = vld [vmem:[%s7662 + $0x110] sm:$0xf]
    %v7709 = vld [vmem:[%s7662 + $0x114] sm:$0xff]
    %v7710 = vld [vmem:[%s7662 + $0x11c] sm:$0xf]
    %v7711 = vld [vmem:[%s7662 + $0x120] sm:$0xff]
    %v7712 = vld [vmem:[%s7662 + $0x128] sm:$0xf]
    %v7713 = vld [vmem:[%s7662 + $0x12c] sm:$0xff]
    %v7714 = vld [vmem:[%s7662 + $0x134] sm:$0xf]
    %v7715 = vld [vmem:[%s7662 + $0x138] sm:$0xff]
    %v7716 = vld [vmem:[%s7662 + $0x140] sm:$0xf]
    %v7717 = vld [vmem:[%s7662 + $0x144] sm:$0xff]
    %v7718 = vld [vmem:[%s7662 + $0x14c] sm:$0xf]
    %v7719 = vld [vmem:[%s7662 + $0x150] sm:$0xff]
    %v7720 = vld [vmem:[%s7662 + $0x158] sm:$0xf]
    %v7721 = vld [vmem:[%s7662 + $0x15c] sm:$0xff]
    %v7722 = vld [vmem:[%s7662 + $0x164] sm:$0xf]
    %v7723 = vld [vmem:[%s7662 + $0x168] sm:$0xff]
    %v7724 = vld [vmem:[%s7662 + $0x170] sm:$0xf]
    %v7725 = vld [vmem:[%s7662 + $0x174] sm:$0xff]
    %v7726 = vld [vmem:[%s7662 + $0x17c] sm:$0xf]
    %v7727 = vld [vmem:[%s7662 + $0x180] sm:$0xff]
    %v7728 = vld [vmem:[%s7662 + $0x188] sm:$0xf]
    %v7729 = vld [vmem:[%s7662 + $0x18c] sm:$0xff]
    %v7730 = vld [vmem:[%s7662 + $0x194] sm:$0xf]
    %v7731 = vld [vmem:[%s7662 + $0x198] sm:$0xff]
    %v7732 = vld [vmem:[%s7662 + $0x1a0] sm:$0xf]
    %v7733 = vld [vmem:[%s7662 + $0x1a4] sm:$0xff]
    %v7734 = vld [vmem:[%s7662 + $0x1ac] sm:$0xf]
    %v7735 = vld [vmem:[%s7662 + $0x1b0] sm:$0xff]
    %v7736 = vld [vmem:[%s7662 + $0x1b8] sm:$0xf]
    %v7737 = vld [vmem:[%s7662 + $0x1bc] sm:$0xff]
    %v7738 = vld [vmem:[%s7662 + $0x1c4] sm:$0xf]
    %v7739 = vld [vmem:[%s7662 + $0x1c8] sm:$0xff]
    %v7740 = vld [vmem:[%s7662 + $0x1d0] sm:$0xf]
    %v7741 = vld [vmem:[%s7662 + $0x1d4] sm:$0xff]
    %v7742 = vld [vmem:[%s7662 + $0x1dc] sm:$0xf]
    %v7743 = vld [vmem:[%s7662 + $0x1e0] sm:$0xff]
    %v7744 = vld [vmem:[%s7662 + $0x1e8] sm:$0xf]
    %v7745 = vld [vmem:[%s7662 + $0x1ec] sm:$0xff]
    %v7746 = vld [vmem:[%s7662 + $0x1f4] sm:$0xf]
    %v7747 = vld [vmem:[%s7662 + $0x1f8] sm:$0xff]
    %v7748 = vld [vmem:[%s7662 + $0x200] sm:$0xf]
    %v7749 = vld [vmem:[%s7662 + $0x204] sm:$0xff]
    %v7750 = vld [vmem:[%s7662 + $0x20c] sm:$0xf]
    %v7751 = vld [vmem:[%s7662 + $0x210] sm:$0xff]
    %v7752 = vld [vmem:[%s7662 + $0x218] sm:$0xf]
    %v7753 = vld [vmem:[%s7662 + $0x21c] sm:$0xff]
    %v7754 = vld [vmem:[%s7662 + $0x224] sm:$0xf]
    %v7755 = vld [vmem:[%s7662 + $0x228] sm:$0xff]
    %v7756 = vld [vmem:[%s7662 + $0x230] sm:$0xf]
    %v7757 = vld [vmem:[%s7662 + $0x234] sm:$0xff]
    %v7758 = vld [vmem:[%s7662 + $0x23c] sm:$0xf]
    %v7759 = vld [vmem:[%s7662 + $0x240] sm:$0xff]
    %v7760 = vld [vmem:[%s7662 + $0x248] sm:$0xf]
    %v7761 = vld [vmem:[%s7662 + $0x24c] sm:$0xff]
    %v7762 = vld [vmem:[%s7662 + $0x254] sm:$0xf]
    %s7763 = scalar_lea.vmem [#allocation18], 6
    %v7764 = vld [vmem:[%s7763] sm:$0x7]
    %v7766 = vlaneseq
    %v7767 = vshrl.u32 %v7766, 7
    %v7768 = vsub.s32 0, %v7767
    %v7769 = vrot.slane %v7764, %v7768
    %v7770 = vlaneseq
    %v7771 = vshrl.u32 %v7770, 7
    %v7772 = vsub.s32 1, %v7771
    %v7773 = vrot.slane %v7764, %v7772
    %v7774 = vlaneseq
    %v7775 = vshrl.u32 %v7774, 7
    %v7776 = vsub.s32 2, %v7775
    %v7777 = vrot.slane %v7764, %v7776
    %7784 = vrot.lane.b32.xlu0 %v5771, 96
    %v7785 = vpop.permute.xlu0 %7784
    %7786 = vrot.lane.b32.xlu0 %v5772, 96
    %v7787 = vpop.permute.xlu0 %7786
    %7788 = vrot.lane.b32.xlu0 %v5773, 96
    %v7789 = vpop.permute.xlu0 %7788
    %7790 = vrot.lane.b32.xlu0 %v5774, 96
    %v7791 = vpop.permute.xlu0 %7790
    %vm7792 = vcmask 785408
    %v7793 = vsel %vm7792, %v7785, %v7787
    %v7794 = vsel %vm7792, %v7787, %v7789
    %v7795 = vsel %vm7792, %v7789, %v7791
    %v7899 = vunpack.c.l.b16 %v7663
    %v7900 = vunpack.c.h.b16 %v7663
    %v7901 = vunpack.c.l.b16 %v7664
    %v7902 = vunpack.c.l.b16 %v7665
    %v7903 = vunpack.c.h.b16 %v7665
    %v7904 = vunpack.c.l.b16 %v7666
    %v7905 = vunpack.c.l.b16 %v7667
    %v7906 = vunpack.c.h.b16 %v7667
    %v7907 = vunpack.c.l.b16 %v7668
    %v7908 = vunpack.c.l.b16 %v7669
    %v7909 = vunpack.c.h.b16 %v7669
    %v7910 = vunpack.c.l.b16 %v7670
    %v7911 = vunpack.c.l.b16 %v7671
    %v7912 = vunpack.c.h.b16 %v7671
    %v7913 = vunpack.c.l.b16 %v7672
    %v7914 = vunpack.c.l.b16 %v7673
    %v7915 = vunpack.c.h.b16 %v7673
    %v7916 = vunpack.c.l.b16 %v7674
    %v7917 = vunpack.c.l.b16 %v7675
    %v7918 = vunpack.c.h.b16 %v7675
    %v7919 = vunpack.c.l.b16 %v7676
    %v7920 = vunpack.c.l.b16 %v7677
    %v7921 = vunpack.c.h.b16 %v7677
    %v7922 = vunpack.c.l.b16 %v7678
    %v7923 = vunpack.c.l.b16 %v7679
    %v7924 = vunpack.c.h.b16 %v7679
    %v7925 = vunpack.c.l.b16 %v7680
    %v7926 = vunpack.c.l.b16 %v7681
    %v7927 = vunpack.c.h.b16 %v7681
    %v7928 = vunpack.c.l.b16 %v7682
    %v7929 = vunpack.c.l.b16 %v7683
    %v7930 = vunpack.c.h.b16 %v7683
    %v7931 = vunpack.c.l.b16 %v7684
    %v7932 = vunpack.c.l.b16 %v7685
    %v7933 = vunpack.c.h.b16 %v7685
    %v7934 = vunpack.c.l.b16 %v7686
    %v7935 = vunpack.c.l.b16 %v7687
    %v7936 = vunpack.c.h.b16 %v7687
    %v7937 = vunpack.c.l.b16 %v7688
    %v7938 = vunpack.c.l.b16 %v7689
    %v7939 = vunpack.c.h.b16 %v7689
    %v7940 = vunpack.c.l.b16 %v7690
    %v7941 = vunpack.c.l.b16 %v7691
    %v7942 = vunpack.c.h.b16 %v7691
    %v7943 = vunpack.c.l.b16 %v7692
    %v7944 = vunpack.c.l.b16 %v7693
    %v7945 = vunpack.c.h.b16 %v7693
    %v7946 = vunpack.c.l.b16 %v7694
    %v7947 = vunpack.c.l.b16 %v7695
    %v7948 = vunpack.c.h.b16 %v7695
    %v7949 = vunpack.c.l.b16 %v7696
    %v7950 = vunpack.c.l.b16 %v7697
    %v7951 = vunpack.c.h.b16 %v7697
    %v7952 = vunpack.c.l.b16 %v7698
    %v7953 = vunpack.c.l.b16 %v7699
    %v7954 = vunpack.c.h.b16 %v7699
    %v7955 = vunpack.c.l.b16 %v7700
    %v7956 = vunpack.c.l.b16 %v7701
    %v7957 = vunpack.c.h.b16 %v7701
    %v7958 = vunpack.c.l.b16 %v7702
    %v7959 = vunpack.c.l.b16 %v7703
    %v7960 = vunpack.c.h.b16 %v7703
    %v7961 = vunpack.c.l.b16 %v7704
    %v7962 = vunpack.c.l.b16 %v7705
    %v7963 = vunpack.c.h.b16 %v7705
    %v7964 = vunpack.c.l.b16 %v7706
    %v7965 = vunpack.c.l.b16 %v7707
    %v7966 = vunpack.c.h.b16 %v7707
    %v7967 = vunpack.c.l.b16 %v7708
    %v7968 = vunpack.c.l.b16 %v7709
    %v7969 = vunpack.c.h.b16 %v7709
    %v7970 = vunpack.c.l.b16 %v7710
    %v7971 = vunpack.c.l.b16 %v7711
    %v7972 = vunpack.c.h.b16 %v7711
    %v7973 = vunpack.c.l.b16 %v7712
    %v7974 = vunpack.c.l.b16 %v7713
    %v7975 = vunpack.c.h.b16 %v7713
    %v7976 = vunpack.c.l.b16 %v7714
    %v7977 = vunpack.c.l.b16 %v7715
    %v7978 = vunpack.c.h.b16 %v7715
    %v7979 = vunpack.c.l.b16 %v7716
    %v7980 = vunpack.c.l.b16 %v7717
    %v7981 = vunpack.c.h.b16 %v7717
    %v7982 = vunpack.c.l.b16 %v7718
    %v7983 = vunpack.c.l.b16 %v7719
    %v7984 = vunpack.c.h.b16 %v7719
    %v7985 = vunpack.c.l.b16 %v7720
    %v7986 = vunpack.c.l.b16 %v7721
    %v7987 = vunpack.c.h.b16 %v7721
    %v7988 = vunpack.c.l.b16 %v7722
    %v7989 = vunpack.c.l.b16 %v7723
    %v7990 = vunpack.c.h.b16 %v7723
    %v7991 = vunpack.c.l.b16 %v7724
    %v7992 = vunpack.c.l.b16 %v7725
    %v7993 = vunpack.c.h.b16 %v7725
    %v7994 = vunpack.c.l.b16 %v7726
    %v7995 = vunpack.c.l.b16 %v7727
    %v7996 = vunpack.c.h.b16 %v7727
    %v7997 = vunpack.c.l.b16 %v7728
    %v7998 = vunpack.c.l.b16 %v7729
    %v7999 = vunpack.c.h.b16 %v7729
    %v8000 = vunpack.c.l.b16 %v7730
    %v8001 = vunpack.c.l.b16 %v7731
    %v8002 = vunpack.c.h.b16 %v7731
    %v8003 = vunpack.c.l.b16 %v7732
    %v8004 = vunpack.c.l.b16 %v7733
    %v8005 = vunpack.c.h.b16 %v7733
    %v8006 = vunpack.c.l.b16 %v7734
    %v8007 = vunpack.c.l.b16 %v7735
    %v8008 = vunpack.c.h.b16 %v7735
    %v8009 = vunpack.c.l.b16 %v7736
    %v8010 = vunpack.c.l.b16 %v7737
    %v8011 = vunpack.c.h.b16 %v7737
    %v8012 = vunpack.c.l.b16 %v7738
    %v8013 = vunpack.c.l.b16 %v7739
    %v8014 = vunpack.c.h.b16 %v7739
    %v8015 = vunpack.c.l.b16 %v7740
    %v8016 = vunpack.c.l.b16 %v7741
    %v8017 = vunpack.c.h.b16 %v7741
    %v8018 = vunpack.c.l.b16 %v7742
    %v8019 = vunpack.c.l.b16 %v7743
    %v8020 = vunpack.c.h.b16 %v7743
    %v8021 = vunpack.c.l.b16 %v7744
    %v8022 = vunpack.c.l.b16 %v7745
    %v8023 = vunpack.c.h.b16 %v7745
    %v8024 = vunpack.c.l.b16 %v7746
    %v8025 = vunpack.c.l.b16 %v7747
    %v8026 = vunpack.c.h.b16 %v7747
    %v8027 = vunpack.c.l.b16 %v7748
    %v8028 = vunpack.c.l.b16 %v7749
    %v8029 = vunpack.c.h.b16 %v7749
    %v8030 = vunpack.c.l.b16 %v7750
    %v8031 = vunpack.c.l.b16 %v7751
    %v8032 = vunpack.c.h.b16 %v7751
    %v8033 = vunpack.c.l.b16 %v7752
    %v8034 = vunpack.c.l.b16 %v7753
    %v8035 = vunpack.c.h.b16 %v7753
    %v8036 = vunpack.c.l.b16 %v7754
    %v8037 = vunpack.c.l.b16 %v7755
    %v8038 = vunpack.c.h.b16 %v7755
    %v8039 = vunpack.c.l.b16 %v7756
    %v8040 = vunpack.c.l.b16 %v7757
    %v8041 = vunpack.c.h.b16 %v7757
    %v8042 = vunpack.c.l.b16 %v7758
    %v8043 = vunpack.c.l.b16 %v7759
    %v8044 = vunpack.c.h.b16 %v7759
    %v8045 = vunpack.c.l.b16 %v7760
    %v8046 = vunpack.c.l.b16 %v7761
    %v8047 = vunpack.c.h.b16 %v7761
    %v8048 = vunpack.c.l.b16 %v7762
    %v8049 = vpack.c.b16 %v7902, %v7899
    %v8050 = vpack.c.b16 %v7903, %v7900
    %v8051 = vpack.c.b16 %v7904, %v7901
    %v8052 = vpack.c.b16 %v7908, %v7905
    %v8053 = vpack.c.b16 %v7909, %v7906
    %v8054 = vpack.c.b16 %v7910, %v7907
    %v8055 = vpack.c.b16 %v7914, %v7911
    %v8056 = vpack.c.b16 %v7915, %v7912
    %v8057 = vpack.c.b16 %v7916, %v7913
    %v8058 = vpack.c.b16 %v7920, %v7917
    %v8059 = vpack.c.b16 %v7921, %v7918
    %v8060 = vpack.c.b16 %v7922, %v7919
    %v8061 = vpack.c.b16 %v7926, %v7923
    %v8062 = vpack.c.b16 %v7927, %v7924
    %v8063 = vpack.c.b16 %v7928, %v7925
    %v8064 = vpack.c.b16 %v7932, %v7929
    %v8065 = vpack.c.b16 %v7933, %v7930
    %v8066 = vpack.c.b16 %v7934, %v7931
    %v8067 = vpack.c.b16 %v7938, %v7935
    %v8068 = vpack.c.b16 %v7939, %v7936
    %v8069 = vpack.c.b16 %v7940, %v7937
    %v8070 = vpack.c.b16 %v7944, %v7941
    %v8071 = vpack.c.b16 %v7945, %v7942
    %v8072 = vpack.c.b16 %v7946, %v7943
    %v8073 = vpack.c.b16 %v7950, %v7947
    %v8074 = vpack.c.b16 %v7951, %v7948
    %v8075 = vpack.c.b16 %v7952, %v7949
    %v8076 = vpack.c.b16 %v7956, %v7953
    %v8077 = vpack.c.b16 %v7957, %v7954
    %v8078 = vpack.c.b16 %v7958, %v7955
    %v8079 = vpack.c.b16 %v7962, %v7959
    %v8080 = vpack.c.b16 %v7963, %v7960
    %v8081 = vpack.c.b16 %v7964, %v7961
    %v8082 = vpack.c.b16 %v7968, %v7965
    %v8083 = vpack.c.b16 %v7969, %v7966
    %v8084 = vpack.c.b16 %v7970, %v7967
    %v8085 = vpack.c.b16 %v7974, %v7971
    %v8086 = vpack.c.b16 %v7975, %v7972
    %v8087 = vpack.c.b16 %v7976, %v7973
    %v8088 = vpack.c.b16 %v7980, %v7977
    %v8089 = vpack.c.b16 %v7981, %v7978
    %v8090 = vpack.c.b16 %v7982, %v7979
    %v8091 = vpack.c.b16 %v7986, %v7983
    %v8092 = vpack.c.b16 %v7987, %v7984
    %v8093 = vpack.c.b16 %v7988, %v7985
    %v8094 = vpack.c.b16 %v7992, %v7989
    %v8095 = vpack.c.b16 %v7993, %v7990
    %v8096 = vpack.c.b16 %v7994, %v7991
    %v8097 = vpack.c.b16 %v7998, %v7995
    %v8098 = vpack.c.b16 %v7999, %v7996
    %v8099 = vpack.c.b16 %v8000, %v7997
    %v8100 = vpack.c.b16 %v8004, %v8001
    %v8101 = vpack.c.b16 %v8005, %v8002
    %v8102 = vpack.c.b16 %v8006, %v8003
    %v8103 = vpack.c.b16 %v8010, %v8007
    %v8104 = vpack.c.b16 %v8011, %v8008
    %v8105 = vpack.c.b16 %v8012, %v8009
    %v8106 = vpack.c.b16 %v8016, %v8013
    %v8107 = vpack.c.b16 %v8017, %v8014
    %v8108 = vpack.c.b16 %v8018, %v8015
    %v8109 = vpack.c.b16 %v8022, %v8019
    %v8110 = vpack.c.b16 %v8023, %v8020
    %v8111 = vpack.c.b16 %v8024, %v8021
    %v8112 = vpack.c.b16 %v8028, %v8025
    %v8113 = vpack.c.b16 %v8029, %v8026
    %v8114 = vpack.c.b16 %v8030, %v8027
    %v8115 = vpack.c.b16 %v8034, %v8031
    %v8116 = vpack.c.b16 %v8035, %v8032
    %v8117 = vpack.c.b16 %v8036, %v8033
    %v8118 = vpack.c.b16 %v8040, %v8037
    %v8119 = vpack.c.b16 %v8041, %v8038
    %v8120 = vpack.c.b16 %v8042, %v8039
    %v8121 = vpack.c.b16 %v8046, %v8043
    %v8122 = vpack.c.b16 %v8047, %v8044
    %v8123 = vpack.c.b16 %v8048, %v8045
    %v8200 = vsel %vm244, %v7791, 0
    %8202 = vmatprep.subr.bf16.mxu0 %v8050
    %8203 = vmatpush1.bf16.msra.mxu0 %v8049
    %8204 = vmatprep.subr.bf16.mxu0 %v8053
    %8205 = vmatpush1.bf16.msra.mxu0 %v8052
    %8206 = vmatprep.subr.bf16.mxu0 %v8056
    %8207 = vmatpush1.bf16.msra.mxu0 %v8055
    %8208 = vmatprep.subr.bf16.mxu0 %v8059
    %8209 = vmatpush1.bf16.msra.mxu0 %v8058
    %8210 = vmatprep.subr.bf16.mxu0 %v8062
    %8211 = vmatpush1.bf16.msra.mxu0 %v8061
    %8212 = vmatprep.subr.bf16.mxu0 %v8065
    %8213 = vmatpush1.bf16.msra.mxu0 %v8064
    %8214 = vmatprep.subr.bf16.mxu0 %v8068
    %8215 = vmatpush1.bf16.msra.mxu0 %v8067
    %8216 = vmatprep.subr.bf16.mxu0 %v8071
    %8217 = vmatpush1.bf16.msra.mxu0 %v8070
    %8218 = vmatprep.subr.bf16.mxu0 %v8074
    %8219 = vmatpush1.bf16.msra.mxu0 %v8073
    %8220 = vmatprep.subr.bf16.mxu0 %v8077
    %8221 = vmatpush1.bf16.msra.mxu0 %v8076
    %8222 = vmatprep.subr.bf16.mxu0 %v8080
    %8223 = vmatpush1.bf16.msra.mxu0 %v8079
    %8224 = vmatprep.subr.bf16.mxu0 %v8083
    %8225 = vmatpush1.bf16.msra.mxu0 %v8082
    %8226 = vmatprep.subr.bf16.mxu0 %v8086
    %8227 = vmatpush1.bf16.msra.mxu0 %v8085
    %8228 = vmatprep.subr.bf16.mxu0 %v8089
    %8229 = vmatpush1.bf16.msra.mxu0 %v8088
    %8230 = vmatprep.subr.bf16.mxu0 %v8092
    %8231 = vmatpush1.bf16.msra.mxu0 %v8091
    %8232 = vmatprep.subr.bf16.mxu0 %v8095
    %8233 = vmatpush1.bf16.msra.mxu0 %v8094
    %8234 = vmatprep.mubr.bf16.mxu0 %v7794
    %8235 = vmatmul.mubr.bf16.gmra.mrb[0].mxu0 %v7793
    %v8236 = vpop.f32.mrb[0].mxu0
    %v8237 = vadd.f32 %v7769, %v8236
    %v8238 = vpop.f32.mrb[0].mxu0
    %v8239 = vadd.f32 %v7773, %v8238
    %v8240 = vpop.f32.mrb[0].mxu0
    %v8241 = vpop.f32.mrb[0].mxu0
    %8242 = vdwg.mxu0
    %8243 = vmatprep.subr.bf16.mxu0 %v8098
    %8244 = vmatpush1.bf16.msra.mxu0 %v8097
    %8245 = vmatprep.subr.bf16.mxu0 %v8101
    %8246 = vmatpush1.bf16.msra.mxu0 %v8100
    %8247 = vmatprep.subr.bf16.mxu0 %v8104
    %8248 = vmatpush1.bf16.msra.mxu0 %v8103
    %8249 = vmatprep.subr.bf16.mxu0 %v8107
    %8250 = vmatpush1.bf16.msra.mxu0 %v8106
    %8251 = vmatprep.subr.bf16.mxu0 %v8110
    %8252 = vmatpush1.bf16.msra.mxu0 %v8109
    %8253 = vmatprep.subr.bf16.mxu0 %v8113
    %8254 = vmatpush1.bf16.msra.mxu0 %v8112
    %8255 = vmatprep.subr.bf16.mxu0 %v8116
    %8256 = vmatpush1.bf16.msra.mxu0 %v8115
    %8257 = vmatprep.subr.bf16.mxu0 %v8119
    %8258 = vmatpush1.bf16.msra.mxu0 %v8118
    %8259 = vmatprep.subr.bf16.mxu0 %v8122
    %8260 = vmatpush1.bf16.msra.mxu0 %v8121
    %8261 = vmatprep.subr.bf16.mxu0 0
    %8262 = vmatpush1.bf16.msra.mxu0 0
    %8263 = vmatprep.subr.bf16.mxu0 0
    %8264 = vmatpush1.bf16.msra.mxu0 0
    %8265 = vmatprep.subr.bf16.mxu0 0
    %8266 = vmatpush1.bf16.msra.mxu0 0
    %8267 = vmatprep.subr.bf16.mxu0 0
    %8268 = vmatpush1.bf16.msra.mxu0 0
    %8269 = vmatprep.subr.bf16.mxu0 0
    %8270 = vmatpush1.bf16.msra.mxu0 0
    %8271 = vmatprep.subr.bf16.mxu0 0
    %8272 = vmatpush1.bf16.msra.mxu0 0
    %8273 = vmatprep.subr.bf16.mxu0 0
    %8274 = vmatpush1.bf16.msra.mxu0 0
    %8275 = vmatprep.mubr.bf16.mxu0 %v8200
    %8276 = vmatmul.mubr.bf16.gmra.mrb[0].mxu0 %v7795
    %v8277 = vpop.f32.mrb[0].mxu0
    %v8278 = vadd.f32 %v8237, %v8277
    %v8279 = vpop.f32.mrb[0].mxu0
    %v8280 = vadd.f32 %v8239, %v8279
    %v8281 = vpop.f32.mrb[0].mxu0
    %v8282 = vpop.f32.mrb[0].mxu0
    %8283 = vdwg.mxu0
    %8284 = vmatprep.subr.bf16.mxu0 0
    %8285 = vmatpush1.bf16.msra.mxu0 %v8051
    %8286 = vmatprep.subr.bf16.mxu0 0
    %8287 = vmatpush1.bf16.msra.mxu0 %v8054
    %8288 = vmatprep.subr.bf16.mxu0 0
    %8289 = vmatpush1.bf16.msra.mxu0 %v8057
    %8290 = vmatprep.subr.bf16.mxu0 0
    %8291 = vmatpush1.bf16.msra.mxu0 %v8060
    %8292 = vmatprep.subr.bf16.mxu0 0
    %8293 = vmatpush1.bf16.msra.mxu0 %v8063
    %8294 = vmatprep.subr.bf16.mxu0 0
    %8295 = vmatpush1.bf16.msra.mxu0 %v8066
    %8296 = vmatprep.subr.bf16.mxu0 0
    %8297 = vmatpush1.bf16.msra.mxu0 %v8069
    %8298 = vmatprep.subr.bf16.mxu0 0
    %8299 = vmatpush1.bf16.msra.mxu0 %v8072
    %8300 = vmatprep.subr.bf16.mxu0 0
    %8301 = vmatpush1.bf16.msra.mxu0 %v8075
    %8302 = vmatprep.subr.bf16.mxu0 0
    %8303 = vmatpush1.bf16.msra.mxu0 %v8078
    %8304 = vmatprep.subr.bf16.mxu0 0
    %8305 = vmatpush1.bf16.msra.mxu0 %v8081
    %8306 = vmatprep.subr.bf16.mxu0 0
    %8307 = vmatpush1.bf16.msra.mxu0 %v8084
    %8308 = vmatprep.subr.bf16.mxu0 0
    %8309 = vmatpush1.bf16.msra.mxu0 %v8087
    %8310 = vmatprep.subr.bf16.mxu0 0
    %8311 = vmatpush1.bf16.msra.mxu0 %v8090
    %8312 = vmatprep.subr.bf16.mxu0 0
    %8313 = vmatpush1.bf16.msra.mxu0 %v8093
    %8314 = vmatprep.subr.bf16.mxu0 0
    %8315 = vmatpush1.bf16.msra.mxu0 %v8096
    %8316 = vmatprep.mubr.bf16.mxu0 %v7794
    %8317 = vmatmul.mubr.bf16.gmra.mrb[0].mxu0 %v7793
    %v8318 = vpop.f32.mrb[0].mxu0
    %v8319 = vadd.f32 %v7777, %v8318
    %v8320 = vpop.f32.mrb[0].mxu0
    %v8321 = vpop.f32.mrb[0].mxu0
    %v8322 = vpop.f32.mrb[0].mxu0
    %8323 = vdwg.mxu0
    %8324 = vmatprep.subr.bf16.mxu0 0
    %8325 = vmatpush1.bf16.msra.mxu0 %v8099
    %8326 = vmatprep.subr.bf16.mxu0 0
    %8327 = vmatpush1.bf16.msra.mxu0 %v8102
    %8328 = vmatprep.subr.bf16.mxu0 0
    %8329 = vmatpush1.bf16.msra.mxu0 %v8105
    %8330 = vmatprep.subr.bf16.mxu0 0
    %8331 = vmatpush1.bf16.msra.mxu0 %v8108
    %8332 = vmatprep.subr.bf16.mxu0 0
    %8333 = vmatpush1.bf16.msra.mxu0 %v8111
    %8334 = vmatprep.subr.bf16.mxu0 0
    %8335 = vmatpush1.bf16.msra.mxu0 %v8114
    %8336 = vmatprep.subr.bf16.mxu0 0
    %8337 = vmatpush1.bf16.msra.mxu0 %v8117
    %8338 = vmatprep.subr.bf16.mxu0 0
    %8339 = vmatpush1.bf16.msra.mxu0 %v8120
    %8340 = vmatprep.subr.bf16.mxu0 0
    %8341 = vmatpush1.bf16.msra.mxu0 %v8123
    %8342 = vmatprep.subr.bf16.mxu0 0
    %8343 = vmatpush1.bf16.msra.mxu0 0
    %8344 = vmatprep.subr.bf16.mxu0 0
    %8345 = vmatpush1.bf16.msra.mxu0 0
    %8346 = vmatprep.subr.bf16.mxu0 0
    %8347 = vmatpush1.bf16.msra.mxu0 0
    %8348 = vmatprep.subr.bf16.mxu0 0
    %8349 = vmatpush1.bf16.msra.mxu0 0
    %8350 = vmatprep.subr.bf16.mxu0 0
    %8351 = vmatpush1.bf16.msra.mxu0 0
    %8352 = vmatprep.subr.bf16.mxu0 0
    %8353 = vmatpush1.bf16.msra.mxu0 0
    %8354 = vmatprep.subr.bf16.mxu0 0
    %8355 = vmatpush1.bf16.msra.mxu0 0
    %8356 = vmatprep.mubr.bf16.mxu0 %v8200
    %8357 = vmatmul.mubr.bf16.gmra.mrb[0].mxu0 %v7795
    %v8358 = vpop.f32.mrb[0].mxu0
    %v8359 = vadd.f32 %v8319, %v8358
    %v8360 = vpop.f32.mrb[0].mxu0
    %v8361 = vpop.f32.mrb[0].mxu0
    %v8362 = vpop.f32.mrb[0].mxu0
    %8363 = vdwg.mxu0
    %v8364 = vmax.f32 %v8278, 0.0
    %v8365 = vmax.f32 %v8280, 0.0
    %v8366 = vmax.f32 %v8359, 0.0
    %v8367 = vpack.c.bf16 %v8364, %v8364
    %v8368 = vpack.c.bf16 %v8365, %v8365
    %v8369 = vpack.c.bf16 %v8366, %v8366
    %s8370 = scalar_lea.vmem %s11, 304
    %v8371 = vld [vmem:[%s8370] sm:$0xf]
    %v8372 = vld [vmem:[%s8370 + $0x4] sm:$0xf]
    %v8373 = vld [vmem:[%s8370 + $0x8] sm:$0xf]
    %v8374 = vld [vmem:[%s8370 + $0xc] sm:$0xf]
    %v8375 = vld [vmem:[%s8370 + $0x10] sm:$0xf]
    %v8376 = vld [vmem:[%s8370 + $0x14] sm:$0xf]
    %v8377 = vld [vmem:[%s8370 + $0x18] sm:$0xf]
    %v8378 = vld [vmem:[%s8370 + $0x1c] sm:$0xf]
    %v8379 = vld [vmem:[%s8370 + $0x20] sm:$0xf]
    %v8380 = vld [vmem:[%s8370 + $0x24] sm:$0xf]
    %v8381 = vld [vmem:[%s8370 + $0x28] sm:$0xf]
    %v8382 = vld [vmem:[%s8370 + $0x2c] sm:$0xf]
    %v8383 = vld [vmem:[%s8370 + $0x30] sm:$0xf]
    %v8384 = vld [vmem:[%s8370 + $0x34] sm:$0xf]
    %v8385 = vld [vmem:[%s8370 + $0x38] sm:$0xf]
    %v8386 = vld [vmem:[%s8370 + $0x3c] sm:$0xf]
    %v8387 = vld [vmem:[%s8370 + $0x40] sm:$0xf]
    %v8388 = vld [vmem:[%s8370 + $0x44] sm:$0xf]
    %v8389 = vld [vmem:[%s8370 + $0x48] sm:$0xf]
    %v8390 = vld [vmem:[%s8370 + $0x4c] sm:$0xf]
    %v8391 = vld [vmem:[%s8370 + $0x50] sm:$0xf]
    %v8392 = vld [vmem:[%s8370 + $0x54] sm:$0xf]
    %v8393 = vld [vmem:[%s8370 + $0x58] sm:$0xf]
    %v8394 = vld [vmem:[%s8370 + $0x5c] sm:$0xf]
    %v8395 = vld [vmem:[%s8370 + $0x60] sm:$0xf]
    %v8396 = vld [vmem:[%s8370 + $0x64] sm:$0xf]
    %v8397 = vld [vmem:[%s8370 + $0x68] sm:$0xf]
    %v8398 = vld [vmem:[%s8370 + $0x6c] sm:$0xf]
    %v8399 = vld [vmem:[%s8370 + $0x70] sm:$0xf]
    %v8400 = vld [vmem:[%s8370 + $0x74] sm:$0xf]
    %v8401 = vld [vmem:[%s8370 + $0x78] sm:$0xf]
    %v8402 = vld [vmem:[%s8370 + $0x7c] sm:$0xf]
    %v8403 = vld [vmem:[%s8370 + $0x80] sm:$0xf]
    %v8404 = vld [vmem:[%s8370 + $0x84] sm:$0xf]
    %v8405 = vld [vmem:[%s8370 + $0x88] sm:$0xf]
    %v8406 = vld [vmem:[%s8370 + $0x8c] sm:$0xf]
    %v8407 = vld [vmem:[%s8370 + $0x90] sm:$0xf]
    %v8408 = vld [vmem:[%s8370 + $0x94] sm:$0x3]
    %v8447 = vunpack.c.l.b16 %v8371
    %v8448 = vunpack.c.l.b16 %v8372
    %v8449 = vunpack.c.l.b16 %v8373
    %v8450 = vunpack.c.l.b16 %v8374
    %v8451 = vunpack.c.l.b16 %v8375
    %v8452 = vunpack.c.l.b16 %v8376
    %v8453 = vunpack.c.l.b16 %v8377
    %v8454 = vunpack.c.l.b16 %v8378
    %v8455 = vunpack.c.l.b16 %v8379
    %v8456 = vunpack.c.l.b16 %v8380
    %v8457 = vunpack.c.l.b16 %v8381
    %v8458 = vunpack.c.l.b16 %v8382
    %v8459 = vunpack.c.l.b16 %v8383
    %v8460 = vunpack.c.l.b16 %v8384
    %v8461 = vunpack.c.l.b16 %v8385
    %v8462 = vunpack.c.l.b16 %v8386
    %v8463 = vunpack.c.l.b16 %v8387
    %v8464 = vunpack.c.l.b16 %v8388
    %v8465 = vunpack.c.l.b16 %v8389
    %v8466 = vunpack.c.l.b16 %v8390
    %v8467 = vunpack.c.l.b16 %v8391
    %v8468 = vunpack.c.l.b16 %v8392
    %v8469 = vunpack.c.l.b16 %v8393
    %v8470 = vunpack.c.l.b16 %v8394
    %v8471 = vunpack.c.l.b16 %v8395
    %v8472 = vunpack.c.l.b16 %v8396
    %v8473 = vunpack.c.l.b16 %v8397
    %v8474 = vunpack.c.l.b16 %v8398
    %v8475 = vunpack.c.l.b16 %v8399
    %v8476 = vunpack.c.l.b16 %v8400
    %v8477 = vunpack.c.l.b16 %v8401
    %v8478 = vunpack.c.l.b16 %v8402
    %v8479 = vunpack.c.l.b16 %v8403
    %v8480 = vunpack.c.l.b16 %v8404
    %v8481 = vunpack.c.l.b16 %v8405
    %v8482 = vunpack.c.l.b16 %v8406
    %v8483 = vunpack.c.l.b16 %v8407
    %v8484 = vunpack.c.l.b16 %v8408
    %v8485 = vpack.c.b16 %v8448, %v8447
    %v8486 = vpack.c.b16 %v8450, %v8449
    %v8487 = vpack.c.b16 %v8452, %v8451
    %v8488 = vpack.c.b16 %v8454, %v8453
    %v8489 = vpack.c.b16 %v8456, %v8455
    %v8490 = vpack.c.b16 %v8458, %v8457
    %v8491 = vpack.c.b16 %v8460, %v8459
    %v8492 = vpack.c.b16 %v8462, %v8461
    %v8493 = vpack.c.b16 %v8464, %v8463
    %v8494 = vpack.c.b16 %v8466, %v8465
    %v8495 = vpack.c.b16 %v8468, %v8467
    %v8496 = vpack.c.b16 %v8470, %v8469
    %v8497 = vpack.c.b16 %v8472, %v8471
    %v8498 = vpack.c.b16 %v8474, %v8473
    %v8499 = vpack.c.b16 %v8476, %v8475
    %v8500 = vpack.c.b16 %v8478, %v8477
    %v8501 = vpack.c.b16 %v8480, %v8479
    %v8502 = vpack.c.b16 %v8482, %v8481
    %v8503 = vpack.c.b16 %v8484, %v8483
    %v8523 = vsel %vm1420, %v8369, 0
    %v8526 = vsel %vm1424, %v8503, 0
    %8528 = vmatprep.subr.bf16.mxu0 0
    %8529 = vmatpush1.bf16.msra.mxu0 %v8485
    %8530 = vmatprep.subr.bf16.mxu0 0
    %8531 = vmatpush1.bf16.msra.mxu0 %v8486
    %8532 = vmatprep.subr.bf16.mxu0 0
    %8533 = vmatpush1.bf16.msra.mxu0 %v8487
    %8534 = vmatprep.subr.bf16.mxu0 0
    %8535 = vmatpush1.bf16.msra.mxu0 %v8488
    %8536 = vmatprep.subr.bf16.mxu0 0
    %8537 = vmatpush1.bf16.msra.mxu0 %v8489
    %8538 = vmatprep.subr.bf16.mxu0 0
    %8539 = vmatpush1.bf16.msra.mxu0 %v8490
    %8540 = vmatprep.subr.bf16.mxu0 0
    %8541 = vmatpush1.bf16.msra.mxu0 %v8491
    %8542 = vmatprep.subr.bf16.mxu0 0
    %8543 = vmatpush1.bf16.msra.mxu0 %v8492
    %8544 = vmatprep.subr.bf16.mxu0 0
    %8545 = vmatpush1.bf16.msra.mxu0 %v8493
    %8546 = vmatprep.subr.bf16.mxu0 0
    %8547 = vmatpush1.bf16.msra.mxu0 %v8494
    %8548 = vmatprep.subr.bf16.mxu0 0
    %8549 = vmatpush1.bf16.msra.mxu0 %v8495
    %8550 = vmatprep.subr.bf16.mxu0 0
    %8551 = vmatpush1.bf16.msra.mxu0 %v8496
    %8552 = vmatprep.subr.bf16.mxu0 0
    %8553 = vmatpush1.bf16.msra.mxu0 %v8497
    %8554 = vmatprep.subr.bf16.mxu0 0
    %8555 = vmatpush1.bf16.msra.mxu0 %v8498
    %8556 = vmatprep.subr.bf16.mxu0 0
    %8557 = vmatpush1.bf16.msra.mxu0 %v8499
    %8558 = vmatprep.subr.bf16.mxu0 0
    %8559 = vmatpush1.bf16.msra.mxu0 %v8500
    %8560 = vmatprep.mubr.bf16.mxu0 %v8368
    %8561 = vmatmul.mubr.bf16.gmra.mrb[0].mxu0 %v8367
    %v8562 = vpop.f32.mrb[0].mxu0
    %v8563 = vadd.f32 0.0, %v8562
    %v8564 = vpop.f32.mrb[0].mxu0
    %v8565 = vpop.f32.mrb[0].mxu0
    %v8566 = vpop.f32.mrb[0].mxu0
    %8567 = vdwg.mxu0
    %8568 = vmatprep.subr.bf16.mxu0 0
    %8569 = vmatpush1.bf16.msra.mxu0 %v8501
    %8570 = vmatprep.subr.bf16.mxu0 0
    %8571 = vmatpush1.bf16.msra.mxu0 %v8502
    %8572 = vmatprep.subr.bf16.mxu0 0
    %8573 = vmatpush1.bf16.msra.mxu0 %v8526
    %8574 = vmatprep.subr.bf16.mxu0 0
    %8575 = vmatpush1.bf16.msra.mxu0 0
    %8576 = vmatprep.subr.bf16.mxu0 0
    %8577 = vmatpush1.bf16.msra.mxu0 0
    %8578 = vmatprep.subr.bf16.mxu0 0
    %8579 = vmatpush1.bf16.msra.mxu0 0
    %8580 = vmatprep.subr.bf16.mxu0 0
    %8581 = vmatpush1.bf16.msra.mxu0 0
    %8582 = vmatprep.subr.bf16.mxu0 0
    %8583 = vmatpush1.bf16.msra.mxu0 0
    %8584 = vmatprep.subr.bf16.mxu0 0
    %8585 = vmatpush1.bf16.msra.mxu0 0
    %8586 = vmatprep.subr.bf16.mxu0 0
    %8587 = vmatpush1.bf16.msra.mxu0 0
    %8588 = vmatprep.subr.bf16.mxu0 0
    %8589 = vmatpush1.bf16.msra.mxu0 0
    %8590 = vmatprep.subr.bf16.mxu0 0
    %8591 = vmatpush1.bf16.msra.mxu0 0
    %8592 = vmatprep.subr.bf16.mxu0 0
    %8593 = vmatpush1.bf16.msra.mxu0 0
    %8594 = vmatprep.subr.bf16.mxu0 0
    %8595 = vmatpush1.bf16.msra.mxu0 0
    %8596 = vmatprep.subr.bf16.mxu0 0
    %8597 = vmatpush1.bf16.msra.mxu0 0
    %8598 = vmatprep.subr.bf16.mxu0 0
    %8599 = vmatpush1.bf16.msra.mxu0 0
    %8600 = vmatprep.mubr.bf16.mxu0 0
    %8601 = vmatmul.mubr.bf16.gmra.mrb[0].mxu0 %v8523
    %v8602 = vpop.f32.mrb[0].mxu0
    %v8603 = vadd.f32 %v8563, %v8602
    %v8604 = vpop.f32.mrb[0].mxu0
    %v8605 = vpop.f32.mrb[0].mxu0
    %v8606 = vpop.f32.mrb[0].mxu0
    %8607 = vdwg.mxu0
    %s8608 = scalar_lea.vmem [#allocation16], 1800
    %v8609 = vld [vmem:[%s8608] sm:$0xff]
    %v8610 = vld [vmem:[%s8608 + $0x8] sm:$0xf]
    %v8611 = vld [vmem:[%s8608 + $0xc] sm:$0xff]
    %v8612 = vld [vmem:[%s8608 + $0x14] sm:$0xf]
    %v8613 = vld [vmem:[%s8608 + $0x18] sm:$0xff]
    %v8614 = vld [vmem:[%s8608 + $0x20] sm:$0xf]
    %v8615 = vld [vmem:[%s8608 + $0x24] sm:$0xff]
    %v8616 = vld [vmem:[%s8608 + $0x2c] sm:$0xf]
    %v8617 = vld [vmem:[%s8608 + $0x30] sm:$0xff]
    %v8618 = vld [vmem:[%s8608 + $0x38] sm:$0xf]
    %v8619 = vld [vmem:[%s8608 + $0x3c] sm:$0xff]
    %v8620 = vld [vmem:[%s8608 + $0x44] sm:$0xf]
    %v8621 = vld [vmem:[%s8608 + $0x48] sm:$0xff]
    %v8622 = vld [vmem:[%s8608 + $0x50] sm:$0xf]
    %v8623 = vld [vmem:[%s8608 + $0x54] sm:$0xff]
    %v8624 = vld [vmem:[%s8608 + $0x5c] sm:$0xf]
    %v8625 = vld [vmem:[%s8608 + $0x60] sm:$0xff]
    %v8626 = vld [vmem:[%s8608 + $0x68] sm:$0xf]
    %v8627 = vld [vmem:[%s8608 + $0x6c] sm:$0xff]
    %v8628 = vld [vmem:[%s8608 + $0x74] sm:$0xf]
    %v8629 = vld [vmem:[%s8608 + $0x78] sm:$0xff]
    %v8630 = vld [vmem:[%s8608 + $0x80] sm:$0xf]
    %v8631 = vld [vmem:[%s8608 + $0x84] sm:$0xff]
    %v8632 = vld [vmem:[%s8608 + $0x8c] sm:$0xf]
    %v8633 = vld [vmem:[%s8608 + $0x90] sm:$0xff]
    %v8634 = vld [vmem:[%s8608 + $0x98] sm:$0xf]
    %v8635 = vld [vmem:[%s8608 + $0x9c] sm:$0xff]
    %v8636 = vld [vmem:[%s8608 + $0xa4] sm:$0xf]
    %v8637 = vld [vmem:[%s8608 + $0xa8] sm:$0xff]
    %v8638 = vld [vmem:[%s8608 + $0xb0] sm:$0xf]
    %v8639 = vld [vmem:[%s8608 + $0xb4] sm:$0xff]
    %v8640 = vld [vmem:[%s8608 + $0xbc] sm:$0xf]
    %v8641 = vld [vmem:[%s8608 + $0xc0] sm:$0xff]
    %v8642 = vld [vmem:[%s8608 + $0xc8] sm:$0xf]
    %v8643 = vld [vmem:[%s8608 + $0xcc] sm:$0xff]
    %v8644 = vld [vmem:[%s8608 + $0xd4] sm:$0xf]
    %v8645 = vld [vmem:[%s8608 + $0xd8] sm:$0xff]
    %v8646 = vld [vmem:[%s8608 + $0xe0] sm:$0xf]
    %v8647 = vld [vmem:[%s8608 + $0xe4] sm:$0xff]
    %v8648 = vld [vmem:[%s8608 + $0xec] sm:$0xf]
    %v8649 = vld [vmem:[%s8608 + $0xf0] sm:$0xff]
    %v8650 = vld [vmem:[%s8608 + $0xf8] sm:$0xf]
    %v8651 = vld [vmem:[%s8608 + $0xfc] sm:$0xff]
    %v8652 = vld [vmem:[%s8608 + $0x104] sm:$0xf]
    %v8653 = vld [vmem:[%s8608 + $0x108] sm:$0xff]
    %v8654 = vld [vmem:[%s8608 + $0x110] sm:$0xf]
    %v8655 = vld [vmem:[%s8608 + $0x114] sm:$0xff]
    %v8656 = vld [vmem:[%s8608 + $0x11c] sm:$0xf]
    %v8657 = vld [vmem:[%s8608 + $0x120] sm:$0xff]
    %v8658 = vld [vmem:[%s8608 + $0x128] sm:$0xf]
    %v8659 = vld [vmem:[%s8608 + $0x12c] sm:$0xff]
    %v8660 = vld [vmem:[%s8608 + $0x134] sm:$0xf]
    %v8661 = vld [vmem:[%s8608 + $0x138] sm:$0xff]
    %v8662 = vld [vmem:[%s8608 + $0x140] sm:$0xf]
    %v8663 = vld [vmem:[%s8608 + $0x144] sm:$0xff]
    %v8664 = vld [vmem:[%s8608 + $0x14c] sm:$0xf]
    %v8665 = vld [vmem:[%s8608 + $0x150] sm:$0xff]
    %v8666 = vld [vmem:[%s8608 + $0x158] sm:$0xf]
    %v8667 = vld [vmem:[%s8608 + $0x15c] sm:$0xff]
    %v8668 = vld [vmem:[%s8608 + $0x164] sm:$0xf]
    %v8669 = vld [vmem:[%s8608 + $0x168] sm:$0xff]
    %v8670 = vld [vmem:[%s8608 + $0x170] sm:$0xf]
    %v8671 = vld [vmem:[%s8608 + $0x174] sm:$0xff]
    %v8672 = vld [vmem:[%s8608 + $0x17c] sm:$0xf]
    %v8673 = vld [vmem:[%s8608 + $0x180] sm:$0xff]
    %v8674 = vld [vmem:[%s8608 + $0x188] sm:$0xf]
    %v8675 = vld [vmem:[%s8608 + $0x18c] sm:$0xff]
    %v8676 = vld [vmem:[%s8608 + $0x194] sm:$0xf]
    %v8677 = vld [vmem:[%s8608 + $0x198] sm:$0xff]
    %v8678 = vld [vmem:[%s8608 + $0x1a0] sm:$0xf]
    %v8679 = vld [vmem:[%s8608 + $0x1a4] sm:$0xff]
    %v8680 = vld [vmem:[%s8608 + $0x1ac] sm:$0xf]
    %v8681 = vld [vmem:[%s8608 + $0x1b0] sm:$0xff]
    %v8682 = vld [vmem:[%s8608 + $0x1b8] sm:$0xf]
    %v8683 = vld [vmem:[%s8608 + $0x1bc] sm:$0xff]
    %v8684 = vld [vmem:[%s8608 + $0x1c4] sm:$0xf]
    %v8685 = vld [vmem:[%s8608 + $0x1c8] sm:$0xff]
    %v8686 = vld [vmem:[%s8608 + $0x1d0] sm:$0xf]
    %v8687 = vld [vmem:[%s8608 + $0x1d4] sm:$0xff]
    %v8688 = vld [vmem:[%s8608 + $0x1dc] sm:$0xf]
    %v8689 = vld [vmem:[%s8608 + $0x1e0] sm:$0xff]
    %v8690 = vld [vmem:[%s8608 + $0x1e8] sm:$0xf]
    %v8691 = vld [vmem:[%s8608 + $0x1ec] sm:$0xff]
    %v8692 = vld [vmem:[%s8608 + $0x1f4] sm:$0xf]
    %v8693 = vld [vmem:[%s8608 + $0x1f8] sm:$0xff]
    %v8694 = vld [vmem:[%s8608 + $0x200] sm:$0xf]
    %v8695 = vld [vmem:[%s8608 + $0x204] sm:$0xff]
    %v8696 = vld [vmem:[%s8608 + $0x20c] sm:$0xf]
    %v8697 = vld [vmem:[%s8608 + $0x210] sm:$0xff]
    %v8698 = vld [vmem:[%s8608 + $0x218] sm:$0xf]
    %v8699 = vld [vmem:[%s8608 + $0x21c] sm:$0xff]
    %v8700 = vld [vmem:[%s8608 + $0x224] sm:$0xf]
    %v8701 = vld [vmem:[%s8608 + $0x228] sm:$0xff]
    %v8702 = vld [vmem:[%s8608 + $0x230] sm:$0xf]
    %v8703 = vld [vmem:[%s8608 + $0x234] sm:$0xff]
    %v8704 = vld [vmem:[%s8608 + $0x23c] sm:$0xf]
    %v8705 = vld [vmem:[%s8608 + $0x240] sm:$0xff]
    %v8706 = vld [vmem:[%s8608 + $0x248] sm:$0xf]
    %v8707 = vld [vmem:[%s8608 + $0x24c] sm:$0xff]
    %v8708 = vld [vmem:[%s8608 + $0x254] sm:$0xf]
    %s8709 = scalar_lea.vmem [#allocation18], 9
    %v8710 = vld [vmem:[%s8709] sm:$0x7]
    %v8712 = vlaneseq
    %v8713 = vshrl.u32 %v8712, 7
    %v8714 = vsub.s32 0, %v8713
    %v8715 = vrot.slane %v8710, %v8714
    %v8716 = vlaneseq
    %v8717 = vshrl.u32 %v8716, 7
    %v8718 = vsub.s32 1, %v8717
    %v8719 = vrot.slane %v8710, %v8718
    %v8720 = vlaneseq
    %v8721 = vshrl.u32 %v8720, 7
    %v8722 = vsub.s32 2, %v8721
    %v8723 = vrot.slane %v8710, %v8722
    %8730 = vrot.lane.b32.xlu0 %v5774, 80
    %v8731 = vpop.permute.xlu0 %8730
    %8732 = vrot.lane.b32.xlu0 %v5775, 80
    %v8733 = vpop.permute.xlu0 %8732
    %8734 = vrot.lane.b32.xlu0 %v5776, 80
    %v8735 = vpop.permute.xlu0 %8734
    %8736 = vrot.lane.b32.xlu0 %v5777, 80
    %v8737 = vpop.permute.xlu0 %8736
    %vm8738 = vcmask 654336
    %v8739 = vsel %vm8738, %v8731, %v8733
    %v8740 = vsel %vm8738, %v8733, %v8735
    %v8741 = vsel %vm8738, %v8735, %v8737
    %v8845 = vunpack.c.l.b16 %v8609
    %v8846 = vunpack.c.h.b16 %v8609
    %v8847 = vunpack.c.l.b16 %v8610
    %v8848 = vunpack.c.l.b16 %v8611
    %v8849 = vunpack.c.h.b16 %v8611
    %v8850 = vunpack.c.l.b16 %v8612
    %v8851 = vunpack.c.l.b16 %v8613
    %v8852 = vunpack.c.h.b16 %v8613
    %v8853 = vunpack.c.l.b16 %v8614
    %v8854 = vunpack.c.l.b16 %v8615
    %v8855 = vunpack.c.h.b16 %v8615
    %v8856 = vunpack.c.l.b16 %v8616
    %v8857 = vunpack.c.l.b16 %v8617
    %v8858 = vunpack.c.h.b16 %v8617
    %v8859 = vunpack.c.l.b16 %v8618
    %v8860 = vunpack.c.l.b16 %v8619
    %v8861 = vunpack.c.h.b16 %v8619
    %v8862 = vunpack.c.l.b16 %v8620
    %v8863 = vunpack.c.l.b16 %v8621
    %v8864 = vunpack.c.h.b16 %v8621
    %v8865 = vunpack.c.l.b16 %v8622
    %v8866 = vunpack.c.l.b16 %v8623
    %v8867 = vunpack.c.h.b16 %v8623
    %v8868 = vunpack.c.l.b16 %v8624
    %v8869 = vunpack.c.l.b16 %v8625
    %v8870 = vunpack.c.h.b16 %v8625
    %v8871 = vunpack.c.l.b16 %v8626
    %v8872 = vunpack.c.l.b16 %v8627
    %v8873 = vunpack.c.h.b16 %v8627
    %v8874 = vunpack.c.l.b16 %v8628
    %v8875 = vunpack.c.l.b16 %v8629
    %v8876 = vunpack.c.h.b16 %v8629
    %v8877 = vunpack.c.l.b16 %v8630
    %v8878 = vunpack.c.l.b16 %v8631
    %v8879 = vunpack.c.h.b16 %v8631
    %v8880 = vunpack.c.l.b16 %v8632
    %v8881 = vunpack.c.l.b16 %v8633
    %v8882 = vunpack.c.h.b16 %v8633
    %v8883 = vunpack.c.l.b16 %v8634
    %v8884 = vunpack.c.l.b16 %v8635
    %v8885 = vunpack.c.h.b16 %v8635
    %v8886 = vunpack.c.l.b16 %v8636
    %v8887 = vunpack.c.l.b16 %v8637
    %v8888 = vunpack.c.h.b16 %v8637
    %v8889 = vunpack.c.l.b16 %v8638
    %v8890 = vunpack.c.l.b16 %v8639
    %v8891 = vunpack.c.h.b16 %v8639
    %v8892 = vunpack.c.l.b16 %v8640
    %v8893 = vunpack.c.l.b16 %v8641
    %v8894 = vunpack.c.h.b16 %v8641
    %v8895 = vunpack.c.l.b16 %v8642
    %v8896 = vunpack.c.l.b16 %v8643
    %v8897 = vunpack.c.h.b16 %v8643
    %v8898 = vunpack.c.l.b16 %v8644
    %v8899 = vunpack.c.l.b16 %v8645
    %v8900 = vunpack.c.h.b16 %v8645
    %v8901 = vunpack.c.l.b16 %v8646
    %v8902 = vunpack.c.l.b16 %v8647
    %v8903 = vunpack.c.h.b16 %v8647
    %v8904 = vunpack.c.l.b16 %v8648
    %v8905 = vunpack.c.l.b16 %v8649
    %v8906 = vunpack.c.h.b16 %v8649
    %v8907 = vunpack.c.l.b16 %v8650
    %v8908 = vunpack.c.l.b16 %v8651
    %v8909 = vunpack.c.h.b16 %v8651
    %v8910 = vunpack.c.l.b16 %v8652
    %v8911 = vunpack.c.l.b16 %v8653
    %v8912 = vunpack.c.h.b16 %v8653
    %v8913 = vunpack.c.l.b16 %v8654
    %v8914 = vunpack.c.l.b16 %v8655
    %v8915 = vunpack.c.h.b16 %v8655
    %v8916 = vunpack.c.l.b16 %v8656
    %v8917 = vunpack.c.l.b16 %v8657
    %v8918 = vunpack.c.h.b16 %v8657
    %v8919 = vunpack.c.l.b16 %v8658
    %v8920 = vunpack.c.l.b16 %v8659
    %v8921 = vunpack.c.h.b16 %v8659
    %v8922 = vunpack.c.l.b16 %v8660
    %v8923 = vunpack.c.l.b16 %v8661
    %v8924 = vunpack.c.h.b16 %v8661
    %v8925 = vunpack.c.l.b16 %v8662
    %v8926 = vunpack.c.l.b16 %v8663
    %v8927 = vunpack.c.h.b16 %v8663
    %v8928 = vunpack.c.l.b16 %v8664
    %v8929 = vunpack.c.l.b16 %v8665
    %v8930 = vunpack.c.h.b16 %v8665
    %v8931 = vunpack.c.l.b16 %v8666
    %v8932 = vunpack.c.l.b16 %v8667
    %v8933 = vunpack.c.h.b16 %v8667
    %v8934 = vunpack.c.l.b16 %v8668
    %v8935 = vunpack.c.l.b16 %v8669
    %v8936 = vunpack.c.h.b16 %v8669
    %v8937 = vunpack.c.l.b16 %v8670
    %v8938 = vunpack.c.l.b16 %v8671
    %v8939 = vunpack.c.h.b16 %v8671
    %v8940 = vunpack.c.l.b16 %v8672
    %v8941 = vunpack.c.l.b16 %v8673
    %v8942 = vunpack.c.h.b16 %v8673
    %v8943 = vunpack.c.l.b16 %v8674
    %v8944 = vunpack.c.l.b16 %v8675
    %v8945 = vunpack.c.h.b16 %v8675
    %v8946 = vunpack.c.l.b16 %v8676
    %v8947 = vunpack.c.l.b16 %v8677
    %v8948 = vunpack.c.h.b16 %v8677
    %v8949 = vunpack.c.l.b16 %v8678
    %v8950 = vunpack.c.l.b16 %v8679
    %v8951 = vunpack.c.h.b16 %v8679
    %v8952 = vunpack.c.l.b16 %v8680
    %v8953 = vunpack.c.l.b16 %v8681
    %v8954 = vunpack.c.h.b16 %v8681
    %v8955 = vunpack.c.l.b16 %v8682
    %v8956 = vunpack.c.l.b16 %v8683
    %v8957 = vunpack.c.h.b16 %v8683
    %v8958 = vunpack.c.l.b16 %v8684
    %v8959 = vunpack.c.l.b16 %v8685
    %v8960 = vunpack.c.h.b16 %v8685
    %v8961 = vunpack.c.l.b16 %v8686
    %v8962 = vunpack.c.l.b16 %v8687
    %v8963 = vunpack.c.h.b16 %v8687
    %v8964 = vunpack.c.l.b16 %v8688
    %v8965 = vunpack.c.l.b16 %v8689
    %v8966 = vunpack.c.h.b16 %v8689
    %v8967 = vunpack.c.l.b16 %v8690
    %v8968 = vunpack.c.l.b16 %v8691
    %v8969 = vunpack.c.h.b16 %v8691
    %v8970 = vunpack.c.l.b16 %v8692
    %v8971 = vunpack.c.l.b16 %v8693
    %v8972 = vunpack.c.h.b16 %v8693
    %v8973 = vunpack.c.l.b16 %v8694
    %v8974 = vunpack.c.l.b16 %v8695
    %v8975 = vunpack.c.h.b16 %v8695
    %v8976 = vunpack.c.l.b16 %v8696
    %v8977 = vunpack.c.l.b16 %v8697
    %v8978 = vunpack.c.h.b16 %v8697
    %v8979 = vunpack.c.l.b16 %v8698
    %v8980 = vunpack.c.l.b16 %v8699
    %v8981 = vunpack.c.h.b16 %v8699
    %v8982 = vunpack.c.l.b16 %v8700
    %v8983 = vunpack.c.l.b16 %v8701
    %v8984 = vunpack.c.h.b16 %v8701
    %v8985 = vunpack.c.l.b16 %v8702
    %v8986 = vunpack.c.l.b16 %v8703
    %v8987 = vunpack.c.h.b16 %v8703
    %v8988 = vunpack.c.l.b16 %v8704
    %v8989 = vunpack.c.l.b16 %v8705
    %v8990 = vunpack.c.h.b16 %v8705
    %v8991 = vunpack.c.l.b16 %v8706
    %v8992 = vunpack.c.l.b16 %v8707
    %v8993 = vunpack.c.h.b16 %v8707
    %v8994 = vunpack.c.l.b16 %v8708
    %v8995 = vpack.c.b16 %v8848, %v8845
    %v8996 = vpack.c.b16 %v8849, %v8846
    %v8997 = vpack.c.b16 %v8850, %v8847
    %v8998 = vpack.c.b16 %v8854, %v8851
    %v8999 = vpack.c.b16 %v8855, %v8852
    %v9000 = vpack.c.b16 %v8856, %v8853
    %v9001 = vpack.c.b16 %v8860, %v8857
    %v9002 = vpack.c.b16 %v8861, %v8858
    %v9003 = vpack.c.b16 %v8862, %v8859
    %v9004 = vpack.c.b16 %v8866, %v8863
    %v9005 = vpack.c.b16 %v8867, %v8864
    %v9006 = vpack.c.b16 %v8868, %v8865
    %v9007 = vpack.c.b16 %v8872, %v8869
    %v9008 = vpack.c.b16 %v8873, %v8870
    %v9009 = vpack.c.b16 %v8874, %v8871
    %v9010 = vpack.c.b16 %v8878, %v8875
    %v9011 = vpack.c.b16 %v8879, %v8876
    %v9012 = vpack.c.b16 %v8880, %v8877
    %v9013 = vpack.c.b16 %v8884, %v8881
    %v9014 = vpack.c.b16 %v8885, %v8882
    %v9015 = vpack.c.b16 %v8886, %v8883
    %v9016 = vpack.c.b16 %v8890, %v8887
    %v9017 = vpack.c.b16 %v8891, %v8888
    %v9018 = vpack.c.b16 %v8892, %v8889
    %v9019 = vpack.c.b16 %v8896, %v8893
    %v9020 = vpack.c.b16 %v8897, %v8894
    %v9021 = vpack.c.b16 %v8898, %v8895
    %v9022 = vpack.c.b16 %v8902, %v8899
    %v9023 = vpack.c.b16 %v8903, %v8900
    %v9024 = vpack.c.b16 %v8904, %v8901
    %v9025 = vpack.c.b16 %v8908, %v8905
    %v9026 = vpack.c.b16 %v8909, %v8906
    %v9027 = vpack.c.b16 %v8910, %v8907
    %v9028 = vpack.c.b16 %v8914, %v8911
    %v9029 = vpack.c.b16 %v8915, %v8912
    %v9030 = vpack.c.b16 %v8916, %v8913
    %v9031 = vpack.c.b16 %v8920, %v8917
    %v9032 = vpack.c.b16 %v8921, %v8918
    %v9033 = vpack.c.b16 %v8922, %v8919
    %v9034 = vpack.c.b16 %v8926, %v8923
    %v9035 = vpack.c.b16 %v8927, %v8924
    %v9036 = vpack.c.b16 %v8928, %v8925
    %v9037 = vpack.c.b16 %v8932, %v8929
    %v9038 = vpack.c.b16 %v8933, %v8930
    %v9039 = vpack.c.b16 %v8934, %v8931
    %v9040 = vpack.c.b16 %v8938, %v8935
    %v9041 = vpack.c.b16 %v8939, %v8936
    %v9042 = vpack.c.b16 %v8940, %v8937
    %v9043 = vpack.c.b16 %v8944, %v8941
    %v9044 = vpack.c.b16 %v8945, %v8942
    %v9045 = vpack.c.b16 %v8946, %v8943
    %v9046 = vpack.c.b16 %v8950, %v8947
    %v9047 = vpack.c.b16 %v8951, %v8948
    %v9048 = vpack.c.b16 %v8952, %v8949
    %v9049 = vpack.c.b16 %v8956, %v8953
    %v9050 = vpack.c.b16 %v8957, %v8954
    %v9051 = vpack.c.b16 %v8958, %v8955
    %v9052 = vpack.c.b16 %v8962, %v8959
    %v9053 = vpack.c.b16 %v8963, %v8960
    %v9054 = vpack.c.b16 %v8964, %v8961
    %v9055 = vpack.c.b16 %v8968, %v8965
    %v9056 = vpack.c.b16 %v8969, %v8966
    %v9057 = vpack.c.b16 %v8970, %v8967
    %v9058 = vpack.c.b16 %v8974, %v8971
    %v9059 = vpack.c.b16 %v8975, %v8972
    %v9060 = vpack.c.b16 %v8976, %v8973
    %v9061 = vpack.c.b16 %v8980, %v8977
    %v9062 = vpack.c.b16 %v8981, %v8978
    %v9063 = vpack.c.b16 %v8982, %v8979
    %v9064 = vpack.c.b16 %v8986, %v8983
    %v9065 = vpack.c.b16 %v8987, %v8984
    %v9066 = vpack.c.b16 %v8988, %v8985
    %v9067 = vpack.c.b16 %v8992, %v8989
    %v9068 = vpack.c.b16 %v8993, %v8990
    %v9069 = vpack.c.b16 %v8994, %v8991
    %v9146 = vsel %vm244, %v8737, 0
    %9148 = vmatprep.subr.bf16.mxu0 %v8996
    %9149 = vmatpush1.bf16.msra.mxu0 %v8995
    %9150 = vmatprep.subr.bf16.mxu0 %v8999
    %9151 = vmatpush1.bf16.msra.mxu0 %v8998
    %9152 = vmatprep.subr.bf16.mxu0 %v9002
    %9153 = vmatpush1.bf16.msra.mxu0 %v9001
    %9154 = vmatprep.subr.bf16.mxu0 %v9005
    %9155 = vmatpush1.bf16.msra.mxu0 %v9004
    %9156 = vmatprep.subr.bf16.mxu0 %v9008
    %9157 = vmatpush1.bf16.msra.mxu0 %v9007
    %9158 = vmatprep.subr.bf16.mxu0 %v9011
    %9159 = vmatpush1.bf16.msra.mxu0 %v9010
    %9160 = vmatprep.subr.bf16.mxu0 %v9014
    %9161 = vmatpush1.bf16.msra.mxu0 %v9013
    %9162 = vmatprep.subr.bf16.mxu0 %v9017
    %9163 = vmatpush1.bf16.msra.mxu0 %v9016
    %9164 = vmatprep.subr.bf16.mxu0 %v9020
    %9165 = vmatpush1.bf16.msra.mxu0 %v9019
    %9166 = vmatprep.subr.bf16.mxu0 %v9023
    %9167 = vmatpush1.bf16.msra.mxu0 %v9022
    %9168 = vmatprep.subr.bf16.mxu0 %v9026
    %9169 = vmatpush1.bf16.msra.mxu0 %v9025
    %9170 = vmatprep.subr.bf16.mxu0 %v9029
    %9171 = vmatpush1.bf16.msra.mxu0 %v9028
    %9172 = vmatprep.subr.bf16.mxu0 %v9032
    %9173 = vmatpush1.bf16.msra.mxu0 %v9031
    %9174 = vmatprep.subr.bf16.mxu0 %v9035
    %9175 = vmatpush1.bf16.msra.mxu0 %v9034
    %9176 = vmatprep.subr.bf16.mxu0 %v9038
    %9177 = vmatpush1.bf16.msra.mxu0 %v9037
    %9178 = vmatprep.subr.bf16.mxu0 %v9041
    %9179 = vmatpush1.bf16.msra.mxu0 %v9040
    %9180 = vmatprep.mubr.bf16.mxu0 %v8740
    %9181 = vmatmul.mubr.bf16.gmra.mrb[0].mxu0 %v8739
    %v9182 = vpop.f32.mrb[0].mxu0
    %v9183 = vadd.f32 %v8715, %v9182
    %v9184 = vpop.f32.mrb[0].mxu0
    %v9185 = vadd.f32 %v8719, %v9184
    %v9186 = vpop.f32.mrb[0].mxu0
    %v9187 = vpop.f32.mrb[0].mxu0
    %9188 = vdwg.mxu0
    %9189 = vmatprep.subr.bf16.mxu0 %v9044
    %9190 = vmatpush1.bf16.msra.mxu0 %v9043
    %9191 = vmatprep.subr.bf16.mxu0 %v9047
    %9192 = vmatpush1.bf16.msra.mxu0 %v9046
    %9193 = vmatprep.subr.bf16.mxu0 %v9050
    %9194 = vmatpush1.bf16.msra.mxu0 %v9049
    %9195 = vmatprep.subr.bf16.mxu0 %v9053
    %9196 = vmatpush1.bf16.msra.mxu0 %v9052
    %9197 = vmatprep.subr.bf16.mxu0 %v9056
    %9198 = vmatpush1.bf16.msra.mxu0 %v9055
    %9199 = vmatprep.subr.bf16.mxu0 %v9059
    %9200 = vmatpush1.bf16.msra.mxu0 %v9058
    %9201 = vmatprep.subr.bf16.mxu0 %v9062
    %9202 = vmatpush1.bf16.msra.mxu0 %v9061
    %9203 = vmatprep.subr.bf16.mxu0 %v9065
    %9204 = vmatpush1.bf16.msra.mxu0 %v9064
    %9205 = vmatprep.subr.bf16.mxu0 %v9068
    %9206 = vmatpush1.bf16.msra.mxu0 %v9067
    %9207 = vmatprep.subr.bf16.mxu0 0
    %9208 = vmatpush1.bf16.msra.mxu0 0
    %9209 = vmatprep.subr.bf16.mxu0 0
    %9210 = vmatpush1.bf16.msra.mxu0 0
    %9211 = vmatprep.subr.bf16.mxu0 0
    %9212 = vmatpush1.bf16.msra.mxu0 0
    %9213 = vmatprep.subr.bf16.mxu0 0
    %9214 = vmatpush1.bf16.msra.mxu0 0
    %9215 = vmatprep.subr.bf16.mxu0 0
    %9216 = vmatpush1.bf16.msra.mxu0 0
    %9217 = vmatprep.subr.bf16.mxu0 0
    %9218 = vmatpush1.bf16.msra.mxu0 0
    %9219 = vmatprep.subr.bf16.mxu0 0
    %9220 = vmatpush1.bf16.msra.mxu0 0
    %9221 = vmatprep.mubr.bf16.mxu0 %v9146
    %9222 = vmatmul.mubr.bf16.gmra.mrb[0].mxu0 %v8741
    %v9223 = vpop.f32.mrb[0].mxu0
    %v9224 = vadd.f32 %v9183, %v9223
    %v9225 = vpop.f32.mrb[0].mxu0
    %v9226 = vadd.f32 %v9185, %v9225
    %v9227 = vpop.f32.mrb[0].mxu0
    %v9228 = vpop.f32.mrb[0].mxu0
    %9229 = vdwg.mxu0
    %9230 = vmatprep.subr.bf16.mxu0 0
    %9231 = vmatpush1.bf16.msra.mxu0 %v8997
    %9232 = vmatprep.subr.bf16.mxu0 0
    %9233 = vmatpush1.bf16.msra.mxu0 %v9000
    %9234 = vmatprep.subr.bf16.mxu0 0
    %9235 = vmatpush1.bf16.msra.mxu0 %v9003
    %9236 = vmatprep.subr.bf16.mxu0 0
    %9237 = vmatpush1.bf16.msra.mxu0 %v9006
    %9238 = vmatprep.subr.bf16.mxu0 0
    %9239 = vmatpush1.bf16.msra.mxu0 %v9009
    %9240 = vmatprep.subr.bf16.mxu0 0
    %9241 = vmatpush1.bf16.msra.mxu0 %v9012
    %9242 = vmatprep.subr.bf16.mxu0 0
    %9243 = vmatpush1.bf16.msra.mxu0 %v9015
    %9244 = vmatprep.subr.bf16.mxu0 0
    %9245 = vmatpush1.bf16.msra.mxu0 %v9018
    %9246 = vmatprep.subr.bf16.mxu0 0
    %9247 = vmatpush1.bf16.msra.mxu0 %v9021
    %9248 = vmatprep.subr.bf16.mxu0 0
    %9249 = vmatpush1.bf16.msra.mxu0 %v9024
    %9250 = vmatprep.subr.bf16.mxu0 0
    %9251 = vmatpush1.bf16.msra.mxu0 %v9027
    %9252 = vmatprep.subr.bf16.mxu0 0
    %9253 = vmatpush1.bf16.msra.mxu0 %v9030
    %9254 = vmatprep.subr.bf16.mxu0 0
    %9255 = vmatpush1.bf16.msra.mxu0 %v9033
    %9256 = vmatprep.subr.bf16.mxu0 0
    %9257 = vmatpush1.bf16.msra.mxu0 %v9036
    %9258 = vmatprep.subr.bf16.mxu0 0
    %9259 = vmatpush1.bf16.msra.mxu0 %v9039
    %9260 = vmatprep.subr.bf16.mxu0 0
    %9261 = vmatpush1.bf16.msra.mxu0 %v9042
    %9262 = vmatprep.mubr.bf16.mxu0 %v8740
    %9263 = vmatmul.mubr.bf16.gmra.mrb[0].mxu0 %v8739
    %v9264 = vpop.f32.mrb[0].mxu0
    %v9265 = vadd.f32 %v8723, %v9264
    %v9266 = vpop.f32.mrb[0].mxu0
    %v9267 = vpop.f32.mrb[0].mxu0
    %v9268 = vpop.f32.mrb[0].mxu0
    %9269 = vdwg.mxu0
    %9270 = vmatprep.subr.bf16.mxu0 0
    %9271 = vmatpush1.bf16.msra.mxu0 %v9045
    %9272 = vmatprep.subr.bf16.mxu0 0
    %9273 = vmatpush1.bf16.msra.mxu0 %v9048
    %9274 = vmatprep.subr.bf16.mxu0 0
    %9275 = vmatpush1.bf16.msra.mxu0 %v9051
    %9276 = vmatprep.subr.bf16.mxu0 0
    %9277 = vmatpush1.bf16.msra.mxu0 %v9054
    %9278 = vmatprep.subr.bf16.mxu0 0
    %9279 = vmatpush1.bf16.msra.mxu0 %v9057
    %9280 = vmatprep.subr.bf16.mxu0 0
    %9281 = vmatpush1.bf16.msra.mxu0 %v9060
    %9282 = vmatprep.subr.bf16.mxu0 0
    %9283 = vmatpush1.bf16.msra.mxu0 %v9063
    %9284 = vmatprep.subr.bf16.mxu0 0
    %9285 = vmatpush1.bf16.msra.mxu0 %v9066
    %9286 = vmatprep.subr.bf16.mxu0 0
    %9287 = vmatpush1.bf16.msra.mxu0 %v9069
    %9288 = vmatprep.subr.bf16.mxu0 0
    %9289 = vmatpush1.bf16.msra.mxu0 0
    %9290 = vmatprep.subr.bf16.mxu0 0
    %9291 = vmatpush1.bf16.msra.mxu0 0
    %9292 = vmatprep.subr.bf16.mxu0 0
    %9293 = vmatpush1.bf16.msra.mxu0 0
    %9294 = vmatprep.subr.bf16.mxu0 0
    %9295 = vmatpush1.bf16.msra.mxu0 0
    %9296 = vmatprep.subr.bf16.mxu0 0
    %9297 = vmatpush1.bf16.msra.mxu0 0
    %9298 = vmatprep.subr.bf16.mxu0 0
    %9299 = vmatpush1.bf16.msra.mxu0 0
    %9300 = vmatprep.subr.bf16.mxu0 0
    %9301 = vmatpush1.bf16.msra.mxu0 0
    %9302 = vmatprep.mubr.bf16.mxu0 %v9146
    %9303 = vmatmul.mubr.bf16.gmra.mrb[0].mxu0 %v8741
    %v9304 = vpop.f32.mrb[0].mxu0
    %v9305 = vadd.f32 %v9265, %v9304
    %v9306 = vpop.f32.mrb[0].mxu0
    %v9307 = vpop.f32.mrb[0].mxu0
    %v9308 = vpop.f32.mrb[0].mxu0
    %9309 = vdwg.mxu0
    %v9310 = vmax.f32 %v9224, 0.0
    %v9311 = vmax.f32 %v9226, 0.0
    %v9312 = vmax.f32 %v9305, 0.0
    %v9313 = vpack.c.bf16 %v9310, %v9310
    %v9314 = vpack.c.bf16 %v9311, %v9311
    %v9315 = vpack.c.bf16 %v9312, %v9312
    %s9316 = scalar_lea.vmem %s11, 456
    %v9317 = vld [vmem:[%s9316] sm:$0xf]
    %v9318 = vld [vmem:[%s9316 + $0x4] sm:$0xf]
    %v9319 = vld [vmem:[%s9316 + $0x8] sm:$0xf]
    %v9320 = vld [vmem:[%s9316 + $0xc] sm:$0xf]
    %v9321 = vld [vmem:[%s9316 + $0x10] sm:$0xf]
    %v9322 = vld [vmem:[%s9316 + $0x14] sm:$0xf]
    %v9323 = vld [vmem:[%s9316 + $0x18] sm:$0xf]
    %v9324 = vld [vmem:[%s9316 + $0x1c] sm:$0xf]
    %v9325 = vld [vmem:[%s9316 + $0x20] sm:$0xf]
    %v9326 = vld [vmem:[%s9316 + $0x24] sm:$0xf]
    %v9327 = vld [vmem:[%s9316 + $0x28] sm:$0xf]
    %v9328 = vld [vmem:[%s9316 + $0x2c] sm:$0xf]
    %v9329 = vld [vmem:[%s9316 + $0x30] sm:$0xf]
    %v9330 = vld [vmem:[%s9316 + $0x34] sm:$0xf]
    %v9331 = vld [vmem:[%s9316 + $0x38] sm:$0xf]
    %v9332 = vld [vmem:[%s9316 + $0x3c] sm:$0xf]
    %v9333 = vld [vmem:[%s9316 + $0x40] sm:$0xf]
    %v9334 = vld [vmem:[%s9316 + $0x44] sm:$0xf]
    %v9335 = vld [vmem:[%s9316 + $0x48] sm:$0xf]
    %v9336 = vld [vmem:[%s9316 + $0x4c] sm:$0xf]
    %v9337 = vld [vmem:[%s9316 + $0x50] sm:$0xf]
    %v9338 = vld [vmem:[%s9316 + $0x54] sm:$0xf]
    %v9339 = vld [vmem:[%s9316 + $0x58] sm:$0xf]
    %v9340 = vld [vmem:[%s9316 + $0x5c] sm:$0xf]
    %v9341 = vld [vmem:[%s9316 + $0x60] sm:$0xf]
    %v9342 = vld [vmem:[%s9316 + $0x64] sm:$0xf]
    %v9343 = vld [vmem:[%s9316 + $0x68] sm:$0xf]
    %v9344 = vld [vmem:[%s9316 + $0x6c] sm:$0xf]
    %v9345 = vld [vmem:[%s9316 + $0x70] sm:$0xf]
    %v9346 = vld [vmem:[%s9316 + $0x74] sm:$0xf]
    %v9347 = vld [vmem:[%s9316 + $0x78] sm:$0xf]
    %v9348 = vld [vmem:[%s9316 + $0x7c] sm:$0xf]
    %v9349 = vld [vmem:[%s9316 + $0x80] sm:$0xf]
    %v9350 = vld [vmem:[%s9316 + $0x84] sm:$0xf]
    %v9351 = vld [vmem:[%s9316 + $0x88] sm:$0xf]
    %v9352 = vld [vmem:[%s9316 + $0x8c] sm:$0xf]
    %v9353 = vld [vmem:[%s9316 + $0x90] sm:$0xf]
    %v9354 = vld [vmem:[%s9316 + $0x94] sm:$0x3]
    %v9393 = vunpack.c.l.b16 %v9317
    %v9394 = vunpack.c.l.b16 %v9318
    %v9395 = vunpack.c.l.b16 %v9319
    %v9396 = vunpack.c.l.b16 %v9320
    %v9397 = vunpack.c.l.b16 %v9321
    %v9398 = vunpack.c.l.b16 %v9322
    %v9399 = vunpack.c.l.b16 %v9323
    %v9400 = vunpack.c.l.b16 %v9324
    %v9401 = vunpack.c.l.b16 %v9325
    %v9402 = vunpack.c.l.b16 %v9326
    %v9403 = vunpack.c.l.b16 %v9327
    %v9404 = vunpack.c.l.b16 %v9328
    %v9405 = vunpack.c.l.b16 %v9329
    %v9406 = vunpack.c.l.b16 %v9330
    %v9407 = vunpack.c.l.b16 %v9331
    %v9408 = vunpack.c.l.b16 %v9332
    %v9409 = vunpack.c.l.b16 %v9333
    %v9410 = vunpack.c.l.b16 %v9334
    %v9411 = vunpack.c.l.b16 %v9335
    %v9412 = vunpack.c.l.b16 %v9336
    %v9413 = vunpack.c.l.b16 %v9337
    %v9414 = vunpack.c.l.b16 %v9338
    %v9415 = vunpack.c.l.b16 %v9339
    %v9416 = vunpack.c.l.b16 %v9340
    %v9417 = vunpack.c.l.b16 %v9341
    %v9418 = vunpack.c.l.b16 %v9342
    %v9419 = vunpack.c.l.b16 %v9343
    %v9420 = vunpack.c.l.b16 %v9344
    %v9421 = vunpack.c.l.b16 %v9345
    %v9422 = vunpack.c.l.b16 %v9346
    %v9423 = vunpack.c.l.b16 %v9347
    %v9424 = vunpack.c.l.b16 %v9348
    %v9425 = vunpack.c.l.b16 %v9349
    %v9426 = vunpack.c.l.b16 %v9350
    %v9427 = vunpack.c.l.b16 %v9351
    %v9428 = vunpack.c.l.b16 %v9352
    %v9429 = vunpack.c.l.b16 %v9353
    %v9430 = vunpack.c.l.b16 %v9354
    %v9431 = vpack.c.b16 %v9394, %v9393
    %v9432 = vpack.c.b16 %v9396, %v9395
    %v9433 = vpack.c.b16 %v9398, %v9397
    %v9434 = vpack.c.b16 %v9400, %v9399
    %v9435 = vpack.c.b16 %v9402, %v9401
    %v9436 = vpack.c.b16 %v9404, %v9403
    %v9437 = vpack.c.b16 %v9406, %v9405
    %v9438 = vpack.c.b16 %v9408, %v9407
    %v9439 = vpack.c.b16 %v9410, %v9409
    %v9440 = vpack.c.b16 %v9412, %v9411
    %v9441 = vpack.c.b16 %v9414, %v9413
    %v9442 = vpack.c.b16 %v9416, %v9415
    %v9443 = vpack.c.b16 %v9418, %v9417
    %v9444 = vpack.c.b16 %v9420, %v9419
    %v9445 = vpack.c.b16 %v9422, %v9421
    %v9446 = vpack.c.b16 %v9424, %v9423
    %v9447 = vpack.c.b16 %v9426, %v9425
    %v9448 = vpack.c.b16 %v9428, %v9427
    %v9449 = vpack.c.b16 %v9430, %v9429
    %v9469 = vsel %vm1420, %v9315, 0
    %v9472 = vsel %vm1424, %v9449, 0
    %9474 = vmatprep.subr.bf16.mxu0 0
    %9475 = vmatpush1.bf16.msra.mxu0 %v9431
    %9476 = vmatprep.subr.bf16.mxu0 0
    %9477 = vmatpush1.bf16.msra.mxu0 %v9432
    %9478 = vmatprep.subr.bf16.mxu0 0
    %9479 = vmatpush1.bf16.msra.mxu0 %v9433
    %9480 = vmatprep.subr.bf16.mxu0 0
    %9481 = vmatpush1.bf16.msra.mxu0 %v9434
    %9482 = vmatprep.subr.bf16.mxu0 0
    %9483 = vmatpush1.bf16.msra.mxu0 %v9435
    %9484 = vmatprep.subr.bf16.mxu0 0
    %9485 = vmatpush1.bf16.msra.mxu0 %v9436
    %9486 = vmatprep.subr.bf16.mxu0 0
    %9487 = vmatpush1.bf16.msra.mxu0 %v9437
    %9488 = vmatprep.subr.bf16.mxu0 0
    %9489 = vmatpush1.bf16.msra.mxu0 %v9438
    %9490 = vmatprep.subr.bf16.mxu0 0
    %9491 = vmatpush1.bf16.msra.mxu0 %v9439
    %9492 = vmatprep.subr.bf16.mxu0 0
    %9493 = vmatpush1.bf16.msra.mxu0 %v9440
    %9494 = vmatprep.subr.bf16.mxu0 0
    %9495 = vmatpush1.bf16.msra.mxu0 %v9441
    %9496 = vmatprep.subr.bf16.mxu0 0
    %9497 = vmatpush1.bf16.msra.mxu0 %v9442
    %9498 = vmatprep.subr.bf16.mxu0 0
    %9499 = vmatpush1.bf16.msra.mxu0 %v9443
    %9500 = vmatprep.subr.bf16.mxu0 0
    %9501 = vmatpush1.bf16.msra.mxu0 %v9444
    %9502 = vmatprep.subr.bf16.mxu0 0
    %9503 = vmatpush1.bf16.msra.mxu0 %v9445
    %9504 = vmatprep.subr.bf16.mxu0 0
    %9505 = vmatpush1.bf16.msra.mxu0 %v9446
    %9506 = vmatprep.mubr.bf16.mxu0 %v9314
    %9507 = vmatmul.mubr.bf16.gmra.mrb[0].mxu0 %v9313
    %v9508 = vpop.f32.mrb[0].mxu0
    %v9509 = vadd.f32 0.0, %v9508
    %v9510 = vpop.f32.mrb[0].mxu0
    %v9511 = vpop.f32.mrb[0].mxu0
    %v9512 = vpop.f32.mrb[0].mxu0
    %9513 = vdwg.mxu0
    %9514 = vmatprep.subr.bf16.mxu0 0
    %9515 = vmatpush1.bf16.msra.mxu0 %v9447
    %9516 = vmatprep.subr.bf16.mxu0 0
    %9517 = vmatpush1.bf16.msra.mxu0 %v9448
    %9518 = vmatprep.subr.bf16.mxu0 0
    %9519 = vmatpush1.bf16.msra.mxu0 %v9472
    %9520 = vmatprep.subr.bf16.mxu0 0
    %9521 = vmatpush1.bf16.msra.mxu0 0
    %9522 = vmatprep.subr.bf16.mxu0 0
    %9523 = vmatpush1.bf16.msra.mxu0 0
    %9524 = vmatprep.subr.bf16.mxu0 0
    %9525 = vmatpush1.bf16.msra.mxu0 0
    %9526 = vmatprep.subr.bf16.mxu0 0
    %9527 = vmatpush1.bf16.msra.mxu0 0
    %9528 = vmatprep.subr.bf16.mxu0 0
    %9529 = vmatpush1.bf16.msra.mxu0 0
    %9530 = vmatprep.subr.bf16.mxu0 0
    %9531 = vmatpush1.bf16.msra.mxu0 0
    %9532 = vmatprep.subr.bf16.mxu0 0
    %9533 = vmatpush1.bf16.msra.mxu0 0
    %9534 = vmatprep.subr.bf16.mxu0 0
    %9535 = vmatpush1.bf16.msra.mxu0 0
    %9536 = vmatprep.subr.bf16.mxu0 0
    %9537 = vmatpush1.bf16.msra.mxu0 0
    %9538 = vmatprep.subr.bf16.mxu0 0
    %9539 = vmatpush1.bf16.msra.mxu0 0
    %9540 = vmatprep.subr.bf16.mxu0 0
    %9541 = vmatpush1.bf16.msra.mxu0 0
    %9542 = vmatprep.subr.bf16.mxu0 0
    %9543 = vmatpush1.bf16.msra.mxu0 0
    %9544 = vmatprep.subr.bf16.mxu0 0
    %9545 = vmatpush1.bf16.msra.mxu0 0
    %9546 = vmatprep.mubr.bf16.mxu0 0
    %9547 = vmatmul.mubr.bf16.gmra.mrb[0].mxu0 %v9469
    %v9548 = vpop.f32.mrb[0].mxu0
    %v9549 = vadd.f32 %v9509, %v9548
    %v9550 = vpop.f32.mrb[0].mxu0
    %v9551 = vpop.f32.mrb[0].mxu0
    %v9552 = vpop.f32.mrb[0].mxu0
    %9553 = vdwg.mxu0
    %s9554 = scalar_lea.vmem [#allocation16], 2400
    %v9555 = vld [vmem:[%s9554] sm:$0xff]
    %v9556 = vld [vmem:[%s9554 + $0x8] sm:$0xf]
    %v9557 = vld [vmem:[%s9554 + $0xc] sm:$0xff]
    %v9558 = vld [vmem:[%s9554 + $0x14] sm:$0xf]
    %v9559 = vld [vmem:[%s9554 + $0x18] sm:$0xff]
    %v9560 = vld [vmem:[%s9554 + $0x20] sm:$0xf]
    %v9561 = vld [vmem:[%s9554 + $0x24] sm:$0xff]
    %v9562 = vld [vmem:[%s9554 + $0x2c] sm:$0xf]
    %v9563 = vld [vmem:[%s9554 + $0x30] sm:$0xff]
    %v9564 = vld [vmem:[%s9554 + $0x38] sm:$0xf]
    %v9565 = vld [vmem:[%s9554 + $0x3c] sm:$0xff]
    %v9566 = vld [vmem:[%s9554 + $0x44] sm:$0xf]
    %v9567 = vld [vmem:[%s9554 + $0x48] sm:$0xff]
    %v9568 = vld [vmem:[%s9554 + $0x50] sm:$0xf]
    %v9569 = vld [vmem:[%s9554 + $0x54] sm:$0xff]
    %v9570 = vld [vmem:[%s9554 + $0x5c] sm:$0xf]
    %v9571 = vld [vmem:[%s9554 + $0x60] sm:$0xff]
    %v9572 = vld [vmem:[%s9554 + $0x68] sm:$0xf]
    %v9573 = vld [vmem:[%s9554 + $0x6c] sm:$0xff]
    %v9574 = vld [vmem:[%s9554 + $0x74] sm:$0xf]
    %v9575 = vld [vmem:[%s9554 + $0x78] sm:$0xff]
    %v9576 = vld [vmem:[%s9554 + $0x80] sm:$0xf]
    %v9577 = vld [vmem:[%s9554 + $0x84] sm:$0xff]
    %v9578 = vld [vmem:[%s9554 + $0x8c] sm:$0xf]
    %v9579 = vld [vmem:[%s9554 + $0x90] sm:$0xff]
    %v9580 = vld [vmem:[%s9554 + $0x98] sm:$0xf]
    %v9581 = vld [vmem:[%s9554 + $0x9c] sm:$0xff]
    %v9582 = vld [vmem:[%s9554 + $0xa4] sm:$0xf]
    %v9583 = vld [vmem:[%s9554 + $0xa8] sm:$0xff]
    %v9584 = vld [vmem:[%s9554 + $0xb0] sm:$0xf]
    %v9585 = vld [vmem:[%s9554 + $0xb4] sm:$0xff]
    %v9586 = vld [vmem:[%s9554 + $0xbc] sm:$0xf]
    %v9587 = vld [vmem:[%s9554 + $0xc0] sm:$0xff]
    %v9588 = vld [vmem:[%s9554 + $0xc8] sm:$0xf]
    %v9589 = vld [vmem:[%s9554 + $0xcc] sm:$0xff]
    %v9590 = vld [vmem:[%s9554 + $0xd4] sm:$0xf]
    %v9591 = vld [vmem:[%s9554 + $0xd8] sm:$0xff]
    %v9592 = vld [vmem:[%s9554 + $0xe0] sm:$0xf]
    %v9593 = vld [vmem:[%s9554 + $0xe4] sm:$0xff]
    %v9594 = vld [vmem:[%s9554 + $0xec] sm:$0xf]
    %v9595 = vld [vmem:[%s9554 + $0xf0] sm:$0xff]
    %v9596 = vld [vmem:[%s9554 + $0xf8] sm:$0xf]
    %v9597 = vld [vmem:[%s9554 + $0xfc] sm:$0xff]
    %v9598 = vld [vmem:[%s9554 + $0x104] sm:$0xf]
    %v9599 = vld [vmem:[%s9554 + $0x108] sm:$0xff]
    %v9600 = vld [vmem:[%s9554 + $0x110] sm:$0xf]
    %v9601 = vld [vmem:[%s9554 + $0x114] sm:$0xff]
    %v9602 = vld [vmem:[%s9554 + $0x11c] sm:$0xf]
    %v9603 = vld [vmem:[%s9554 + $0x120] sm:$0xff]
    %v9604 = vld [vmem:[%s9554 + $0x128] sm:$0xf]
    %v9605 = vld [vmem:[%s9554 + $0x12c] sm:$0xff]
    %v9606 = vld [vmem:[%s9554 + $0x134] sm:$0xf]
    %v9607 = vld [vmem:[%s9554 + $0x138] sm:$0xff]
    %v9608 = vld [vmem:[%s9554 + $0x140] sm:$0xf]
    %v9609 = vld [vmem:[%s9554 + $0x144] sm:$0xff]
    %v9610 = vld [vmem:[%s9554 + $0x14c] sm:$0xf]
    %v9611 = vld [vmem:[%s9554 + $0x150] sm:$0xff]
    %v9612 = vld [vmem:[%s9554 + $0x158] sm:$0xf]
    %v9613 = vld [vmem:[%s9554 + $0x15c] sm:$0xff]
    %v9614 = vld [vmem:[%s9554 + $0x164] sm:$0xf]
    %v9615 = vld [vmem:[%s9554 + $0x168] sm:$0xff]
    %v9616 = vld [vmem:[%s9554 + $0x170] sm:$0xf]
    %v9617 = vld [vmem:[%s9554 + $0x174] sm:$0xff]
    %v9618 = vld [vmem:[%s9554 + $0x17c] sm:$0xf]
    %v9619 = vld [vmem:[%s9554 + $0x180] sm:$0xff]
    %v9620 = vld [vmem:[%s9554 + $0x188] sm:$0xf]
    %v9621 = vld [vmem:[%s9554 + $0x18c] sm:$0xff]
    %v9622 = vld [vmem:[%s9554 + $0x194] sm:$0xf]
    %v9623 = vld [vmem:[%s9554 + $0x198] sm:$0xff]
    %v9624 = vld [vmem:[%s9554 + $0x1a0] sm:$0xf]
    %v9625 = vld [vmem:[%s9554 + $0x1a4] sm:$0xff]
    %v9626 = vld [vmem:[%s9554 + $0x1ac] sm:$0xf]
    %v9627 = vld [vmem:[%s9554 + $0x1b0] sm:$0xff]
    %v9628 = vld [vmem:[%s9554 + $0x1b8] sm:$0xf]
    %v9629 = vld [vmem:[%s9554 + $0x1bc] sm:$0xff]
    %v9630 = vld [vmem:[%s9554 + $0x1c4] sm:$0xf]
    %v9631 = vld [vmem:[%s9554 + $0x1c8] sm:$0xff]
    %v9632 = vld [vmem:[%s9554 + $0x1d0] sm:$0xf]
    %v9633 = vld [vmem:[%s9554 + $0x1d4] sm:$0xff]
    %v9634 = vld [vmem:[%s9554 + $0x1dc] sm:$0xf]
    %v9635 = vld [vmem:[%s9554 + $0x1e0] sm:$0xff]
    %v9636 = vld [vmem:[%s9554 + $0x1e8] sm:$0xf]
    %v9637 = vld [vmem:[%s9554 + $0x1ec] sm:$0xff]
    %v9638 = vld [vmem:[%s9554 + $0x1f4] sm:$0xf]
    %v9639 = vld [vmem:[%s9554 + $0x1f8] sm:$0xff]
    %v9640 = vld [vmem:[%s9554 + $0x200] sm:$0xf]
    %v9641 = vld [vmem:[%s9554 + $0x204] sm:$0xff]
    %v9642 = vld [vmem:[%s9554 + $0x20c] sm:$0xf]
    %v9643 = vld [vmem:[%s9554 + $0x210] sm:$0xff]
    %v9644 = vld [vmem:[%s9554 + $0x218] sm:$0xf]
    %v9645 = vld [vmem:[%s9554 + $0x21c] sm:$0xff]
    %v9646 = vld [vmem:[%s9554 + $0x224] sm:$0xf]
    %v9647 = vld [vmem:[%s9554 + $0x228] sm:$0xff]
    %v9648 = vld [vmem:[%s9554 + $0x230] sm:$0xf]
    %v9649 = vld [vmem:[%s9554 + $0x234] sm:$0xff]
    %v9650 = vld [vmem:[%s9554 + $0x23c] sm:$0xf]
    %v9651 = vld [vmem:[%s9554 + $0x240] sm:$0xff]
    %v9652 = vld [vmem:[%s9554 + $0x248] sm:$0xf]
    %v9653 = vld [vmem:[%s9554 + $0x24c] sm:$0xff]
    %v9654 = vld [vmem:[%s9554 + $0x254] sm:$0xf]
    %s9655 = scalar_lea.vmem [#allocation18], 12
    %v9656 = vld [vmem:[%s9655] sm:$0x7]
    %v9658 = vlaneseq
    %v9659 = vshrl.u32 %v9658, 7
    %v9660 = vsub.s32 0, %v9659
    %v9661 = vrot.slane %v9656, %v9660
    %v9662 = vlaneseq
    %v9663 = vshrl.u32 %v9662, 7
    %v9664 = vsub.s32 1, %v9663
    %v9665 = vrot.slane %v9656, %v9664
    %v9666 = vlaneseq
    %v9667 = vshrl.u32 %v9666, 7
    %v9668 = vsub.s32 2, %v9667
    %v9669 = vrot.slane %v9656, %v9668
    %9676 = vrot.lane.b32.xlu0 %v5777, 64
    %v9677 = vpop.permute.xlu0 %9676
    %9678 = vrot.lane.b32.xlu0 %v5778, 64
    %v9679 = vpop.permute.xlu0 %9678
    %9680 = vrot.lane.b32.xlu0 %v5779, 64
    %v9681 = vpop.permute.xlu0 %9680
    %9682 = vrot.lane.b32.xlu0 %v5780, 64
    %v9683 = vpop.permute.xlu0 %9682
    %vm9684 = vcmask 523264
    %v9685 = vsel %vm9684, %v9677, %v9679
    %v9686 = vsel %vm9684, %v9679, %v9681
    %v9687 = vsel %vm9684, %v9681, %v9683
    %v9791 = vunpack.c.l.b16 %v9555
    %v9792 = vunpack.c.h.b16 %v9555
    %v9793 = vunpack.c.l.b16 %v9556
    %v9794 = vunpack.c.l.b16 %v9557
    %v9795 = vunpack.c.h.b16 %v9557
    %v9796 = vunpack.c.l.b16 %v9558
    %v9797 = vunpack.c.l.b16 %v9559
    %v9798 = vunpack.c.h.b16 %v9559
    %v9799 = vunpack.c.l.b16 %v9560
    %v9800 = vunpack.c.l.b16 %v9561
    %v9801 = vunpack.c.h.b16 %v9561
    %v9802 = vunpack.c.l.b16 %v9562
    %v9803 = vunpack.c.l.b16 %v9563
    %v9804 = vunpack.c.h.b16 %v9563
    %v9805 = vunpack.c.l.b16 %v9564
    %v9806 = vunpack.c.l.b16 %v9565
    %v9807 = vunpack.c.h.b16 %v9565
    %v9808 = vunpack.c.l.b16 %v9566
    %v9809 = vunpack.c.l.b16 %v9567
    %v9810 = vunpack.c.h.b16 %v9567
    %v9811 = vunpack.c.l.b16 %v9568
    %v9812 = vunpack.c.l.b16 %v9569
    %v9813 = vunpack.c.h.b16 %v9569
    %v9814 = vunpack.c.l.b16 %v9570
    %v9815 = vunpack.c.l.b16 %v9571
    %v9816 = vunpack.c.h.b16 %v9571
    %v9817 = vunpack.c.l.b16 %v9572
    %v9818 = vunpack.c.l.b16 %v9573
    %v9819 = vunpack.c.h.b16 %v9573
    %v9820 = vunpack.c.l.b16 %v9574
    %v9821 = vunpack.c.l.b16 %v9575
    %v9822 = vunpack.c.h.b16 %v9575
    %v9823 = vunpack.c.l.b16 %v9576
    %v9824 = vunpack.c.l.b16 %v9577
    %v9825 = vunpack.c.h.b16 %v9577
    %v9826 = vunpack.c.l.b16 %v9578
    %v9827 = vunpack.c.l.b16 %v9579
    %v9828 = vunpack.c.h.b16 %v9579
    %v9829 = vunpack.c.l.b16 %v9580
    %v9830 = vunpack.c.l.b16 %v9581
    %v9831 = vunpack.c.h.b16 %v9581
    %v9832 = vunpack.c.l.b16 %v9582
    %v9833 = vunpack.c.l.b16 %v9583
    %v9834 = vunpack.c.h.b16 %v9583
    %v9835 = vunpack.c.l.b16 %v9584
    %v9836 = vunpack.c.l.b16 %v9585
    %v9837 = vunpack.c.h.b16 %v9585
    %v9838 = vunpack.c.l.b16 %v9586
    %v9839 = vunpack.c.l.b16 %v9587
    %v9840 = vunpack.c.h.b16 %v9587
    %v9841 = vunpack.c.l.b16 %v9588
    %v9842 = vunpack.c.l.b16 %v9589
    %v9843 = vunpack.c.h.b16 %v9589
    %v9844 = vunpack.c.l.b16 %v9590
    %v9845 = vunpack.c.l.b16 %v9591
    %v9846 = vunpack.c.h.b16 %v9591
    %v9847 = vunpack.c.l.b16 %v9592
    %v9848 = vunpack.c.l.b16 %v9593
    %v9849 = vunpack.c.h.b16 %v9593
    %v9850 = vunpack.c.l.b16 %v9594
    %v9851 = vunpack.c.l.b16 %v9595
    %v9852 = vunpack.c.h.b16 %v9595
    %v9853 = vunpack.c.l.b16 %v9596
    %v9854 = vunpack.c.l.b16 %v9597
    %v9855 = vunpack.c.h.b16 %v9597
    %v9856 = vunpack.c.l.b16 %v9598
    %v9857 = vunpack.c.l.b16 %v9599
    %v9858 = vunpack.c.h.b16 %v9599
    %v9859 = vunpack.c.l.b16 %v9600
    %v9860 = vunpack.c.l.b16 %v9601
    %v9861 = vunpack.c.h.b16 %v9601
    %v9862 = vunpack.c.l.b16 %v9602
    %v9863 = vunpack.c.l.b16 %v9603
    %v9864 = vunpack.c.h.b16 %v9603
    %v9865 = vunpack.c.l.b16 %v9604
    %v9866 = vunpack.c.l.b16 %v9605
    %v9867 = vunpack.c.h.b16 %v9605
    %v9868 = vunpack.c.l.b16 %v9606
    %v9869 = vunpack.c.l.b16 %v9607
    %v9870 = vunpack.c.h.b16 %v9607
    %v9871 = vunpack.c.l.b16 %v9608
    %v9872 = vunpack.c.l.b16 %v9609
    %v9873 = vunpack.c.h.b16 %v9609
    %v9874 = vunpack.c.l.b16 %v9610
    %v9875 = vunpack.c.l.b16 %v9611
    %v9876 = vunpack.c.h.b16 %v9611
    %v9877 = vunpack.c.l.b16 %v9612
    %v9878 = vunpack.c.l.b16 %v9613
    %v9879 = vunpack.c.h.b16 %v9613
    %v9880 = vunpack.c.l.b16 %v9614
    %v9881 = vunpack.c.l.b16 %v9615
    %v9882 = vunpack.c.h.b16 %v9615
    %v9883 = vunpack.c.l.b16 %v9616
    %v9884 = vunpack.c.l.b16 %v9617
    %v9885 = vunpack.c.h.b16 %v9617
    %v9886 = vunpack.c.l.b16 %v9618
    %v9887 = vunpack.c.l.b16 %v9619
    %v9888 = vunpack.c.h.b16 %v9619
    %v9889 = vunpack.c.l.b16 %v9620
    %v9890 = vunpack.c.l.b16 %v9621
    %v9891 = vunpack.c.h.b16 %v9621
    %v9892 = vunpack.c.l.b16 %v9622
    %v9893 = vunpack.c.l.b16 %v9623
    %v9894 = vunpack.c.h.b16 %v9623
    %v9895 = vunpack.c.l.b16 %v9624
    %v9896 = vunpack.c.l.b16 %v9625
    %v9897 = vunpack.c.h.b16 %v9625
    %v9898 = vunpack.c.l.b16 %v9626
    %v9899 = vunpack.c.l.b16 %v9627
    %v9900 = vunpack.c.h.b16 %v9627
    %v9901 = vunpack.c.l.b16 %v9628
    %v9902 = vunpack.c.l.b16 %v9629
    %v9903 = vunpack.c.h.b16 %v9629
    %v9904 = vunpack.c.l.b16 %v9630
    %v9905 = vunpack.c.l.b16 %v9631
    %v9906 = vunpack.c.h.b16 %v9631
    %v9907 = vunpack.c.l.b16 %v9632
    %v9908 = vunpack.c.l.b16 %v9633
    %v9909 = vunpack.c.h.b16 %v9633
    %v9910 = vunpack.c.l.b16 %v9634
    %v9911 = vunpack.c.l.b16 %v9635
    %v9912 = vunpack.c.h.b16 %v9635
    %v9913 = vunpack.c.l.b16 %v9636
    %v9914 = vunpack.c.l.b16 %v9637
    %v9915 = vunpack.c.h.b16 %v9637
    %v9916 = vunpack.c.l.b16 %v9638
    %v9917 = vunpack.c.l.b16 %v9639
    %v9918 = vunpack.c.h.b16 %v9639
    %v9919 = vunpack.c.l.b16 %v9640
    %v9920 = vunpack.c.l.b16 %v9641
    %v9921 = vunpack.c.h.b16 %v9641
    %v9922 = vunpack.c.l.b16 %v9642
    %v9923 = vunpack.c.l.b16 %v9643
    %v9924 = vunpack.c.h.b16 %v9643
    %v9925 = vunpack.c.l.b16 %v9644
    %v9926 = vunpack.c.l.b16 %v9645
    %v9927 = vunpack.c.h.b16 %v9645
    %v9928 = vunpack.c.l.b16 %v9646
    %v9929 = vunpack.c.l.b16 %v9647
    %v9930 = vunpack.c.h.b16 %v9647
    %v9931 = vunpack.c.l.b16 %v9648
    %v9932 = vunpack.c.l.b16 %v9649
    %v9933 = vunpack.c.h.b16 %v9649
    %v9934 = vunpack.c.l.b16 %v9650
    %v9935 = vunpack.c.l.b16 %v9651
    %v9936 = vunpack.c.h.b16 %v9651
    %v9937 = vunpack.c.l.b16 %v9652
    %v9938 = vunpack.c.l.b16 %v9653
    %v9939 = vunpack.c.h.b16 %v9653
    %v9940 = vunpack.c.l.b16 %v9654
    %v9941 = vpack.c.b16 %v9794, %v9791
    %v9942 = vpack.c.b16 %v9795, %v9792
    %v9943 = vpack.c.b16 %v9796, %v9793
    %v9944 = vpack.c.b16 %v9800, %v9797
    %v9945 = vpack.c.b16 %v9801, %v9798
    %v9946 = vpack.c.b16 %v9802, %v9799
    %v9947 = vpack.c.b16 %v9806, %v9803
    %v9948 = vpack.c.b16 %v9807, %v9804
    %v9949 = vpack.c.b16 %v9808, %v9805
    %v9950 = vpack.c.b16 %v9812, %v9809
    %v9951 = vpack.c.b16 %v9813, %v9810
    %v9952 = vpack.c.b16 %v9814, %v9811
    %v9953 = vpack.c.b16 %v9818, %v9815
    %v9954 = vpack.c.b16 %v9819, %v9816
    %v9955 = vpack.c.b16 %v9820, %v9817
    %v9956 = vpack.c.b16 %v9824, %v9821
    %v9957 = vpack.c.b16 %v9825, %v9822
    %v9958 = vpack.c.b16 %v9826, %v9823
    %v9959 = vpack.c.b16 %v9830, %v9827
    %v9960 = vpack.c.b16 %v9831, %v9828
    %v9961 = vpack.c.b16 %v9832, %v9829
    %v9962 = vpack.c.b16 %v9836, %v9833
    %v9963 = vpack.c.b16 %v9837, %v9834
    %v9964 = vpack.c.b16 %v9838, %v9835
    %v9965 = vpack.c.b16 %v9842, %v9839
    %v9966 = vpack.c.b16 %v9843, %v9840
    %v9967 = vpack.c.b16 %v9844, %v9841
    %v9968 = vpack.c.b16 %v9848, %v9845
    %v9969 = vpack.c.b16 %v9849, %v9846
    %v9970 = vpack.c.b16 %v9850, %v9847
    %v9971 = vpack.c.b16 %v9854, %v9851
    %v9972 = vpack.c.b16 %v9855, %v9852
    %v9973 = vpack.c.b16 %v9856, %v9853
    %v9974 = vpack.c.b16 %v9860, %v9857
    %v9975 = vpack.c.b16 %v9861, %v9858
    %v9976 = vpack.c.b16 %v9862, %v9859
    %v9977 = vpack.c.b16 %v9866, %v9863
    %v9978 = vpack.c.b16 %v9867, %v9864
    %v9979 = vpack.c.b16 %v9868, %v9865
    %v9980 = vpack.c.b16 %v9872, %v9869
    %v9981 = vpack.c.b16 %v9873, %v9870
    %v9982 = vpack.c.b16 %v9874, %v9871
    %v9983 = vpack.c.b16 %v9878, %v9875
    %v9984 = vpack.c.b16 %v9879, %v9876
    %v9985 = vpack.c.b16 %v9880, %v9877
    %v9986 = vpack.c.b16 %v9884, %v9881
    %v9987 = vpack.c.b16 %v9885, %v9882
    %v9988 = vpack.c.b16 %v9886, %v9883
    %v9989 = vpack.c.b16 %v9890, %v9887
    %v9990 = vpack.c.b16 %v9891, %v9888
    %v9991 = vpack.c.b16 %v9892, %v9889
    %v9992 = vpack.c.b16 %v9896, %v9893
    %v9993 = vpack.c.b16 %v9897, %v9894
    %v9994 = vpack.c.b16 %v9898, %v9895
    %v9995 = vpack.c.b16 %v9902, %v9899
    %v9996 = vpack.c.b16 %v9903, %v9900
    %v9997 = vpack.c.b16 %v9904, %v9901
    %v9998 = vpack.c.b16 %v9908, %v9905
    %v9999 = vpack.c.b16 %v9909, %v9906
    %v10000 = vpack.c.b16 %v9910, %v9907
    %v10001 = vpack.c.b16 %v9914, %v9911
    %v10002 = vpack.c.b16 %v9915, %v9912
    %v10003 = vpack.c.b16 %v9916, %v9913
    %v10004 = vpack.c.b16 %v9920, %v9917
    %v10005 = vpack.c.b16 %v9921, %v9918
    %v10006 = vpack.c.b16 %v9922, %v9919
    %v10007 = vpack.c.b16 %v9926, %v9923
    %v10008 = vpack.c.b16 %v9927, %v9924
    %v10009 = vpack.c.b16 %v9928, %v9925
    %v10010 = vpack.c.b16 %v9932, %v9929
    %v10011 = vpack.c.b16 %v9933, %v9930
    %v10012 = vpack.c.b16 %v9934, %v9931
    %v10013 = vpack.c.b16 %v9938, %v9935
    %v10014 = vpack.c.b16 %v9939, %v9936
    %v10015 = vpack.c.b16 %v9940, %v9937
    %v10092 = vsel %vm244, %v9683, 0
    %10094 = vmatprep.subr.bf16.mxu0 %v9942
    %10095 = vmatpush1.bf16.msra.mxu0 %v9941
    %10096 = vmatprep.subr.bf16.mxu0 %v9945
    %10097 = vmatpush1.bf16.msra.mxu0 %v9944
    %10098 = vmatprep.subr.bf16.mxu0 %v9948
    %10099 = vmatpush1.bf16.msra.mxu0 %v9947
    %10100 = vmatprep.subr.bf16.mxu0 %v9951
    %10101 = vmatpush1.bf16.msra.mxu0 %v9950
    %10102 = vmatprep.subr.bf16.mxu0 %v9954
    %10103 = vmatpush1.bf16.msra.mxu0 %v9953
    %10104 = vmatprep.subr.bf16.mxu0 %v9957
    %10105 = vmatpush1.bf16.msra.mxu0 %v9956
    %10106 = vmatprep.subr.bf16.mxu0 %v9960
    %10107 = vmatpush1.bf16.msra.mxu0 %v9959
    %10108 = vmatprep.subr.bf16.mxu0 %v9963
    %10109 = vmatpush1.bf16.msra.mxu0 %v9962
    %10110 = vmatprep.subr.bf16.mxu0 %v9966
    %10111 = vmatpush1.bf16.msra.mxu0 %v9965
    %10112 = vmatprep.subr.bf16.mxu0 %v9969
    %10113 = vmatpush1.bf16.msra.mxu0 %v9968
    %10114 = vmatprep.subr.bf16.mxu0 %v9972
    %10115 = vmatpush1.bf16.msra.mxu0 %v9971
    %10116 = vmatprep.subr.bf16.mxu0 %v9975
    %10117 = vmatpush1.bf16.msra.mxu0 %v9974
    %10118 = vmatprep.subr.bf16.mxu0 %v9978
    %10119 = vmatpush1.bf16.msra.mxu0 %v9977
    %10120 = vmatprep.subr.bf16.mxu0 %v9981
    %10121 = vmatpush1.bf16.msra.mxu0 %v9980
    %10122 = vmatprep.subr.bf16.mxu0 %v9984
    %10123 = vmatpush1.bf16.msra.mxu0 %v9983
    %10124 = vmatprep.subr.bf16.mxu0 %v9987
    %10125 = vmatpush1.bf16.msra.mxu0 %v9986
    %10126 = vmatprep.mubr.bf16.mxu0 %v9686
    %10127 = vmatmul.mubr.bf16.gmra.mrb[0].mxu0 %v9685
    %v10128 = vpop.f32.mrb[0].mxu0
    %v10129 = vadd.f32 %v9661, %v10128
    %v10130 = vpop.f32.mrb[0].mxu0
    %v10131 = vadd.f32 %v9665, %v10130
    %v10132 = vpop.f32.mrb[0].mxu0
    %v10133 = vpop.f32.mrb[0].mxu0
    %10134 = vdwg.mxu0
    %10135 = vmatprep.subr.bf16.mxu0 %v9990
    %10136 = vmatpush1.bf16.msra.mxu0 %v9989
    %10137 = vmatprep.subr.bf16.mxu0 %v9993
    %10138 = vmatpush1.bf16.msra.mxu0 %v9992
    %10139 = vmatprep.subr.bf16.mxu0 %v9996
    %10140 = vmatpush1.bf16.msra.mxu0 %v9995
    %10141 = vmatprep.subr.bf16.mxu0 %v9999
    %10142 = vmatpush1.bf16.msra.mxu0 %v9998
    %10143 = vmatprep.subr.bf16.mxu0 %v10002
    %10144 = vmatpush1.bf16.msra.mxu0 %v10001
    %10145 = vmatprep.subr.bf16.mxu0 %v10005
    %10146 = vmatpush1.bf16.msra.mxu0 %v10004
    %10147 = vmatprep.subr.bf16.mxu0 %v10008
    %10148 = vmatpush1.bf16.msra.mxu0 %v10007
    %10149 = vmatprep.subr.bf16.mxu0 %v10011
    %10150 = vmatpush1.bf16.msra.mxu0 %v10010
    %10151 = vmatprep.subr.bf16.mxu0 %v10014
    %10152 = vmatpush1.bf16.msra.mxu0 %v10013
    %10153 = vmatprep.subr.bf16.mxu0 0
    %10154 = vmatpush1.bf16.msra.mxu0 0
    %10155 = vmatprep.subr.bf16.mxu0 0
    %10156 = vmatpush1.bf16.msra.mxu0 0
    %10157 = vmatprep.subr.bf16.mxu0 0
    %10158 = vmatpush1.bf16.msra.mxu0 0
    %10159 = vmatprep.subr.bf16.mxu0 0
    %10160 = vmatpush1.bf16.msra.mxu0 0
    %10161 = vmatprep.subr.bf16.mxu0 0
    %10162 = vmatpush1.bf16.msra.mxu0 0
    %10163 = vmatprep.subr.bf16.mxu0 0
    %10164 = vmatpush1.bf16.msra.mxu0 0
    %10165 = vmatprep.subr.bf16.mxu0 0
    %10166 = vmatpush1.bf16.msra.mxu0 0
    %10167 = vmatprep.mubr.bf16.mxu0 %v10092
    %10168 = vmatmul.mubr.bf16.gmra.mrb[0].mxu0 %v9687
    %v10169 = vpop.f32.mrb[0].mxu0
    %v10170 = vadd.f32 %v10129, %v10169
    %v10171 = vpop.f32.mrb[0].mxu0
    %v10172 = vadd.f32 %v10131, %v10171
    %v10173 = vpop.f32.mrb[0].mxu0
    %v10174 = vpop.f32.mrb[0].mxu0
    %10175 = vdwg.mxu0
    %10176 = vmatprep.subr.bf16.mxu0 0
    %10177 = vmatpush1.bf16.msra.mxu0 %v9943
    %10178 = vmatprep.subr.bf16.mxu0 0
    %10179 = vmatpush1.bf16.msra.mxu0 %v9946
    %10180 = vmatprep.subr.bf16.mxu0 0
    %10181 = vmatpush1.bf16.msra.mxu0 %v9949
    %10182 = vmatprep.subr.bf16.mxu0 0
    %10183 = vmatpush1.bf16.msra.mxu0 %v9952
    %10184 = vmatprep.subr.bf16.mxu0 0
    %10185 = vmatpush1.bf16.msra.mxu0 %v9955
    %10186 = vmatprep.subr.bf16.mxu0 0
    %10187 = vmatpush1.bf16.msra.mxu0 %v9958
    %10188 = vmatprep.subr.bf16.mxu0 0
    %10189 = vmatpush1.bf16.msra.mxu0 %v9961
    %10190 = vmatprep.subr.bf16.mxu0 0
    %10191 = vmatpush1.bf16.msra.mxu0 %v9964
    %10192 = vmatprep.subr.bf16.mxu0 0
    %10193 = vmatpush1.bf16.msra.mxu0 %v9967
    %10194 = vmatprep.subr.bf16.mxu0 0
    %10195 = vmatpush1.bf16.msra.mxu0 %v9970
    %10196 = vmatprep.subr.bf16.mxu0 0
    %10197 = vmatpush1.bf16.msra.mxu0 %v9973
    %10198 = vmatprep.subr.bf16.mxu0 0
    %10199 = vmatpush1.bf16.msra.mxu0 %v9976
    %10200 = vmatprep.subr.bf16.mxu0 0
    %10201 = vmatpush1.bf16.msra.mxu0 %v9979
    %10202 = vmatprep.subr.bf16.mxu0 0
    %10203 = vmatpush1.bf16.msra.mxu0 %v9982
    %10204 = vmatprep.subr.bf16.mxu0 0
    %10205 = vmatpush1.bf16.msra.mxu0 %v9985
    %10206 = vmatprep.subr.bf16.mxu0 0
    %10207 = vmatpush1.bf16.msra.mxu0 %v9988
    %10208 = vmatprep.mubr.bf16.mxu0 %v9686
    %10209 = vmatmul.mubr.bf16.gmra.mrb[0].mxu0 %v9685
    %v10210 = vpop.f32.mrb[0].mxu0
    %v10211 = vadd.f32 %v9669, %v10210
    %v10212 = vpop.f32.mrb[0].mxu0
    %v10213 = vpop.f32.mrb[0].mxu0
    %v10214 = vpop.f32.mrb[0].mxu0
    %10215 = vdwg.mxu0
    %10216 = vmatprep.subr.bf16.mxu0 0
    %10217 = vmatpush1.bf16.msra.mxu0 %v9991
    %10218 = vmatprep.subr.bf16.mxu0 0
    %10219 = vmatpush1.bf16.msra.mxu0 %v9994
    %10220 = vmatprep.subr.bf16.mxu0 0
    %10221 = vmatpush1.bf16.msra.mxu0 %v9997
    %10222 = vmatprep.subr.bf16.mxu0 0
    %10223 = vmatpush1.bf16.msra.mxu0 %v10000
    %10224 = vmatprep.subr.bf16.mxu0 0
    %10225 = vmatpush1.bf16.msra.mxu0 %v10003
    %10226 = vmatprep.subr.bf16.mxu0 0
    %10227 = vmatpush1.bf16.msra.mxu0 %v10006
    %10228 = vmatprep.subr.bf16.mxu0 0
    %10229 = vmatpush1.bf16.msra.mxu0 %v10009
    %10230 = vmatprep.subr.bf16.mxu0 0
    %10231 = vmatpush1.bf16.msra.mxu0 %v10012
    %10232 = vmatprep.subr.bf16.mxu0 0
    %10233 = vmatpush1.bf16.msra.mxu0 %v10015
    %10234 = vmatprep.subr.bf16.mxu0 0
    %10235 = vmatpush1.bf16.msra.mxu0 0
    %10236 = vmatprep.subr.bf16.mxu0 0
    %10237 = vmatpush1.bf16.msra.mxu0 0
    %10238 = vmatprep.subr.bf16.mxu0 0
    %10239 = vmatpush1.bf16.msra.mxu0 0
    %10240 = vmatprep.subr.bf16.mxu0 0
    %10241 = vmatpush1.bf16.msra.mxu0 0
    %10242 = vmatprep.subr.bf16.mxu0 0
    %10243 = vmatpush1.bf16.msra.mxu0 0
    %10244 = vmatprep.subr.bf16.mxu0 0
    %10245 = vmatpush1.bf16.msra.mxu0 0
    %10246 = vmatprep.subr.bf16.mxu0 0
    %10247 = vmatpush1.bf16.msra.mxu0 0
    %10248 = vmatprep.mubr.bf16.mxu0 %v10092
    %10249 = vmatmul.mubr.bf16.gmra.mrb[0].mxu0 %v9687
    %v10250 = vpop.f32.mrb[0].mxu0
    %v10251 = vadd.f32 %v10211, %v10250
    %v10252 = vpop.f32.mrb[0].mxu0
    %v10253 = vpop.f32.mrb[0].mxu0
    %v10254 = vpop.f32.mrb[0].mxu0
    %10255 = vdwg.mxu0
    %v10256 = vmax.f32 %v10170, 0.0
    %v10257 = vmax.f32 %v10172, 0.0
    %v10258 = vmax.f32 %v10251, 0.0
    %v10259 = vpack.c.bf16 %v10256, %v10256
    %v10260 = vpack.c.bf16 %v10257, %v10257
    %v10261 = vpack.c.bf16 %v10258, %v10258
    %s10262 = scalar_lea.vmem %s11, 608
    %v10263 = vld [vmem:[%s10262] sm:$0xf]
    %v10264 = vld [vmem:[%s10262 + $0x4] sm:$0xf]
    %v10265 = vld [vmem:[%s10262 + $0x8] sm:$0xf]
    %v10266 = vld [vmem:[%s10262 + $0xc] sm:$0xf]
    %v10267 = vld [vmem:[%s10262 + $0x10] sm:$0xf]
    %v10268 = vld [vmem:[%s10262 + $0x14] sm:$0xf]
    %v10269 = vld [vmem:[%s10262 + $0x18] sm:$0xf]
    %v10270 = vld [vmem:[%s10262 + $0x1c] sm:$0xf]
    %v10271 = vld [vmem:[%s10262 + $0x20] sm:$0xf]
    %v10272 = vld [vmem:[%s10262 + $0x24] sm:$0xf]
    %v10273 = vld [vmem:[%s10262 + $0x28] sm:$0xf]
    %v10274 = vld [vmem:[%s10262 + $0x2c] sm:$0xf]
    %v10275 = vld [vmem:[%s10262 + $0x30] sm:$0xf]
    %v10276 = vld [vmem:[%s10262 + $0x34] sm:$0xf]
    %v10277 = vld [vmem:[%s10262 + $0x38] sm:$0xf]
    %v10278 = vld [vmem:[%s10262 + $0x3c] sm:$0xf]
    %v10279 = vld [vmem:[%s10262 + $0x40] sm:$0xf]
    %v10280 = vld [vmem:[%s10262 + $0x44] sm:$0xf]
    %v10281 = vld [vmem:[%s10262 + $0x48] sm:$0xf]
    %v10282 = vld [vmem:[%s10262 + $0x4c] sm:$0xf]
    %v10283 = vld [vmem:[%s10262 + $0x50] sm:$0xf]
    %v10284 = vld [vmem:[%s10262 + $0x54] sm:$0xf]
    %v10285 = vld [vmem:[%s10262 + $0x58] sm:$0xf]
    %v10286 = vld [vmem:[%s10262 + $0x5c] sm:$0xf]
    %v10287 = vld [vmem:[%s10262 + $0x60] sm:$0xf]
    %v10288 = vld [vmem:[%s10262 + $0x64] sm:$0xf]
    %v10289 = vld [vmem:[%s10262 + $0x68] sm:$0xf]
    %v10290 = vld [vmem:[%s10262 + $0x6c] sm:$0xf]
    %v10291 = vld [vmem:[%s10262 + $0x70] sm:$0xf]
    %v10292 = vld [vmem:[%s10262 + $0x74] sm:$0xf]
    %v10293 = vld [vmem:[%s10262 + $0x78] sm:$0xf]
    %v10294 = vld [vmem:[%s10262 + $0x7c] sm:$0xf]
    %v10295 = vld [vmem:[%s10262 + $0x80] sm:$0xf]
    %v10296 = vld [vmem:[%s10262 + $0x84] sm:$0xf]
    %v10297 = vld [vmem:[%s10262 + $0x88] sm:$0xf]
    %v10298 = vld [vmem:[%s10262 + $0x8c] sm:$0xf]
    %v10299 = vld [vmem:[%s10262 + $0x90] sm:$0xf]
    %v10300 = vld [vmem:[%s10262 + $0x94] sm:$0x3]
    %v10339 = vunpack.c.l.b16 %v10263
    %v10340 = vunpack.c.l.b16 %v10264
    %v10341 = vunpack.c.l.b16 %v10265
    %v10342 = vunpack.c.l.b16 %v10266
    %v10343 = vunpack.c.l.b16 %v10267
    %v10344 = vunpack.c.l.b16 %v10268
    %v10345 = vunpack.c.l.b16 %v10269
    %v10346 = vunpack.c.l.b16 %v10270
    %v10347 = vunpack.c.l.b16 %v10271
    %v10348 = vunpack.c.l.b16 %v10272
    %v10349 = vunpack.c.l.b16 %v10273
    %v10350 = vunpack.c.l.b16 %v10274
    %v10351 = vunpack.c.l.b16 %v10275
    %v10352 = vunpack.c.l.b16 %v10276
    %v10353 = vunpack.c.l.b16 %v10277
    %v10354 = vunpack.c.l.b16 %v10278
    %v10355 = vunpack.c.l.b16 %v10279
    %v10356 = vunpack.c.l.b16 %v10280
    %v10357 = vunpack.c.l.b16 %v10281
    %v10358 = vunpack.c.l.b16 %v10282
    %v10359 = vunpack.c.l.b16 %v10283
    %v10360 = vunpack.c.l.b16 %v10284
    %v10361 = vunpack.c.l.b16 %v10285
    %v10362 = vunpack.c.l.b16 %v10286
    %v10363 = vunpack.c.l.b16 %v10287
    %v10364 = vunpack.c.l.b16 %v10288
    %v10365 = vunpack.c.l.b16 %v10289
    %v10366 = vunpack.c.l.b16 %v10290
    %v10367 = vunpack.c.l.b16 %v10291
    %v10368 = vunpack.c.l.b16 %v10292
    %v10369 = vunpack.c.l.b16 %v10293
    %v10370 = vunpack.c.l.b16 %v10294
    %v10371 = vunpack.c.l.b16 %v10295
    %v10372 = vunpack.c.l.b16 %v10296
    %v10373 = vunpack.c.l.b16 %v10297
    %v10374 = vunpack.c.l.b16 %v10298
    %v10375 = vunpack.c.l.b16 %v10299
    %v10376 = vunpack.c.l.b16 %v10300
    %v10377 = vpack.c.b16 %v10340, %v10339
    %v10378 = vpack.c.b16 %v10342, %v10341
    %v10379 = vpack.c.b16 %v10344, %v10343
    %v10380 = vpack.c.b16 %v10346, %v10345
    %v10381 = vpack.c.b16 %v10348, %v10347
    %v10382 = vpack.c.b16 %v10350, %v10349
    %v10383 = vpack.c.b16 %v10352, %v10351
    %v10384 = vpack.c.b16 %v10354, %v10353
    %v10385 = vpack.c.b16 %v10356, %v10355
    %v10386 = vpack.c.b16 %v10358, %v10357
    %v10387 = vpack.c.b16 %v10360, %v10359
    %v10388 = vpack.c.b16 %v10362, %v10361
    %v10389 = vpack.c.b16 %v10364, %v10363
    %v10390 = vpack.c.b16 %v10366, %v10365
    %v10391 = vpack.c.b16 %v10368, %v10367
    %v10392 = vpack.c.b16 %v10370, %v10369
    %v10393 = vpack.c.b16 %v10372, %v10371
    %v10394 = vpack.c.b16 %v10374, %v10373
    %v10395 = vpack.c.b16 %v10376, %v10375
    %v10415 = vsel %vm1420, %v10261, 0
    %v10418 = vsel %vm1424, %v10395, 0
    %10420 = vmatprep.subr.bf16.mxu0 0
    %10421 = vmatpush1.bf16.msra.mxu0 %v10377
    %10422 = vmatprep.subr.bf16.mxu0 0
    %10423 = vmatpush1.bf16.msra.mxu0 %v10378
    %10424 = vmatprep.subr.bf16.mxu0 0
    %10425 = vmatpush1.bf16.msra.mxu0 %v10379
    %10426 = vmatprep.subr.bf16.mxu0 0
    %10427 = vmatpush1.bf16.msra.mxu0 %v10380
    %10428 = vmatprep.subr.bf16.mxu0 0
    %10429 = vmatpush1.bf16.msra.mxu0 %v10381
    %10430 = vmatprep.subr.bf16.mxu0 0
    %10431 = vmatpush1.bf16.msra.mxu0 %v10382
    %10432 = vmatprep.subr.bf16.mxu0 0
    %10433 = vmatpush1.bf16.msra.mxu0 %v10383
    %10434 = vmatprep.subr.bf16.mxu0 0
    %10435 = vmatpush1.bf16.msra.mxu0 %v10384
    %10436 = vmatprep.subr.bf16.mxu0 0
    %10437 = vmatpush1.bf16.msra.mxu0 %v10385
    %10438 = vmatprep.subr.bf16.mxu0 0
    %10439 = vmatpush1.bf16.msra.mxu0 %v10386
    %10440 = vmatprep.subr.bf16.mxu0 0
    %10441 = vmatpush1.bf16.msra.mxu0 %v10387
    %10442 = vmatprep.subr.bf16.mxu0 0
    %10443 = vmatpush1.bf16.msra.mxu0 %v10388
    %10444 = vmatprep.subr.bf16.mxu0 0
    %10445 = vmatpush1.bf16.msra.mxu0 %v10389
    %10446 = vmatprep.subr.bf16.mxu0 0
    %10447 = vmatpush1.bf16.msra.mxu0 %v10390
    %10448 = vmatprep.subr.bf16.mxu0 0
    %10449 = vmatpush1.bf16.msra.mxu0 %v10391
    %10450 = vmatprep.subr.bf16.mxu0 0
    %10451 = vmatpush1.bf16.msra.mxu0 %v10392
    %10452 = vmatprep.mubr.bf16.mxu0 %v10260
    %10453 = vmatmul.mubr.bf16.gmra.mrb[0].mxu0 %v10259
    %v10454 = vpop.f32.mrb[0].mxu0
    %v10455 = vadd.f32 0.0, %v10454
    %v10456 = vpop.f32.mrb[0].mxu0
    %v10457 = vpop.f32.mrb[0].mxu0
    %v10458 = vpop.f32.mrb[0].mxu0
    %10459 = vdwg.mxu0
    %10460 = vmatprep.subr.bf16.mxu0 0
    %10461 = vmatpush1.bf16.msra.mxu0 %v10393
    %10462 = vmatprep.subr.bf16.mxu0 0
    %10463 = vmatpush1.bf16.msra.mxu0 %v10394
    %10464 = vmatprep.subr.bf16.mxu0 0
    %10465 = vmatpush1.bf16.msra.mxu0 %v10418
    %10466 = vmatprep.subr.bf16.mxu0 0
    %10467 = vmatpush1.bf16.msra.mxu0 0
    %10468 = vmatprep.subr.bf16.mxu0 0
    %10469 = vmatpush1.bf16.msra.mxu0 0
    %10470 = vmatprep.subr.bf16.mxu0 0
    %10471 = vmatpush1.bf16.msra.mxu0 0
    %10472 = vmatprep.subr.bf16.mxu0 0
    %10473 = vmatpush1.bf16.msra.mxu0 0
    %10474 = vmatprep.subr.bf16.mxu0 0
    %10475 = vmatpush1.bf16.msra.mxu0 0
    %10476 = vmatprep.subr.bf16.mxu0 0
    %10477 = vmatpush1.bf16.msra.mxu0 0
    %10478 = vmatprep.subr.bf16.mxu0 0
    %10479 = vmatpush1.bf16.msra.mxu0 0
    %10480 = vmatprep.subr.bf16.mxu0 0
    %10481 = vmatpush1.bf16.msra.mxu0 0
    %10482 = vmatprep.subr.bf16.mxu0 0
    %10483 = vmatpush1.bf16.msra.mxu0 0
    %10484 = vmatprep.subr.bf16.mxu0 0
    %10485 = vmatpush1.bf16.msra.mxu0 0
    %10486 = vmatprep.subr.bf16.mxu0 0
    %10487 = vmatpush1.bf16.msra.mxu0 0
    %10488 = vmatprep.subr.bf16.mxu0 0
    %10489 = vmatpush1.bf16.msra.mxu0 0
    %10490 = vmatprep.subr.bf16.mxu0 0
    %10491 = vmatpush1.bf16.msra.mxu0 0
    %10492 = vmatprep.mubr.bf16.mxu0 0
    %10493 = vmatmul.mubr.bf16.gmra.mrb[0].mxu0 %v10415
    %v10494 = vpop.f32.mrb[0].mxu0
    %v10495 = vadd.f32 %v10455, %v10494
    %v10496 = vpop.f32.mrb[0].mxu0
    %v10497 = vpop.f32.mrb[0].mxu0
    %v10498 = vpop.f32.mrb[0].mxu0
    %10499 = vdwg.mxu0
    %s10500 = scalar_lea.vmem [#allocation16], 3000
    %v10501 = vld [vmem:[%s10500] sm:$0xff]
    %v10502 = vld [vmem:[%s10500 + $0x8] sm:$0xf]
    %v10503 = vld [vmem:[%s10500 + $0xc] sm:$0xff]
    %v10504 = vld [vmem:[%s10500 + $0x14] sm:$0xf]
    %v10505 = vld [vmem:[%s10500 + $0x18] sm:$0xff]
    %v10506 = vld [vmem:[%s10500 + $0x20] sm:$0xf]
    %v10507 = vld [vmem:[%s10500 + $0x24] sm:$0xff]
    %v10508 = vld [vmem:[%s10500 + $0x2c] sm:$0xf]
    %v10509 = vld [vmem:[%s10500 + $0x30] sm:$0xff]
    %v10510 = vld [vmem:[%s10500 + $0x38] sm:$0xf]
    %v10511 = vld [vmem:[%s10500 + $0x3c] sm:$0xff]
    %v10512 = vld [vmem:[%s10500 + $0x44] sm:$0xf]
    %v10513 = vld [vmem:[%s10500 + $0x48] sm:$0xff]
    %v10514 = vld [vmem:[%s10500 + $0x50] sm:$0xf]
    %v10515 = vld [vmem:[%s10500 + $0x54] sm:$0xff]
    %v10516 = vld [vmem:[%s10500 + $0x5c] sm:$0xf]
    %v10517 = vld [vmem:[%s10500 + $0x60] sm:$0xff]
    %v10518 = vld [vmem:[%s10500 + $0x68] sm:$0xf]
    %v10519 = vld [vmem:[%s10500 + $0x6c] sm:$0xff]
    %v10520 = vld [vmem:[%s10500 + $0x74] sm:$0xf]
    %v10521 = vld [vmem:[%s10500 + $0x78] sm:$0xff]
    %v10522 = vld [vmem:[%s10500 + $0x80] sm:$0xf]
    %v10523 = vld [vmem:[%s10500 + $0x84] sm:$0xff]
    %v10524 = vld [vmem:[%s10500 + $0x8c] sm:$0xf]
    %v10525 = vld [vmem:[%s10500 + $0x90] sm:$0xff]
    %v10526 = vld [vmem:[%s10500 + $0x98] sm:$0xf]
    %v10527 = vld [vmem:[%s10500 + $0x9c] sm:$0xff]
    %v10528 = vld [vmem:[%s10500 + $0xa4] sm:$0xf]
    %v10529 = vld [vmem:[%s10500 + $0xa8] sm:$0xff]
    %v10530 = vld [vmem:[%s10500 + $0xb0] sm:$0xf]
    %v10531 = vld [vmem:[%s10500 + $0xb4] sm:$0xff]
    %v10532 = vld [vmem:[%s10500 + $0xbc] sm:$0xf]
    %v10533 = vld [vmem:[%s10500 + $0xc0] sm:$0xff]
    %v10534 = vld [vmem:[%s10500 + $0xc8] sm:$0xf]
    %v10535 = vld [vmem:[%s10500 + $0xcc] sm:$0xff]
    %v10536 = vld [vmem:[%s10500 + $0xd4] sm:$0xf]
    %v10537 = vld [vmem:[%s10500 + $0xd8] sm:$0xff]
    %v10538 = vld [vmem:[%s10500 + $0xe0] sm:$0xf]
    %v10539 = vld [vmem:[%s10500 + $0xe4] sm:$0xff]
    %v10540 = vld [vmem:[%s10500 + $0xec] sm:$0xf]
    %v10541 = vld [vmem:[%s10500 + $0xf0] sm:$0xff]
    %v10542 = vld [vmem:[%s10500 + $0xf8] sm:$0xf]
    %v10543 = vld [vmem:[%s10500 + $0xfc] sm:$0xff]
    %v10544 = vld [vmem:[%s10500 + $0x104] sm:$0xf]
    %v10545 = vld [vmem:[%s10500 + $0x108] sm:$0xff]
    %v10546 = vld [vmem:[%s10500 + $0x110] sm:$0xf]
    %v10547 = vld [vmem:[%s10500 + $0x114] sm:$0xff]
    %v10548 = vld [vmem:[%s10500 + $0x11c] sm:$0xf]
    %v10549 = vld [vmem:[%s10500 + $0x120] sm:$0xff]
    %v10550 = vld [vmem:[%s10500 + $0x128] sm:$0xf]
    %v10551 = vld [vmem:[%s10500 + $0x12c] sm:$0xff]
    %v10552 = vld [vmem:[%s10500 + $0x134] sm:$0xf]
    %v10553 = vld [vmem:[%s10500 + $0x138] sm:$0xff]
    %v10554 = vld [vmem:[%s10500 + $0x140] sm:$0xf]
    %v10555 = vld [vmem:[%s10500 + $0x144] sm:$0xff]
    %v10556 = vld [vmem:[%s10500 + $0x14c] sm:$0xf]
    %v10557 = vld [vmem:[%s10500 + $0x150] sm:$0xff]
    %v10558 = vld [vmem:[%s10500 + $0x158] sm:$0xf]
    %v10559 = vld [vmem:[%s10500 + $0x15c] sm:$0xff]
    %v10560 = vld [vmem:[%s10500 + $0x164] sm:$0xf]
    %v10561 = vld [vmem:[%s10500 + $0x168] sm:$0xff]
    %v10562 = vld [vmem:[%s10500 + $0x170] sm:$0xf]
    %v10563 = vld [vmem:[%s10500 + $0x174] sm:$0xff]
    %v10564 = vld [vmem:[%s10500 + $0x17c] sm:$0xf]
    %v10565 = vld [vmem:[%s10500 + $0x180] sm:$0xff]
    %v10566 = vld [vmem:[%s10500 + $0x188] sm:$0xf]
    %v10567 = vld [vmem:[%s10500 + $0x18c] sm:$0xff]
    %v10568 = vld [vmem:[%s10500 + $0x194] sm:$0xf]
    %v10569 = vld [vmem:[%s10500 + $0x198] sm:$0xff]
    %v10570 = vld [vmem:[%s10500 + $0x1a0] sm:$0xf]
    %v10571 = vld [vmem:[%s10500 + $0x1a4] sm:$0xff]
    %v10572 = vld [vmem:[%s10500 + $0x1ac] sm:$0xf]
    %v10573 = vld [vmem:[%s10500 + $0x1b0] sm:$0xff]
    %v10574 = vld [vmem:[%s10500 + $0x1b8] sm:$0xf]
    %v10575 = vld [vmem:[%s10500 + $0x1bc] sm:$0xff]
    %v10576 = vld [vmem:[%s10500 + $0x1c4] sm:$0xf]
    %v10577 = vld [vmem:[%s10500 + $0x1c8] sm:$0xff]
    %v10578 = vld [vmem:[%s10500 + $0x1d0] sm:$0xf]
    %v10579 = vld [vmem:[%s10500 + $0x1d4] sm:$0xff]
    %v10580 = vld [vmem:[%s10500 + $0x1dc] sm:$0xf]
    %v10581 = vld [vmem:[%s10500 + $0x1e0] sm:$0xff]
    %v10582 = vld [vmem:[%s10500 + $0x1e8] sm:$0xf]
    %v10583 = vld [vmem:[%s10500 + $0x1ec] sm:$0xff]
    %v10584 = vld [vmem:[%s10500 + $0x1f4] sm:$0xf]
    %v10585 = vld [vmem:[%s10500 + $0x1f8] sm:$0xff]
    %v10586 = vld [vmem:[%s10500 + $0x200] sm:$0xf]
    %v10587 = vld [vmem:[%s10500 + $0x204] sm:$0xff]
    %v10588 = vld [vmem:[%s10500 + $0x20c] sm:$0xf]
    %v10589 = vld [vmem:[%s10500 + $0x210] sm:$0xff]
    %v10590 = vld [vmem:[%s10500 + $0x218] sm:$0xf]
    %v10591 = vld [vmem:[%s10500 + $0x21c] sm:$0xff]
    %v10592 = vld [vmem:[%s10500 + $0x224] sm:$0xf]
    %v10593 = vld [vmem:[%s10500 + $0x228] sm:$0xff]
    %v10594 = vld [vmem:[%s10500 + $0x230] sm:$0xf]
    %v10595 = vld [vmem:[%s10500 + $0x234] sm:$0xff]
    %v10596 = vld [vmem:[%s10500 + $0x23c] sm:$0xf]
    %v10597 = vld [vmem:[%s10500 + $0x240] sm:$0xff]
    %v10598 = vld [vmem:[%s10500 + $0x248] sm:$0xf]
    %v10599 = vld [vmem:[%s10500 + $0x24c] sm:$0xff]
    %v10600 = vld [vmem:[%s10500 + $0x254] sm:$0xf]
    %s10601 = scalar_lea.vmem [#allocation18], 15
    %v10602 = vld [vmem:[%s10601] sm:$0x7]
    %v10604 = vlaneseq
    %v10605 = vshrl.u32 %v10604, 7
    %v10606 = vsub.s32 0, %v10605
    %v10607 = vrot.slane %v10602, %v10606
    %v10608 = vlaneseq
    %v10609 = vshrl.u32 %v10608, 7
    %v10610 = vsub.s32 1, %v10609
    %v10611 = vrot.slane %v10602, %v10610
    %v10612 = vlaneseq
    %v10613 = vshrl.u32 %v10612, 7
    %v10614 = vsub.s32 2, %v10613
    %v10615 = vrot.slane %v10602, %v10614
    %10622 = vrot.lane.b32.xlu0 %v5780, 48
    %v10623 = vpop.permute.xlu0 %10622
    %10624 = vrot.lane.b32.xlu0 %v5781, 48
    %v10625 = vpop.permute.xlu0 %10624
    %10626 = vrot.lane.b32.xlu0 %v5782, 48
    %v10627 = vpop.permute.xlu0 %10626
    %10628 = vrot.lane.b32.xlu0 %v5783, 48
    %v10629 = vpop.permute.xlu0 %10628
    %vm10630 = vcmask 392192
    %v10631 = vsel %vm10630, %v10623, %v10625
    %v10632 = vsel %vm10630, %v10625, %v10627
    %v10633 = vsel %vm10630, %v10627, %v10629
    %v10737 = vunpack.c.l.b16 %v10501
    %v10738 = vunpack.c.h.b16 %v10501
    %v10739 = vunpack.c.l.b16 %v10502
    %v10740 = vunpack.c.l.b16 %v10503
    %v10741 = vunpack.c.h.b16 %v10503
    %v10742 = vunpack.c.l.b16 %v10504
    %v10743 = vunpack.c.l.b16 %v10505
    %v10744 = vunpack.c.h.b16 %v10505
    %v10745 = vunpack.c.l.b16 %v10506
    %v10746 = vunpack.c.l.b16 %v10507
    %v10747 = vunpack.c.h.b16 %v10507
    %v10748 = vunpack.c.l.b16 %v10508
    %v10749 = vunpack.c.l.b16 %v10509
    %v10750 = vunpack.c.h.b16 %v10509
    %v10751 = vunpack.c.l.b16 %v10510
    %v10752 = vunpack.c.l.b16 %v10511
    %v10753 = vunpack.c.h.b16 %v10511
    %v10754 = vunpack.c.l.b16 %v10512
    %v10755 = vunpack.c.l.b16 %v10513
    %v10756 = vunpack.c.h.b16 %v10513
    %v10757 = vunpack.c.l.b16 %v10514
    %v10758 = vunpack.c.l.b16 %v10515
    %v10759 = vunpack.c.h.b16 %v10515
    %v10760 = vunpack.c.l.b16 %v10516
    %v10761 = vunpack.c.l.b16 %v10517
    %v10762 = vunpack.c.h.b16 %v10517
    %v10763 = vunpack.c.l.b16 %v10518
    %v10764 = vunpack.c.l.b16 %v10519
    %v10765 = vunpack.c.h.b16 %v10519
    %v10766 = vunpack.c.l.b16 %v10520
    %v10767 = vunpack.c.l.b16 %v10521
    %v10768 = vunpack.c.h.b16 %v10521
    %v10769 = vunpack.c.l.b16 %v10522
    %v10770 = vunpack.c.l.b16 %v10523
    %v10771 = vunpack.c.h.b16 %v10523
    %v10772 = vunpack.c.l.b16 %v10524
    %v10773 = vunpack.c.l.b16 %v10525
    %v10774 = vunpack.c.h.b16 %v10525
    %v10775 = vunpack.c.l.b16 %v10526
    %v10776 = vunpack.c.l.b16 %v10527
    %v10777 = vunpack.c.h.b16 %v10527
    %v10778 = vunpack.c.l.b16 %v10528
    %v10779 = vunpack.c.l.b16 %v10529
    %v10780 = vunpack.c.h.b16 %v10529
    %v10781 = vunpack.c.l.b16 %v10530
    %v10782 = vunpack.c.l.b16 %v10531
    %v10783 = vunpack.c.h.b16 %v10531
    %v10784 = vunpack.c.l.b16 %v10532
    %v10785 = vunpack.c.l.b16 %v10533
    %v10786 = vunpack.c.h.b16 %v10533
    %v10787 = vunpack.c.l.b16 %v10534
    %v10788 = vunpack.c.l.b16 %v10535
    %v10789 = vunpack.c.h.b16 %v10535
    %v10790 = vunpack.c.l.b16 %v10536
    %v10791 = vunpack.c.l.b16 %v10537
    %v10792 = vunpack.c.h.b16 %v10537
    %v10793 = vunpack.c.l.b16 %v10538
    %v10794 = vunpack.c.l.b16 %v10539
    %v10795 = vunpack.c.h.b16 %v10539
    %v10796 = vunpack.c.l.b16 %v10540
    %v10797 = vunpack.c.l.b16 %v10541
    %v10798 = vunpack.c.h.b16 %v10541
    %v10799 = vunpack.c.l.b16 %v10542
    %v10800 = vunpack.c.l.b16 %v10543
    %v10801 = vunpack.c.h.b16 %v10543
    %v10802 = vunpack.c.l.b16 %v10544
    %v10803 = vunpack.c.l.b16 %v10545
    %v10804 = vunpack.c.h.b16 %v10545
    %v10805 = vunpack.c.l.b16 %v10546
    %v10806 = vunpack.c.l.b16 %v10547
    %v10807 = vunpack.c.h.b16 %v10547
    %v10808 = vunpack.c.l.b16 %v10548
    %v10809 = vunpack.c.l.b16 %v10549
    %v10810 = vunpack.c.h.b16 %v10549
    %v10811 = vunpack.c.l.b16 %v10550
    %v10812 = vunpack.c.l.b16 %v10551
    %v10813 = vunpack.c.h.b16 %v10551
    %v10814 = vunpack.c.l.b16 %v10552
    %v10815 = vunpack.c.l.b16 %v10553
    %v10816 = vunpack.c.h.b16 %v10553
    %v10817 = vunpack.c.l.b16 %v10554
    %v10818 = vunpack.c.l.b16 %v10555
    %v10819 = vunpack.c.h.b16 %v10555
    %v10820 = vunpack.c.l.b16 %v10556
    %v10821 = vunpack.c.l.b16 %v10557
    %v10822 = vunpack.c.h.b16 %v10557
    %v10823 = vunpack.c.l.b16 %v10558
    %v10824 = vunpack.c.l.b16 %v10559
    %v10825 = vunpack.c.h.b16 %v10559
    %v10826 = vunpack.c.l.b16 %v10560
    %v10827 = vunpack.c.l.b16 %v10561
    %v10828 = vunpack.c.h.b16 %v10561
    %v10829 = vunpack.c.l.b16 %v10562
    %v10830 = vunpack.c.l.b16 %v10563
    %v10831 = vunpack.c.h.b16 %v10563
    %v10832 = vunpack.c.l.b16 %v10564
    %v10833 = vunpack.c.l.b16 %v10565
    %v10834 = vunpack.c.h.b16 %v10565
    %v10835 = vunpack.c.l.b16 %v10566
    %v10836 = vunpack.c.l.b16 %v10567
    %v10837 = vunpack.c.h.b16 %v10567
    %v10838 = vunpack.c.l.b16 %v10568
    %v10839 = vunpack.c.l.b16 %v10569
    %v10840 = vunpack.c.h.b16 %v10569
    %v10841 = vunpack.c.l.b16 %v10570
    %v10842 = vunpack.c.l.b16 %v10571
    %v10843 = vunpack.c.h.b16 %v10571
    %v10844 = vunpack.c.l.b16 %v10572
    %v10845 = vunpack.c.l.b16 %v10573
    %v10846 = vunpack.c.h.b16 %v10573
    %v10847 = vunpack.c.l.b16 %v10574
    %v10848 = vunpack.c.l.b16 %v10575
    %v10849 = vunpack.c.h.b16 %v10575
    %v10850 = vunpack.c.l.b16 %v10576
    %v10851 = vunpack.c.l.b16 %v10577
    %v10852 = vunpack.c.h.b16 %v10577
    %v10853 = vunpack.c.l.b16 %v10578
    %v10854 = vunpack.c.l.b16 %v10579
    %v10855 = vunpack.c.h.b16 %v10579
    %v10856 = vunpack.c.l.b16 %v10580
    %v10857 = vunpack.c.l.b16 %v10581
    %v10858 = vunpack.c.h.b16 %v10581
    %v10859 = vunpack.c.l.b16 %v10582
    %v10860 = vunpack.c.l.b16 %v10583
    %v10861 = vunpack.c.h.b16 %v10583
    %v10862 = vunpack.c.l.b16 %v10584
    %v10863 = vunpack.c.l.b16 %v10585
    %v10864 = vunpack.c.h.b16 %v10585
    %v10865 = vunpack.c.l.b16 %v10586
    %v10866 = vunpack.c.l.b16 %v10587
    %v10867 = vunpack.c.h.b16 %v10587
    %v10868 = vunpack.c.l.b16 %v10588
    %v10869 = vunpack.c.l.b16 %v10589
    %v10870 = vunpack.c.h.b16 %v10589
    %v10871 = vunpack.c.l.b16 %v10590
    %v10872 = vunpack.c.l.b16 %v10591
    %v10873 = vunpack.c.h.b16 %v10591
    %v10874 = vunpack.c.l.b16 %v10592
    %v10875 = vunpack.c.l.b16 %v10593
    %v10876 = vunpack.c.h.b16 %v10593
    %v10877 = vunpack.c.l.b16 %v10594
    %v10878 = vunpack.c.l.b16 %v10595
    %v10879 = vunpack.c.h.b16 %v10595
    %v10880 = vunpack.c.l.b16 %v10596
    %v10881 = vunpack.c.l.b16 %v10597
    %v10882 = vunpack.c.h.b16 %v10597
    %v10883 = vunpack.c.l.b16 %v10598
    %v10884 = vunpack.c.l.b16 %v10599
    %v10885 = vunpack.c.h.b16 %v10599
    %v10886 = vunpack.c.l.b16 %v10600
    %v10887 = vpack.c.b16 %v10740, %v10737
    %v10888 = vpack.c.b16 %v10741, %v10738
    %v10889 = vpack.c.b16 %v10742, %v10739
    %v10890 = vpack.c.b16 %v10746, %v10743
    %v10891 = vpack.c.b16 %v10747, %v10744
    %v10892 = vpack.c.b16 %v10748, %v10745
    %v10893 = vpack.c.b16 %v10752, %v10749
    %v10894 = vpack.c.b16 %v10753, %v10750
    %v10895 = vpack.c.b16 %v10754, %v10751
    %v10896 = vpack.c.b16 %v10758, %v10755
    %v10897 = vpack.c.b16 %v10759, %v10756
    %v10898 = vpack.c.b16 %v10760, %v10757
    %v10899 = vpack.c.b16 %v10764, %v10761
    %v10900 = vpack.c.b16 %v10765, %v10762
    %v10901 = vpack.c.b16 %v10766, %v10763
    %v10902 = vpack.c.b16 %v10770, %v10767
    %v10903 = vpack.c.b16 %v10771, %v10768
    %v10904 = vpack.c.b16 %v10772, %v10769
    %v10905 = vpack.c.b16 %v10776, %v10773
    %v10906 = vpack.c.b16 %v10777, %v10774
    %v10907 = vpack.c.b16 %v10778, %v10775
    %v10908 = vpack.c.b16 %v10782, %v10779
    %v10909 = vpack.c.b16 %v10783, %v10780
    %v10910 = vpack.c.b16 %v10784, %v10781
    %v10911 = vpack.c.b16 %v10788, %v10785
    %v10912 = vpack.c.b16 %v10789, %v10786
    %v10913 = vpack.c.b16 %v10790, %v10787
    %v10914 = vpack.c.b16 %v10794, %v10791
    %v10915 = vpack.c.b16 %v10795, %v10792
    %v10916 = vpack.c.b16 %v10796, %v10793
    %v10917 = vpack.c.b16 %v10800, %v10797
    %v10918 = vpack.c.b16 %v10801, %v10798
    %v10919 = vpack.c.b16 %v10802, %v10799
    %v10920 = vpack.c.b16 %v10806, %v10803
    %v10921 = vpack.c.b16 %v10807, %v10804
    %v10922 = vpack.c.b16 %v10808, %v10805
    %v10923 = vpack.c.b16 %v10812, %v10809
    %v10924 = vpack.c.b16 %v10813, %v10810
    %v10925 = vpack.c.b16 %v10814, %v10811
    %v10926 = vpack.c.b16 %v10818, %v10815
    %v10927 = vpack.c.b16 %v10819, %v10816
    %v10928 = vpack.c.b16 %v10820, %v10817
    %v10929 = vpack.c.b16 %v10824, %v10821
    %v10930 = vpack.c.b16 %v10825, %v10822
    %v10931 = vpack.c.b16 %v10826, %v10823
    %v10932 = vpack.c.b16 %v10830, %v10827
    %v10933 = vpack.c.b16 %v10831, %v10828
    %v10934 = vpack.c.b16 %v10832, %v10829
    %v10935 = vpack.c.b16 %v10836, %v10833
    %v10936 = vpack.c.b16 %v10837, %v10834
    %v10937 = vpack.c.b16 %v10838, %v10835
    %v10938 = vpack.c.b16 %v10842, %v10839
    %v10939 = vpack.c.b16 %v10843, %v10840
    %v10940 = vpack.c.b16 %v10844, %v10841
    %v10941 = vpack.c.b16 %v10848, %v10845
    %v10942 = vpack.c.b16 %v10849, %v10846
    %v10943 = vpack.c.b16 %v10850, %v10847
    %v10944 = vpack.c.b16 %v10854, %v10851
    %v10945 = vpack.c.b16 %v10855, %v10852
    %v10946 = vpack.c.b16 %v10856, %v10853
    %v10947 = vpack.c.b16 %v10860, %v10857
    %v10948 = vpack.c.b16 %v10861, %v10858
    %v10949 = vpack.c.b16 %v10862, %v10859
    %v10950 = vpack.c.b16 %v10866, %v10863
    %v10951 = vpack.c.b16 %v10867, %v10864
    %v10952 = vpack.c.b16 %v10868, %v10865
    %v10953 = vpack.c.b16 %v10872, %v10869
    %v10954 = vpack.c.b16 %v10873, %v10870
    %v10955 = vpack.c.b16 %v10874, %v10871
    %v10956 = vpack.c.b16 %v10878, %v10875
    %v10957 = vpack.c.b16 %v10879, %v10876
    %v10958 = vpack.c.b16 %v10880, %v10877
    %v10959 = vpack.c.b16 %v10884, %v10881
    %v10960 = vpack.c.b16 %v10885, %v10882
    %v10961 = vpack.c.b16 %v10886, %v10883
    %v11038 = vsel %vm244, %v10629, 0
    %11040 = vmatprep.subr.bf16.mxu0 %v10888
    %11041 = vmatpush1.bf16.msra.mxu0 %v10887
    %11042 = vmatprep.subr.bf16.mxu0 %v10891
    %11043 = vmatpush1.bf16.msra.mxu0 %v10890
    %11044 = vmatprep.subr.bf16.mxu0 %v10894
    %11045 = vmatpush1.bf16.msra.mxu0 %v10893
    %11046 = vmatprep.subr.bf16.mxu0 %v10897
    %11047 = vmatpush1.bf16.msra.mxu0 %v10896
    %11048 = vmatprep.subr.bf16.mxu0 %v10900
    %11049 = vmatpush1.bf16.msra.mxu0 %v10899
    %11050 = vmatprep.subr.bf16.mxu0 %v10903
    %11051 = vmatpush1.bf16.msra.mxu0 %v10902
    %11052 = vmatprep.subr.bf16.mxu0 %v10906
    %11053 = vmatpush1.bf16.msra.mxu0 %v10905
    %11054 = vmatprep.subr.bf16.mxu0 %v10909
    %11055 = vmatpush1.bf16.msra.mxu0 %v10908
    %11056 = vmatprep.subr.bf16.mxu0 %v10912
    %11057 = vmatpush1.bf16.msra.mxu0 %v10911
    %11058 = vmatprep.subr.bf16.mxu0 %v10915
    %11059 = vmatpush1.bf16.msra.mxu0 %v10914
    %11060 = vmatprep.subr.bf16.mxu0 %v10918
    %11061 = vmatpush1.bf16.msra.mxu0 %v10917
    %11062 = vmatprep.subr.bf16.mxu0 %v10921
    %11063 = vmatpush1.bf16.msra.mxu0 %v10920
    %11064 = vmatprep.subr.bf16.mxu0 %v10924
    %11065 = vmatpush1.bf16.msra.mxu0 %v10923
    %11066 = vmatprep.subr.bf16.mxu0 %v10927
    %11067 = vmatpush1.bf16.msra.mxu0 %v10926
    %11068 = vmatprep.subr.bf16.mxu0 %v10930
    %11069 = vmatpush1.bf16.msra.mxu0 %v10929
    %11070 = vmatprep.subr.bf16.mxu0 %v10933
    %11071 = vmatpush1.bf16.msra.mxu0 %v10932
    %11072 = vmatprep.mubr.bf16.mxu0 %v10632
    %11073 = vmatmul.mubr.bf16.gmra.mrb[0].mxu0 %v10631
    %v11074 = vpop.f32.mrb[0].mxu0
    %v11075 = vadd.f32 %v10607, %v11074
    %v11076 = vpop.f32.mrb[0].mxu0
    %v11077 = vadd.f32 %v10611, %v11076
    %v11078 = vpop.f32.mrb[0].mxu0
    %v11079 = vpop.f32.mrb[0].mxu0
    %11080 = vdwg.mxu0
    %11081 = vmatprep.subr.bf16.mxu0 %v10936
    %11082 = vmatpush1.bf16.msra.mxu0 %v10935
    %11083 = vmatprep.subr.bf16.mxu0 %v10939
    %11084 = vmatpush1.bf16.msra.mxu0 %v10938
    %11085 = vmatprep.subr.bf16.mxu0 %v10942
    %11086 = vmatpush1.bf16.msra.mxu0 %v10941
    %11087 = vmatprep.subr.bf16.mxu0 %v10945
    %11088 = vmatpush1.bf16.msra.mxu0 %v10944
    %11089 = vmatprep.subr.bf16.mxu0 %v10948
    %11090 = vmatpush1.bf16.msra.mxu0 %v10947
    %11091 = vmatprep.subr.bf16.mxu0 %v10951
    %11092 = vmatpush1.bf16.msra.mxu0 %v10950
    %11093 = vmatprep.subr.bf16.mxu0 %v10954
    %11094 = vmatpush1.bf16.msra.mxu0 %v10953
    %11095 = vmatprep.subr.bf16.mxu0 %v10957
    %11096 = vmatpush1.bf16.msra.mxu0 %v10956
    %11097 = vmatprep.subr.bf16.mxu0 %v10960
    %11098 = vmatpush1.bf16.msra.mxu0 %v10959
    %11099 = vmatprep.subr.bf16.mxu0 0
    %11100 = vmatpush1.bf16.msra.mxu0 0
    %11101 = vmatprep.subr.bf16.mxu0 0
    %11102 = vmatpush1.bf16.msra.mxu0 0
    %11103 = vmatprep.subr.bf16.mxu0 0
    %11104 = vmatpush1.bf16.msra.mxu0 0
    %11105 = vmatprep.subr.bf16.mxu0 0
    %11106 = vmatpush1.bf16.msra.mxu0 0
    %11107 = vmatprep.subr.bf16.mxu0 0
    %11108 = vmatpush1.bf16.msra.mxu0 0
    %11109 = vmatprep.subr.bf16.mxu0 0
    %11110 = vmatpush1.bf16.msra.mxu0 0
    %11111 = vmatprep.subr.bf16.mxu0 0
    %11112 = vmatpush1.bf16.msra.mxu0 0
    %11113 = vmatprep.mubr.bf16.mxu0 %v11038
    %11114 = vmatmul.mubr.bf16.gmra.mrb[0].mxu0 %v10633
    %v11115 = vpop.f32.mrb[0].mxu0
    %v11116 = vadd.f32 %v11075, %v11115
    %v11117 = vpop.f32.mrb[0].mxu0
    %v11118 = vadd.f32 %v11077, %v11117
    %v11119 = vpop.f32.mrb[0].mxu0
    %v11120 = vpop.f32.mrb[0].mxu0
    %11121 = vdwg.mxu0
    %11122 = vmatprep.subr.bf16.mxu0 0
    %11123 = vmatpush1.bf16.msra.mxu0 %v10889
    %11124 = vmatprep.subr.bf16.mxu0 0
    %11125 = vmatpush1.bf16.msra.mxu0 %v10892
    %11126 = vmatprep.subr.bf16.mxu0 0
    %11127 = vmatpush1.bf16.msra.mxu0 %v10895
    %11128 = vmatprep.subr.bf16.mxu0 0
    %11129 = vmatpush1.bf16.msra.mxu0 %v10898
    %11130 = vmatprep.subr.bf16.mxu0 0
    %11131 = vmatpush1.bf16.msra.mxu0 %v10901
    %11132 = vmatprep.subr.bf16.mxu0 0
    %11133 = vmatpush1.bf16.msra.mxu0 %v10904
    %11134 = vmatprep.subr.bf16.mxu0 0
    %11135 = vmatpush1.bf16.msra.mxu0 %v10907
    %11136 = vmatprep.subr.bf16.mxu0 0
    %11137 = vmatpush1.bf16.msra.mxu0 %v10910
    %11138 = vmatprep.subr.bf16.mxu0 0
    %11139 = vmatpush1.bf16.msra.mxu0 %v10913
    %11140 = vmatprep.subr.bf16.mxu0 0
    %11141 = vmatpush1.bf16.msra.mxu0 %v10916
    %11142 = vmatprep.subr.bf16.mxu0 0
    %11143 = vmatpush1.bf16.msra.mxu0 %v10919
    %11144 = vmatprep.subr.bf16.mxu0 0
    %11145 = vmatpush1.bf16.msra.mxu0 %v10922
    %11146 = vmatprep.subr.bf16.mxu0 0
    %11147 = vmatpush1.bf16.msra.mxu0 %v10925
    %11148 = vmatprep.subr.bf16.mxu0 0
    %11149 = vmatpush1.bf16.msra.mxu0 %v10928
    %11150 = vmatprep.subr.bf16.mxu0 0
    %11151 = vmatpush1.bf16.msra.mxu0 %v10931
    %11152 = vmatprep.subr.bf16.mxu0 0
    %11153 = vmatpush1.bf16.msra.mxu0 %v10934
    %11154 = vmatprep.mubr.bf16.mxu0 %v10632
    %11155 = vmatmul.mubr.bf16.gmra.mrb[0].mxu0 %v10631
    %v11156 = vpop.f32.mrb[0].mxu0
    %v11157 = vadd.f32 %v10615, %v11156
    %v11158 = vpop.f32.mrb[0].mxu0
    %v11159 = vpop.f32.mrb[0].mxu0
    %v11160 = vpop.f32.mrb[0].mxu0
    %11161 = vdwg.mxu0
    %11162 = vmatprep.subr.bf16.mxu0 0
    %11163 = vmatpush1.bf16.msra.mxu0 %v10937
    %11164 = vmatprep.subr.bf16.mxu0 0
    %11165 = vmatpush1.bf16.msra.mxu0 %v10940
    %11166 = vmatprep.subr.bf16.mxu0 0
    %11167 = vmatpush1.bf16.msra.mxu0 %v10943
    %11168 = vmatprep.subr.bf16.mxu0 0
    %11169 = vmatpush1.bf16.msra.mxu0 %v10946
    %11170 = vmatprep.subr.bf16.mxu0 0
    %11171 = vmatpush1.bf16.msra.mxu0 %v10949
    %11172 = vmatprep.subr.bf16.mxu0 0
    %11173 = vmatpush1.bf16.msra.mxu0 %v10952
    %11174 = vmatprep.subr.bf16.mxu0 0
    %11175 = vmatpush1.bf16.msra.mxu0 %v10955
    %11176 = vmatprep.subr.bf16.mxu0 0
    %11177 = vmatpush1.bf16.msra.mxu0 %v10958
    %11178 = vmatprep.subr.bf16.mxu0 0
    %11179 = vmatpush1.bf16.msra.mxu0 %v10961
    %11180 = vmatprep.subr.bf16.mxu0 0
    %11181 = vmatpush1.bf16.msra.mxu0 0
    %11182 = vmatprep.subr.bf16.mxu0 0
    %11183 = vmatpush1.bf16.msra.mxu0 0
    %11184 = vmatprep.subr.bf16.mxu0 0
    %11185 = vmatpush1.bf16.msra.mxu0 0
    %11186 = vmatprep.subr.bf16.mxu0 0
    %11187 = vmatpush1.bf16.msra.mxu0 0
    %11188 = vmatprep.subr.bf16.mxu0 0
    %11189 = vmatpush1.bf16.msra.mxu0 0
    %11190 = vmatprep.subr.bf16.mxu0 0
    %11191 = vmatpush1.bf16.msra.mxu0 0
    %11192 = vmatprep.subr.bf16.mxu0 0
    %11193 = vmatpush1.bf16.msra.mxu0 0
    %11194 = vmatprep.mubr.bf16.mxu0 %v11038
    %11195 = vmatmul.mubr.bf16.gmra.mrb[0].mxu0 %v10633
    %v11196 = vpop.f32.mrb[0].mxu0
    %v11197 = vadd.f32 %v11157, %v11196
    %v11198 = vpop.f32.mrb[0].mxu0
    %v11199 = vpop.f32.mrb[0].mxu0
    %v11200 = vpop.f32.mrb[0].mxu0
    %11201 = vdwg.mxu0
    %v11202 = vmax.f32 %v11116, 0.0
    %v11203 = vmax.f32 %v11118, 0.0
    %v11204 = vmax.f32 %v11197, 0.0
    %v11205 = vpack.c.bf16 %v11202, %v11202
    %v11206 = vpack.c.bf16 %v11203, %v11203
    %v11207 = vpack.c.bf16 %v11204, %v11204
    %s11208 = scalar_lea.vmem %s11, 760
    %v11209 = vld [vmem:[%s11208] sm:$0xf]
    %v11210 = vld [vmem:[%s11208 + $0x4] sm:$0xf]
    %v11211 = vld [vmem:[%s11208 + $0x8] sm:$0xf]
    %v11212 = vld [vmem:[%s11208 + $0xc] sm:$0xf]
    %v11213 = vld [vmem:[%s11208 + $0x10] sm:$0xf]
    %v11214 = vld [vmem:[%s11208 + $0x14] sm:$0xf]
    %v11215 = vld [vmem:[%s11208 + $0x18] sm:$0xf]
    %v11216 = vld [vmem:[%s11208 + $0x1c] sm:$0xf]
    %v11217 = vld [vmem:[%s11208 + $0x20] sm:$0xf]
    %v11218 = vld [vmem:[%s11208 + $0x24] sm:$0xf]
    %v11219 = vld [vmem:[%s11208 + $0x28] sm:$0xf]
    %v11220 = vld [vmem:[%s11208 + $0x2c] sm:$0xf]
    %v11221 = vld [vmem:[%s11208 + $0x30] sm:$0xf]
    %v11222 = vld [vmem:[%s11208 + $0x34] sm:$0xf]
    %v11223 = vld [vmem:[%s11208 + $0x38] sm:$0xf]
    %v11224 = vld [vmem:[%s11208 + $0x3c] sm:$0xf]
    %v11225 = vld [vmem:[%s11208 + $0x40] sm:$0xf]
    %v11226 = vld [vmem:[%s11208 + $0x44] sm:$0xf]
    %v11227 = vld [vmem:[%s11208 + $0x48] sm:$0xf]
    %v11228 = vld [vmem:[%s11208 + $0x4c] sm:$0xf]
    %v11229 = vld [vmem:[%s11208 + $0x50] sm:$0xf]
    %v11230 = vld [vmem:[%s11208 + $0x54] sm:$0xf]
    %v11231 = vld [vmem:[%s11208 + $0x58] sm:$0xf]
    %v11232 = vld [vmem:[%s11208 + $0x5c] sm:$0xf]
    %v11233 = vld [vmem:[%s11208 + $0x60] sm:$0xf]
    %v11234 = vld [vmem:[%s11208 + $0x64] sm:$0xf]
    %v11235 = vld [vmem:[%s11208 + $0x68] sm:$0xf]
    %v11236 = vld [vmem:[%s11208 + $0x6c] sm:$0xf]
    %v11237 = vld [vmem:[%s11208 + $0x70] sm:$0xf]
    %v11238 = vld [vmem:[%s11208 + $0x74] sm:$0xf]
    %v11239 = vld [vmem:[%s11208 + $0x78] sm:$0xf]
    %v11240 = vld [vmem:[%s11208 + $0x7c] sm:$0xf]
    %v11241 = vld [vmem:[%s11208 + $0x80] sm:$0xf]
    %v11242 = vld [vmem:[%s11208 + $0x84] sm:$0xf]
    %v11243 = vld [vmem:[%s11208 + $0x88] sm:$0xf]
    %v11244 = vld [vmem:[%s11208 + $0x8c] sm:$0xf]
    %v11245 = vld [vmem:[%s11208 + $0x90] sm:$0xf]
    %v11246 = vld [vmem:[%s11208 + $0x94] sm:$0x3]
    %v11285 = vunpack.c.l.b16 %v11209
    %v11286 = vunpack.c.l.b16 %v11210
    %v11287 = vunpack.c.l.b16 %v11211
    %v11288 = vunpack.c.l.b16 %v11212
    %v11289 = vunpack.c.l.b16 %v11213
    %v11290 = vunpack.c.l.b16 %v11214
    %v11291 = vunpack.c.l.b16 %v11215
    %v11292 = vunpack.c.l.b16 %v11216
    %v11293 = vunpack.c.l.b16 %v11217
    %v11294 = vunpack.c.l.b16 %v11218
    %v11295 = vunpack.c.l.b16 %v11219
    %v11296 = vunpack.c.l.b16 %v11220
    %v11297 = vunpack.c.l.b16 %v11221
    %v11298 = vunpack.c.l.b16 %v11222
    %v11299 = vunpack.c.l.b16 %v11223
    %v11300 = vunpack.c.l.b16 %v11224
    %v11301 = vunpack.c.l.b16 %v11225
    %v11302 = vunpack.c.l.b16 %v11226
    %v11303 = vunpack.c.l.b16 %v11227
    %v11304 = vunpack.c.l.b16 %v11228
    %v11305 = vunpack.c.l.b16 %v11229
    %v11306 = vunpack.c.l.b16 %v11230
    %v11307 = vunpack.c.l.b16 %v11231
    %v11308 = vunpack.c.l.b16 %v11232
    %v11309 = vunpack.c.l.b16 %v11233
    %v11310 = vunpack.c.l.b16 %v11234
    %v11311 = vunpack.c.l.b16 %v11235
    %v11312 = vunpack.c.l.b16 %v11236
    %v11313 = vunpack.c.l.b16 %v11237
    %v11314 = vunpack.c.l.b16 %v11238
    %v11315 = vunpack.c.l.b16 %v11239
    %v11316 = vunpack.c.l.b16 %v11240
    %v11317 = vunpack.c.l.b16 %v11241
    %v11318 = vunpack.c.l.b16 %v11242
    %v11319 = vunpack.c.l.b16 %v11243
    %v11320 = vunpack.c.l.b16 %v11244
    %v11321 = vunpack.c.l.b16 %v11245
    %v11322 = vunpack.c.l.b16 %v11246
    %v11323 = vpack.c.b16 %v11286, %v11285
    %v11324 = vpack.c.b16 %v11288, %v11287
    %v11325 = vpack.c.b16 %v11290, %v11289
    %v11326 = vpack.c.b16 %v11292, %v11291
    %v11327 = vpack.c.b16 %v11294, %v11293
    %v11328 = vpack.c.b16 %v11296, %v11295
    %v11329 = vpack.c.b16 %v11298, %v11297
    %v11330 = vpack.c.b16 %v11300, %v11299
    %v11331 = vpack.c.b16 %v11302, %v11301
    %v11332 = vpack.c.b16 %v11304, %v11303
    %v11333 = vpack.c.b16 %v11306, %v11305
    %v11334 = vpack.c.b16 %v11308, %v11307
    %v11335 = vpack.c.b16 %v11310, %v11309
    %v11336 = vpack.c.b16 %v11312, %v11311
    %v11337 = vpack.c.b16 %v11314, %v11313
    %v11338 = vpack.c.b16 %v11316, %v11315
    %v11339 = vpack.c.b16 %v11318, %v11317
    %v11340 = vpack.c.b16 %v11320, %v11319
    %v11341 = vpack.c.b16 %v11322, %v11321
    %v11361 = vsel %vm1420, %v11207, 0
    %v11364 = vsel %vm1424, %v11341, 0
    %11366 = vmatprep.subr.bf16.mxu0 0
    %11367 = vmatpush1.bf16.msra.mxu0 %v11323
    %11368 = vmatprep.subr.bf16.mxu0 0
    %11369 = vmatpush1.bf16.msra.mxu0 %v11324
    %11370 = vmatprep.subr.bf16.mxu0 0
    %11371 = vmatpush1.bf16.msra.mxu0 %v11325
    %11372 = vmatprep.subr.bf16.mxu0 0
    %11373 = vmatpush1.bf16.msra.mxu0 %v11326
    %11374 = vmatprep.subr.bf16.mxu0 0
    %11375 = vmatpush1.bf16.msra.mxu0 %v11327
    %11376 = vmatprep.subr.bf16.mxu0 0
    %11377 = vmatpush1.bf16.msra.mxu0 %v11328
    %11378 = vmatprep.subr.bf16.mxu0 0
    %11379 = vmatpush1.bf16.msra.mxu0 %v11329
    %11380 = vmatprep.subr.bf16.mxu0 0
    %11381 = vmatpush1.bf16.msra.mxu0 %v11330
    %11382 = vmatprep.subr.bf16.mxu0 0
    %11383 = vmatpush1.bf16.msra.mxu0 %v11331
    %11384 = vmatprep.subr.bf16.mxu0 0
    %11385 = vmatpush1.bf16.msra.mxu0 %v11332
    %11386 = vmatprep.subr.bf16.mxu0 0
    %11387 = vmatpush1.bf16.msra.mxu0 %v11333
    %11388 = vmatprep.subr.bf16.mxu0 0
    %11389 = vmatpush1.bf16.msra.mxu0 %v11334
    %11390 = vmatprep.subr.bf16.mxu0 0
    %11391 = vmatpush1.bf16.msra.mxu0 %v11335
    %11392 = vmatprep.subr.bf16.mxu0 0
    %11393 = vmatpush1.bf16.msra.mxu0 %v11336
    %11394 = vmatprep.subr.bf16.mxu0 0
    %11395 = vmatpush1.bf16.msra.mxu0 %v11337
    %11396 = vmatprep.subr.bf16.mxu0 0
    %11397 = vmatpush1.bf16.msra.mxu0 %v11338
    %11398 = vmatprep.mubr.bf16.mxu0 %v11206
    %11399 = vmatmul.mubr.bf16.gmra.mrb[0].mxu0 %v11205
    %v11400 = vpop.f32.mrb[0].mxu0
    %v11401 = vadd.f32 0.0, %v11400
    %v11402 = vpop.f32.mrb[0].mxu0
    %v11403 = vpop.f32.mrb[0].mxu0
    %v11404 = vpop.f32.mrb[0].mxu0
    %11405 = vdwg.mxu0
    %11406 = vmatprep.subr.bf16.mxu0 0
    %11407 = vmatpush1.bf16.msra.mxu0 %v11339
    %11408 = vmatprep.subr.bf16.mxu0 0
    %11409 = vmatpush1.bf16.msra.mxu0 %v11340
    %11410 = vmatprep.subr.bf16.mxu0 0
    %11411 = vmatpush1.bf16.msra.mxu0 %v11364
    %11412 = vmatprep.subr.bf16.mxu0 0
    %11413 = vmatpush1.bf16.msra.mxu0 0
    %11414 = vmatprep.subr.bf16.mxu0 0
    %11415 = vmatpush1.bf16.msra.mxu0 0
    %11416 = vmatprep.subr.bf16.mxu0 0
    %11417 = vmatpush1.bf16.msra.mxu0 0
    %11418 = vmatprep.subr.bf16.mxu0 0
    %11419 = vmatpush1.bf16.msra.mxu0 0
    %11420 = vmatprep.subr.bf16.mxu0 0
    %11421 = vmatpush1.bf16.msra.mxu0 0
    %11422 = vmatprep.subr.bf16.mxu0 0
    %11423 = vmatpush1.bf16.msra.mxu0 0
    %11424 = vmatprep.subr.bf16.mxu0 0
    %11425 = vmatpush1.bf16.msra.mxu0 0
    %11426 = vmatprep.subr.bf16.mxu0 0
    %11427 = vmatpush1.bf16.msra.mxu0 0
    %11428 = vmatprep.subr.bf16.mxu0 0
    %11429 = vmatpush1.bf16.msra.mxu0 0
    %11430 = vmatprep.subr.bf16.mxu0 0
    %11431 = vmatpush1.bf16.msra.mxu0 0
    %11432 = vmatprep.subr.bf16.mxu0 0
    %11433 = vmatpush1.bf16.msra.mxu0 0
    %11434 = vmatprep.subr.bf16.mxu0 0
    %11435 = vmatpush1.bf16.msra.mxu0 0
    %11436 = vmatprep.subr.bf16.mxu0 0
    %11437 = vmatpush1.bf16.msra.mxu0 0
    %11438 = vmatprep.mubr.bf16.mxu0 0
    %11439 = vmatmul.mubr.bf16.gmra.mrb[0].mxu0 %v11361
    %v11440 = vpop.f32.mrb[0].mxu0
    %v11441 = vadd.f32 %v11401, %v11440
    %v11442 = vpop.f32.mrb[0].mxu0
    %v11443 = vpop.f32.mrb[0].mxu0
    %v11444 = vpop.f32.mrb[0].mxu0
    %11445 = vdwg.mxu0
    %s11446 = scalar_lea.vmem [#allocation16], 3600
    %v11447 = vld [vmem:[%s11446] sm:$0xff]
    %v11448 = vld [vmem:[%s11446 + $0x8] sm:$0xf]
    %v11449 = vld [vmem:[%s11446 + $0xc] sm:$0xff]
    %v11450 = vld [vmem:[%s11446 + $0x14] sm:$0xf]
    %v11451 = vld [vmem:[%s11446 + $0x18] sm:$0xff]
    %v11452 = vld [vmem:[%s11446 + $0x20] sm:$0xf]
    %v11453 = vld [vmem:[%s11446 + $0x24] sm:$0xff]
    %v11454 = vld [vmem:[%s11446 + $0x2c] sm:$0xf]
    %v11455 = vld [vmem:[%s11446 + $0x30] sm:$0xff]
    %v11456 = vld [vmem:[%s11446 + $0x38] sm:$0xf]
    %v11457 = vld [vmem:[%s11446 + $0x3c] sm:$0xff]
    %v11458 = vld [vmem:[%s11446 + $0x44] sm:$0xf]
    %v11459 = vld [vmem:[%s11446 + $0x48] sm:$0xff]
    %v11460 = vld [vmem:[%s11446 + $0x50] sm:$0xf]
    %v11461 = vld [vmem:[%s11446 + $0x54] sm:$0xff]
    %v11462 = vld [vmem:[%s11446 + $0x5c] sm:$0xf]
    %v11463 = vld [vmem:[%s11446 + $0x60] sm:$0xff]
    %v11464 = vld [vmem:[%s11446 + $0x68] sm:$0xf]
    %v11465 = vld [vmem:[%s11446 + $0x6c] sm:$0xff]
    %v11466 = vld [vmem:[%s11446 + $0x74] sm:$0xf]
    %v11467 = vld [vmem:[%s11446 + $0x78] sm:$0xff]
    %v11468 = vld [vmem:[%s11446 + $0x80] sm:$0xf]
    %v11469 = vld [vmem:[%s11446 + $0x84] sm:$0xff]
    %v11470 = vld [vmem:[%s11446 + $0x8c] sm:$0xf]
    %v11471 = vld [vmem:[%s11446 + $0x90] sm:$0xff]
    %v11472 = vld [vmem:[%s11446 + $0x98] sm:$0xf]
    %v11473 = vld [vmem:[%s11446 + $0x9c] sm:$0xff]
    %v11474 = vld [vmem:[%s11446 + $0xa4] sm:$0xf]
    %v11475 = vld [vmem:[%s11446 + $0xa8] sm:$0xff]
    %v11476 = vld [vmem:[%s11446 + $0xb0] sm:$0xf]
    %v11477 = vld [vmem:[%s11446 + $0xb4] sm:$0xff]
    %v11478 = vld [vmem:[%s11446 + $0xbc] sm:$0xf]
    %v11479 = vld [vmem:[%s11446 + $0xc0] sm:$0xff]
    %v11480 = vld [vmem:[%s11446 + $0xc8] sm:$0xf]
    %v11481 = vld [vmem:[%s11446 + $0xcc] sm:$0xff]
    %v11482 = vld [vmem:[%s11446 + $0xd4] sm:$0xf]
    %v11483 = vld [vmem:[%s11446 + $0xd8] sm:$0xff]
    %v11484 = vld [vmem:[%s11446 + $0xe0] sm:$0xf]
    %v11485 = vld [vmem:[%s11446 + $0xe4] sm:$0xff]
    %v11486 = vld [vmem:[%s11446 + $0xec] sm:$0xf]
    %v11487 = vld [vmem:[%s11446 + $0xf0] sm:$0xff]
    %v11488 = vld [vmem:[%s11446 + $0xf8] sm:$0xf]
    %v11489 = vld [vmem:[%s11446 + $0xfc] sm:$0xff]
    %v11490 = vld [vmem:[%s11446 + $0x104] sm:$0xf]
    %v11491 = vld [vmem:[%s11446 + $0x108] sm:$0xff]
    %v11492 = vld [vmem:[%s11446 + $0x110] sm:$0xf]
    %v11493 = vld [vmem:[%s11446 + $0x114] sm:$0xff]
    %v11494 = vld [vmem:[%s11446 + $0x11c] sm:$0xf]
    %v11495 = vld [vmem:[%s11446 + $0x120] sm:$0xff]
    %v11496 = vld [vmem:[%s11446 + $0x128] sm:$0xf]
    %v11497 = vld [vmem:[%s11446 + $0x12c] sm:$0xff]
    %v11498 = vld [vmem:[%s11446 + $0x134] sm:$0xf]
    %v11499 = vld [vmem:[%s11446 + $0x138] sm:$0xff]
    %v11500 = vld [vmem:[%s11446 + $0x140] sm:$0xf]
    %v11501 = vld [vmem:[%s11446 + $0x144] sm:$0xff]
    %v11502 = vld [vmem:[%s11446 + $0x14c] sm:$0xf]
    %v11503 = vld [vmem:[%s11446 + $0x150] sm:$0xff]
    %v11504 = vld [vmem:[%s11446 + $0x158] sm:$0xf]
    %v11505 = vld [vmem:[%s11446 + $0x15c] sm:$0xff]
    %v11506 = vld [vmem:[%s11446 + $0x164] sm:$0xf]
    %v11507 = vld [vmem:[%s11446 + $0x168] sm:$0xff]
    %v11508 = vld [vmem:[%s11446 + $0x170] sm:$0xf]
    %v11509 = vld [vmem:[%s11446 + $0x174] sm:$0xff]
    %v11510 = vld [vmem:[%s11446 + $0x17c] sm:$0xf]
    %v11511 = vld [vmem:[%s11446 + $0x180] sm:$0xff]
    %v11512 = vld [vmem:[%s11446 + $0x188] sm:$0xf]
    %v11513 = vld [vmem:[%s11446 + $0x18c] sm:$0xff]
    %v11514 = vld [vmem:[%s11446 + $0x194] sm:$0xf]
    %v11515 = vld [vmem:[%s11446 + $0x198] sm:$0xff]
    %v11516 = vld [vmem:[%s11446 + $0x1a0] sm:$0xf]
    %v11517 = vld [vmem:[%s11446 + $0x1a4] sm:$0xff]
    %v11518 = vld [vmem:[%s11446 + $0x1ac] sm:$0xf]
    %v11519 = vld [vmem:[%s11446 + $0x1b0] sm:$0xff]
    %v11520 = vld [vmem:[%s11446 + $0x1b8] sm:$0xf]
    %v11521 = vld [vmem:[%s11446 + $0x1bc] sm:$0xff]
    %v11522 = vld [vmem:[%s11446 + $0x1c4] sm:$0xf]
    %v11523 = vld [vmem:[%s11446 + $0x1c8] sm:$0xff]
    %v11524 = vld [vmem:[%s11446 + $0x1d0] sm:$0xf]
    %v11525 = vld [vmem:[%s11446 + $0x1d4] sm:$0xff]
    %v11526 = vld [vmem:[%s11446 + $0x1dc] sm:$0xf]
    %v11527 = vld [vmem:[%s11446 + $0x1e0] sm:$0xff]
    %v11528 = vld [vmem:[%s11446 + $0x1e8] sm:$0xf]
    %v11529 = vld [vmem:[%s11446 + $0x1ec] sm:$0xff]
    %v11530 = vld [vmem:[%s11446 + $0x1f4] sm:$0xf]
    %v11531 = vld [vmem:[%s11446 + $0x1f8] sm:$0xff]
    %v11532 = vld [vmem:[%s11446 + $0x200] sm:$0xf]
    %v11533 = vld [vmem:[%s11446 + $0x204] sm:$0xff]
    %v11534 = vld [vmem:[%s11446 + $0x20c] sm:$0xf]
    %v11535 = vld [vmem:[%s11446 + $0x210] sm:$0xff]
    %v11536 = vld [vmem:[%s11446 + $0x218] sm:$0xf]
    %v11537 = vld [vmem:[%s11446 + $0x21c] sm:$0xff]
    %v11538 = vld [vmem:[%s11446 + $0x224] sm:$0xf]
    %v11539 = vld [vmem:[%s11446 + $0x228] sm:$0xff]
    %v11540 = vld [vmem:[%s11446 + $0x230] sm:$0xf]
    %v11541 = vld [vmem:[%s11446 + $0x234] sm:$0xff]
    %v11542 = vld [vmem:[%s11446 + $0x23c] sm:$0xf]
    %v11543 = vld [vmem:[%s11446 + $0x240] sm:$0xff]
    %v11544 = vld [vmem:[%s11446 + $0x248] sm:$0xf]
    %v11545 = vld [vmem:[%s11446 + $0x24c] sm:$0xff]
    %v11546 = vld [vmem:[%s11446 + $0x254] sm:$0xf]
    %s11547 = scalar_lea.vmem [#allocation18], 18
    %v11548 = vld [vmem:[%s11547] sm:$0x7]
    %v11550 = vlaneseq
    %v11551 = vshrl.u32 %v11550, 7
    %v11552 = vsub.s32 0, %v11551
    %v11553 = vrot.slane %v11548, %v11552
    %v11554 = vlaneseq
    %v11555 = vshrl.u32 %v11554, 7
    %v11556 = vsub.s32 1, %v11555
    %v11557 = vrot.slane %v11548, %v11556
    %v11558 = vlaneseq
    %v11559 = vshrl.u32 %v11558, 7
    %v11560 = vsub.s32 2, %v11559
    %v11561 = vrot.slane %v11548, %v11560
    %11568 = vrot.lane.b32.xlu0 %v5783, 32
    %v11569 = vpop.permute.xlu0 %11568
    %11570 = vrot.lane.b32.xlu0 %v5784, 32
    %v11571 = vpop.permute.xlu0 %11570
    %11572 = vrot.lane.b32.xlu0 %v5785, 32
    %v11573 = vpop.permute.xlu0 %11572
    %11574 = vrot.lane.b32.xlu0 %v5786, 32
    %v11575 = vpop.permute.xlu0 %11574
    %vm11576 = vcmask 261120
    %v11577 = vsel %vm11576, %v11569, %v11571
    %v11578 = vsel %vm11576, %v11571, %v11573
    %v11579 = vsel %vm11576, %v11573, %v11575
    %v11683 = vunpack.c.l.b16 %v11447
    %v11684 = vunpack.c.h.b16 %v11447
    %v11685 = vunpack.c.l.b16 %v11448
    %v11686 = vunpack.c.l.b16 %v11449
    %v11687 = vunpack.c.h.b16 %v11449
    %v11688 = vunpack.c.l.b16 %v11450
    %v11689 = vunpack.c.l.b16 %v11451
    %v11690 = vunpack.c.h.b16 %v11451
    %v11691 = vunpack.c.l.b16 %v11452
    %v11692 = vunpack.c.l.b16 %v11453
    %v11693 = vunpack.c.h.b16 %v11453
    %v11694 = vunpack.c.l.b16 %v11454
    %v11695 = vunpack.c.l.b16 %v11455
    %v11696 = vunpack.c.h.b16 %v11455
    %v11697 = vunpack.c.l.b16 %v11456
    %v11698 = vunpack.c.l.b16 %v11457
    %v11699 = vunpack.c.h.b16 %v11457
    %v11700 = vunpack.c.l.b16 %v11458
    %v11701 = vunpack.c.l.b16 %v11459
    %v11702 = vunpack.c.h.b16 %v11459
    %v11703 = vunpack.c.l.b16 %v11460
    %v11704 = vunpack.c.l.b16 %v11461
    %v11705 = vunpack.c.h.b16 %v11461
    %v11706 = vunpack.c.l.b16 %v11462
    %v11707 = vunpack.c.l.b16 %v11463
    %v11708 = vunpack.c.h.b16 %v11463
    %v11709 = vunpack.c.l.b16 %v11464
    %v11710 = vunpack.c.l.b16 %v11465
    %v11711 = vunpack.c.h.b16 %v11465
    %v11712 = vunpack.c.l.b16 %v11466
    %v11713 = vunpack.c.l.b16 %v11467
    %v11714 = vunpack.c.h.b16 %v11467
    %v11715 = vunpack.c.l.b16 %v11468
    %v11716 = vunpack.c.l.b16 %v11469
    %v11717 = vunpack.c.h.b16 %v11469
    %v11718 = vunpack.c.l.b16 %v11470
    %v11719 = vunpack.c.l.b16 %v11471
    %v11720 = vunpack.c.h.b16 %v11471
    %v11721 = vunpack.c.l.b16 %v11472
    %v11722 = vunpack.c.l.b16 %v11473
    %v11723 = vunpack.c.h.b16 %v11473
    %v11724 = vunpack.c.l.b16 %v11474
    %v11725 = vunpack.c.l.b16 %v11475
    %v11726 = vunpack.c.h.b16 %v11475
    %v11727 = vunpack.c.l.b16 %v11476
    %v11728 = vunpack.c.l.b16 %v11477
    %v11729 = vunpack.c.h.b16 %v11477
    %v11730 = vunpack.c.l.b16 %v11478
    %v11731 = vunpack.c.l.b16 %v11479
    %v11732 = vunpack.c.h.b16 %v11479
    %v11733 = vunpack.c.l.b16 %v11480
    %v11734 = vunpack.c.l.b16 %v11481
    %v11735 = vunpack.c.h.b16 %v11481
    %v11736 = vunpack.c.l.b16 %v11482
    %v11737 = vunpack.c.l.b16 %v11483
    %v11738 = vunpack.c.h.b16 %v11483
    %v11739 = vunpack.c.l.b16 %v11484
    %v11740 = vunpack.c.l.b16 %v11485
    %v11741 = vunpack.c.h.b16 %v11485
    %v11742 = vunpack.c.l.b16 %v11486
    %v11743 = vunpack.c.l.b16 %v11487
    %v11744 = vunpack.c.h.b16 %v11487
    %v11745 = vunpack.c.l.b16 %v11488
    %v11746 = vunpack.c.l.b16 %v11489
    %v11747 = vunpack.c.h.b16 %v11489
    %v11748 = vunpack.c.l.b16 %v11490
    %v11749 = vunpack.c.l.b16 %v11491
    %v11750 = vunpack.c.h.b16 %v11491
    %v11751 = vunpack.c.l.b16 %v11492
    %v11752 = vunpack.c.l.b16 %v11493
    %v11753 = vunpack.c.h.b16 %v11493
    %v11754 = vunpack.c.l.b16 %v11494
    %v11755 = vunpack.c.l.b16 %v11495
    %v11756 = vunpack.c.h.b16 %v11495
    %v11757 = vunpack.c.l.b16 %v11496
    %v11758 = vunpack.c.l.b16 %v11497
    %v11759 = vunpack.c.h.b16 %v11497
    %v11760 = vunpack.c.l.b16 %v11498
    %v11761 = vunpack.c.l.b16 %v11499
    %v11762 = vunpack.c.h.b16 %v11499
    %v11763 = vunpack.c.l.b16 %v11500
    %v11764 = vunpack.c.l.b16 %v11501
    %v11765 = vunpack.c.h.b16 %v11501
    %v11766 = vunpack.c.l.b16 %v11502
    %v11767 = vunpack.c.l.b16 %v11503
    %v11768 = vunpack.c.h.b16 %v11503
    %v11769 = vunpack.c.l.b16 %v11504
    %v11770 = vunpack.c.l.b16 %v11505
    %v11771 = vunpack.c.h.b16 %v11505
    %v11772 = vunpack.c.l.b16 %v11506
    %v11773 = vunpack.c.l.b16 %v11507
    %v11774 = vunpack.c.h.b16 %v11507
    %v11775 = vunpack.c.l.b16 %v11508
    %v11776 = vunpack.c.l.b16 %v11509
    %v11777 = vunpack.c.h.b16 %v11509
    %v11778 = vunpack.c.l.b16 %v11510
    %v11779 = vunpack.c.l.b16 %v11511
    %v11780 = vunpack.c.h.b16 %v11511
    %v11781 = vunpack.c.l.b16 %v11512
    %v11782 = vunpack.c.l.b16 %v11513
    %v11783 = vunpack.c.h.b16 %v11513
    %v11784 = vunpack.c.l.b16 %v11514
    %v11785 = vunpack.c.l.b16 %v11515
    %v11786 = vunpack.c.h.b16 %v11515
    %v11787 = vunpack.c.l.b16 %v11516
    %v11788 = vunpack.c.l.b16 %v11517
    %v11789 = vunpack.c.h.b16 %v11517
    %v11790 = vunpack.c.l.b16 %v11518
    %v11791 = vunpack.c.l.b16 %v11519
    %v11792 = vunpack.c.h.b16 %v11519
    %v11793 = vunpack.c.l.b16 %v11520
    %v11794 = vunpack.c.l.b16 %v11521
    %v11795 = vunpack.c.h.b16 %v11521
    %v11796 = vunpack.c.l.b16 %v11522
    %v11797 = vunpack.c.l.b16 %v11523
    %v11798 = vunpack.c.h.b16 %v11523
    %v11799 = vunpack.c.l.b16 %v11524
    %v11800 = vunpack.c.l.b16 %v11525
    %v11801 = vunpack.c.h.b16 %v11525
    %v11802 = vunpack.c.l.b16 %v11526
    %v11803 = vunpack.c.l.b16 %v11527
    %v11804 = vunpack.c.h.b16 %v11527
    %v11805 = vunpack.c.l.b16 %v11528
    %v11806 = vunpack.c.l.b16 %v11529
    %v11807 = vunpack.c.h.b16 %v11529
    %v11808 = vunpack.c.l.b16 %v11530
    %v11809 = vunpack.c.l.b16 %v11531
    %v11810 = vunpack.c.h.b16 %v11531
    %v11811 = vunpack.c.l.b16 %v11532
    %v11812 = vunpack.c.l.b16 %v11533
    %v11813 = vunpack.c.h.b16 %v11533
    %v11814 = vunpack.c.l.b16 %v11534
    %v11815 = vunpack.c.l.b16 %v11535
    %v11816 = vunpack.c.h.b16 %v11535
    %v11817 = vunpack.c.l.b16 %v11536
    %v11818 = vunpack.c.l.b16 %v11537
    %v11819 = vunpack.c.h.b16 %v11537
    %v11820 = vunpack.c.l.b16 %v11538
    %v11821 = vunpack.c.l.b16 %v11539
    %v11822 = vunpack.c.h.b16 %v11539
    %v11823 = vunpack.c.l.b16 %v11540
    %v11824 = vunpack.c.l.b16 %v11541
    %v11825 = vunpack.c.h.b16 %v11541
    %v11826 = vunpack.c.l.b16 %v11542
    %v11827 = vunpack.c.l.b16 %v11543
    %v11828 = vunpack.c.h.b16 %v11543
    %v11829 = vunpack.c.l.b16 %v11544
    %v11830 = vunpack.c.l.b16 %v11545
    %v11831 = vunpack.c.h.b16 %v11545
    %v11832 = vunpack.c.l.b16 %v11546
    %v11833 = vpack.c.b16 %v11686, %v11683
    %v11834 = vpack.c.b16 %v11687, %v11684
    %v11835 = vpack.c.b16 %v11688, %v11685
    %v11836 = vpack.c.b16 %v11692, %v11689
    %v11837 = vpack.c.b16 %v11693, %v11690
    %v11838 = vpack.c.b16 %v11694, %v11691
    %v11839 = vpack.c.b16 %v11698, %v11695
    %v11840 = vpack.c.b16 %v11699, %v11696
    %v11841 = vpack.c.b16 %v11700, %v11697
    %v11842 = vpack.c.b16 %v11704, %v11701
    %v11843 = vpack.c.b16 %v11705, %v11702
    %v11844 = vpack.c.b16 %v11706, %v11703
    %v11845 = vpack.c.b16 %v11710, %v11707
    %v11846 = vpack.c.b16 %v11711, %v11708
    %v11847 = vpack.c.b16 %v11712, %v11709
    %v11848 = vpack.c.b16 %v11716, %v11713
    %v11849 = vpack.c.b16 %v11717, %v11714
    %v11850 = vpack.c.b16 %v11718, %v11715
    %v11851 = vpack.c.b16 %v11722, %v11719
    %v11852 = vpack.c.b16 %v11723, %v11720
    %v11853 = vpack.c.b16 %v11724, %v11721
    %v11854 = vpack.c.b16 %v11728, %v11725
    %v11855 = vpack.c.b16 %v11729, %v11726
    %v11856 = vpack.c.b16 %v11730, %v11727
    %v11857 = vpack.c.b16 %v11734, %v11731
    %v11858 = vpack.c.b16 %v11735, %v11732
    %v11859 = vpack.c.b16 %v11736, %v11733
    %v11860 = vpack.c.b16 %v11740, %v11737
    %v11861 = vpack.c.b16 %v11741, %v11738
    %v11862 = vpack.c.b16 %v11742, %v11739
    %v11863 = vpack.c.b16 %v11746, %v11743
    %v11864 = vpack.c.b16 %v11747, %v11744
    %v11865 = vpack.c.b16 %v11748, %v11745
    %v11866 = vpack.c.b16 %v11752, %v11749
    %v11867 = vpack.c.b16 %v11753, %v11750
    %v11868 = vpack.c.b16 %v11754, %v11751
    %v11869 = vpack.c.b16 %v11758, %v11755
    %v11870 = vpack.c.b16 %v11759, %v11756
    %v11871 = vpack.c.b16 %v11760, %v11757
    %v11872 = vpack.c.b16 %v11764, %v11761
    %v11873 = vpack.c.b16 %v11765, %v11762
    %v11874 = vpack.c.b16 %v11766, %v11763
    %v11875 = vpack.c.b16 %v11770, %v11767
    %v11876 = vpack.c.b16 %v11771, %v11768
    %v11877 = vpack.c.b16 %v11772, %v11769
    %v11878 = vpack.c.b16 %v11776, %v11773
    %v11879 = vpack.c.b16 %v11777, %v11774
    %v11880 = vpack.c.b16 %v11778, %v11775
    %v11881 = vpack.c.b16 %v11782, %v11779
    %v11882 = vpack.c.b16 %v11783, %v11780
    %v11883 = vpack.c.b16 %v11784, %v11781
    %v11884 = vpack.c.b16 %v11788, %v11785
    %v11885 = vpack.c.b16 %v11789, %v11786
    %v11886 = vpack.c.b16 %v11790, %v11787
    %v11887 = vpack.c.b16 %v11794, %v11791
    %v11888 = vpack.c.b16 %v11795, %v11792
    %v11889 = vpack.c.b16 %v11796, %v11793
    %v11890 = vpack.c.b16 %v11800, %v11797
    %v11891 = vpack.c.b16 %v11801, %v11798
    %v11892 = vpack.c.b16 %v11802, %v11799
    %v11893 = vpack.c.b16 %v11806, %v11803
    %v11894 = vpack.c.b16 %v11807, %v11804
    %v11895 = vpack.c.b16 %v11808, %v11805
    %v11896 = vpack.c.b16 %v11812, %v11809
    %v11897 = vpack.c.b16 %v11813, %v11810
    %v11898 = vpack.c.b16 %v11814, %v11811
    %v11899 = vpack.c.b16 %v11818, %v11815
    %v11900 = vpack.c.b16 %v11819, %v11816
    %v11901 = vpack.c.b16 %v11820, %v11817
    %v11902 = vpack.c.b16 %v11824, %v11821
    %v11903 = vpack.c.b16 %v11825, %v11822
    %v11904 = vpack.c.b16 %v11826, %v11823
    %v11905 = vpack.c.b16 %v11830, %v11827
    %v11906 = vpack.c.b16 %v11831, %v11828
    %v11907 = vpack.c.b16 %v11832, %v11829
    %v11984 = vsel %vm244, %v11575, 0
    %11986 = vmatprep.subr.bf16.mxu0 %v11834
    %11987 = vmatpush1.bf16.msra.mxu0 %v11833
    %11988 = vmatprep.subr.bf16.mxu0 %v11837
    %11989 = vmatpush1.bf16.msra.mxu0 %v11836
    %11990 = vmatprep.subr.bf16.mxu0 %v11840
    %11991 = vmatpush1.bf16.msra.mxu0 %v11839
    %11992 = vmatprep.subr.bf16.mxu0 %v11843
    %11993 = vmatpush1.bf16.msra.mxu0 %v11842
    %11994 = vmatprep.subr.bf16.mxu0 %v11846
    %11995 = vmatpush1.bf16.msra.mxu0 %v11845
    %11996 = vmatprep.subr.bf16.mxu0 %v11849
    %11997 = vmatpush1.bf16.msra.mxu0 %v11848
    %11998 = vmatprep.subr.bf16.mxu0 %v11852
    %11999 = vmatpush1.bf16.msra.mxu0 %v11851
    %12000 = vmatprep.subr.bf16.mxu0 %v11855
    %12001 = vmatpush1.bf16.msra.mxu0 %v11854
    %12002 = vmatprep.subr.bf16.mxu0 %v11858
    %12003 = vmatpush1.bf16.msra.mxu0 %v11857
    %12004 = vmatprep.subr.bf16.mxu0 %v11861
    %12005 = vmatpush1.bf16.msra.mxu0 %v11860
    %12006 = vmatprep.subr.bf16.mxu0 %v11864
    %12007 = vmatpush1.bf16.msra.mxu0 %v11863
    %12008 = vmatprep.subr.bf16.mxu0 %v11867
    %12009 = vmatpush1.bf16.msra.mxu0 %v11866
    %12010 = vmatprep.subr.bf16.mxu0 %v11870
    %12011 = vmatpush1.bf16.msra.mxu0 %v11869
    %12012 = vmatprep.subr.bf16.mxu0 %v11873
    %12013 = vmatpush1.bf16.msra.mxu0 %v11872
    %12014 = vmatprep.subr.bf16.mxu0 %v11876
    %12015 = vmatpush1.bf16.msra.mxu0 %v11875
    %12016 = vmatprep.subr.bf16.mxu0 %v11879
    %12017 = vmatpush1.bf16.msra.mxu0 %v11878
    %12018 = vmatprep.mubr.bf16.mxu0 %v11578
    %12019 = vmatmul.mubr.bf16.gmra.mrb[0].mxu0 %v11577
    %v12020 = vpop.f32.mrb[0].mxu0
    %v12021 = vadd.f32 %v11553, %v12020
    %v12022 = vpop.f32.mrb[0].mxu0
    %v12023 = vadd.f32 %v11557, %v12022
    %v12024 = vpop.f32.mrb[0].mxu0
    %v12025 = vpop.f32.mrb[0].mxu0
    %12026 = vdwg.mxu0
    %12027 = vmatprep.subr.bf16.mxu0 %v11882
    %12028 = vmatpush1.bf16.msra.mxu0 %v11881
    %12029 = vmatprep.subr.bf16.mxu0 %v11885
    %12030 = vmatpush1.bf16.msra.mxu0 %v11884
    %12031 = vmatprep.subr.bf16.mxu0 %v11888
    %12032 = vmatpush1.bf16.msra.mxu0 %v11887
    %12033 = vmatprep.subr.bf16.mxu0 %v11891
    %12034 = vmatpush1.bf16.msra.mxu0 %v11890
    %12035 = vmatprep.subr.bf16.mxu0 %v11894
    %12036 = vmatpush1.bf16.msra.mxu0 %v11893
    %12037 = vmatprep.subr.bf16.mxu0 %v11897
    %12038 = vmatpush1.bf16.msra.mxu0 %v11896
    %12039 = vmatprep.subr.bf16.mxu0 %v11900
    %12040 = vmatpush1.bf16.msra.mxu0 %v11899
    %12041 = vmatprep.subr.bf16.mxu0 %v11903
    %12042 = vmatpush1.bf16.msra.mxu0 %v11902
    %12043 = vmatprep.subr.bf16.mxu0 %v11906
    %12044 = vmatpush1.bf16.msra.mxu0 %v11905
    %12045 = vmatprep.subr.bf16.mxu0 0
    %12046 = vmatpush1.bf16.msra.mxu0 0
    %12047 = vmatprep.subr.bf16.mxu0 0
    %12048 = vmatpush1.bf16.msra.mxu0 0
    %12049 = vmatprep.subr.bf16.mxu0 0
    %12050 = vmatpush1.bf16.msra.mxu0 0
    %12051 = vmatprep.subr.bf16.mxu0 0
    %12052 = vmatpush1.bf16.msra.mxu0 0
    %12053 = vmatprep.subr.bf16.mxu0 0
    %12054 = vmatpush1.bf16.msra.mxu0 0
    %12055 = vmatprep.subr.bf16.mxu0 0
    %12056 = vmatpush1.bf16.msra.mxu0 0
    %12057 = vmatprep.subr.bf16.mxu0 0
    %12058 = vmatpush1.bf16.msra.mxu0 0
    %12059 = vmatprep.mubr.bf16.mxu0 %v11984
    %12060 = vmatmul.mubr.bf16.gmra.mrb[0].mxu0 %v11579
    %v12061 = vpop.f32.mrb[0].mxu0
    %v12062 = vadd.f32 %v12021, %v12061
    %v12063 = vpop.f32.mrb[0].mxu0
    %v12064 = vadd.f32 %v12023, %v12063
    %v12065 = vpop.f32.mrb[0].mxu0
    %v12066 = vpop.f32.mrb[0].mxu0
    %12067 = vdwg.mxu0
    %12068 = vmatprep.subr.bf16.mxu0 0
    %12069 = vmatpush1.bf16.msra.mxu0 %v11835
    %12070 = vmatprep.subr.bf16.mxu0 0
    %12071 = vmatpush1.bf16.msra.mxu0 %v11838
    %12072 = vmatprep.subr.bf16.mxu0 0
    %12073 = vmatpush1.bf16.msra.mxu0 %v11841
    %12074 = vmatprep.subr.bf16.mxu0 0
    %12075 = vmatpush1.bf16.msra.mxu0 %v11844
    %12076 = vmatprep.subr.bf16.mxu0 0
    %12077 = vmatpush1.bf16.msra.mxu0 %v11847
    %12078 = vmatprep.subr.bf16.mxu0 0
    %12079 = vmatpush1.bf16.msra.mxu0 %v11850
    %12080 = vmatprep.subr.bf16.mxu0 0
    %12081 = vmatpush1.bf16.msra.mxu0 %v11853
    %12082 = vmatprep.subr.bf16.mxu0 0
    %12083 = vmatpush1.bf16.msra.mxu0 %v11856
    %12084 = vmatprep.subr.bf16.mxu0 0
    %12085 = vmatpush1.bf16.msra.mxu0 %v11859
    %12086 = vmatprep.subr.bf16.mxu0 0
    %12087 = vmatpush1.bf16.msra.mxu0 %v11862
    %12088 = vmatprep.subr.bf16.mxu0 0
    %12089 = vmatpush1.bf16.msra.mxu0 %v11865
    %12090 = vmatprep.subr.bf16.mxu0 0
    %12091 = vmatpush1.bf16.msra.mxu0 %v11868
    %12092 = vmatprep.subr.bf16.mxu0 0
    %12093 = vmatpush1.bf16.msra.mxu0 %v11871
    %12094 = vmatprep.subr.bf16.mxu0 0
    %12095 = vmatpush1.bf16.msra.mxu0 %v11874
    %12096 = vmatprep.subr.bf16.mxu0 0
    %12097 = vmatpush1.bf16.msra.mxu0 %v11877
    %12098 = vmatprep.subr.bf16.mxu0 0
    %12099 = vmatpush1.bf16.msra.mxu0 %v11880
    %12100 = vmatprep.mubr.bf16.mxu0 %v11578
    %12101 = vmatmul.mubr.bf16.gmra.mrb[0].mxu0 %v11577
    %v12102 = vpop.f32.mrb[0].mxu0
    %v12103 = vadd.f32 %v11561, %v12102
    %v12104 = vpop.f32.mrb[0].mxu0
    %v12105 = vpop.f32.mrb[0].mxu0
    %v12106 = vpop.f32.mrb[0].mxu0
    %12107 = vdwg.mxu0
    %12108 = vmatprep.subr.bf16.mxu0 0
    %12109 = vmatpush1.bf16.msra.mxu0 %v11883
    %12110 = vmatprep.subr.bf16.mxu0 0
    %12111 = vmatpush1.bf16.msra.mxu0 %v11886
    %12112 = vmatprep.subr.bf16.mxu0 0
    %12113 = vmatpush1.bf16.msra.mxu0 %v11889
    %12114 = vmatprep.subr.bf16.mxu0 0
    %12115 = vmatpush1.bf16.msra.mxu0 %v11892
    %12116 = vmatprep.subr.bf16.mxu0 0
    %12117 = vmatpush1.bf16.msra.mxu0 %v11895
    %12118 = vmatprep.subr.bf16.mxu0 0
    %12119 = vmatpush1.bf16.msra.mxu0 %v11898
    %12120 = vmatprep.subr.bf16.mxu0 0
    %12121 = vmatpush1.bf16.msra.mxu0 %v11901
    %12122 = vmatprep.subr.bf16.mxu0 0
    %12123 = vmatpush1.bf16.msra.mxu0 %v11904
    %12124 = vmatprep.subr.bf16.mxu0 0
    %12125 = vmatpush1.bf16.msra.mxu0 %v11907
    %12126 = vmatprep.subr.bf16.mxu0 0
    %12127 = vmatpush1.bf16.msra.mxu0 0
    %12128 = vmatprep.subr.bf16.mxu0 0
    %12129 = vmatpush1.bf16.msra.mxu0 0
    %12130 = vmatprep.subr.bf16.mxu0 0
    %12131 = vmatpush1.bf16.msra.mxu0 0
    %12132 = vmatprep.subr.bf16.mxu0 0
    %12133 = vmatpush1.bf16.msra.mxu0 0
    %12134 = vmatprep.subr.bf16.mxu0 0
    %12135 = vmatpush1.bf16.msra.mxu0 0
    %12136 = vmatprep.subr.bf16.mxu0 0
    %12137 = vmatpush1.bf16.msra.mxu0 0
    %12138 = vmatprep.subr.bf16.mxu0 0
    %12139 = vmatpush1.bf16.msra.mxu0 0
    %12140 = vmatprep.mubr.bf16.mxu0 %v11984
    %12141 = vmatmul.mubr.bf16.gmra.mrb[0].mxu0 %v11579
    %v12142 = vpop.f32.mrb[0].mxu0
    %v12143 = vadd.f32 %v12103, %v12142
    %v12144 = vpop.f32.mrb[0].mxu0
    %v12145 = vpop.f32.mrb[0].mxu0
    %v12146 = vpop.f32.mrb[0].mxu0
    %12147 = vdwg.mxu0
    %v12148 = vmax.f32 %v12062, 0.0
    %v12149 = vmax.f32 %v12064, 0.0
    %v12150 = vmax.f32 %v12143, 0.0
    %v12151 = vpack.c.bf16 %v12148, %v12148
    %v12152 = vpack.c.bf16 %v12149, %v12149
    %v12153 = vpack.c.bf16 %v12150, %v12150
    %s12154 = scalar_lea.vmem %s11, 912
    %v12155 = vld [vmem:[%s12154] sm:$0xf]
    %v12156 = vld [vmem:[%s12154 + $0x4] sm:$0xf]
    %v12157 = vld [vmem:[%s12154 + $0x8] sm:$0xf]
    %v12158 = vld [vmem:[%s12154 + $0xc] sm:$0xf]
    %v12159 = vld [vmem:[%s12154 + $0x10] sm:$0xf]
    %v12160 = vld [vmem:[%s12154 + $0x14] sm:$0xf]
    %v12161 = vld [vmem:[%s12154 + $0x18] sm:$0xf]
    %v12162 = vld [vmem:[%s12154 + $0x1c] sm:$0xf]
    %v12163 = vld [vmem:[%s12154 + $0x20] sm:$0xf]
    %v12164 = vld [vmem:[%s12154 + $0x24] sm:$0xf]
    %v12165 = vld [vmem:[%s12154 + $0x28] sm:$0xf]
    %v12166 = vld [vmem:[%s12154 + $0x2c] sm:$0xf]
    %v12167 = vld [vmem:[%s12154 + $0x30] sm:$0xf]
    %v12168 = vld [vmem:[%s12154 + $0x34] sm:$0xf]
    %v12169 = vld [vmem:[%s12154 + $0x38] sm:$0xf]
    %v12170 = vld [vmem:[%s12154 + $0x3c] sm:$0xf]
    %v12171 = vld [vmem:[%s12154 + $0x40] sm:$0xf]
    %v12172 = vld [vmem:[%s12154 + $0x44] sm:$0xf]
    %v12173 = vld [vmem:[%s12154 + $0x48] sm:$0xf]
    %v12174 = vld [vmem:[%s12154 + $0x4c] sm:$0xf]
    %v12175 = vld [vmem:[%s12154 + $0x50] sm:$0xf]
    %v12176 = vld [vmem:[%s12154 + $0x54] sm:$0xf]
    %v12177 = vld [vmem:[%s12154 + $0x58] sm:$0xf]
    %v12178 = vld [vmem:[%s12154 + $0x5c] sm:$0xf]
    %v12179 = vld [vmem:[%s12154 + $0x60] sm:$0xf]
    %v12180 = vld [vmem:[%s12154 + $0x64] sm:$0xf]
    %v12181 = vld [vmem:[%s12154 + $0x68] sm:$0xf]
    %v12182 = vld [vmem:[%s12154 + $0x6c] sm:$0xf]
    %v12183 = vld [vmem:[%s12154 + $0x70] sm:$0xf]
    %v12184 = vld [vmem:[%s12154 + $0x74] sm:$0xf]
    %v12185 = vld [vmem:[%s12154 + $0x78] sm:$0xf]
    %v12186 = vld [vmem:[%s12154 + $0x7c] sm:$0xf]
    %v12187 = vld [vmem:[%s12154 + $0x80] sm:$0xf]
    %v12188 = vld [vmem:[%s12154 + $0x84] sm:$0xf]
    %v12189 = vld [vmem:[%s12154 + $0x88] sm:$0xf]
    %v12190 = vld [vmem:[%s12154 + $0x8c] sm:$0xf]
    %v12191 = vld [vmem:[%s12154 + $0x90] sm:$0xf]
    %v12192 = vld [vmem:[%s12154 + $0x94] sm:$0x3]
    %v12231 = vunpack.c.l.b16 %v12155
    %v12232 = vunpack.c.l.b16 %v12156
    %v12233 = vunpack.c.l.b16 %v12157
    %v12234 = vunpack.c.l.b16 %v12158
    %v12235 = vunpack.c.l.b16 %v12159
    %v12236 = vunpack.c.l.b16 %v12160
    %v12237 = vunpack.c.l.b16 %v12161
    %v12238 = vunpack.c.l.b16 %v12162
    %v12239 = vunpack.c.l.b16 %v12163
    %v12240 = vunpack.c.l.b16 %v12164
    %v12241 = vunpack.c.l.b16 %v12165
    %v12242 = vunpack.c.l.b16 %v12166
    %v12243 = vunpack.c.l.b16 %v12167
    %v12244 = vunpack.c.l.b16 %v12168
    %v12245 = vunpack.c.l.b16 %v12169
    %v12246 = vunpack.c.l.b16 %v12170
    %v12247 = vunpack.c.l.b16 %v12171
    %v12248 = vunpack.c.l.b16 %v12172
    %v12249 = vunpack.c.l.b16 %v12173
    %v12250 = vunpack.c.l.b16 %v12174
    %v12251 = vunpack.c.l.b16 %v12175
    %v12252 = vunpack.c.l.b16 %v12176
    %v12253 = vunpack.c.l.b16 %v12177
    %v12254 = vunpack.c.l.b16 %v12178
    %v12255 = vunpack.c.l.b16 %v12179
    %v12256 = vunpack.c.l.b16 %v12180
    %v12257 = vunpack.c.l.b16 %v12181
    %v12258 = vunpack.c.l.b16 %v12182
    %v12259 = vunpack.c.l.b16 %v12183
    %v12260 = vunpack.c.l.b16 %v12184
    %v12261 = vunpack.c.l.b16 %v12185
    %v12262 = vunpack.c.l.b16 %v12186
    %v12263 = vunpack.c.l.b16 %v12187
    %v12264 = vunpack.c.l.b16 %v12188
    %v12265 = vunpack.c.l.b16 %v12189
    %v12266 = vunpack.c.l.b16 %v12190
    %v12267 = vunpack.c.l.b16 %v12191
    %v12268 = vunpack.c.l.b16 %v12192
    %v12269 = vpack.c.b16 %v12232, %v12231
    %v12270 = vpack.c.b16 %v12234, %v12233
    %v12271 = vpack.c.b16 %v12236, %v12235
    %v12272 = vpack.c.b16 %v12238, %v12237
    %v12273 = vpack.c.b16 %v12240, %v12239
    %v12274 = vpack.c.b16 %v12242, %v12241
    %v12275 = vpack.c.b16 %v12244, %v12243
    %v12276 = vpack.c.b16 %v12246, %v12245
    %v12277 = vpack.c.b16 %v12248, %v12247
    %v12278 = vpack.c.b16 %v12250, %v12249
    %v12279 = vpack.c.b16 %v12252, %v12251
    %v12280 = vpack.c.b16 %v12254, %v12253
    %v12281 = vpack.c.b16 %v12256, %v12255
    %v12282 = vpack.c.b16 %v12258, %v12257
    %v12283 = vpack.c.b16 %v12260, %v12259
    %v12284 = vpack.c.b16 %v12262, %v12261
    %v12285 = vpack.c.b16 %v12264, %v12263
    %v12286 = vpack.c.b16 %v12266, %v12265
    %v12287 = vpack.c.b16 %v12268, %v12267
    %v12307 = vsel %vm1420, %v12153, 0
    %v12310 = vsel %vm1424, %v12287, 0
    %12312 = vmatprep.subr.bf16.mxu0 0
    %12313 = vmatpush1.bf16.msra.mxu0 %v12269
    %12314 = vmatprep.subr.bf16.mxu0 0
    %12315 = vmatpush1.bf16.msra.mxu0 %v12270
    %12316 = vmatprep.subr.bf16.mxu0 0
    %12317 = vmatpush1.bf16.msra.mxu0 %v12271
    %12318 = vmatprep.subr.bf16.mxu0 0
    %12319 = vmatpush1.bf16.msra.mxu0 %v12272
    %12320 = vmatprep.subr.bf16.mxu0 0
    %12321 = vmatpush1.bf16.msra.mxu0 %v12273
    %12322 = vmatprep.subr.bf16.mxu0 0
    %12323 = vmatpush1.bf16.msra.mxu0 %v12274
    %12324 = vmatprep.subr.bf16.mxu0 0
    %12325 = vmatpush1.bf16.msra.mxu0 %v12275
    %12326 = vmatprep.subr.bf16.mxu0 0
    %12327 = vmatpush1.bf16.msra.mxu0 %v12276
    %12328 = vmatprep.subr.bf16.mxu0 0
    %12329 = vmatpush1.bf16.msra.mxu0 %v12277
    %12330 = vmatprep.subr.bf16.mxu0 0
    %12331 = vmatpush1.bf16.msra.mxu0 %v12278
    %12332 = vmatprep.subr.bf16.mxu0 0
    %12333 = vmatpush1.bf16.msra.mxu0 %v12279
    %12334 = vmatprep.subr.bf16.mxu0 0
    %12335 = vmatpush1.bf16.msra.mxu0 %v12280
    %12336 = vmatprep.subr.bf16.mxu0 0
    %12337 = vmatpush1.bf16.msra.mxu0 %v12281
    %12338 = vmatprep.subr.bf16.mxu0 0
    %12339 = vmatpush1.bf16.msra.mxu0 %v12282
    %12340 = vmatprep.subr.bf16.mxu0 0
    %12341 = vmatpush1.bf16.msra.mxu0 %v12283
    %12342 = vmatprep.subr.bf16.mxu0 0
    %12343 = vmatpush1.bf16.msra.mxu0 %v12284
    %12344 = vmatprep.mubr.bf16.mxu0 %v12152
    %12345 = vmatmul.mubr.bf16.gmra.mrb[0].mxu0 %v12151
    %v12346 = vpop.f32.mrb[0].mxu0
    %v12347 = vadd.f32 0.0, %v12346
    %v12348 = vpop.f32.mrb[0].mxu0
    %v12349 = vpop.f32.mrb[0].mxu0
    %v12350 = vpop.f32.mrb[0].mxu0
    %12351 = vdwg.mxu0
    %12352 = vmatprep.subr.bf16.mxu0 0
    %12353 = vmatpush1.bf16.msra.mxu0 %v12285
    %12354 = vmatprep.subr.bf16.mxu0 0
    %12355 = vmatpush1.bf16.msra.mxu0 %v12286
    %12356 = vmatprep.subr.bf16.mxu0 0
    %12357 = vmatpush1.bf16.msra.mxu0 %v12310
    %12358 = vmatprep.subr.bf16.mxu0 0
    %12359 = vmatpush1.bf16.msra.mxu0 0
    %12360 = vmatprep.subr.bf16.mxu0 0
    %12361 = vmatpush1.bf16.msra.mxu0 0
    %12362 = vmatprep.subr.bf16.mxu0 0
    %12363 = vmatpush1.bf16.msra.mxu0 0
    %12364 = vmatprep.subr.bf16.mxu0 0
    %12365 = vmatpush1.bf16.msra.mxu0 0
    %12366 = vmatprep.subr.bf16.mxu0 0
    %12367 = vmatpush1.bf16.msra.mxu0 0
    %12368 = vmatprep.subr.bf16.mxu0 0
    %12369 = vmatpush1.bf16.msra.mxu0 0
    %12370 = vmatprep.subr.bf16.mxu0 0
    %12371 = vmatpush1.bf16.msra.mxu0 0
    %12372 = vmatprep.subr.bf16.mxu0 0
    %12373 = vmatpush1.bf16.msra.mxu0 0
    %12374 = vmatprep.subr.bf16.mxu0 0
    %12375 = vmatpush1.bf16.msra.mxu0 0
    %12376 = vmatprep.subr.bf16.mxu0 0
    %12377 = vmatpush1.bf16.msra.mxu0 0
    %12378 = vmatprep.subr.bf16.mxu0 0
    %12379 = vmatpush1.bf16.msra.mxu0 0
    %12380 = vmatprep.subr.bf16.mxu0 0
    %12381 = vmatpush1.bf16.msra.mxu0 0
    %12382 = vmatprep.subr.bf16.mxu0 0
    %12383 = vmatpush1.bf16.msra.mxu0 0
    %12384 = vmatprep.mubr.bf16.mxu0 0
    %12385 = vmatmul.mubr.bf16.gmra.mrb[0].mxu0 %v12307
    %v12386 = vpop.f32.mrb[0].mxu0
    %v12387 = vadd.f32 %v12347, %v12386
    %v12388 = vpop.f32.mrb[0].mxu0
    %v12389 = vpop.f32.mrb[0].mxu0
    %v12390 = vpop.f32.mrb[0].mxu0
    %12391 = vdwg.mxu0
    %s12392 = scalar_lea.vmem [#allocation16], 4200
    %v12393 = vld [vmem:[%s12392] sm:$0xff]
    %v12394 = vld [vmem:[%s12392 + $0x8] sm:$0xf]
    %v12395 = vld [vmem:[%s12392 + $0xc] sm:$0xff]
    %v12396 = vld [vmem:[%s12392 + $0x14] sm:$0xf]
    %v12397 = vld [vmem:[%s12392 + $0x18] sm:$0xff]
    %v12398 = vld [vmem:[%s12392 + $0x20] sm:$0xf]
    %v12399 = vld [vmem:[%s12392 + $0x24] sm:$0xff]
    %v12400 = vld [vmem:[%s12392 + $0x2c] sm:$0xf]
    %v12401 = vld [vmem:[%s12392 + $0x30] sm:$0xff]
    %v12402 = vld [vmem:[%s12392 + $0x38] sm:$0xf]
    %v12403 = vld [vmem:[%s12392 + $0x3c] sm:$0xff]
    %v12404 = vld [vmem:[%s12392 + $0x44] sm:$0xf]
    %v12405 = vld [vmem:[%s12392 + $0x48] sm:$0xff]
    %v12406 = vld [vmem:[%s12392 + $0x50] sm:$0xf]
    %v12407 = vld [vmem:[%s12392 + $0x54] sm:$0xff]
    %v12408 = vld [vmem:[%s12392 + $0x5c] sm:$0xf]
    %v12409 = vld [vmem:[%s12392 + $0x60] sm:$0xff]
    %v12410 = vld [vmem:[%s12392 + $0x68] sm:$0xf]
    %v12411 = vld [vmem:[%s12392 + $0x6c] sm:$0xff]
    %v12412 = vld [vmem:[%s12392 + $0x74] sm:$0xf]
    %v12413 = vld [vmem:[%s12392 + $0x78] sm:$0xff]
    %v12414 = vld [vmem:[%s12392 + $0x80] sm:$0xf]
    %v12415 = vld [vmem:[%s12392 + $0x84] sm:$0xff]
    %v12416 = vld [vmem:[%s12392 + $0x8c] sm:$0xf]
    %v12417 = vld [vmem:[%s12392 + $0x90] sm:$0xff]
    %v12418 = vld [vmem:[%s12392 + $0x98] sm:$0xf]
    %v12419 = vld [vmem:[%s12392 + $0x9c] sm:$0xff]
    %v12420 = vld [vmem:[%s12392 + $0xa4] sm:$0xf]
    %v12421 = vld [vmem:[%s12392 + $0xa8] sm:$0xff]
    %v12422 = vld [vmem:[%s12392 + $0xb0] sm:$0xf]
    %v12423 = vld [vmem:[%s12392 + $0xb4] sm:$0xff]
    %v12424 = vld [vmem:[%s12392 + $0xbc] sm:$0xf]
    %v12425 = vld [vmem:[%s12392 + $0xc0] sm:$0xff]
    %v12426 = vld [vmem:[%s12392 + $0xc8] sm:$0xf]
    %v12427 = vld [vmem:[%s12392 + $0xcc] sm:$0xff]
    %v12428 = vld [vmem:[%s12392 + $0xd4] sm:$0xf]
    %v12429 = vld [vmem:[%s12392 + $0xd8] sm:$0xff]
    %v12430 = vld [vmem:[%s12392 + $0xe0] sm:$0xf]
    %v12431 = vld [vmem:[%s12392 + $0xe4] sm:$0xff]
    %v12432 = vld [vmem:[%s12392 + $0xec] sm:$0xf]
    %v12433 = vld [vmem:[%s12392 + $0xf0] sm:$0xff]
    %v12434 = vld [vmem:[%s12392 + $0xf8] sm:$0xf]
    %v12435 = vld [vmem:[%s12392 + $0xfc] sm:$0xff]
    %v12436 = vld [vmem:[%s12392 + $0x104] sm:$0xf]
    %v12437 = vld [vmem:[%s12392 + $0x108] sm:$0xff]
    %v12438 = vld [vmem:[%s12392 + $0x110] sm:$0xf]
    %v12439 = vld [vmem:[%s12392 + $0x114] sm:$0xff]
    %v12440 = vld [vmem:[%s12392 + $0x11c] sm:$0xf]
    %v12441 = vld [vmem:[%s12392 + $0x120] sm:$0xff]
    %v12442 = vld [vmem:[%s12392 + $0x128] sm:$0xf]
    %v12443 = vld [vmem:[%s12392 + $0x12c] sm:$0xff]
    %v12444 = vld [vmem:[%s12392 + $0x134] sm:$0xf]
    %v12445 = vld [vmem:[%s12392 + $0x138] sm:$0xff]
    %v12446 = vld [vmem:[%s12392 + $0x140] sm:$0xf]
    %v12447 = vld [vmem:[%s12392 + $0x144] sm:$0xff]
    %v12448 = vld [vmem:[%s12392 + $0x14c] sm:$0xf]
    %v12449 = vld [vmem:[%s12392 + $0x150] sm:$0xff]
    %v12450 = vld [vmem:[%s12392 + $0x158] sm:$0xf]
    %v12451 = vld [vmem:[%s12392 + $0x15c] sm:$0xff]
    %v12452 = vld [vmem:[%s12392 + $0x164] sm:$0xf]
    %v12453 = vld [vmem:[%s12392 + $0x168] sm:$0xff]
    %v12454 = vld [vmem:[%s12392 + $0x170] sm:$0xf]
    %v12455 = vld [vmem:[%s12392 + $0x174] sm:$0xff]
    %v12456 = vld [vmem:[%s12392 + $0x17c] sm:$0xf]
    %v12457 = vld [vmem:[%s12392 + $0x180] sm:$0xff]
    %v12458 = vld [vmem:[%s12392 + $0x188] sm:$0xf]
    %v12459 = vld [vmem:[%s12392 + $0x18c] sm:$0xff]
    %v12460 = vld [vmem:[%s12392 + $0x194] sm:$0xf]
    %v12461 = vld [vmem:[%s12392 + $0x198] sm:$0xff]
    %v12462 = vld [vmem:[%s12392 + $0x1a0] sm:$0xf]
    %v12463 = vld [vmem:[%s12392 + $0x1a4] sm:$0xff]
    %v12464 = vld [vmem:[%s12392 + $0x1ac] sm:$0xf]
    %v12465 = vld [vmem:[%s12392 + $0x1b0] sm:$0xff]
    %v12466 = vld [vmem:[%s12392 + $0x1b8] sm:$0xf]
    %v12467 = vld [vmem:[%s12392 + $0x1bc] sm:$0xff]
    %v12468 = vld [vmem:[%s12392 + $0x1c4] sm:$0xf]
    %v12469 = vld [vmem:[%s12392 + $0x1c8] sm:$0xff]
    %v12470 = vld [vmem:[%s12392 + $0x1d0] sm:$0xf]
    %v12471 = vld [vmem:[%s12392 + $0x1d4] sm:$0xff]
    %v12472 = vld [vmem:[%s12392 + $0x1dc] sm:$0xf]
    %v12473 = vld [vmem:[%s12392 + $0x1e0] sm:$0xff]
    %v12474 = vld [vmem:[%s12392 + $0x1e8] sm:$0xf]
    %v12475 = vld [vmem:[%s12392 + $0x1ec] sm:$0xff]
    %v12476 = vld [vmem:[%s12392 + $0x1f4] sm:$0xf]
    %v12477 = vld [vmem:[%s12392 + $0x1f8] sm:$0xff]
    %v12478 = vld [vmem:[%s12392 + $0x200] sm:$0xf]
    %v12479 = vld [vmem:[%s12392 + $0x204] sm:$0xff]
    %v12480 = vld [vmem:[%s12392 + $0x20c] sm:$0xf]
    %v12481 = vld [vmem:[%s12392 + $0x210] sm:$0xff]
    %v12482 = vld [vmem:[%s12392 + $0x218] sm:$0xf]
    %v12483 = vld [vmem:[%s12392 + $0x21c] sm:$0xff]
    %v12484 = vld [vmem:[%s12392 + $0x224] sm:$0xf]
    %v12485 = vld [vmem:[%s12392 + $0x228] sm:$0xff]
    %v12486 = vld [vmem:[%s12392 + $0x230] sm:$0xf]
    %v12487 = vld [vmem:[%s12392 + $0x234] sm:$0xff]
    %v12488 = vld [vmem:[%s12392 + $0x23c] sm:$0xf]
    %v12489 = vld [vmem:[%s12392 + $0x240] sm:$0xff]
    %v12490 = vld [vmem:[%s12392 + $0x248] sm:$0xf]
    %v12491 = vld [vmem:[%s12392 + $0x24c] sm:$0xff]
    %v12492 = vld [vmem:[%s12392 + $0x254] sm:$0xf]
    %s12493 = scalar_lea.vmem [#allocation18], 21
    %v12494 = vld [vmem:[%s12493] sm:$0x7]
    %v12496 = vlaneseq
    %v12497 = vshrl.u32 %v12496, 7
    %v12498 = vsub.s32 0, %v12497
    %v12499 = vrot.slane %v12494, %v12498
    %v12500 = vlaneseq
    %v12501 = vshrl.u32 %v12500, 7
    %v12502 = vsub.s32 1, %v12501
    %v12503 = vrot.slane %v12494, %v12502
    %v12504 = vlaneseq
    %v12505 = vshrl.u32 %v12504, 7
    %v12506 = vsub.s32 2, %v12505
    %v12507 = vrot.slane %v12494, %v12506
    %12514 = vrot.lane.b32.xlu0 %v5786, 16
    %v12515 = vpop.permute.xlu0 %12514
    %12516 = vrot.lane.b32.xlu0 %v5787, 16
    %v12517 = vpop.permute.xlu0 %12516
    %12518 = vrot.lane.b32.xlu0 %v5788, 16
    %v12519 = vpop.permute.xlu0 %12518
    %12520 = vrot.lane.b32.xlu0 %v5789, 16
    %v12521 = vpop.permute.xlu0 %12520
    %vm12522 = vcmask 130048
    %v12523 = vsel %vm12522, %v12515, %v12517
    %v12524 = vsel %vm12522, %v12517, %v12519
    %v12525 = vsel %vm12522, %v12519, %v12521
    %v12629 = vunpack.c.l.b16 %v12393
    %v12630 = vunpack.c.h.b16 %v12393
    %v12631 = vunpack.c.l.b16 %v12394
    %v12632 = vunpack.c.l.b16 %v12395
    %v12633 = vunpack.c.h.b16 %v12395
    %v12634 = vunpack.c.l.b16 %v12396
    %v12635 = vunpack.c.l.b16 %v12397
    %v12636 = vunpack.c.h.b16 %v12397
    %v12637 = vunpack.c.l.b16 %v12398
    %v12638 = vunpack.c.l.b16 %v12399
    %v12639 = vunpack.c.h.b16 %v12399
    %v12640 = vunpack.c.l.b16 %v12400
    %v12641 = vunpack.c.l.b16 %v12401
    %v12642 = vunpack.c.h.b16 %v12401
    %v12643 = vunpack.c.l.b16 %v12402
    %v12644 = vunpack.c.l.b16 %v12403
    %v12645 = vunpack.c.h.b16 %v12403
    %v12646 = vunpack.c.l.b16 %v12404
    %v12647 = vunpack.c.l.b16 %v12405
    %v12648 = vunpack.c.h.b16 %v12405
    %v12649 = vunpack.c.l.b16 %v12406
    %v12650 = vunpack.c.l.b16 %v12407
    %v12651 = vunpack.c.h.b16 %v12407
    %v12652 = vunpack.c.l.b16 %v12408
    %v12653 = vunpack.c.l.b16 %v12409
    %v12654 = vunpack.c.h.b16 %v12409
    %v12655 = vunpack.c.l.b16 %v12410
    %v12656 = vunpack.c.l.b16 %v12411
    %v12657 = vunpack.c.h.b16 %v12411
    %v12658 = vunpack.c.l.b16 %v12412
    %v12659 = vunpack.c.l.b16 %v12413
    %v12660 = vunpack.c.h.b16 %v12413
    %v12661 = vunpack.c.l.b16 %v12414
    %v12662 = vunpack.c.l.b16 %v12415
    %v12663 = vunpack.c.h.b16 %v12415
    %v12664 = vunpack.c.l.b16 %v12416
    %v12665 = vunpack.c.l.b16 %v12417
    %v12666 = vunpack.c.h.b16 %v12417
    %v12667 = vunpack.c.l.b16 %v12418
    %v12668 = vunpack.c.l.b16 %v12419
    %v12669 = vunpack.c.h.b16 %v12419
    %v12670 = vunpack.c.l.b16 %v12420
    %v12671 = vunpack.c.l.b16 %v12421
    %v12672 = vunpack.c.h.b16 %v12421
    %v12673 = vunpack.c.l.b16 %v12422
    %v12674 = vunpack.c.l.b16 %v12423
    %v12675 = vunpack.c.h.b16 %v12423
    %v12676 = vunpack.c.l.b16 %v12424
    %v12677 = vunpack.c.l.b16 %v12425
    %v12678 = vunpack.c.h.b16 %v12425
    %v12679 = vunpack.c.l.b16 %v12426
    %v12680 = vunpack.c.l.b16 %v12427
    %v12681 = vunpack.c.h.b16 %v12427
    %v12682 = vunpack.c.l.b16 %v12428
    %v12683 = vunpack.c.l.b16 %v12429
    %v12684 = vunpack.c.h.b16 %v12429
    %v12685 = vunpack.c.l.b16 %v12430
    %v12686 = vunpack.c.l.b16 %v12431
    %v12687 = vunpack.c.h.b16 %v12431
    %v12688 = vunpack.c.l.b16 %v12432
    %v12689 = vunpack.c.l.b16 %v12433
    %v12690 = vunpack.c.h.b16 %v12433
    %v12691 = vunpack.c.l.b16 %v12434
    %v12692 = vunpack.c.l.b16 %v12435
    %v12693 = vunpack.c.h.b16 %v12435
    %v12694 = vunpack.c.l.b16 %v12436
    %v12695 = vunpack.c.l.b16 %v12437
    %v12696 = vunpack.c.h.b16 %v12437
    %v12697 = vunpack.c.l.b16 %v12438
    %v12698 = vunpack.c.l.b16 %v12439
    %v12699 = vunpack.c.h.b16 %v12439
    %v12700 = vunpack.c.l.b16 %v12440
    %v12701 = vunpack.c.l.b16 %v12441
    %v12702 = vunpack.c.h.b16 %v12441
    %v12703 = vunpack.c.l.b16 %v12442
    %v12704 = vunpack.c.l.b16 %v12443
    %v12705 = vunpack.c.h.b16 %v12443
    %v12706 = vunpack.c.l.b16 %v12444
    %v12707 = vunpack.c.l.b16 %v12445
    %v12708 = vunpack.c.h.b16 %v12445
    %v12709 = vunpack.c.l.b16 %v12446
    %v12710 = vunpack.c.l.b16 %v12447
    %v12711 = vunpack.c.h.b16 %v12447
    %v12712 = vunpack.c.l.b16 %v12448
    %v12713 = vunpack.c.l.b16 %v12449
    %v12714 = vunpack.c.h.b16 %v12449
    %v12715 = vunpack.c.l.b16 %v12450
    %v12716 = vunpack.c.l.b16 %v12451
    %v12717 = vunpack.c.h.b16 %v12451
    %v12718 = vunpack.c.l.b16 %v12452
    %v12719 = vunpack.c.l.b16 %v12453
    %v12720 = vunpack.c.h.b16 %v12453
    %v12721 = vunpack.c.l.b16 %v12454
    %v12722 = vunpack.c.l.b16 %v12455
    %v12723 = vunpack.c.h.b16 %v12455
    %v12724 = vunpack.c.l.b16 %v12456
    %v12725 = vunpack.c.l.b16 %v12457
    %v12726 = vunpack.c.h.b16 %v12457
    %v12727 = vunpack.c.l.b16 %v12458
    %v12728 = vunpack.c.l.b16 %v12459
    %v12729 = vunpack.c.h.b16 %v12459
    %v12730 = vunpack.c.l.b16 %v12460
    %v12731 = vunpack.c.l.b16 %v12461
    %v12732 = vunpack.c.h.b16 %v12461
    %v12733 = vunpack.c.l.b16 %v12462
    %v12734 = vunpack.c.l.b16 %v12463
    %v12735 = vunpack.c.h.b16 %v12463
    %v12736 = vunpack.c.l.b16 %v12464
    %v12737 = vunpack.c.l.b16 %v12465
    %v12738 = vunpack.c.h.b16 %v12465
    %v12739 = vunpack.c.l.b16 %v12466
    %v12740 = vunpack.c.l.b16 %v12467
    %v12741 = vunpack.c.h.b16 %v12467
    %v12742 = vunpack.c.l.b16 %v12468
    %v12743 = vunpack.c.l.b16 %v12469
    %v12744 = vunpack.c.h.b16 %v12469
    %v12745 = vunpack.c.l.b16 %v12470
    %v12746 = vunpack.c.l.b16 %v12471
    %v12747 = vunpack.c.h.b16 %v12471
    %v12748 = vunpack.c.l.b16 %v12472
    %v12749 = vunpack.c.l.b16 %v12473
    %v12750 = vunpack.c.h.b16 %v12473
    %v12751 = vunpack.c.l.b16 %v12474
    %v12752 = vunpack.c.l.b16 %v12475
    %v12753 = vunpack.c.h.b16 %v12475
    %v12754 = vunpack.c.l.b16 %v12476
    %v12755 = vunpack.c.l.b16 %v12477
    %v12756 = vunpack.c.h.b16 %v12477
    %v12757 = vunpack.c.l.b16 %v12478
    %v12758 = vunpack.c.l.b16 %v12479
    %v12759 = vunpack.c.h.b16 %v12479
    %v12760 = vunpack.c.l.b16 %v12480
    %v12761 = vunpack.c.l.b16 %v12481
    %v12762 = vunpack.c.h.b16 %v12481
    %v12763 = vunpack.c.l.b16 %v12482
    %v12764 = vunpack.c.l.b16 %v12483
    %v12765 = vunpack.c.h.b16 %v12483
    %v12766 = vunpack.c.l.b16 %v12484
    %v12767 = vunpack.c.l.b16 %v12485
    %v12768 = vunpack.c.h.b16 %v12485
    %v12769 = vunpack.c.l.b16 %v12486
    %v12770 = vunpack.c.l.b16 %v12487
    %v12771 = vunpack.c.h.b16 %v12487
    %v12772 = vunpack.c.l.b16 %v12488
    %v12773 = vunpack.c.l.b16 %v12489
    %v12774 = vunpack.c.h.b16 %v12489
    %v12775 = vunpack.c.l.b16 %v12490
    %v12776 = vunpack.c.l.b16 %v12491
    %v12777 = vunpack.c.h.b16 %v12491
    %v12778 = vunpack.c.l.b16 %v12492
    %v12779 = vpack.c.b16 %v12632, %v12629
    %v12780 = vpack.c.b16 %v12633, %v12630
    %v12781 = vpack.c.b16 %v12634, %v12631
    %v12782 = vpack.c.b16 %v12638, %v12635
    %v12783 = vpack.c.b16 %v12639, %v12636
    %v12784 = vpack.c.b16 %v12640, %v12637
    %v12785 = vpack.c.b16 %v12644, %v12641
    %v12786 = vpack.c.b16 %v12645, %v12642
    %v12787 = vpack.c.b16 %v12646, %v12643
    %v12788 = vpack.c.b16 %v12650, %v12647
    %v12789 = vpack.c.b16 %v12651, %v12648
    %v12790 = vpack.c.b16 %v12652, %v12649
    %v12791 = vpack.c.b16 %v12656, %v12653
    %v12792 = vpack.c.b16 %v12657, %v12654
    %v12793 = vpack.c.b16 %v12658, %v12655
    %v12794 = vpack.c.b16 %v12662, %v12659
    %v12795 = vpack.c.b16 %v12663, %v12660
    %v12796 = vpack.c.b16 %v12664, %v12661
    %v12797 = vpack.c.b16 %v12668, %v12665
    %v12798 = vpack.c.b16 %v12669, %v12666
    %v12799 = vpack.c.b16 %v12670, %v12667
    %v12800 = vpack.c.b16 %v12674, %v12671
    %v12801 = vpack.c.b16 %v12675, %v12672
    %v12802 = vpack.c.b16 %v12676, %v12673
    %v12803 = vpack.c.b16 %v12680, %v12677
    %v12804 = vpack.c.b16 %v12681, %v12678
    %v12805 = vpack.c.b16 %v12682, %v12679
    %v12806 = vpack.c.b16 %v12686, %v12683
    %v12807 = vpack.c.b16 %v12687, %v12684
    %v12808 = vpack.c.b16 %v12688, %v12685
    %v12809 = vpack.c.b16 %v12692, %v12689
    %v12810 = vpack.c.b16 %v12693, %v12690
    %v12811 = vpack.c.b16 %v12694, %v12691
    %v12812 = vpack.c.b16 %v12698, %v12695
    %v12813 = vpack.c.b16 %v12699, %v12696
    %v12814 = vpack.c.b16 %v12700, %v12697
    %v12815 = vpack.c.b16 %v12704, %v12701
    %v12816 = vpack.c.b16 %v12705, %v12702
    %v12817 = vpack.c.b16 %v12706, %v12703
    %v12818 = vpack.c.b16 %v12710, %v12707
    %v12819 = vpack.c.b16 %v12711, %v12708
    %v12820 = vpack.c.b16 %v12712, %v12709
    %v12821 = vpack.c.b16 %v12716, %v12713
    %v12822 = vpack.c.b16 %v12717, %v12714
    %v12823 = vpack.c.b16 %v12718, %v12715
    %v12824 = vpack.c.b16 %v12722, %v12719
    %v12825 = vpack.c.b16 %v12723, %v12720
    %v12826 = vpack.c.b16 %v12724, %v12721
    %v12827 = vpack.c.b16 %v12728, %v12725
    %v12828 = vpack.c.b16 %v12729, %v12726
    %v12829 = vpack.c.b16 %v12730, %v12727
    %v12830 = vpack.c.b16 %v12734, %v12731
    %v12831 = vpack.c.b16 %v12735, %v12732
    %v12832 = vpack.c.b16 %v12736, %v12733
    %v12833 = vpack.c.b16 %v12740, %v12737
    %v12834 = vpack.c.b16 %v12741, %v12738
    %v12835 = vpack.c.b16 %v12742, %v12739
    %v12836 = vpack.c.b16 %v12746, %v12743
    %v12837 = vpack.c.b16 %v12747, %v12744
    %v12838 = vpack.c.b16 %v12748, %v12745
    %v12839 = vpack.c.b16 %v12752, %v12749
    %v12840 = vpack.c.b16 %v12753, %v12750
    %v12841 = vpack.c.b16 %v12754, %v12751
    %v12842 = vpack.c.b16 %v12758, %v12755
    %v12843 = vpack.c.b16 %v12759, %v12756
    %v12844 = vpack.c.b16 %v12760, %v12757
    %v12845 = vpack.c.b16 %v12764, %v12761
    %v12846 = vpack.c.b16 %v12765, %v12762
    %v12847 = vpack.c.b16 %v12766, %v12763
    %v12848 = vpack.c.b16 %v12770, %v12767
    %v12849 = vpack.c.b16 %v12771, %v12768
    %v12850 = vpack.c.b16 %v12772, %v12769
    %v12851 = vpack.c.b16 %v12776, %v12773
    %v12852 = vpack.c.b16 %v12777, %v12774
    %v12853 = vpack.c.b16 %v12778, %v12775
    %v12930 = vsel %vm244, %v12521, 0
    %12932 = vmatprep.subr.bf16.mxu0 %v12780
    %12933 = vmatpush1.bf16.msra.mxu0 %v12779
    %12934 = vmatprep.subr.bf16.mxu0 %v12783
    %12935 = vmatpush1.bf16.msra.mxu0 %v12782
    %12936 = vmatprep.subr.bf16.mxu0 %v12786
    %12937 = vmatpush1.bf16.msra.mxu0 %v12785
    %12938 = vmatprep.subr.bf16.mxu0 %v12789
    %12939 = vmatpush1.bf16.msra.mxu0 %v12788
    %12940 = vmatprep.subr.bf16.mxu0 %v12792
    %12941 = vmatpush1.bf16.msra.mxu0 %v12791
    %12942 = vmatprep.subr.bf16.mxu0 %v12795
    %12943 = vmatpush1.bf16.msra.mxu0 %v12794
    %12944 = vmatprep.subr.bf16.mxu0 %v12798
    %12945 = vmatpush1.bf16.msra.mxu0 %v12797
    %12946 = vmatprep.subr.bf16.mxu0 %v12801
    %12947 = vmatpush1.bf16.msra.mxu0 %v12800
    %12948 = vmatprep.subr.bf16.mxu0 %v12804
    %12949 = vmatpush1.bf16.msra.mxu0 %v12803
    %12950 = vmatprep.subr.bf16.mxu0 %v12807
    %12951 = vmatpush1.bf16.msra.mxu0 %v12806
    %12952 = vmatprep.subr.bf16.mxu0 %v12810
    %12953 = vmatpush1.bf16.msra.mxu0 %v12809
    %12954 = vmatprep.subr.bf16.mxu0 %v12813
    %12955 = vmatpush1.bf16.msra.mxu0 %v12812
    %12956 = vmatprep.subr.bf16.mxu0 %v12816
    %12957 = vmatpush1.bf16.msra.mxu0 %v12815
    %12958 = vmatprep.subr.bf16.mxu0 %v12819
    %12959 = vmatpush1.bf16.msra.mxu0 %v12818
    %12960 = vmatprep.subr.bf16.mxu0 %v12822
    %12961 = vmatpush1.bf16.msra.mxu0 %v12821
    %12962 = vmatprep.subr.bf16.mxu0 %v12825
    %12963 = vmatpush1.bf16.msra.mxu0 %v12824
    %12964 = vmatprep.mubr.bf16.mxu0 %v12524
    %12965 = vmatmul.mubr.bf16.gmra.mrb[0].mxu0 %v12523
    %v12966 = vpop.f32.mrb[0].mxu0
    %v12967 = vadd.f32 %v12499, %v12966
    %v12968 = vpop.f32.mrb[0].mxu0
    %v12969 = vadd.f32 %v12503, %v12968
    %v12970 = vpop.f32.mrb[0].mxu0
    %v12971 = vpop.f32.mrb[0].mxu0
    %12972 = vdwg.mxu0
    %12973 = vmatprep.subr.bf16.mxu0 %v12828
    %12974 = vmatpush1.bf16.msra.mxu0 %v12827
    %12975 = vmatprep.subr.bf16.mxu0 %v12831
    %12976 = vmatpush1.bf16.msra.mxu0 %v12830
    %12977 = vmatprep.subr.bf16.mxu0 %v12834
    %12978 = vmatpush1.bf16.msra.mxu0 %v12833
    %12979 = vmatprep.subr.bf16.mxu0 %v12837
    %12980 = vmatpush1.bf16.msra.mxu0 %v12836
    %12981 = vmatprep.subr.bf16.mxu0 %v12840
    %12982 = vmatpush1.bf16.msra.mxu0 %v12839
    %12983 = vmatprep.subr.bf16.mxu0 %v12843
    %12984 = vmatpush1.bf16.msra.mxu0 %v12842
    %12985 = vmatprep.subr.bf16.mxu0 %v12846
    %12986 = vmatpush1.bf16.msra.mxu0 %v12845
    %12987 = vmatprep.subr.bf16.mxu0 %v12849
    %12988 = vmatpush1.bf16.msra.mxu0 %v12848
    %12989 = vmatprep.subr.bf16.mxu0 %v12852
    %12990 = vmatpush1.bf16.msra.mxu0 %v12851
    %12991 = vmatprep.subr.bf16.mxu0 0
    %12992 = vmatpush1.bf16.msra.mxu0 0
    %12993 = vmatprep.subr.bf16.mxu0 0
    %12994 = vmatpush1.bf16.msra.mxu0 0
    %12995 = vmatprep.subr.bf16.mxu0 0
    %12996 = vmatpush1.bf16.msra.mxu0 0
    %12997 = vmatprep.subr.bf16.mxu0 0
    %12998 = vmatpush1.bf16.msra.mxu0 0
    %12999 = vmatprep.subr.bf16.mxu0 0
    %13000 = vmatpush1.bf16.msra.mxu0 0
    %13001 = vmatprep.subr.bf16.mxu0 0
    %13002 = vmatpush1.bf16.msra.mxu0 0
    %13003 = vmatprep.subr.bf16.mxu0 0
    %13004 = vmatpush1.bf16.msra.mxu0 0
    %13005 = vmatprep.mubr.bf16.mxu0 %v12930
    %13006 = vmatmul.mubr.bf16.gmra.mrb[0].mxu0 %v12525
    %v13007 = vpop.f32.mrb[0].mxu0
    %v13008 = vadd.f32 %v12967, %v13007
    %v13009 = vpop.f32.mrb[0].mxu0
    %v13010 = vadd.f32 %v12969, %v13009
    %v13011 = vpop.f32.mrb[0].mxu0
    %v13012 = vpop.f32.mrb[0].mxu0
    %13013 = vdwg.mxu0
    %13014 = vmatprep.subr.bf16.mxu0 0
    %13015 = vmatpush1.bf16.msra.mxu0 %v12781
    %13016 = vmatprep.subr.bf16.mxu0 0
    %13017 = vmatpush1.bf16.msra.mxu0 %v12784
    %13018 = vmatprep.subr.bf16.mxu0 0
    %13019 = vmatpush1.bf16.msra.mxu0 %v12787
    %13020 = vmatprep.subr.bf16.mxu0 0
    %13021 = vmatpush1.bf16.msra.mxu0 %v12790
    %13022 = vmatprep.subr.bf16.mxu0 0
    %13023 = vmatpush1.bf16.msra.mxu0 %v12793
    %13024 = vmatprep.subr.bf16.mxu0 0
    %13025 = vmatpush1.bf16.msra.mxu0 %v12796
    %13026 = vmatprep.subr.bf16.mxu0 0
    %13027 = vmatpush1.bf16.msra.mxu0 %v12799
    %13028 = vmatprep.subr.bf16.mxu0 0
    %13029 = vmatpush1.bf16.msra.mxu0 %v12802
    %13030 = vmatprep.subr.bf16.mxu0 0
    %13031 = vmatpush1.bf16.msra.mxu0 %v12805
    %13032 = vmatprep.subr.bf16.mxu0 0
    %13033 = vmatpush1.bf16.msra.mxu0 %v12808
    %13034 = vmatprep.subr.bf16.mxu0 0
    %13035 = vmatpush1.bf16.msra.mxu0 %v12811
    %13036 = vmatprep.subr.bf16.mxu0 0
    %13037 = vmatpush1.bf16.msra.mxu0 %v12814
    %13038 = vmatprep.subr.bf16.mxu0 0
    %13039 = vmatpush1.bf16.msra.mxu0 %v12817
    %13040 = vmatprep.subr.bf16.mxu0 0
    %13041 = vmatpush1.bf16.msra.mxu0 %v12820
    %13042 = vmatprep.subr.bf16.mxu0 0
    %13043 = vmatpush1.bf16.msra.mxu0 %v12823
    %13044 = vmatprep.subr.bf16.mxu0 0
    %13045 = vmatpush1.bf16.msra.mxu0 %v12826
    %13046 = vmatprep.mubr.bf16.mxu0 %v12524
    %13047 = vmatmul.mubr.bf16.gmra.mrb[0].mxu0 %v12523
    %v13048 = vpop.f32.mrb[0].mxu0
    %v13049 = vadd.f32 %v12507, %v13048
    %v13050 = vpop.f32.mrb[0].mxu0
    %v13051 = vpop.f32.mrb[0].mxu0
    %v13052 = vpop.f32.mrb[0].mxu0
    %13053 = vdwg.mxu0
    %13054 = vmatprep.subr.bf16.mxu0 0
    %13055 = vmatpush1.bf16.msra.mxu0 %v12829
    %13056 = vmatprep.subr.bf16.mxu0 0
    %13057 = vmatpush1.bf16.msra.mxu0 %v12832
    %13058 = vmatprep.subr.bf16.mxu0 0
    %13059 = vmatpush1.bf16.msra.mxu0 %v12835
    %13060 = vmatprep.subr.bf16.mxu0 0
    %13061 = vmatpush1.bf16.msra.mxu0 %v12838
    %13062 = vmatprep.subr.bf16.mxu0 0
    %13063 = vmatpush1.bf16.msra.mxu0 %v12841
    %13064 = vmatprep.subr.bf16.mxu0 0
    %13065 = vmatpush1.bf16.msra.mxu0 %v12844
    %13066 = vmatprep.subr.bf16.mxu0 0
    %13067 = vmatpush1.bf16.msra.mxu0 %v12847
    %13068 = vmatprep.subr.bf16.mxu0 0
    %13069 = vmatpush1.bf16.msra.mxu0 %v12850
    %13070 = vmatprep.subr.bf16.mxu0 0
    %13071 = vmatpush1.bf16.msra.mxu0 %v12853
    %13072 = vmatprep.subr.bf16.mxu0 0
    %13073 = vmatpush1.bf16.msra.mxu0 0
    %13074 = vmatprep.subr.bf16.mxu0 0
    %13075 = vmatpush1.bf16.msra.mxu0 0
    %13076 = vmatprep.subr.bf16.mxu0 0
    %13077 = vmatpush1.bf16.msra.mxu0 0
    %13078 = vmatprep.subr.bf16.mxu0 0
    %13079 = vmatpush1.bf16.msra.mxu0 0
    %13080 = vmatprep.subr.bf16.mxu0 0
    %13081 = vmatpush1.bf16.msra.mxu0 0
    %13082 = vmatprep.subr.bf16.mxu0 0
    %13083 = vmatpush1.bf16.msra.mxu0 0
    %13084 = vmatprep.subr.bf16.mxu0 0
    %13085 = vmatpush1.bf16.msra.mxu0 0
    %13086 = vmatprep.mubr.bf16.mxu0 %v12930
    %13087 = vmatmul.mubr.bf16.gmra.mrb[0].mxu0 %v12525
    %v13088 = vpop.f32.mrb[0].mxu0
    %v13089 = vadd.f32 %v13049, %v13088
    %v13090 = vpop.f32.mrb[0].mxu0
    %v13091 = vpop.f32.mrb[0].mxu0
    %v13092 = vpop.f32.mrb[0].mxu0
    %13093 = vdwg.mxu0
    %v13094 = vmax.f32 %v13008, 0.0
    %v13095 = vmax.f32 %v13010, 0.0
    %v13096 = vmax.f32 %v13089, 0.0
    %v13097 = vpack.c.bf16 %v13094, %v13094
    %v13098 = vpack.c.bf16 %v13095, %v13095
    %v13099 = vpack.c.bf16 %v13096, %v13096
    %s13100 = scalar_lea.vmem %s11, 1064
    %v13101 = vld [vmem:[%s13100] sm:$0xf]
    %v13102 = vld [vmem:[%s13100 + $0x4] sm:$0xf]
    %v13103 = vld [vmem:[%s13100 + $0x8] sm:$0xf]
    %v13104 = vld [vmem:[%s13100 + $0xc] sm:$0xf]
    %v13105 = vld [vmem:[%s13100 + $0x10] sm:$0xf]
    %v13106 = vld [vmem:[%s13100 + $0x14] sm:$0xf]
    %v13107 = vld [vmem:[%s13100 + $0x18] sm:$0xf]
    %v13108 = vld [vmem:[%s13100 + $0x1c] sm:$0xf]
    %v13109 = vld [vmem:[%s13100 + $0x20] sm:$0xf]
    %v13110 = vld [vmem:[%s13100 + $0x24] sm:$0xf]
    %v13111 = vld [vmem:[%s13100 + $0x28] sm:$0xf]
    %v13112 = vld [vmem:[%s13100 + $0x2c] sm:$0xf]
    %v13113 = vld [vmem:[%s13100 + $0x30] sm:$0xf]
    %v13114 = vld [vmem:[%s13100 + $0x34] sm:$0xf]
    %v13115 = vld [vmem:[%s13100 + $0x38] sm:$0xf]
    %v13116 = vld [vmem:[%s13100 + $0x3c] sm:$0xf]
    %v13117 = vld [vmem:[%s13100 + $0x40] sm:$0xf]
    %v13118 = vld [vmem:[%s13100 + $0x44] sm:$0xf]
    %v13119 = vld [vmem:[%s13100 + $0x48] sm:$0xf]
    %v13120 = vld [vmem:[%s13100 + $0x4c] sm:$0xf]
    %v13121 = vld [vmem:[%s13100 + $0x50] sm:$0xf]
    %v13122 = vld [vmem:[%s13100 + $0x54] sm:$0xf]
    %v13123 = vld [vmem:[%s13100 + $0x58] sm:$0xf]
    %v13124 = vld [vmem:[%s13100 + $0x5c] sm:$0xf]
    %v13125 = vld [vmem:[%s13100 + $0x60] sm:$0xf]
    %v13126 = vld [vmem:[%s13100 + $0x64] sm:$0xf]
    %v13127 = vld [vmem:[%s13100 + $0x68] sm:$0xf]
    %v13128 = vld [vmem:[%s13100 + $0x6c] sm:$0xf]
    %v13129 = vld [vmem:[%s13100 + $0x70] sm:$0xf]
    %v13130 = vld [vmem:[%s13100 + $0x74] sm:$0xf]
    %v13131 = vld [vmem:[%s13100 + $0x78] sm:$0xf]
    %v13132 = vld [vmem:[%s13100 + $0x7c] sm:$0xf]
    %v13133 = vld [vmem:[%s13100 + $0x80] sm:$0xf]
    %v13134 = vld [vmem:[%s13100 + $0x84] sm:$0xf]
    %v13135 = vld [vmem:[%s13100 + $0x88] sm:$0xf]
    %v13136 = vld [vmem:[%s13100 + $0x8c] sm:$0xf]
    %v13137 = vld [vmem:[%s13100 + $0x90] sm:$0xf]
    %v13138 = vld [vmem:[%s13100 + $0x94] sm:$0x3]
    %v13177 = vunpack.c.l.b16 %v13101
    %v13178 = vunpack.c.l.b16 %v13102
    %v13179 = vunpack.c.l.b16 %v13103
    %v13180 = vunpack.c.l.b16 %v13104
    %v13181 = vunpack.c.l.b16 %v13105
    %v13182 = vunpack.c.l.b16 %v13106
    %v13183 = vunpack.c.l.b16 %v13107
    %v13184 = vunpack.c.l.b16 %v13108
    %v13185 = vunpack.c.l.b16 %v13109
    %v13186 = vunpack.c.l.b16 %v13110
    %v13187 = vunpack.c.l.b16 %v13111
    %v13188 = vunpack.c.l.b16 %v13112
    %v13189 = vunpack.c.l.b16 %v13113
    %v13190 = vunpack.c.l.b16 %v13114
    %v13191 = vunpack.c.l.b16 %v13115
    %v13192 = vunpack.c.l.b16 %v13116
    %v13193 = vunpack.c.l.b16 %v13117
    %v13194 = vunpack.c.l.b16 %v13118
    %v13195 = vunpack.c.l.b16 %v13119
    %v13196 = vunpack.c.l.b16 %v13120
    %v13197 = vunpack.c.l.b16 %v13121
    %v13198 = vunpack.c.l.b16 %v13122
    %v13199 = vunpack.c.l.b16 %v13123
    %v13200 = vunpack.c.l.b16 %v13124
    %v13201 = vunpack.c.l.b16 %v13125
    %v13202 = vunpack.c.l.b16 %v13126
    %v13203 = vunpack.c.l.b16 %v13127
    %v13204 = vunpack.c.l.b16 %v13128
    %v13205 = vunpack.c.l.b16 %v13129
    %v13206 = vunpack.c.l.b16 %v13130
    %v13207 = vunpack.c.l.b16 %v13131
    %v13208 = vunpack.c.l.b16 %v13132
    %v13209 = vunpack.c.l.b16 %v13133
    %v13210 = vunpack.c.l.b16 %v13134
    %v13211 = vunpack.c.l.b16 %v13135
    %v13212 = vunpack.c.l.b16 %v13136
    %v13213 = vunpack.c.l.b16 %v13137
    %v13214 = vunpack.c.l.b16 %v13138
    %v13215 = vpack.c.b16 %v13178, %v13177
    %v13216 = vpack.c.b16 %v13180, %v13179
    %v13217 = vpack.c.b16 %v13182, %v13181
    %v13218 = vpack.c.b16 %v13184, %v13183
    %v13219 = vpack.c.b16 %v13186, %v13185
    %v13220 = vpack.c.b16 %v13188, %v13187
    %v13221 = vpack.c.b16 %v13190, %v13189
    %v13222 = vpack.c.b16 %v13192, %v13191
    %v13223 = vpack.c.b16 %v13194, %v13193
    %v13224 = vpack.c.b16 %v13196, %v13195
    %v13225 = vpack.c.b16 %v13198, %v13197
    %v13226 = vpack.c.b16 %v13200, %v13199
    %v13227 = vpack.c.b16 %v13202, %v13201
    %v13228 = vpack.c.b16 %v13204, %v13203
    %v13229 = vpack.c.b16 %v13206, %v13205
    %v13230 = vpack.c.b16 %v13208, %v13207
    %v13231 = vpack.c.b16 %v13210, %v13209
    %v13232 = vpack.c.b16 %v13212, %v13211
    %v13233 = vpack.c.b16 %v13214, %v13213
    %v13253 = vsel %vm1420, %v13099, 0
    %v13256 = vsel %vm1424, %v13233, 0
    %13258 = vmatprep.subr.bf16.mxu0 0
    %13259 = vmatpush1.bf16.msra.mxu0 %v13215
    %13260 = vmatprep.subr.bf16.mxu0 0
    %13261 = vmatpush1.bf16.msra.mxu0 %v13216
    %13262 = vmatprep.subr.bf16.mxu0 0
    %13263 = vmatpush1.bf16.msra.mxu0 %v13217
    %13264 = vmatprep.subr.bf16.mxu0 0
    %13265 = vmatpush1.bf16.msra.mxu0 %v13218
    %13266 = vmatprep.subr.bf16.mxu0 0
    %13267 = vmatpush1.bf16.msra.mxu0 %v13219
    %13268 = vmatprep.subr.bf16.mxu0 0
    %13269 = vmatpush1.bf16.msra.mxu0 %v13220
    %13270 = vmatprep.subr.bf16.mxu0 0
    %13271 = vmatpush1.bf16.msra.mxu0 %v13221
    %13272 = vmatprep.subr.bf16.mxu0 0
    %13273 = vmatpush1.bf16.msra.mxu0 %v13222
    %13274 = vmatprep.subr.bf16.mxu0 0
    %13275 = vmatpush1.bf16.msra.mxu0 %v13223
    %13276 = vmatprep.subr.bf16.mxu0 0
    %13277 = vmatpush1.bf16.msra.mxu0 %v13224
    %13278 = vmatprep.subr.bf16.mxu0 0
    %13279 = vmatpush1.bf16.msra.mxu0 %v13225
    %13280 = vmatprep.subr.bf16.mxu0 0
    %13281 = vmatpush1.bf16.msra.mxu0 %v13226
    %13282 = vmatprep.subr.bf16.mxu0 0
    %13283 = vmatpush1.bf16.msra.mxu0 %v13227
    %13284 = vmatprep.subr.bf16.mxu0 0
    %13285 = vmatpush1.bf16.msra.mxu0 %v13228
    %13286 = vmatprep.subr.bf16.mxu0 0
    %13287 = vmatpush1.bf16.msra.mxu0 %v13229
    %13288 = vmatprep.subr.bf16.mxu0 0
    %13289 = vmatpush1.bf16.msra.mxu0 %v13230
    %13290 = vmatprep.mubr.bf16.mxu0 %v13098
    %13291 = vmatmul.mubr.bf16.gmra.mrb[0].mxu0 %v13097
    %v13292 = vpop.f32.mrb[0].mxu0
    %v13293 = vadd.f32 0.0, %v13292
    %v13294 = vpop.f32.mrb[0].mxu0
    %v13295 = vpop.f32.mrb[0].mxu0
    %v13296 = vpop.f32.mrb[0].mxu0
    %13297 = vdwg.mxu0
    %13298 = vmatprep.subr.bf16.mxu0 0
    %13299 = vmatpush1.bf16.msra.mxu0 %v13231
    %13300 = vmatprep.subr.bf16.mxu0 0
    %13301 = vmatpush1.bf16.msra.mxu0 %v13232
    %13302 = vmatprep.subr.bf16.mxu0 0
    %13303 = vmatpush1.bf16.msra.mxu0 %v13256
    %13304 = vmatprep.subr.bf16.mxu0 0
    %13305 = vmatpush1.bf16.msra.mxu0 0
    %13306 = vmatprep.subr.bf16.mxu0 0
    %13307 = vmatpush1.bf16.msra.mxu0 0
    %13308 = vmatprep.subr.bf16.mxu0 0
    %13309 = vmatpush1.bf16.msra.mxu0 0
    %13310 = vmatprep.subr.bf16.mxu0 0
    %13311 = vmatpush1.bf16.msra.mxu0 0
    %13312 = vmatprep.subr.bf16.mxu0 0
    %13313 = vmatpush1.bf16.msra.mxu0 0
    %13314 = vmatprep.subr.bf16.mxu0 0
    %13315 = vmatpush1.bf16.msra.mxu0 0
    %13316 = vmatprep.subr.bf16.mxu0 0
    %13317 = vmatpush1.bf16.msra.mxu0 0
    %13318 = vmatprep.subr.bf16.mxu0 0
    %13319 = vmatpush1.bf16.msra.mxu0 0
    %13320 = vmatprep.subr.bf16.mxu0 0
    %13321 = vmatpush1.bf16.msra.mxu0 0
    %13322 = vmatprep.subr.bf16.mxu0 0
    %13323 = vmatpush1.bf16.msra.mxu0 0
    %13324 = vmatprep.subr.bf16.mxu0 0
    %13325 = vmatpush1.bf16.msra.mxu0 0
    %13326 = vmatprep.subr.bf16.mxu0 0
    %13327 = vmatpush1.bf16.msra.mxu0 0
    %13328 = vmatprep.subr.bf16.mxu0 0
    %13329 = vmatpush1.bf16.msra.mxu0 0
    %13330 = vmatprep.mubr.bf16.mxu0 0
    %13331 = vmatmul.mubr.bf16.gmra.mrb[0].mxu0 %v13253
    %v13332 = vpop.f32.mrb[0].mxu0
    %v13333 = vadd.f32 %v13293, %v13332
    %v13334 = vpop.f32.mrb[0].mxu0
    %v13335 = vpop.f32.mrb[0].mxu0
    %v13336 = vpop.f32.mrb[0].mxu0
    %13337 = vdwg.mxu0
    %13339 = vrot.lane.b32.xlu0 %v7657, 6
    %v13340 = vpop.permute.xlu0 %13339
    %13343 = vrot.lane.b32.xlu0 %v8603, 12
    %v13344 = vpop.permute.xlu0 %13343
    %13347 = vrot.lane.b32.xlu0 %v9549, 18
    %v13348 = vpop.permute.xlu0 %13347
    %13351 = vrot.lane.b32.xlu0 %v10495, 24
    %v13352 = vpop.permute.xlu0 %13351
    %13355 = vrot.lane.b32.xlu0 %v11441, 30
    %v13356 = vpop.permute.xlu0 %13355
    %13359 = vrot.lane.b32.xlu0 %v12387, 36
    %v13360 = vpop.permute.xlu0 %13359
    %13363 = vrot.lane.b32.xlu0 %v13333, 42
    %v13364 = vpop.permute.xlu0 %13363
    %vm13366 = vcmask 48128
    %v13367 = vsel %vm13366, %v6710, %v13340
    %vm13368 = vcmask 97280
    %v13369 = vsel %vm13368, %v13367, %v13344
    %vm13370 = vcmask 146432
    %v13371 = vsel %vm13370, %v13369, %v13348
    %vm13372 = vcmask 195584
    %v13373 = vsel %vm13372, %v13371, %v13352
    %vm13374 = vcmask 244736
    %v13375 = vsel %vm13374, %v13373, %v13356
    %vm13376 = vcmask 293888
    %v13377 = vsel %vm13376, %v13375, %v13360
    %vm13378 = vcmask 343040
    %v13379 = vsel %vm13378, %v13377, %v13364
    %v13380 = vld [vmem:[#allocation19] sm:$0x1]
    %v13382 = vlaneseq
    %v13383 = vshrl.u32 %v13382, 7
    %v13384 = vsub.s32 0, %v13383
    %v13385 = vrot.slane %v13380, %v13384
    %v13387 = vadd.f32 %v13379, %v13385
    %v13388 = vxor.u32 %v13387, 2147483648
    %v13389 = vmul.f32 %v13388, 1.442695
    %v13390 = vpow.pop %v13389
    %v13391 = vadd.f32 %v13390, 1.0
    %v13392 = vrcp.pop %v13391
    %v13393 = vmul.f32 1.0, %v13392
    %vm13394 = vcmask 386048
    %13395 = vst.msk [vmem:[%s13] sm:$0x3] %vm13394, %v13393
    // Predicated region
    $region102: #{actor_forward.1} parent=1 // pred_check
      _
    $region103: #{actor_forward.1} parent=1 // pred_check_branch
      %13397 = sbr.rel (0) target = $region105
    $region104: #{actor_forward.1} parent=1 // pred_region
      _
    $region105: #{actor_forward.1} parent=1 // pred_fallthru
      _
    // Predicated region
    $region106: #{actor_forward.1} parent=1 // pred_check
      _
    $region107: #{actor_forward.1} parent=1 // pred_check_branch
      %13399 = sbr.rel (0) target = $region109
    $region108: #{actor_forward.1} parent=1 // pred_region
      _
    $region109: #{actor_forward.1} parent=1 // pred_fallthru
      _
    %13400 = vsyncpa [#allocation3], 1
    %13401 = vsyncpa [#allocation5], 1
    %13402 = vsyncpa [#allocation8], 1
    %13403 = vsyncpa [#allocation11], 1
    %13404 = vsyncpa [#allocation14], 1
    %13405 = vsyncpa [#allocation17], 1
    %13406 = vsyncpa [#allocation20], 1

</llo_original>
